<compile_context>
chip_gen: v7x
topology: tpu7x:2x2x1
jax: 0.10.0
libtpu: 0.0.40
codegen_flags: <defaults>
</compile_context>

<pallas_src>
import functools

import jax
import jax.numpy as jnp
from jax import lax
from jax.experimental import pallas as pl
from jax.experimental.pallas import tpu as pltpu


def _round_up(n, m):
    return ((n + m - 1) // m) * m


def _choose_tc(S, B, Hp, *, cap=64, vmem_budget=40 * 1024 * 1024):
    """Largest time chunk (<= cap) whose double-buffered slabs fit the budget."""
    per_t = (2 * 2 * B * 4 * Hp * 2      # two bf16 gate slabs, double-buffered
             + 2 * 2 * B * Hp * 2        # two bf16 hseq output blocks, dbl-buf
             + 2 * B * Hp * 4)           # two f32 per-chunk hseq scratches
    fixed = (2 * 2 * Hp * 4 * Hp * 4     # W_hh_f / W_hh_b (assume dbl-buffered)
             + 2 * 2 * 2 * B * Hp * 4    # h0 / c0 blocks
             + 4 * B * Hp * 4)           # h/c state scratch
    tc = (vmem_budget - fixed) // max(per_t, 1)
    return int(max(1, min(cap, S, tc)))


# ----------------------------------------------------------------------------
# 1) Fused input projection for both directions (bf16 MXU, bf16 G outputs).
#    X2d: (R, E) @ W: (E, 8Hp) + b -> G_f, G_b each (R, 4Hp) bf16.
# ----------------------------------------------------------------------------
def _proj_kernel(x_ref, w_ref, b_ref, gf_ref, gb_ref, *, H4):
    y = (jnp.dot(x_ref[...], w_ref[...], preferred_element_type=jnp.float32)
         + b_ref[...])
    gf_ref[...] = y[:, :H4].astype(gf_ref.dtype)     # lane-aligned split
    gb_ref[...] = y[:, H4:].astype(gb_ref.dtype)


def gate_projection(x2d, w, b, *, row_tile=512):
    R, E = x2d.shape
    G8 = w.shape[1]
    H4 = G8 // 2
    Rt = min(row_tile, _round_up(R, 8))
    Rp = _round_up(R, Rt)
    if Rp != R:
        x2d = jnp.pad(x2d, ((0, Rp - R), (0, 0)))
    kernel = functools.partial(_proj_kernel, H4=H4)
    gf, gb = pl.pallas_call(
        kernel,
        out_shape=(jax.ShapeDtypeStruct((Rp, H4), jnp.bfloat16),
                   jax.ShapeDtypeStruct((Rp, H4), jnp.bfloat16)),
        grid_spec=pltpu.PrefetchScalarGridSpec(
            num_scalar_prefetch=0,
            grid=(Rp // Rt,),
            in_specs=[
                pl.BlockSpec((Rt, E), lambda r: (r, 0)),
                pl.BlockSpec((E, G8), lambda r: (0, 0)),
                pl.BlockSpec((1, G8), lambda r: (0, 0)),
            ],
            out_specs=[
                pl.BlockSpec((Rt, H4), lambda r: (r, 0)),
                pl.BlockSpec((Rt, H4), lambda r: (r, 0)),
            ],
        ),
        compiler_params=pltpu.CompilerParams(
            dimension_semantics=("parallel",),
            vmem_limit_bytes=64 * 1024 * 1024),
    )(x2d.astype(jnp.bfloat16), w, b)
    if Rp != R:
        gf, gb = gf[:R], gb[:R]
    return gf, gb


# ----------------------------------------------------------------------------
# 2) Fused bidirectional recurrence: both directions interleaved per timestep.
#    Internal fused gate column order: [ i | f | o | g ]  (sigmoid gates
#    contiguous -> one EUP sweep over 3*Hp columns).
# ----------------------------------------------------------------------------
def _lstm_cell(g_pre, h, c, w_ref, Hp):
    gates = g_pre.astype(jnp.float32) + jnp.dot(
        h, w_ref[...], preferred_element_type=jnp.float32)
    sg = jax.nn.sigmoid(gates[:, : 3 * Hp])
    i_g = sg[:, :Hp]
    f_g = sg[:, Hp:2 * Hp]
    o_g = sg[:, 2 * Hp:3 * Hp]
    g_g = jnp.tanh(gates[:, 3 * Hp:])
    c_new = f_g * c + i_g * g_g
    h_new = o_g * jnp.tanh(c_new)
    return h_new, c_new


def _bilstm_rec_kernel(gf_ref, gb_ref, h0_ref, c0_ref, wf_ref, wb_ref,
                       hsf_ref, hsb_ref, hfin_ref, cfin_ref,
                       hf_sc, cf_sc, hb_sc, cb_sc, hsf_sc, hsb_sc,
                       *, Tc, Hp, seq_len, n_chunks, unroll):
    c_idx = pl.program_id(0)

    @pl.when(c_idx == 0)
    def _():
        hf_sc[...] = h0_ref[0]
        cf_sc[...] = c0_ref[0]
        hb_sc[...] = h0_ref[1]
        cb_sc[...] = c0_ref[1]

    mask_time = (n_chunks * Tc) != seq_len        # only when S was padded
    base_f = c_idx * Tc
    base_b = (n_chunks - 1 - c_idx) * Tc

    def step(i, carry):
        tf = i                 # forward local time
        tb = Tc - 1 - i        # backward local time (walks time in reverse)
        hf, cf = hf_sc[...], cf_sc[...]
        hb, cb = hb_sc[...], cb_sc[...]
        # Two independent dependence chains -> scheduler interleaves them,
        # filling MXU/EUP bubbles of the latency-bound serial loop.
        hf_new, cf_new = _lstm_cell(gf_ref[tf], hf, cf, wf_ref, Hp)
        hb_new, cb_new = _lstm_cell(gb_ref[tb], hb, cb, wb_ref, Hp)
        if mask_time:
            vf = (base_f + tf) < seq_len
            vb = (base_b + tb) < seq_len
            hf_new = jnp.where(vf, hf_new, hf)
            cf_new = jnp.where(vf, cf_new, cf)
            hb_new = jnp.where(vb, hb_new, hb)
            cb_new = jnp.where(vb, cb_new, cb)
        hf_sc[...] = hf_new
        cf_sc[...] = cf_new
        hb_sc[...] = hb_new
        cb_sc[...] = cb_new
        hsf_sc[tf] = hf_new
        hsb_sc[tb] = hb_new
        return carry

    lax.fori_loop(0, Tc, step, 0, unroll=unroll)

    # Bulk, dense bf16 writeback of this chunk's hidden outputs.
    hsf_ref[...] = hsf_sc[...].astype(hsf_ref.dtype)
    hsb_ref[...] = hsb_sc[...].astype(hsb_ref.dtype)

    @pl.when(c_idx == n_chunks - 1)
    def _():
        hfin_ref[0] = hf_sc[...]
        cfin_ref[0] = cf_sc[...]
        hfin_ref[1] = hb_sc[...]
        cfin_ref[1] = cb_sc[...]


def bilstm_recurrence(g_fwd, g_bwd, h0p, c0p, w_hh_f, w_hh_b, *, Tc, seq_len):
    Sp, B, H4 = g_fwd.shape
    Hp = w_hh_f.shape[0]
    n_chunks = Sp // Tc
    unroll = min(8, Tc)

    kernel = functools.partial(_bilstm_rec_kernel, Tc=Tc, Hp=Hp,
                               seq_len=seq_len, n_chunks=n_chunks,
                               unroll=unroll)
    return pl.pallas_call(
        kernel,
        out_shape=(
            jax.ShapeDtypeStruct((Sp, B, Hp), jnp.bfloat16),   # fwd hidden seq
            jax.ShapeDtypeStruct((Sp, B, Hp), jnp.bfloat16),   # bwd hidden seq
            jax.ShapeDtypeStruct((2, B, Hp), jnp.float32),     # final h (f, b)
            jax.ShapeDtypeStruct((2, B, Hp), jnp.float32),     # final c (f, b)
        ),
        grid_spec=pltpu.PrefetchScalarGridSpec(
            num_scalar_prefetch=0,
            grid=(n_chunks,),
            in_specs=[
                pl.BlockSpec((Tc, B, H4), lambda c: (c, 0, 0)),
                pl.BlockSpec((Tc, B, H4), lambda c: (n_chunks - 1 - c, 0, 0)),
                pl.BlockSpec((2, B, Hp), lambda c: (0, 0, 0)),
                pl.BlockSpec((2, B, Hp), lambda c: (0, 0, 0)),
                pl.BlockSpec((Hp, H4), lambda c: (0, 0)),
                pl.BlockSpec((Hp, H4), lambda c: (0, 0)),
            ],
            out_specs=[
                pl.BlockSpec((Tc, B, Hp), lambda c: (c, 0, 0)),
                pl.BlockSpec((Tc, B, Hp), lambda c: (n_chunks - 1 - c, 0, 0)),
                pl.BlockSpec((2, B, Hp), lambda c: (0, 0, 0)),
                pl.BlockSpec((2, B, Hp), lambda c: (0, 0, 0)),
            ],
            scratch_shapes=[
                pltpu.VMEM((B, Hp), jnp.float32),       # h fwd
                pltpu.VMEM((B, Hp), jnp.float32),       # c fwd
                pltpu.VMEM((B, Hp), jnp.float32),       # h bwd
                pltpu.VMEM((B, Hp), jnp.float32),       # c bwd
                pltpu.VMEM((Tc, B, Hp), jnp.float32),   # fwd chunk hseq
                pltpu.VMEM((Tc, B, Hp), jnp.float32),   # bwd chunk hseq
            ],
        ),
        compiler_params=pltpu.CompilerParams(
            dimension_semantics=("arbitrary",),
            vmem_limit_bytes=64 * 1024 * 1024),
    )(g_fwd, g_bwd, h0p, c0p, w_hh_f, w_hh_b)


# ----------------------------------------------------------------------------
# 3) Fused Linear + ReLU over both direction outputs (no feature concat):
#    y = relu(hf @ Wf + hb @ Wb + b), rows = S*B collapsed, lane-dense Dp out.
# ----------------------------------------------------------------------------
def _fc_relu_kernel(hf_ref, hb_ref, wf_ref, wb_ref, b_ref, o_ref):
    y = (jnp.dot(hf_ref[...], wf_ref[...], preferred_element_type=jnp.float32)
         + jnp.dot(hb_ref[...], wb_ref[...], preferred_element_type=jnp.float32)
         + b_ref[...])
    o_ref[...] = jnp.maximum(y, 0.0)


def fc_relu(hf2d, hb2d, wf, wb, b, *, row_tile=512):
    R, Hp = hf2d.shape
    Dp = wf.shape[1]
    Rt = min(row_tile, _round_up(R, 8))
    Rp = _round_up(R, Rt)
    if Rp != R:
        hf2d = jnp.pad(hf2d, ((0, Rp - R), (0, 0)))
        hb2d = jnp.pad(hb2d, ((0, Rp - R), (0, 0)))
    out = pl.pallas_call(
        _fc_relu_kernel,
        out_shape=jax.ShapeDtypeStruct((Rp, Dp), jnp.float32),
        grid_spec=pltpu.PrefetchScalarGridSpec(
            num_scalar_prefetch=0,
            grid=(Rp // Rt,),
            in_specs=[
                pl.BlockSpec((Rt, Hp), lambda r: (r, 0)),
                pl.BlockSpec((Rt, Hp), lambda r: (r, 0)),
                pl.BlockSpec((Hp, Dp), lambda r: (0, 0)),
                pl.BlockSpec((Hp, Dp), lambda r: (0, 0)),
                pl.BlockSpec((1, Dp), lambda r: (0, 0)),
            ],
            out_specs=pl.BlockSpec((Rt, Dp), lambda r: (r, 0)),
        ),
        compiler_params=pltpu.CompilerParams(
            dimension_semantics=("parallel",),
            vmem_limit_bytes=64 * 1024 * 1024),
    )(hf2d, hb2d, wf, wb, b)
    return out[:R] if Rp != R else out


# ----------------------------------------------------------------------------
# Full module forward:  X (B, S, E) -> (outputs (S, B, hidden_dim),
#                                        h (2, B, H), c (2, B, H))
# ----------------------------------------------------------------------------
@functools.partial(jax.jit, static_argnames=("lstm_dim", "hidden_dim"))
def lstm_module_forward(X, h0, c0, params, *, lstm_dim, hidden_dim):
    B, S, E = X.shape
    H, D = lstm_dim, hidden_dim
    Hp = params["w_hh_f"].shape[0]
    Dp = params["w_fc_f"].shape[1]

    Tc = _choose_tc(S, B, Hp)
    Sp = _round_up(S, Tc)

    x_t = jnp.transpose(X, (1, 0, 2))                 # (S, B, E) time-major
    if Sp != S:
        x_t = jnp.pad(x_t, ((0, Sp - S), (0, 0), (0, 0)))

    # 1) fused dual-direction input projection (off the serial path)
    gf2d, gb2d = gate_projection(x_t.reshape(Sp * B, E),
                                 params["w_ih"], params["b_ih"])
    g_fwd = gf2d.reshape(Sp, B, 4 * Hp)
    g_bwd = gb2d.reshape(Sp, B, 4 * Hp)

    # 2) single fused bidirectional recurrence (interleaved fwd/bwd steps)
    pad_h = Hp - H
    h0p = jnp.pad(h0, ((0, 0), (0, 0), (0, pad_h))) if pad_h else h0
    c0p = jnp.pad(c0, ((0, 0), (0, 0), (0, pad_h))) if pad_h else c0
    hseq_f, hseq_b, hfin, cfin = bilstm_recurrence(
        g_fwd, g_bwd, h0p, c0p, params["w_hh_f"], params["w_hh_b"],
        Tc=Tc, seq_len=S)

    # 3) fused FC + ReLU over both direction outputs (no concat, no flip)
    out2d = fc_relu(hseq_f.reshape(Sp * B, Hp), hseq_b.reshape(Sp * B, Hp),
                    params["w_fc_f"], params["w_fc_b"], params["b_fc"])
    outputs = out2d.reshape(Sp, B, Dp)[:S, :, :D]

    hidden_state = hfin[:, :, :H]
    cell_state = cfin[:, :, :H]
    return outputs, hidden_state, cell_state


def init_params(key, emb_dim, lstm_dim, hidden_dim):
    """Deterministic synthetic init (PyTorch-style uniform(-1/sqrt(H), 1/sqrt(H))).

    Weights are stored directly in the fused, padded, lane-dense layout:
      * per-direction gate columns are [ i | f | o | g ] (column permutation of
        PyTorch's (i,f,g,o); sigmoid gates contiguous), each gate block padded
        H -> Hp (multiple of 128),
      * the two directions' input projections are concatenated to (E, 8Hp),
        stored bf16, with the combined bias b_ih + b_hh folded in (f32),
      * W_hh is (Hp, 4Hp) f32 (rows and gate columns zero-padded),
      * the FC weight is split into forward/backward halves (Hp, Dp) bf16.
    Real PyTorch weights must be permuted/padded into this layout when loaded.
    """
    H, D = lstm_dim, hidden_dim
    Hp = _round_up(H, 128)
    Dp = _round_up(D, 128)
    ks = jax.random.split(key, 12)
    s = 1.0 / jnp.sqrt(jnp.float32(H))

    def u(k, shape):
        return jax.random.uniform(k, shape, jnp.float32, -s, s)

    def pad_gates(w):   # (..., 4H) -> (..., 4Hp) zero-padding each gate block
        lead = w.shape[:-1]
        w4 = w.reshape(lead + (4, H))
        w4 = jnp.pad(w4, [(0, 0)] * len(lead) + [(0, 0), (0, Hp - H)])
        return w4.reshape(lead + (4 * Hp,))

    w_ih_f = pad_gates(u(ks[0], (emb_dim, 4 * H)))
    w_hh_f = pad_gates(jnp.pad(u(ks[1], (H, 4 * H)), ((0, Hp - H), (0, 0))))
    b_f = pad_gates(u(ks[2], (1, 4 * H)) + u(ks[3], (1, 4 * H)))   # b_ih + b_hh
    w_ih_b = pad_gates(u(ks[4], (emb_dim, 4 * H)))
    w_hh_b = pad_gates(jnp.pad(u(ks[5], (H, 4 * H)), ((0, Hp - H), (0, 0))))
    b_b = pad_gates(u(ks[6], (1, 4 * H)) + u(ks[7], (1, 4 * H)))

    w_fc_f = jnp.pad(u(ks[8], (H, D)), ((0, Hp - H), (0, Dp - D)))
    w_fc_b = jnp.pad(u(ks[9], (H, D)), ((0, Hp - H), (0, Dp - D)))
    b_fc = jnp.pad(u(ks[10], (1, D)), ((0, 0), (0, Dp - D)))

    return {
        "w_ih": jnp.concatenate([w_ih_f, w_ih_b], axis=1).astype(jnp.bfloat16),
        "b_ih": jnp.concatenate([b_f, b_b], axis=1),              # (1, 8Hp) f32
        "w_hh_f": w_hh_f,                                          # (Hp, 4Hp) f32
        "w_hh_b": w_hh_b,                                          # (Hp, 4Hp) f32
        "w_fc_f": w_fc_f.astype(jnp.bfloat16),                     # (Hp, Dp) bf16
        "w_fc_b": w_fc_b.astype(jnp.bfloat16),                     # (Hp, Dp) bf16
        "b_fc": b_fc,                                              # (1, Dp) f32
    }


def _reference_forward(X, h0, c0, params, H, D):
    """Pure-JAX f32 reference using the same fused/padded parameter layout."""
    B, S, E = X.shape
    Hp = params["w_hh_f"].shape[0]
    x_t = jnp.transpose(X, (1, 0, 2)).astype(jnp.float32)
    g = jnp.einsum("sbe,eg->sbg", x_t,
                   params["w_ih"].astype(jnp.float32)) + params["b_ih"]
    gf, gb = g[..., :4 * Hp], g[..., 4 * Hp:]

    def cell(gt, h, c, w):
        gates = gt + h @ w
        i = jax.nn.sigmoid(gates[:, :Hp])
        f = jax.nn.sigmoid(gates[:, Hp:2 * Hp])
        o = jax.nn.sigmoid(gates[:, 2 * Hp:3 * Hp])
        gg = jnp.tanh(gates[:, 3 * Hp:])
        c = f * c + i * gg
        h = o * jnp.tanh(c)
        return h, c

    pad = Hp - H
    hf = jnp.pad(h0[0], ((0, 0), (0, pad))); cf = jnp.pad(c0[0], ((0, 0), (0, pad)))
    hb = jnp.pad(h0[1], ((0, 0), (0, pad))); cb = jnp.pad(c0[1], ((0, 0), (0, pad)))
    hfs, hbs = [], []
    for t in range(S):
        hf, cf = cell(gf[t], hf, cf, params["w_hh_f"])
        hfs.append(hf)
    for t in range(S - 1, -1, -1):
        hb, cb = cell(gb[t], hb, cb, params["w_hh_b"])
        hbs.append(hb)
    hf_seq = jnp.stack(hfs)
    hb_seq = jnp.stack(hbs[::-1])
    y = (hf_seq @ params["w_fc_f"].astype(jnp.float32)
         + hb_seq @ params["w_fc_b"].astype(jnp.float32) + params["b_fc"])
    out = jnp.maximum(y, 0.0)[:, :, :D]
    return out, jnp.stack([hf, hb])[:, :, :H], jnp.stack([cf, cb])[:, :, :H]


if __name__ == "__main__":
    batch, seq_len = 2, 8
    emb_dim, lstm_dim, hidden_dim = 16, 32, 32

    key = jax.random.PRNGKey(0)
    kx, kp = jax.random.split(key)
    X = jax.random.normal(kx, (batch, seq_len, emb_dim), jnp.float32)
    params = init_params(kp, emb_dim, lstm_dim, hidden_dim)

    # initial hidden/cell states (externally supplied in the reference module;
    # zeros here for determinism)
    h0 = jnp.zeros((2, batch, lstm_dim), jnp.float32)
    c0 = jnp.zeros((2, batch, lstm_dim), jnp.float32)

    outputs, hidden_state, cell_state = lstm_module_forward(
        X, h0, c0, params, lstm_dim=lstm_dim, hidden_dim=hidden_dim)
    jax.block_until_ready((outputs, hidden_state, cell_state))

    assert outputs.shape == (seq_len, batch, hidden_dim)
    assert hidden_state.shape == (2, batch, lstm_dim)
    assert cell_state.shape == (2, batch, lstm_dim)

    # numerical sanity vs pure-JAX f32 reference (bf16 MXU operands -> loose tol)
    ref_out, ref_h, ref_c = _reference_forward(X, h0, c0, params,
                                               lstm_dim, hidden_dim)
    assert float(jnp.max(jnp.abs(outputs - ref_out))) < 5e-2
    assert float(jnp.max(jnp.abs(hidden_state - ref_h))) < 5e-2
    assert float(jnp.max(jnp.abs(cell_state - ref_c))) < 5e-2

    print("KERNEL_OK")
</pallas_src>

<mosaic_0001>
module attributes {stable_mosaic.version = 11 : i64} {
  func.func @_proj_kernel(%arg0: i32, %arg1: memref<16x16xbf16, #tpu.memory_space<vmem>>, %arg2: memref<16x1024xbf16, #tpu.memory_space<vmem>>, %arg3: memref<1x1024xf32, #tpu.memory_space<vmem>>, %arg4: memref<16x512xbf16, #tpu.memory_space<vmem>>, %arg5: memref<16x512xbf16, #tpu.memory_space<vmem>>) attributes {dimension_semantics = [#tpu.dimension_semantics<parallel>], iteration_bounds = array<i64: 1>, scalar_prefetch = 0 : i64, scratch_operands = 0 : i64, tpu.core_type = #tpu.core_type<tc>, window_params = [{transform_indices = @transform_0, window_bounds = array<i64: 16, 16>}, {pipeline_mode = #tpu.pipeline_mode<synchronous>, transform_indices = @transform_1, window_bounds = array<i64: 16, 1024>}, {pipeline_mode = #tpu.pipeline_mode<synchronous>, transform_indices = @transform_2, window_bounds = array<i64: 1, 1024>}, {transform_indices = @transform_3, window_bounds = array<i64: 16, 512>}, {transform_indices = @transform_4, window_bounds = array<i64: 16, 512>}]} {
    %c0 = arith.constant 0 : index
    %c0_0 = arith.constant 0 : index
    %0 = vector.load %arg1[%c0, %c0_0] : memref<16x16xbf16, #tpu.memory_space<vmem>>, vector<16x16xbf16>
    %c0_1 = arith.constant 0 : index
    %c0_2 = arith.constant 0 : index
    %1 = vector.load %arg2[%c0_1, %c0_2] : memref<16x1024xbf16, #tpu.memory_space<vmem>>, vector<16x1024xbf16>
    %cst = arith.constant dense<0.000000e+00> : vector<16x1024xf32>
    %2 = tpu.matmul %0, %1, %cst {dimension_numbers = #tpu.dot_dimension_numbers<[1], [0], [0], [1], [0, 0, 1, 1], [], []>} : vector<16x16xbf16>, vector<16x1024xbf16>, vector<16x1024xf32> -> vector<16x1024xf32>
    %c0_3 = arith.constant 0 : index
    %c0_4 = arith.constant 0 : index
    %3 = vector.load %arg3[%c0_3, %c0_4] : memref<1x1024xf32, #tpu.memory_space<vmem>>, vector<1x1024xf32>
    %4 = vector.broadcast %3 : vector<1x1024xf32> to vector<16x1024xf32>
    %5 = arith.addf %2, %4 : vector<16x1024xf32>
    %6 = vector.extract_strided_slice %5 {offsets = [0, 0], sizes = [16, 512], strides = [1, 1]} : vector<16x1024xf32> to vector<16x512xf32>
    %7 = arith.truncf %6 : vector<16x512xf32> to vector<16x512xbf16>
    %c0_5 = arith.constant 0 : index
    %c0_6 = arith.constant 0 : index
    %8 = vector.load %arg4[%c0_5, %c0_6] : memref<16x512xbf16, #tpu.memory_space<vmem>>, vector<16x512xbf16>
    tpu.vector_store %arg4[%c0_5, %c0_6], %7 {strides = array<i32>} : memref<16x512xbf16, #tpu.memory_space<vmem>>, vector<16x512xbf16>,
    %9 = vector.extract_strided_slice %5 {offsets = [0, 512], sizes = [16, 512], strides = [1, 1]} : vector<16x1024xf32> to vector<16x512xf32>
    %10 = arith.truncf %9 : vector<16x512xf32> to vector<16x512xbf16>
    %c0_7 = arith.constant 0 : index
    %c0_8 = arith.constant 0 : index
    %11 = vector.load %arg5[%c0_7, %c0_8] : memref<16x512xbf16, #tpu.memory_space<vmem>>, vector<16x512xbf16>
    tpu.vector_store %arg5[%c0_7, %c0_8], %10 {strides = array<i32>} : memref<16x512xbf16, #tpu.memory_space<vmem>>, vector<16x512xbf16>,
    return
  }
  func.func @transform_0(%arg0: i32) -> (i32, i32) {
    %c0_i32 = arith.constant 0 : i32
    %c0_i32_0 = arith.constant 0 : i32
    return %arg0, %c0_i32 : i32, i32
  }
  func.func @transform_1(%arg0: i32) -> (i32, i32) {
    %c0_i32 = arith.constant 0 : i32
    %c0_i32_0 = arith.constant 0 : i32
    %c0_i32_1 = arith.constant 0 : i32
    return %c0_i32, %c0_i32_0 : i32, i32
  }
  func.func @transform_2(%arg0: i32) -> (i32, i32) {
    %c0_i32 = arith.constant 0 : i32
    %c0_i32_0 = arith.constant 0 : i32
    %c0_i32_1 = arith.constant 0 : i32
    return %c0_i32, %c0_i32_0 : i32, i32
  }
  func.func @transform_3(%arg0: i32) -> (i32, i32) {
    %c0_i32 = arith.constant 0 : i32
    %c0_i32_0 = arith.constant 0 : i32
    return %arg0, %c0_i32 : i32, i32
  }
  func.func @transform_4(%arg0: i32) -> (i32, i32) {
    %c0_i32 = arith.constant 0 : i32
    %c0_i32_0 = arith.constant 0 : i32
    return %arg0, %c0_i32 : i32, i32
  }
}

module attributes {stable_mosaic.version = 11 : i64} {
  func.func @_fc_relu_kernel(%arg0: i32, %arg1: memref<16x128xbf16, #tpu.memory_space<vmem>>, %arg2: memref<16x128xbf16, #tpu.memory_space<vmem>>, %arg3: memref<128x128xbf16, #tpu.memory_space<vmem>>, %arg4: memref<128x128xbf16, #tpu.memory_space<vmem>>, %arg5: memref<1x128xf32, #tpu.memory_space<vmem>>, %arg6: memref<16x128xf32, #tpu.memory_space<vmem>>) attributes {dimension_semantics = [#tpu.dimension_semantics<parallel>], iteration_bounds = array<i64: 1>, scalar_prefetch = 0 : i64, scratch_operands = 0 : i64, tpu.core_type = #tpu.core_type<tc>, window_params = [{transform_indices = @transform_0, window_bounds = array<i64: 16, 128>}, {transform_indices = @transform_1, window_bounds = array<i64: 16, 128>}, {pipeline_mode = #tpu.pipeline_mode<synchronous>, transform_indices = @transform_2, window_bounds = array<i64: 128, 128>}, {pipeline_mode = #tpu.pipeline_mode<synchronous>, transform_indices = @transform_3, window_bounds = array<i64: 128, 128>}, {pipeline_mode = #tpu.pipeline_mode<synchronous>, transform_indices = @transform_4, window_bounds = array<i64: 1, 128>}, {transform_indices = @transform_5, window_bounds = array<i64: 16, 128>}]} {
    %c0 = arith.constant 0 : index
    %c0_0 = arith.constant 0 : index
    %0 = vector.load %arg1[%c0, %c0_0] : memref<16x128xbf16, #tpu.memory_space<vmem>>, vector<16x128xbf16>
    %c0_1 = arith.constant 0 : index
    %c0_2 = arith.constant 0 : index
    %1 = vector.load %arg3[%c0_1, %c0_2] : memref<128x128xbf16, #tpu.memory_space<vmem>>, vector<128x128xbf16>
    %cst = arith.constant dense<0.000000e+00> : vector<16x128xf32>
    %2 = tpu.matmul %0, %1, %cst {dimension_numbers = #tpu.dot_dimension_numbers<[1], [0], [0], [1], [0, 0, 1, 1], [], []>} : vector<16x128xbf16>, vector<128x128xbf16>, vector<16x128xf32> -> vector<16x128xf32>
    %c0_3 = arith.constant 0 : index
    %c0_4 = arith.constant 0 : index
    %3 = vector.load %arg2[%c0_3, %c0_4] : memref<16x128xbf16, #tpu.memory_space<vmem>>, vector<16x128xbf16>
    %c0_5 = arith.constant 0 : index
    %c0_6 = arith.constant 0 : index
    %4 = vector.load %arg4[%c0_5, %c0_6] : memref<128x128xbf16, #tpu.memory_space<vmem>>, vector<128x128xbf16>
    %cst_7 = arith.constant dense<0.000000e+00> : vector<16x128xf32>
    %5 = tpu.matmul %3, %4, %cst_7 {dimension_numbers = #tpu.dot_dimension_numbers<[1], [0], [0], [1], [0, 0, 1, 1], [], []>} : vector<16x128xbf16>, vector<128x128xbf16>, vector<16x128xf32> -> vector<16x128xf32>
    %6 = arith.addf %2, %5 : vector<16x128xf32>
    %c0_8 = arith.constant 0 : index
    %c0_9 = arith.constant 0 : index
    %7 = vector.load %arg5[%c0_8, %c0_9] : memref<1x128xf32, #tpu.memory_space<vmem>>, vector<1x128xf32>
    %8 = vector.broadcast %7 : vector<1x128xf32> to vector<16x128xf32>
    %9 = arith.addf %6, %8 : vector<16x128xf32>
    %cst_10 = arith.constant 0.000000e+00 : f32
    %10 = vector.broadcast %cst_10 : f32 to vector<16x128xf32>
    %11 = arith.maximumf %9, %10 : vector<16x128xf32>
    %c0_11 = arith.constant 0 : index
    %c0_12 = arith.constant 0 : index
    %12 = vector.load %arg6[%c0_11, %c0_12] : memref<16x128xf32, #tpu.memory_space<vmem>>, vector<16x128xf32>
    tpu.vector_store %arg6[%c0_11, %c0_12], %11 {strides = array<i32>} : memref<16x128xf32, #tpu.memory_space<vmem>>, vector<16x128xf32>,
    return
  }
  func.func @transform_0(%arg0: i32) -> (i32, i32) {
    %c0_i32 = arith.constant 0 : i32
    %c0_i32_0 = arith.constant 0 : i32
    return %arg0, %c0_i32 : i32, i32
  }
  func.func @transform_1(%arg0: i32) -> (i32, i32) {
    %c0_i32 = arith.constant 0 : i32
    %c0_i32_0 = arith.constant 0 : i32
    return %arg0, %c0_i32 : i32, i32
  }
  func.func @transform_2(%arg0: i32) -> (i32, i32) {
    %c0_i32 = arith.constant 0 : i32
    %c0_i32_0 = arith.constant 0 : i32
    %c0_i32_1 = arith.constant 0 : i32
    return %c0_i32, %c0_i32_0 : i32, i32
  }
  func.func @transform_3(%arg0: i32) -> (i32, i32) {
    %c0_i32 = arith.constant 0 : i32
    %c0_i32_0 = arith.constant 0 : i32
    %c0_i32_1 = arith.constant 0 : i32
    return %c0_i32, %c0_i32_0 : i32, i32
  }
  func.func @transform_4(%arg0: i32) -> (i32, i32) {
    %c0_i32 = arith.constant 0 : i32
    %c0_i32_0 = arith.constant 0 : i32
    %c0_i32_1 = arith.constant 0 : i32
    return %c0_i32, %c0_i32_0 : i32, i32
  }
  func.func @transform_5(%arg0: i32) -> (i32, i32) {
    %c0_i32 = arith.constant 0 : i32
    %c0_i32_0 = arith.constant 0 : i32
    return %arg0, %c0_i32 : i32, i32
  }
}

module attributes {stable_mosaic.version = 11 : i64} {
  func.func @_bilstm_rec_kernel(%arg0: i32, %arg1: memref<8x2x512xbf16, #tpu.memory_space<vmem>>, %arg2: memref<8x2x512xbf16, #tpu.memory_space<vmem>>, %arg3: memref<2x2x128xf32, #tpu.memory_space<vmem>>, %arg4: memref<2x2x128xf32, #tpu.memory_space<vmem>>, %arg5: memref<128x512xf32, #tpu.memory_space<vmem>>, %arg6: memref<128x512xf32, #tpu.memory_space<vmem>>, %arg7: memref<8x2x128xbf16, #tpu.memory_space<vmem>>, %arg8: memref<8x2x128xbf16, #tpu.memory_space<vmem>>, %arg9: memref<2x2x128xf32, #tpu.memory_space<vmem>>, %arg10: memref<2x2x128xf32, #tpu.memory_space<vmem>>, %arg11: memref<2x128xf32, #tpu.memory_space<vmem>>, %arg12: memref<2x128xf32, #tpu.memory_space<vmem>>, %arg13: memref<2x128xf32, #tpu.memory_space<vmem>>, %arg14: memref<2x128xf32, #tpu.memory_space<vmem>>, %arg15: memref<8x2x128xf32, #tpu.memory_space<vmem>>, %arg16: memref<8x2x128xf32, #tpu.memory_space<vmem>>) attributes {dimension_semantics = [#tpu.dimension_semantics<arbitrary>], iteration_bounds = array<i64: 1>, scalar_prefetch = 0 : i64, scratch_operands = 6 : i64, tpu.core_type = #tpu.core_type<tc>, window_params = [{transform_indices = @transform_0, window_bounds = array<i64: 8, 2, 512>}, {transform_indices = @transform_1, window_bounds = array<i64: 8, 2, 512>}, {pipeline_mode = #tpu.pipeline_mode<synchronous>, transform_indices = @transform_2, window_bounds = array<i64: 2, 2, 128>}, {pipeline_mode = #tpu.pipeline_mode<synchronous>, transform_indices = @transform_3, window_bounds = array<i64: 2, 2, 128>}, {pipeline_mode = #tpu.pipeline_mode<synchronous>, transform_indices = @transform_4, window_bounds = array<i64: 128, 512>}, {pipeline_mode = #tpu.pipeline_mode<synchronous>, transform_indices = @transform_5, window_bounds = array<i64: 128, 512>}, {transform_indices = @transform_6, window_bounds = array<i64: 8, 2, 128>}, {transform_indices = @transform_7, window_bounds = array<i64: 8, 2, 128>}, {pipeline_mode = #tpu.pipeline_mode<synchronous>, transform_indices = @transform_8, window_bounds = array<i64: 2, 2, 128>}, {pipeline_mode = #tpu.pipeline_mode<synchronous>, transform_indices = @transform_9, window_bounds = array<i64: 2, 2, 128>}]} {
    %c0_i32 = arith.constant 0 : i32
    %0 = arith.cmpi eq, %arg0, %c0_i32 : i32
    %1 = arith.extui %0 : i1 to i32
    %c0_i32_0 = arith.constant 0 : i32
    %2 = arith.cmpi ne, %1, %c0_i32_0 : i32
    scf.if %2 {
      %c0_278 = arith.constant 0 : index
      %c0_279 = arith.constant 0 : index
      %c0_280 = arith.constant 0 : index
      %516 = vector.load %arg3[%c0_278, %c0_279, %c0_280] : memref<2x2x128xf32, #tpu.memory_space<vmem>>, vector<1x2x128xf32>
      %517 = vector.shape_cast %516 : vector<1x2x128xf32> to vector<2x128xf32>
      %c0_281 = arith.constant 0 : index
      %c0_282 = arith.constant 0 : index
      %518 = vector.load %arg11[%c0_281, %c0_282] : memref<2x128xf32, #tpu.memory_space<vmem>>, vector<2x128xf32>
      tpu.vector_store %arg11[%c0_281, %c0_282], %517 {strides = array<i32>} : memref<2x128xf32, #tpu.memory_space<vmem>>, vector<2x128xf32>,
      %c0_283 = arith.constant 0 : index
      %c0_284 = arith.constant 0 : index
      %c0_285 = arith.constant 0 : index
      %519 = vector.load %arg4[%c0_283, %c0_284, %c0_285] : memref<2x2x128xf32, #tpu.memory_space<vmem>>, vector<1x2x128xf32>
      %520 = vector.shape_cast %519 : vector<1x2x128xf32> to vector<2x128xf32>
      %c0_286 = arith.constant 0 : index
      %c0_287 = arith.constant 0 : index
      %521 = vector.load %arg12[%c0_286, %c0_287] : memref<2x128xf32, #tpu.memory_space<vmem>>, vector<2x128xf32>
      tpu.vector_store %arg12[%c0_286, %c0_287], %520 {strides = array<i32>} : memref<2x128xf32, #tpu.memory_space<vmem>>, vector<2x128xf32>,
      %c1 = arith.constant 1 : index
      %c0_288 = arith.constant 0 : index
      %c0_289 = arith.constant 0 : index
      %522 = vector.load %arg3[%c1, %c0_288, %c0_289] : memref<2x2x128xf32, #tpu.memory_space<vmem>>, vector<1x2x128xf32>
      %523 = vector.shape_cast %522 : vector<1x2x128xf32> to vector<2x128xf32>
      %c0_290 = arith.constant 0 : index
      %c0_291 = arith.constant 0 : index
      %524 = vector.load %arg13[%c0_290, %c0_291] : memref<2x128xf32, #tpu.memory_space<vmem>>, vector<2x128xf32>
      tpu.vector_store %arg13[%c0_290, %c0_291], %523 {strides = array<i32>} : memref<2x128xf32, #tpu.memory_space<vmem>>, vector<2x128xf32>,
      %c1_292 = arith.constant 1 : index
      %c0_293 = arith.constant 0 : index
      %c0_294 = arith.constant 0 : index
      %525 = vector.load %arg4[%c1_292, %c0_293, %c0_294] : memref<2x2x128xf32, #tpu.memory_space<vmem>>, vector<1x2x128xf32>
      %526 = vector.shape_cast %525 : vector<1x2x128xf32> to vector<2x128xf32>
      %c0_295 = arith.constant 0 : index
      %c0_296 = arith.constant 0 : index
      %527 = vector.load %arg14[%c0_295, %c0_296] : memref<2x128xf32, #tpu.memory_space<vmem>>, vector<2x128xf32>
      tpu.vector_store %arg14[%c0_295, %c0_296], %526 {strides = array<i32>} : memref<2x128xf32, #tpu.memory_space<vmem>>, vector<2x128xf32>,
    } else {
    }
    %c0_i32_1 = arith.constant 0 : i32
    %c7_i32 = arith.constant 7 : i32
    %3 = arith.subi %c7_i32, %c0_i32_1 : i32
    %c0 = arith.constant 0 : index
    %c0_2 = arith.constant 0 : index
    %4 = vector.load %arg11[%c0, %c0_2] : memref<2x128xf32, #tpu.memory_space<vmem>>, vector<2x128xf32>
    %c0_3 = arith.constant 0 : index
    %c0_4 = arith.constant 0 : index
    %5 = vector.load %arg12[%c0_3, %c0_4] : memref<2x128xf32, #tpu.memory_space<vmem>>, vector<2x128xf32>
    %c0_5 = arith.constant 0 : index
    %c0_6 = arith.constant 0 : index
    %6 = vector.load %arg13[%c0_5, %c0_6] : memref<2x128xf32, #tpu.memory_space<vmem>>, vector<2x128xf32>
    %c0_7 = arith.constant 0 : index
    %c0_8 = arith.constant 0 : index
    %7 = vector.load %arg14[%c0_7, %c0_8] : memref<2x128xf32, #tpu.memory_space<vmem>>, vector<2x128xf32>
    %8 = arith.index_cast %c0_i32_1 : i32 to index
    %c0_9 = arith.constant 0 : index
    %c0_10 = arith.constant 0 : index
    %9 = vector.load %arg1[%8, %c0_9, %c0_10] : memref<8x2x512xbf16, #tpu.memory_space<vmem>>, vector<1x2x512xbf16>
    %10 = vector.shape_cast %9 : vector<1x2x512xbf16> to vector<2x512xbf16>
    %11 = arith.extf %10 : vector<2x512xbf16> to vector<2x512xf32>
    %c0_11 = arith.constant 0 : index
    %c0_12 = arith.constant 0 : index
    %12 = vector.load %arg5[%c0_11, %c0_12] : memref<128x512xf32, #tpu.memory_space<vmem>>, vector<128x512xf32>
    %cst = arith.constant dense<0.000000e+00> : vector<2x512xf32>
    %13 = tpu.matmul %4, %12, %cst {dimension_numbers = #tpu.dot_dimension_numbers<[1], [0], [0], [1], [0, 0, 1, 1], [], []>} : vector<2x128xf32>, vector<128x512xf32>, vector<2x512xf32> -> vector<2x512xf32>
    %14 = arith.addf %11, %13 : vector<2x512xf32>
    %15 = vector.extract_strided_slice %14 {offsets = [0, 0], sizes = [2, 384], strides = [1, 1]} : vector<2x512xf32> to vector<2x384xf32>
    %16 = arith.negf %15 : vector<2x384xf32>
    %17 = math.exp %16 : vector<2x384xf32>
    %cst_13 = arith.constant 1.000000e+00 : f32
    %18 = vector.broadcast %cst_13 : f32 to vector<2x384xf32>
    %19 = arith.addf %18, %17 : vector<2x384xf32>
    %20 = arith.divf %18, %19 : vector<2x384xf32>
    %21 = vector.extract_strided_slice %20 {offsets = [0, 0], sizes = [2, 128], strides = [1, 1]} : vector<2x384xf32> to vector<2x128xf32>
    %22 = vector.extract_strided_slice %20 {offsets = [0, 128], sizes = [2, 128], strides = [1, 1]} : vector<2x384xf32> to vector<2x128xf32>
    %23 = vector.extract_strided_slice %20 {offsets = [0, 256], sizes = [2, 128], strides = [1, 1]} : vector<2x384xf32> to vector<2x128xf32>
    %24 = vector.extract_strided_slice %14 {offsets = [0, 384], sizes = [2, 128], strides = [1, 1]} : vector<2x512xf32> to vector<2x128xf32>
    %25 = math.tanh %24 : vector<2x128xf32>
    %26 = arith.mulf %22, %5 : vector<2x128xf32>
    %27 = arith.mulf %21, %25 : vector<2x128xf32>
    %28 = arith.addf %26, %27 : vector<2x128xf32>
    %29 = math.tanh %28 : vector<2x128xf32>
    %30 = arith.mulf %23, %29 : vector<2x128xf32>
    %31 = arith.index_cast %3 : i32 to index
    %c0_14 = arith.constant 0 : index
    %c0_15 = arith.constant 0 : index
    %32 = vector.load %arg2[%31, %c0_14, %c0_15] : memref<8x2x512xbf16, #tpu.memory_space<vmem>>, vector<1x2x512xbf16>
    %33 = vector.shape_cast %32 : vector<1x2x512xbf16> to vector<2x512xbf16>
    %34 = arith.extf %33 : vector<2x512xbf16> to vector<2x512xf32>
    %c0_16 = arith.constant 0 : index
    %c0_17 = arith.constant 0 : index
    %35 = vector.load %arg6[%c0_16, %c0_17] : memref<128x512xf32, #tpu.memory_space<vmem>>, vector<128x512xf32>
    %cst_18 = arith.constant dense<0.000000e+00> : vector<2x512xf32>
    %36 = tpu.matmul %6, %35, %cst_18 {dimension_numbers = #tpu.dot_dimension_numbers<[1], [0], [0], [1], [0, 0, 1, 1], [], []>} : vector<2x128xf32>, vector<128x512xf32>, vector<2x512xf32> -> vector<2x512xf32>
    %37 = arith.addf %34, %36 : vector<2x512xf32>
    %38 = vector.extract_strided_slice %37 {offsets = [0, 0], sizes = [2, 384], strides = [1, 1]} : vector<2x512xf32> to vector<2x384xf32>
    %39 = arith.negf %38 : vector<2x384xf32>
    %40 = math.exp %39 : vector<2x384xf32>
    %cst_19 = arith.constant 1.000000e+00 : f32
    %41 = vector.broadcast %cst_19 : f32 to vector<2x384xf32>
    %42 = arith.addf %41, %40 : vector<2x384xf32>
    %43 = arith.divf %41, %42 : vector<2x384xf32>
    %44 = vector.extract_strided_slice %43 {offsets = [0, 0], sizes = [2, 128], strides = [1, 1]} : vector<2x384xf32> to vector<2x128xf32>
    %45 = vector.extract_strided_slice %43 {offsets = [0, 128], sizes = [2, 128], strides = [1, 1]} : vector<2x384xf32> to vector<2x128xf32>
    %46 = vector.extract_strided_slice %43 {offsets = [0, 256], sizes = [2, 128], strides = [1, 1]} : vector<2x384xf32> to vector<2x128xf32>
    %47 = vector.extract_strided_slice %37 {offsets = [0, 384], sizes = [2, 128], strides = [1, 1]} : vector<2x512xf32> to vector<2x128xf32>
    %48 = math.tanh %47 : vector<2x128xf32>
    %49 = arith.mulf %45, %7 : vector<2x128xf32>
    %50 = arith.mulf %44, %48 : vector<2x128xf32>
    %51 = arith.addf %49, %50 : vector<2x128xf32>
    %52 = math.tanh %51 : vector<2x128xf32>
    %53 = arith.mulf %46, %52 : vector<2x128xf32>
    %c0_20 = arith.constant 0 : index
    %c0_21 = arith.constant 0 : index
    %54 = vector.load %arg11[%c0_20, %c0_21] : memref<2x128xf32, #tpu.memory_space<vmem>>, vector<2x128xf32>
    tpu.vector_store %arg11[%c0_20, %c0_21], %30 {strides = array<i32>} : memref<2x128xf32, #tpu.memory_space<vmem>>, vector<2x128xf32>,
    %c0_22 = arith.constant 0 : index
    %c0_23 = arith.constant 0 : index
    %55 = vector.load %arg12[%c0_22, %c0_23] : memref<2x128xf32, #tpu.memory_space<vmem>>, vector<2x128xf32>
    tpu.vector_store %arg12[%c0_22, %c0_23], %28 {strides = array<i32>} : memref<2x128xf32, #tpu.memory_space<vmem>>, vector<2x128xf32>,
    %c0_24 = arith.constant 0 : index
    %c0_25 = arith.constant 0 : index
    %56 = vector.load %arg13[%c0_24, %c0_25] : memref<2x128xf32, #tpu.memory_space<vmem>>, vector<2x128xf32>
    tpu.vector_store %arg13[%c0_24, %c0_25], %53 {strides = array<i32>} : memref<2x128xf32, #tpu.memory_space<vmem>>, vector<2x128xf32>,
    %c0_26 = arith.constant 0 : index
    %c0_27 = arith.constant 0 : index
    %57 = vector.load %arg14[%c0_26, %c0_27] : memref<2x128xf32, #tpu.memory_space<vmem>>, vector<2x128xf32>
    tpu.vector_store %arg14[%c0_26, %c0_27], %51 {strides = array<i32>} : memref<2x128xf32, #tpu.memory_space<vmem>>, vector<2x128xf32>,
    %58 = arith.index_cast %c0_i32_1 : i32 to index
    %c0_28 = arith.constant 0 : index
    %c0_29 = arith.constant 0 : index
    %59 = vector.load %arg15[%58, %c0_28, %c0_29] : memref<8x2x128xf32, #tpu.memory_space<vmem>>, vector<1x2x128xf32>
    %60 = vector.shape_cast %59 : vector<1x2x128xf32> to vector<2x128xf32>
    %61 = vector.shape_cast %30 : vector<2x128xf32> to vector<1x2x128xf32>
    tpu.vector_store %arg15[%58, %c0_28, %c0_29], %61 {strides = array<i32>} : memref<8x2x128xf32, #tpu.memory_space<vmem>>, vector<1x2x128xf32>,
    %62 = arith.index_cast %3 : i32 to index
    %c0_30 = arith.constant 0 : index
    %c0_31 = arith.constant 0 : index
    %63 = vector.load %arg16[%62, %c0_30, %c0_31] : memref<8x2x128xf32, #tpu.memory_space<vmem>>, vector<1x2x128xf32>
    %64 = vector.shape_cast %63 : vector<1x2x128xf32> to vector<2x128xf32>
    %65 = vector.shape_cast %53 : vector<2x128xf32> to vector<1x2x128xf32>
    tpu.vector_store %arg16[%62, %c0_30, %c0_31], %65 {strides = array<i32>} : memref<8x2x128xf32, #tpu.memory_space<vmem>>, vector<1x2x128xf32>,
    %c1_i32 = arith.constant 1 : i32
    %c7_i32_32 = arith.constant 7 : i32
    %66 = arith.subi %c7_i32_32, %c1_i32 : i32
    %c0_33 = arith.constant 0 : index
    %c0_34 = arith.constant 0 : index
    %67 = vector.load %arg11[%c0_33, %c0_34] : memref<2x128xf32, #tpu.memory_space<vmem>>, vector<2x128xf32>
    %c0_35 = arith.constant 0 : index
    %c0_36 = arith.constant 0 : index
    %68 = vector.load %arg12[%c0_35, %c0_36] : memref<2x128xf32, #tpu.memory_space<vmem>>, vector<2x128xf32>
    %c0_37 = arith.constant 0 : index
    %c0_38 = arith.constant 0 : index
    %69 = vector.load %arg13[%c0_37, %c0_38] : memref<2x128xf32, #tpu.memory_space<vmem>>, vector<2x128xf32>
    %c0_39 = arith.constant 0 : index
    %c0_40 = arith.constant 0 : index
    %70 = vector.load %arg14[%c0_39, %c0_40] : memref<2x128xf32, #tpu.memory_space<vmem>>, vector<2x128xf32>
    %71 = arith.index_cast %c1_i32 : i32 to index
    %c0_41 = arith.constant 0 : index
    %c0_42 = arith.constant 0 : index
    %72 = vector.load %arg1[%71, %c0_41, %c0_42] : memref<8x2x512xbf16, #tpu.memory_space<vmem>>, vector<1x2x512xbf16>
    %73 = vector.shape_cast %72 : vector<1x2x512xbf16> to vector<2x512xbf16>
    %74 = arith.extf %73 : vector<2x512xbf16> to vector<2x512xf32>
    %c0_43 = arith.constant 0 : index
    %c0_44 = arith.constant 0 : index
    %75 = vector.load %arg5[%c0_43, %c0_44] : memref<128x512xf32, #tpu.memory_space<vmem>>, vector<128x512xf32>
    %cst_45 = arith.constant dense<0.000000e+00> : vector<2x512xf32>
    %76 = tpu.matmul %67, %75, %cst_45 {dimension_numbers = #tpu.dot_dimension_numbers<[1], [0], [0], [1], [0, 0, 1, 1], [], []>} : vector<2x128xf32>, vector<128x512xf32>, vector<2x512xf32> -> vector<2x512xf32>
    %77 = arith.addf %74, %76 : vector<2x512xf32>
    %78 = vector.extract_strided_slice %77 {offsets = [0, 0], sizes = [2, 384], strides = [1, 1]} : vector<2x512xf32> to vector<2x384xf32>
    %79 = arith.negf %78 : vector<2x384xf32>
    %80 = math.exp %79 : vector<2x384xf32>
    %cst_46 = arith.constant 1.000000e+00 : f32
    %81 = vector.broadcast %cst_46 : f32 to vector<2x384xf32>
    %82 = arith.addf %81, %80 : vector<2x384xf32>
    %83 = arith.divf %81, %82 : vector<2x384xf32>
    %84 = vector.extract_strided_slice %83 {offsets = [0, 0], sizes = [2, 128], strides = [1, 1]} : vector<2x384xf32> to vector<2x128xf32>
    %85 = vector.extract_strided_slice %83 {offsets = [0, 128], sizes = [2, 128], strides = [1, 1]} : vector<2x384xf32> to vector<2x128xf32>
    %86 = vector.extract_strided_slice %83 {offsets = [0, 256], sizes = [2, 128], strides = [1, 1]} : vector<2x384xf32> to vector<2x128xf32>
    %87 = vector.extract_strided_slice %77 {offsets = [0, 384], sizes = [2, 128], strides = [1, 1]} : vector<2x512xf32> to vector<2x128xf32>
    %88 = math.tanh %87 : vector<2x128xf32>
    %89 = arith.mulf %85, %68 : vector<2x128xf32>
    %90 = arith.mulf %84, %88 : vector<2x128xf32>
    %91 = arith.addf %89, %90 : vector<2x128xf32>
    %92 = math.tanh %91 : vector<2x128xf32>
    %93 = arith.mulf %86, %92 : vector<2x128xf32>
    %94 = arith.index_cast %66 : i32 to index
    %c0_47 = arith.constant 0 : index
    %c0_48 = arith.constant 0 : index
    %95 = vector.load %arg2[%94, %c0_47, %c0_48] : memref<8x2x512xbf16, #tpu.memory_space<vmem>>, vector<1x2x512xbf16>
    %96 = vector.shape_cast %95 : vector<1x2x512xbf16> to vector<2x512xbf16>
    %97 = arith.extf %96 : vector<2x512xbf16> to vector<2x512xf32>
    %c0_49 = arith.constant 0 : index
    %c0_50 = arith.constant 0 : index
    %98 = vector.load %arg6[%c0_49, %c0_50] : memref<128x512xf32, #tpu.memory_space<vmem>>, vector<128x512xf32>
    %cst_51 = arith.constant dense<0.000000e+00> : vector<2x512xf32>
    %99 = tpu.matmul %69, %98, %cst_51 {dimension_numbers = #tpu.dot_dimension_numbers<[1], [0], [0], [1], [0, 0, 1, 1], [], []>} : vector<2x128xf32>, vector<128x512xf32>, vector<2x512xf32> -> vector<2x512xf32>
    %100 = arith.addf %97, %99 : vector<2x512xf32>
    %101 = vector.extract_strided_slice %100 {offsets = [0, 0], sizes = [2, 384], strides = [1, 1]} : vector<2x512xf32> to vector<2x384xf32>
    %102 = arith.negf %101 : vector<2x384xf32>
    %103 = math.exp %102 : vector<2x384xf32>
    %cst_52 = arith.constant 1.000000e+00 : f32
    %104 = vector.broadcast %cst_52 : f32 to vector<2x384xf32>
    %105 = arith.addf %104, %103 : vector<2x384xf32>
    %106 = arith.divf %104, %105 : vector<2x384xf32>
    %107 = vector.extract_strided_slice %106 {offsets = [0, 0], sizes = [2, 128], strides = [1, 1]} : vector<2x384xf32> to vector<2x128xf32>
    %108 = vector.extract_strided_slice %106 {offsets = [0, 128], sizes = [2, 128], strides = [1, 1]} : vector<2x384xf32> to vector<2x128xf32>
    %109 = vector.extract_strided_slice %106 {offsets = [0, 256], sizes = [2, 128], strides = [1, 1]} : vector<2x384xf32> to vector<2x128xf32>
    %110 = vector.extract_strided_slice %100 {offsets = [0, 384], sizes = [2, 128], strides = [1, 1]} : vector<2x512xf32> to vector<2x128xf32>
    %111 = math.tanh %110 : vector<2x128xf32>
    %112 = arith.mulf %108, %70 : vector<2x128xf32>
    %113 = arith.mulf %107, %111 : vector<2x128xf32>
    %114 = arith.addf %112, %113 : vector<2x128xf32>
    %115 = math.tanh %114 : vector<2x128xf32>
    %116 = arith.mulf %109, %115 : vector<2x128xf32>
    %c0_53 = arith.constant 0 : index
    %c0_54 = arith.constant 0 : index
    %117 = vector.load %arg11[%c0_53, %c0_54] : memref<2x128xf32, #tpu.memory_space<vmem>>, vector<2x128xf32>
    tpu.vector_store %arg11[%c0_53, %c0_54], %93 {strides = array<i32>} : memref<2x128xf32, #tpu.memory_space<vmem>>, vector<2x128xf32>,
    %c0_55 = arith.constant 0 : index
    %c0_56 = arith.constant 0 : index
    %118 = vector.load %arg12[%c0_55, %c0_56] : memref<2x128xf32, #tpu.memory_space<vmem>>, vector<2x128xf32>
    tpu.vector_store %arg12[%c0_55, %c0_56], %91 {strides = array<i32>} : memref<2x128xf32, #tpu.memory_space<vmem>>, vector<2x128xf32>,
    %c0_57 = arith.constant 0 : index
    %c0_58 = arith.constant 0 : index
    %119 = vector.load %arg13[%c0_57, %c0_58] : memref<2x128xf32, #tpu.memory_space<vmem>>, vector<2x128xf32>
    tpu.vector_store %arg13[%c0_57, %c0_58], %116 {strides = array<i32>} : memref<2x128xf32, #tpu.memory_space<vmem>>, vector<2x128xf32>,
    %c0_59 = arith.constant 0 : index
    %c0_60 = arith.constant 0 : index
    %120 = vector.load %arg14[%c0_59, %c0_60] : memref<2x128xf32, #tpu.memory_space<vmem>>, vector<2x128xf32>
    tpu.vector_store %arg14[%c0_59, %c0_60], %114 {strides = array<i32>} : memref<2x128xf32, #tpu.memory_space<vmem>>, vector<2x128xf32>,
    %121 = arith.index_cast %c1_i32 : i32 to index
    %c0_61 = arith.constant 0 : index
    %c0_62 = arith.constant 0 : index
    %122 = vector.load %arg15[%121, %c0_61, %c0_62] : memref<8x2x128xf32, #tpu.memory_space<vmem>>, vector<1x2x128xf32>
    %123 = vector.shape_cast %122 : vector<1x2x128xf32> to vector<2x128xf32>
    %124 = vector.shape_cast %93 : vector<2x128xf32> to vector<1x2x128xf32>
    tpu.vector_store %arg15[%121, %c0_61, %c0_62], %124 {strides = array<i32>} : memref<8x2x128xf32, #tpu.memory_space<vmem>>, vector<1x2x128xf32>,
    %125 = arith.index_cast %66 : i32 to index
    %c0_63 = arith.constant 0 : index
    %c0_64 = arith.constant 0 : index
    %126 = vector.load %arg16[%125, %c0_63, %c0_64] : memref<8x2x128xf32, #tpu.memory_space<vmem>>, vector<1x2x128xf32>
    %127 = vector.shape_cast %126 : vector<1x2x128xf32> to vector<2x128xf32>
    %128 = vector.shape_cast %116 : vector<2x128xf32> to vector<1x2x128xf32>
    tpu.vector_store %arg16[%125, %c0_63, %c0_64], %128 {strides = array<i32>} : memref<8x2x128xf32, #tpu.memory_space<vmem>>, vector<1x2x128xf32>,
    %c2_i32 = arith.constant 2 : i32
    %c7_i32_65 = arith.constant 7 : i32
    %129 = arith.subi %c7_i32_65, %c2_i32 : i32
    %c0_66 = arith.constant 0 : index
    %c0_67 = arith.constant 0 : index
    %130 = vector.load %arg11[%c0_66, %c0_67] : memref<2x128xf32, #tpu.memory_space<vmem>>, vector<2x128xf32>
    %c0_68 = arith.constant 0 : index
    %c0_69 = arith.constant 0 : index
    %131 = vector.load %arg12[%c0_68, %c0_69] : memref<2x128xf32, #tpu.memory_space<vmem>>, vector<2x128xf32>
    %c0_70 = arith.constant 0 : index
    %c0_71 = arith.constant 0 : index
    %132 = vector.load %arg13[%c0_70, %c0_71] : memref<2x128xf32, #tpu.memory_space<vmem>>, vector<2x128xf32>
    %c0_72 = arith.constant 0 : index
    %c0_73 = arith.constant 0 : index
    %133 = vector.load %arg14[%c0_72, %c0_73] : memref<2x128xf32, #tpu.memory_space<vmem>>, vector<2x128xf32>
    %134 = arith.index_cast %c2_i32 : i32 to index
    %c0_74 = arith.constant 0 : index
    %c0_75 = arith.constant 0 : index
    %135 = vector.load %arg1[%134, %c0_74, %c0_75] : memref<8x2x512xbf16, #tpu.memory_space<vmem>>, vector<1x2x512xbf16>
    %136 = vector.shape_cast %135 : vector<1x2x512xbf16> to vector<2x512xbf16>
    %137 = arith.extf %136 : vector<2x512xbf16> to vector<2x512xf32>
    %c0_76 = arith.constant 0 : index
    %c0_77 = arith.constant 0 : index
    %138 = vector.load %arg5[%c0_76, %c0_77] : memref<128x512xf32, #tpu.memory_space<vmem>>, vector<128x512xf32>
    %cst_78 = arith.constant dense<0.000000e+00> : vector<2x512xf32>
    %139 = tpu.matmul %130, %138, %cst_78 {dimension_numbers = #tpu.dot_dimension_numbers<[1], [0], [0], [1], [0, 0, 1, 1], [], []>} : vector<2x128xf32>, vector<128x512xf32>, vector<2x512xf32> -> vector<2x512xf32>
    %140 = arith.addf %137, %139 : vector<2x512xf32>
    %141 = vector.extract_strided_slice %140 {offsets = [0, 0], sizes = [2, 384], strides = [1, 1]} : vector<2x512xf32> to vector<2x384xf32>
    %142 = arith.negf %141 : vector<2x384xf32>
    %143 = math.exp %142 : vector<2x384xf32>
    %cst_79 = arith.constant 1.000000e+00 : f32
    %144 = vector.broadcast %cst_79 : f32 to vector<2x384xf32>
    %145 = arith.addf %144, %143 : vector<2x384xf32>
    %146 = arith.divf %144, %145 : vector<2x384xf32>
    %147 = vector.extract_strided_slice %146 {offsets = [0, 0], sizes = [2, 128], strides = [1, 1]} : vector<2x384xf32> to vector<2x128xf32>
    %148 = vector.extract_strided_slice %146 {offsets = [0, 128], sizes = [2, 128], strides = [1, 1]} : vector<2x384xf32> to vector<2x128xf32>
    %149 = vector.extract_strided_slice %146 {offsets = [0, 256], sizes = [2, 128], strides = [1, 1]} : vector<2x384xf32> to vector<2x128xf32>
    %150 = vector.extract_strided_slice %140 {offsets = [0, 384], sizes = [2, 128], strides = [1, 1]} : vector<2x512xf32> to vector<2x128xf32>
    %151 = math.tanh %150 : vector<2x128xf32>
    %152 = arith.mulf %148, %131 : vector<2x128xf32>
    %153 = arith.mulf %147, %151 : vector<2x128xf32>
    %154 = arith.addf %152, %153 : vector<2x128xf32>
    %155 = math.tanh %154 : vector<2x128xf32>
    %156 = arith.mulf %149, %155 : vector<2x128xf32>
    %157 = arith.index_cast %129 : i32 to index
    %c0_80 = arith.constant 0 : index
    %c0_81 = arith.constant 0 : index
    %158 = vector.load %arg2[%157, %c0_80, %c0_81] : memref<8x2x512xbf16, #tpu.memory_space<vmem>>, vector<1x2x512xbf16>
    %159 = vector.shape_cast %158 : vector<1x2x512xbf16> to vector<2x512xbf16>
    %160 = arith.extf %159 : vector<2x512xbf16> to vector<2x512xf32>
    %c0_82 = arith.constant 0 : index
    %c0_83 = arith.constant 0 : index
    %161 = vector.load %arg6[%c0_82, %c0_83] : memref<128x512xf32, #tpu.memory_space<vmem>>, vector<128x512xf32>
    %cst_84 = arith.constant dense<0.000000e+00> : vector<2x512xf32>
    %162 = tpu.matmul %132, %161, %cst_84 {dimension_numbers = #tpu.dot_dimension_numbers<[1], [0], [0], [1], [0, 0, 1, 1], [], []>} : vector<2x128xf32>, vector<128x512xf32>, vector<2x512xf32> -> vector<2x512xf32>
    %163 = arith.addf %160, %162 : vector<2x512xf32>
    %164 = vector.extract_strided_slice %163 {offsets = [0, 0], sizes = [2, 384], strides = [1, 1]} : vector<2x512xf32> to vector<2x384xf32>
    %165 = arith.negf %164 : vector<2x384xf32>
    %166 = math.exp %165 : vector<2x384xf32>
    %cst_85 = arith.constant 1.000000e+00 : f32
    %167 = vector.broadcast %cst_85 : f32 to vector<2x384xf32>
    %168 = arith.addf %167, %166 : vector<2x384xf32>
    %169 = arith.divf %167, %168 : vector<2x384xf32>
    %170 = vector.extract_strided_slice %169 {offsets = [0, 0], sizes = [2, 128], strides = [1, 1]} : vector<2x384xf32> to vector<2x128xf32>
    %171 = vector.extract_strided_slice %169 {offsets = [0, 128], sizes = [2, 128], strides = [1, 1]} : vector<2x384xf32> to vector<2x128xf32>
    %172 = vector.extract_strided_slice %169 {offsets = [0, 256], sizes = [2, 128], strides = [1, 1]} : vector<2x384xf32> to vector<2x128xf32>
    %173 = vector.extract_strided_slice %163 {offsets = [0, 384], sizes = [2, 128], strides = [1, 1]} : vector<2x512xf32> to vector<2x128xf32>
    %174 = math.tanh %173 : vector<2x128xf32>
    %175 = arith.mulf %171, %133 : vector<2x128xf32>
    %176 = arith.mulf %170, %174 : vector<2x128xf32>
    %177 = arith.addf %175, %176 : vector<2x128xf32>
    %178 = math.tanh %177 : vector<2x128xf32>
    %179 = arith.mulf %172, %178 : vector<2x128xf32>
    %c0_86 = arith.constant 0 : index
    %c0_87 = arith.constant 0 : index
    %180 = vector.load %arg11[%c0_86, %c0_87] : memref<2x128xf32, #tpu.memory_space<vmem>>, vector<2x128xf32>
    tpu.vector_store %arg11[%c0_86, %c0_87], %156 {strides = array<i32>} : memref<2x128xf32, #tpu.memory_space<vmem>>, vector<2x128xf32>,
    %c0_88 = arith.constant 0 : index
    %c0_89 = arith.constant 0 : index
    %181 = vector.load %arg12[%c0_88, %c0_89] : memref<2x128xf32, #tpu.memory_space<vmem>>, vector<2x128xf32>
    tpu.vector_store %arg12[%c0_88, %c0_89], %154 {strides = array<i32>} : memref<2x128xf32, #tpu.memory_space<vmem>>, vector<2x128xf32>,
    %c0_90 = arith.constant 0 : index
    %c0_91 = arith.constant 0 : index
    %182 = vector.load %arg13[%c0_90, %c0_91] : memref<2x128xf32, #tpu.memory_space<vmem>>, vector<2x128xf32>
    tpu.vector_store %arg13[%c0_90, %c0_91], %179 {strides = array<i32>} : memref<2x128xf32, #tpu.memory_space<vmem>>, vector<2x128xf32>,
    %c0_92 = arith.constant 0 : index
    %c0_93 = arith.constant 0 : index
    %183 = vector.load %arg14[%c0_92, %c0_93] : memref<2x128xf32, #tpu.memory_space<vmem>>, vector<2x128xf32>
    tpu.vector_store %arg14[%c0_92, %c0_93], %177 {strides = array<i32>} : memref<2x128xf32, #tpu.memory_space<vmem>>, vector<2x128xf32>,
    %184 = arith.index_cast %c2_i32 : i32 to index
    %c0_94 = arith.constant 0 : index
    %c0_95 = arith.constant 0 : index
    %185 = vector.load %arg15[%184, %c0_94, %c0_95] : memref<8x2x128xf32, #tpu.memory_space<vmem>>, vector<1x2x128xf32>
    %186 = vector.shape_cast %185 : vector<1x2x128xf32> to vector<2x128xf32>
    %187 = vector.shape_cast %156 : vector<2x128xf32> to vector<1x2x128xf32>
    tpu.vector_store %arg15[%184, %c0_94, %c0_95], %187 {strides = array<i32>} : memref<8x2x128xf32, #tpu.memory_space<vmem>>, vector<1x2x128xf32>,
    %188 = arith.index_cast %129 : i32 to index
    %c0_96 = arith.constant 0 : index
    %c0_97 = arith.constant 0 : index
    %189 = vector.load %arg16[%188, %c0_96, %c0_97] : memref<8x2x128xf32, #tpu.memory_space<vmem>>, vector<1x2x128xf32>
    %190 = vector.shape_cast %189 : vector<1x2x128xf32> to vector<2x128xf32>
    %191 = vector.shape_cast %179 : vector<2x128xf32> to vector<1x2x128xf32>
    tpu.vector_store %arg16[%188, %c0_96, %c0_97], %191 {strides = array<i32>} : memref<8x2x128xf32, #tpu.memory_space<vmem>>, vector<1x2x128xf32>,
    %c3_i32 = arith.constant 3 : i32
    %c7_i32_98 = arith.constant 7 : i32
    %192 = arith.subi %c7_i32_98, %c3_i32 : i32
    %c0_99 = arith.constant 0 : index
    %c0_100 = arith.constant 0 : index
    %193 = vector.load %arg11[%c0_99, %c0_100] : memref<2x128xf32, #tpu.memory_space<vmem>>, vector<2x128xf32>
    %c0_101 = arith.constant 0 : index
    %c0_102 = arith.constant 0 : index
    %194 = vector.load %arg12[%c0_101, %c0_102] : memref<2x128xf32, #tpu.memory_space<vmem>>, vector<2x128xf32>
    %c0_103 = arith.constant 0 : index
    %c0_104 = arith.constant 0 : index
    %195 = vector.load %arg13[%c0_103, %c0_104] : memref<2x128xf32, #tpu.memory_space<vmem>>, vector<2x128xf32>
    %c0_105 = arith.constant 0 : index
    %c0_106 = arith.constant 0 : index
    %196 = vector.load %arg14[%c0_105, %c0_106] : memref<2x128xf32, #tpu.memory_space<vmem>>, vector<2x128xf32>
    %197 = arith.index_cast %c3_i32 : i32 to index
    %c0_107 = arith.constant 0 : index
    %c0_108 = arith.constant 0 : index
    %198 = vector.load %arg1[%197, %c0_107, %c0_108] : memref<8x2x512xbf16, #tpu.memory_space<vmem>>, vector<1x2x512xbf16>
    %199 = vector.shape_cast %198 : vector<1x2x512xbf16> to vector<2x512xbf16>
    %200 = arith.extf %199 : vector<2x512xbf16> to vector<2x512xf32>
    %c0_109 = arith.constant 0 : index
    %c0_110 = arith.constant 0 : index
    %201 = vector.load %arg5[%c0_109, %c0_110] : memref<128x512xf32, #tpu.memory_space<vmem>>, vector<128x512xf32>
    %cst_111 = arith.constant dense<0.000000e+00> : vector<2x512xf32>
    %202 = tpu.matmul %193, %201, %cst_111 {dimension_numbers = #tpu.dot_dimension_numbers<[1], [0], [0], [1], [0, 0, 1, 1], [], []>} : vector<2x128xf32>, vector<128x512xf32>, vector<2x512xf32> -> vector<2x512xf32>
    %203 = arith.addf %200, %202 : vector<2x512xf32>
    %204 = vector.extract_strided_slice %203 {offsets = [0, 0], sizes = [2, 384], strides = [1, 1]} : vector<2x512xf32> to vector<2x384xf32>
    %205 = arith.negf %204 : vector<2x384xf32>
    %206 = math.exp %205 : vector<2x384xf32>
    %cst_112 = arith.constant 1.000000e+00 : f32
    %207 = vector.broadcast %cst_112 : f32 to vector<2x384xf32>
    %208 = arith.addf %207, %206 : vector<2x384xf32>
    %209 = arith.divf %207, %208 : vector<2x384xf32>
    %210 = vector.extract_strided_slice %209 {offsets = [0, 0], sizes = [2, 128], strides = [1, 1]} : vector<2x384xf32> to vector<2x128xf32>
    %211 = vector.extract_strided_slice %209 {offsets = [0, 128], sizes = [2, 128], strides = [1, 1]} : vector<2x384xf32> to vector<2x128xf32>
    %212 = vector.extract_strided_slice %209 {offsets = [0, 256], sizes = [2, 128], strides = [1, 1]} : vector<2x384xf32> to vector<2x128xf32>
    %213 = vector.extract_strided_slice %203 {offsets = [0, 384], sizes = [2, 128], strides = [1, 1]} : vector<2x512xf32> to vector<2x128xf32>
    %214 = math.tanh %213 : vector<2x128xf32>
    %215 = arith.mulf %211, %194 : vector<2x128xf32>
    %216 = arith.mulf %210, %214 : vector<2x128xf32>
    %217 = arith.addf %215, %216 : vector<2x128xf32>
    %218 = math.tanh %217 : vector<2x128xf32>
    %219 = arith.mulf %212, %218 : vector<2x128xf32>
    %220 = arith.index_cast %192 : i32 to index
    %c0_113 = arith.constant 0 : index
    %c0_114 = arith.constant 0 : index
    %221 = vector.load %arg2[%220, %c0_113, %c0_114] : memref<8x2x512xbf16, #tpu.memory_space<vmem>>, vector<1x2x512xbf16>
    %222 = vector.shape_cast %221 : vector<1x2x512xbf16> to vector<2x512xbf16>
    %223 = arith.extf %222 : vector<2x512xbf16> to vector<2x512xf32>
    %c0_115 = arith.constant 0 : index
    %c0_116 = arith.constant 0 : index
    %224 = vector.load %arg6[%c0_115, %c0_116] : memref<128x512xf32, #tpu.memory_space<vmem>>, vector<128x512xf32>
    %cst_117 = arith.constant dense<0.000000e+00> : vector<2x512xf32>
    %225 = tpu.matmul %195, %224, %cst_117 {dimension_numbers = #tpu.dot_dimension_numbers<[1], [0], [0], [1], [0, 0, 1, 1], [], []>} : vector<2x128xf32>, vector<128x512xf32>, vector<2x512xf32> -> vector<2x512xf32>
    %226 = arith.addf %223, %225 : vector<2x512xf32>
    %227 = vector.extract_strided_slice %226 {offsets = [0, 0], sizes = [2, 384], strides = [1, 1]} : vector<2x512xf32> to vector<2x384xf32>
    %228 = arith.negf %227 : vector<2x384xf32>
    %229 = math.exp %228 : vector<2x384xf32>
    %cst_118 = arith.constant 1.000000e+00 : f32
    %230 = vector.broadcast %cst_118 : f32 to vector<2x384xf32>
    %231 = arith.addf %230, %229 : vector<2x384xf32>
    %232 = arith.divf %230, %231 : vector<2x384xf32>
    %233 = vector.extract_strided_slice %232 {offsets = [0, 0], sizes = [2, 128], strides = [1, 1]} : vector<2x384xf32> to vector<2x128xf32>
    %234 = vector.extract_strided_slice %232 {offsets = [0, 128], sizes = [2, 128], strides = [1, 1]} : vector<2x384xf32> to vector<2x128xf32>
    %235 = vector.extract_strided_slice %232 {offsets = [0, 256], sizes = [2, 128], strides = [1, 1]} : vector<2x384xf32> to vector<2x128xf32>
    %236 = vector.extract_strided_slice %226 {offsets = [0, 384], sizes = [2, 128], strides = [1, 1]} : vector<2x512xf32> to vector<2x128xf32>
    %237 = math.tanh %236 : vector<2x128xf32>
    %238 = arith.mulf %234, %196 : vector<2x128xf32>
    %239 = arith.mulf %233, %237 : vector<2x128xf32>
    %240 = arith.addf %238, %239 : vector<2x128xf32>
    %241 = math.tanh %240 : vector<2x128xf32>
    %242 = arith.mulf %235, %241 : vector<2x128xf32>
    %c0_119 = arith.constant 0 : index
    %c0_120 = arith.constant 0 : index
    %243 = vector.load %arg11[%c0_119, %c0_120] : memref<2x128xf32, #tpu.memory_space<vmem>>, vector<2x128xf32>
    tpu.vector_store %arg11[%c0_119, %c0_120], %219 {strides = array<i32>} : memref<2x128xf32, #tpu.memory_space<vmem>>, vector<2x128xf32>,
    %c0_121 = arith.constant 0 : index
    %c0_122 = arith.constant 0 : index
    %244 = vector.load %arg12[%c0_121, %c0_122] : memref<2x128xf32, #tpu.memory_space<vmem>>, vector<2x128xf32>
    tpu.vector_store %arg12[%c0_121, %c0_122], %217 {strides = array<i32>} : memref<2x128xf32, #tpu.memory_space<vmem>>, vector<2x128xf32>,
    %c0_123 = arith.constant 0 : index
    %c0_124 = arith.constant 0 : index
    %245 = vector.load %arg13[%c0_123, %c0_124] : memref<2x128xf32, #tpu.memory_space<vmem>>, vector<2x128xf32>
    tpu.vector_store %arg13[%c0_123, %c0_124], %242 {strides = array<i32>} : memref<2x128xf32, #tpu.memory_space<vmem>>, vector<2x128xf32>,
    %c0_125 = arith.constant 0 : index
    %c0_126 = arith.constant 0 : index
    %246 = vector.load %arg14[%c0_125, %c0_126] : memref<2x128xf32, #tpu.memory_space<vmem>>, vector<2x128xf32>
    tpu.vector_store %arg14[%c0_125, %c0_126], %240 {strides = array<i32>} : memref<2x128xf32, #tpu.memory_space<vmem>>, vector<2x128xf32>,
    %247 = arith.index_cast %c3_i32 : i32 to index
    %c0_127 = arith.constant 0 : index
    %c0_128 = arith.constant 0 : index
    %248 = vector.load %arg15[%247, %c0_127, %c0_128] : memref<8x2x128xf32, #tpu.memory_space<vmem>>, vector<1x2x128xf32>
    %249 = vector.shape_cast %248 : vector<1x2x128xf32> to vector<2x128xf32>
    %250 = vector.shape_cast %219 : vector<2x128xf32> to vector<1x2x128xf32>
    tpu.vector_store %arg15[%247, %c0_127, %c0_128], %250 {strides = array<i32>} : memref<8x2x128xf32, #tpu.memory_space<vmem>>, vector<1x2x128xf32>,
    %251 = arith.index_cast %192 : i32 to index
    %c0_129 = arith.constant 0 : index
    %c0_130 = arith.constant 0 : index
    %252 = vector.load %arg16[%251, %c0_129, %c0_130] : memref<8x2x128xf32, #tpu.memory_space<vmem>>, vector<1x2x128xf32>
    %253 = vector.shape_cast %252 : vector<1x2x128xf32> to vector<2x128xf32>
    %254 = vector.shape_cast %242 : vector<2x128xf32> to vector<1x2x128xf32>
    tpu.vector_store %arg16[%251, %c0_129, %c0_130], %254 {strides = array<i32>} : memref<8x2x128xf32, #tpu.memory_space<vmem>>, vector<1x2x128xf32>,
    %c4_i32 = arith.constant 4 : i32
    %c7_i32_131 = arith.constant 7 : i32
    %255 = arith.subi %c7_i32_131, %c4_i32 : i32
    %c0_132 = arith.constant 0 : index
    %c0_133 = arith.constant 0 : index
    %256 = vector.load %arg11[%c0_132, %c0_133] : memref<2x128xf32, #tpu.memory_space<vmem>>, vector<2x128xf32>
    %c0_134 = arith.constant 0 : index
    %c0_135 = arith.constant 0 : index
    %257 = vector.load %arg12[%c0_134, %c0_135] : memref<2x128xf32, #tpu.memory_space<vmem>>, vector<2x128xf32>
    %c0_136 = arith.constant 0 : index
    %c0_137 = arith.constant 0 : index
    %258 = vector.load %arg13[%c0_136, %c0_137] : memref<2x128xf32, #tpu.memory_space<vmem>>, vector<2x128xf32>
    %c0_138 = arith.constant 0 : index
    %c0_139 = arith.constant 0 : index
    %259 = vector.load %arg14[%c0_138, %c0_139] : memref<2x128xf32, #tpu.memory_space<vmem>>, vector<2x128xf32>
    %260 = arith.index_cast %c4_i32 : i32 to index
    %c0_140 = arith.constant 0 : index
    %c0_141 = arith.constant 0 : index
    %261 = vector.load %arg1[%260, %c0_140, %c0_141] : memref<8x2x512xbf16, #tpu.memory_space<vmem>>, vector<1x2x512xbf16>
    %262 = vector.shape_cast %261 : vector<1x2x512xbf16> to vector<2x512xbf16>
    %263 = arith.extf %262 : vector<2x512xbf16> to vector<2x512xf32>
    %c0_142 = arith.constant 0 : index
    %c0_143 = arith.constant 0 : index
    %264 = vector.load %arg5[%c0_142, %c0_143] : memref<128x512xf32, #tpu.memory_space<vmem>>, vector<128x512xf32>
    %cst_144 = arith.constant dense<0.000000e+00> : vector<2x512xf32>
    %265 = tpu.matmul %256, %264, %cst_144 {dimension_numbers = #tpu.dot_dimension_numbers<[1], [0], [0], [1], [0, 0, 1, 1], [], []>} : vector<2x128xf32>, vector<128x512xf32>, vector<2x512xf32> -> vector<2x512xf32>
    %266 = arith.addf %263, %265 : vector<2x512xf32>
    %267 = vector.extract_strided_slice %266 {offsets = [0, 0], sizes = [2, 384], strides = [1, 1]} : vector<2x512xf32> to vector<2x384xf32>
    %268 = arith.negf %267 : vector<2x384xf32>
    %269 = math.exp %268 : vector<2x384xf32>
    %cst_145 = arith.constant 1.000000e+00 : f32
    %270 = vector.broadcast %cst_145 : f32 to vector<2x384xf32>
    %271 = arith.addf %270, %269 : vector<2x384xf32>
    %272 = arith.divf %270, %271 : vector<2x384xf32>
    %273 = vector.extract_strided_slice %272 {offsets = [0, 0], sizes = [2, 128], strides = [1, 1]} : vector<2x384xf32> to vector<2x128xf32>
    %274 = vector.extract_strided_slice %272 {offsets = [0, 128], sizes = [2, 128], strides = [1, 1]} : vector<2x384xf32> to vector<2x128xf32>
    %275 = vector.extract_strided_slice %272 {offsets = [0, 256], sizes = [2, 128], strides = [1, 1]} : vector<2x384xf32> to vector<2x128xf32>
    %276 = vector.extract_strided_slice %266 {offsets = [0, 384], sizes = [2, 128], strides = [1, 1]} : vector<2x512xf32> to vector<2x128xf32>
    %277 = math.tanh %276 : vector<2x128xf32>
    %278 = arith.mulf %274, %257 : vector<2x128xf32>
    %279 = arith.mulf %273, %277 : vector<2x128xf32>
    %280 = arith.addf %278, %279 : vector<2x128xf32>
    %281 = math.tanh %280 : vector<2x128xf32>
    %282 = arith.mulf %275, %281 : vector<2x128xf32>
    %283 = arith.index_cast %255 : i32 to index
    %c0_146 = arith.constant 0 : index
    %c0_147 = arith.constant 0 : index
    %284 = vector.load %arg2[%283, %c0_146, %c0_147] : memref<8x2x512xbf16, #tpu.memory_space<vmem>>, vector<1x2x512xbf16>
    %285 = vector.shape_cast %284 : vector<1x2x512xbf16> to vector<2x512xbf16>
    %286 = arith.extf %285 : vector<2x512xbf16> to vector<2x512xf32>
    %c0_148 = arith.constant 0 : index
    %c0_149 = arith.constant 0 : index
    %287 = vector.load %arg6[%c0_148, %c0_149] : memref<128x512xf32, #tpu.memory_space<vmem>>, vector<128x512xf32>
    %cst_150 = arith.constant dense<0.000000e+00> : vector<2x512xf32>
    %288 = tpu.matmul %258, %287, %cst_150 {dimension_numbers = #tpu.dot_dimension_numbers<[1], [0], [0], [1], [0, 0, 1, 1], [], []>} : vector<2x128xf32>, vector<128x512xf32>, vector<2x512xf32> -> vector<2x512xf32>
    %289 = arith.addf %286, %288 : vector<2x512xf32>
    %290 = vector.extract_strided_slice %289 {offsets = [0, 0], sizes = [2, 384], strides = [1, 1]} : vector<2x512xf32> to vector<2x384xf32>
    %291 = arith.negf %290 : vector<2x384xf32>
    %292 = math.exp %291 : vector<2x384xf32>
    %cst_151 = arith.constant 1.000000e+00 : f32
    %293 = vector.broadcast %cst_151 : f32 to vector<2x384xf32>
    %294 = arith.addf %293, %292 : vector<2x384xf32>
    %295 = arith.divf %293, %294 : vector<2x384xf32>
    %296 = vector.extract_strided_slice %295 {offsets = [0, 0], sizes = [2, 128], strides = [1, 1]} : vector<2x384xf32> to vector<2x128xf32>
    %297 = vector.extract_strided_slice %295 {offsets = [0, 128], sizes = [2, 128], strides = [1, 1]} : vector<2x384xf32> to vector<2x128xf32>
    %298 = vector.extract_strided_slice %295 {offsets = [0, 256], sizes = [2, 128], strides = [1, 1]} : vector<2x384xf32> to vector<2x128xf32>
    %299 = vector.extract_strided_slice %289 {offsets = [0, 384], sizes = [2, 128], strides = [1, 1]} : vector<2x512xf32> to vector<2x128xf32>
    %300 = math.tanh %299 : vector<2x128xf32>
    %301 = arith.mulf %297, %259 : vector<2x128xf32>
    %302 = arith.mulf %296, %300 : vector<2x128xf32>
    %303 = arith.addf %301, %302 : vector<2x128xf32>
    %304 = math.tanh %303 : vector<2x128xf32>
    %305 = arith.mulf %298, %304 : vector<2x128xf32>
    %c0_152 = arith.constant 0 : index
    %c0_153 = arith.constant 0 : index
    %306 = vector.load %arg11[%c0_152, %c0_153] : memref<2x128xf32, #tpu.memory_space<vmem>>, vector<2x128xf32>
    tpu.vector_store %arg11[%c0_152, %c0_153], %282 {strides = array<i32>} : memref<2x128xf32, #tpu.memory_space<vmem>>, vector<2x128xf32>,
    %c0_154 = arith.constant 0 : index
    %c0_155 = arith.constant 0 : index
    %307 = vector.load %arg12[%c0_154, %c0_155] : memref<2x128xf32, #tpu.memory_space<vmem>>, vector<2x128xf32>
    tpu.vector_store %arg12[%c0_154, %c0_155], %280 {strides = array<i32>} : memref<2x128xf32, #tpu.memory_space<vmem>>, vector<2x128xf32>,
    %c0_156 = arith.constant 0 : index
    %c0_157 = arith.constant 0 : index
    %308 = vector.load %arg13[%c0_156, %c0_157] : memref<2x128xf32, #tpu.memory_space<vmem>>, vector<2x128xf32>
    tpu.vector_store %arg13[%c0_156, %c0_157], %305 {strides = array<i32>} : memref<2x128xf32, #tpu.memory_space<vmem>>, vector<2x128xf32>,
    %c0_158 = arith.constant 0 : index
    %c0_159 = arith.constant 0 : index
    %309 = vector.load %arg14[%c0_158, %c0_159] : memref<2x128xf32, #tpu.memory_space<vmem>>, vector<2x128xf32>
    tpu.vector_store %arg14[%c0_158, %c0_159], %303 {strides = array<i32>} : memref<2x128xf32, #tpu.memory_space<vmem>>, vector<2x128xf32>,
    %310 = arith.index_cast %c4_i32 : i32 to index
    %c0_160 = arith.constant 0 : index
    %c0_161 = arith.constant 0 : index
    %311 = vector.load %arg15[%310, %c0_160, %c0_161] : memref<8x2x128xf32, #tpu.memory_space<vmem>>, vector<1x2x128xf32>
    %312 = vector.shape_cast %311 : vector<1x2x128xf32> to vector<2x128xf32>
    %313 = vector.shape_cast %282 : vector<2x128xf32> to vector<1x2x128xf32>
    tpu.vector_store %arg15[%310, %c0_160, %c0_161], %313 {strides = array<i32>} : memref<8x2x128xf32, #tpu.memory_space<vmem>>, vector<1x2x128xf32>,
    %314 = arith.index_cast %255 : i32 to index
    %c0_162 = arith.constant 0 : index
    %c0_163 = arith.constant 0 : index
    %315 = vector.load %arg16[%314, %c0_162, %c0_163] : memref<8x2x128xf32, #tpu.memory_space<vmem>>, vector<1x2x128xf32>
    %316 = vector.shape_cast %315 : vector<1x2x128xf32> to vector<2x128xf32>
    %317 = vector.shape_cast %305 : vector<2x128xf32> to vector<1x2x128xf32>
    tpu.vector_store %arg16[%314, %c0_162, %c0_163], %317 {strides = array<i32>} : memref<8x2x128xf32, #tpu.memory_space<vmem>>, vector<1x2x128xf32>,
    %c5_i32 = arith.constant 5 : i32
    %c7_i32_164 = arith.constant 7 : i32
    %318 = arith.subi %c7_i32_164, %c5_i32 : i32
    %c0_165 = arith.constant 0 : index
    %c0_166 = arith.constant 0 : index
    %319 = vector.load %arg11[%c0_165, %c0_166] : memref<2x128xf32, #tpu.memory_space<vmem>>, vector<2x128xf32>
    %c0_167 = arith.constant 0 : index
    %c0_168 = arith.constant 0 : index
    %320 = vector.load %arg12[%c0_167, %c0_168] : memref<2x128xf32, #tpu.memory_space<vmem>>, vector<2x128xf32>
    %c0_169 = arith.constant 0 : index
    %c0_170 = arith.constant 0 : index
    %321 = vector.load %arg13[%c0_169, %c0_170] : memref<2x128xf32, #tpu.memory_space<vmem>>, vector<2x128xf32>
    %c0_171 = arith.constant 0 : index
    %c0_172 = arith.constant 0 : index
    %322 = vector.load %arg14[%c0_171, %c0_172] : memref<2x128xf32, #tpu.memory_space<vmem>>, vector<2x128xf32>
    %323 = arith.index_cast %c5_i32 : i32 to index
    %c0_173 = arith.constant 0 : index
    %c0_174 = arith.constant 0 : index
    %324 = vector.load %arg1[%323, %c0_173, %c0_174] : memref<8x2x512xbf16, #tpu.memory_space<vmem>>, vector<1x2x512xbf16>
    %325 = vector.shape_cast %324 : vector<1x2x512xbf16> to vector<2x512xbf16>
    %326 = arith.extf %325 : vector<2x512xbf16> to vector<2x512xf32>
    %c0_175 = arith.constant 0 : index
    %c0_176 = arith.constant 0 : index
    %327 = vector.load %arg5[%c0_175, %c0_176] : memref<128x512xf32, #tpu.memory_space<vmem>>, vector<128x512xf32>
    %cst_177 = arith.constant dense<0.000000e+00> : vector<2x512xf32>
    %328 = tpu.matmul %319, %327, %cst_177 {dimension_numbers = #tpu.dot_dimension_numbers<[1], [0], [0], [1], [0, 0, 1, 1], [], []>} : vector<2x128xf32>, vector<128x512xf32>, vector<2x512xf32> -> vector<2x512xf32>
    %329 = arith.addf %326, %328 : vector<2x512xf32>
    %330 = vector.extract_strided_slice %329 {offsets = [0, 0], sizes = [2, 384], strides = [1, 1]} : vector<2x512xf32> to vector<2x384xf32>
    %331 = arith.negf %330 : vector<2x384xf32>
    %332 = math.exp %331 : vector<2x384xf32>
    %cst_178 = arith.constant 1.000000e+00 : f32
    %333 = vector.broadcast %cst_178 : f32 to vector<2x384xf32>
    %334 = arith.addf %333, %332 : vector<2x384xf32>
    %335 = arith.divf %333, %334 : vector<2x384xf32>
    %336 = vector.extract_strided_slice %335 {offsets = [0, 0], sizes = [2, 128], strides = [1, 1]} : vector<2x384xf32> to vector<2x128xf32>
    %337 = vector.extract_strided_slice %335 {offsets = [0, 128], sizes = [2, 128], strides = [1, 1]} : vector<2x384xf32> to vector<2x128xf32>
    %338 = vector.extract_strided_slice %335 {offsets = [0, 256], sizes = [2, 128], strides = [1, 1]} : vector<2x384xf32> to vector<2x128xf32>
    %339 = vector.extract_strided_slice %329 {offsets = [0, 384], sizes = [2, 128], strides = [1, 1]} : vector<2x512xf32> to vector<2x128xf32>
    %340 = math.tanh %339 : vector<2x128xf32>
    %341 = arith.mulf %337, %320 : vector<2x128xf32>
    %342 = arith.mulf %336, %340 : vector<2x128xf32>
    %343 = arith.addf %341, %342 : vector<2x128xf32>
    %344 = math.tanh %343 : vector<2x128xf32>
    %345 = arith.mulf %338, %344 : vector<2x128xf32>
    %346 = arith.index_cast %318 : i32 to index
    %c0_179 = arith.constant 0 : index
    %c0_180 = arith.constant 0 : index
    %347 = vector.load %arg2[%346, %c0_179, %c0_180] : memref<8x2x512xbf16, #tpu.memory_space<vmem>>, vector<1x2x512xbf16>
    %348 = vector.shape_cast %347 : vector<1x2x512xbf16> to vector<2x512xbf16>
    %349 = arith.extf %348 : vector<2x512xbf16> to vector<2x512xf32>
    %c0_181 = arith.constant 0 : index
    %c0_182 = arith.constant 0 : index
    %350 = vector.load %arg6[%c0_181, %c0_182] : memref<128x512xf32, #tpu.memory_space<vmem>>, vector<128x512xf32>
    %cst_183 = arith.constant dense<0.000000e+00> : vector<2x512xf32>
    %351 = tpu.matmul %321, %350, %cst_183 {dimension_numbers = #tpu.dot_dimension_numbers<[1], [0], [0], [1], [0, 0, 1, 1], [], []>} : vector<2x128xf32>, vector<128x512xf32>, vector<2x512xf32> -> vector<2x512xf32>
    %352 = arith.addf %349, %351 : vector<2x512xf32>
    %353 = vector.extract_strided_slice %352 {offsets = [0, 0], sizes = [2, 384], strides = [1, 1]} : vector<2x512xf32> to vector<2x384xf32>
    %354 = arith.negf %353 : vector<2x384xf32>
    %355 = math.exp %354 : vector<2x384xf32>
    %cst_184 = arith.constant 1.000000e+00 : f32
    %356 = vector.broadcast %cst_184 : f32 to vector<2x384xf32>
    %357 = arith.addf %356, %355 : vector<2x384xf32>
    %358 = arith.divf %356, %357 : vector<2x384xf32>
    %359 = vector.extract_strided_slice %358 {offsets = [0, 0], sizes = [2, 128], strides = [1, 1]} : vector<2x384xf32> to vector<2x128xf32>
    %360 = vector.extract_strided_slice %358 {offsets = [0, 128], sizes = [2, 128], strides = [1, 1]} : vector<2x384xf32> to vector<2x128xf32>
    %361 = vector.extract_strided_slice %358 {offsets = [0, 256], sizes = [2, 128], strides = [1, 1]} : vector<2x384xf32> to vector<2x128xf32>
    %362 = vector.extract_strided_slice %352 {offsets = [0, 384], sizes = [2, 128], strides = [1, 1]} : vector<2x512xf32> to vector<2x128xf32>
    %363 = math.tanh %362 : vector<2x128xf32>
    %364 = arith.mulf %360, %322 : vector<2x128xf32>
    %365 = arith.mulf %359, %363 : vector<2x128xf32>
    %366 = arith.addf %364, %365 : vector<2x128xf32>
    %367 = math.tanh %366 : vector<2x128xf32>
    %368 = arith.mulf %361, %367 : vector<2x128xf32>
    %c0_185 = arith.constant 0 : index
    %c0_186 = arith.constant 0 : index
    %369 = vector.load %arg11[%c0_185, %c0_186] : memref<2x128xf32, #tpu.memory_space<vmem>>, vector<2x128xf32>
    tpu.vector_store %arg11[%c0_185, %c0_186], %345 {strides = array<i32>} : memref<2x128xf32, #tpu.memory_space<vmem>>, vector<2x128xf32>,
    %c0_187 = arith.constant 0 : index
    %c0_188 = arith.constant 0 : index
    %370 = vector.load %arg12[%c0_187, %c0_188] : memref<2x128xf32, #tpu.memory_space<vmem>>, vector<2x128xf32>
    tpu.vector_store %arg12[%c0_187, %c0_188], %343 {strides = array<i32>} : memref<2x128xf32, #tpu.memory_space<vmem>>, vector<2x128xf32>,
    %c0_189 = arith.constant 0 : index
    %c0_190 = arith.constant 0 : index
    %371 = vector.load %arg13[%c0_189, %c0_190] : memref<2x128xf32, #tpu.memory_space<vmem>>, vector<2x128xf32>
    tpu.vector_store %arg13[%c0_189, %c0_190], %368 {strides = array<i32>} : memref<2x128xf32, #tpu.memory_space<vmem>>, vector<2x128xf32>,
    %c0_191 = arith.constant 0 : index
    %c0_192 = arith.constant 0 : index
    %372 = vector.load %arg14[%c0_191, %c0_192] : memref<2x128xf32, #tpu.memory_space<vmem>>, vector<2x128xf32>
    tpu.vector_store %arg14[%c0_191, %c0_192], %366 {strides = array<i32>} : memref<2x128xf32, #tpu.memory_space<vmem>>, vector<2x128xf32>,
    %373 = arith.index_cast %c5_i32 : i32 to index
    %c0_193 = arith.constant 0 : index
    %c0_194 = arith.constant 0 : index
    %374 = vector.load %arg15[%373, %c0_193, %c0_194] : memref<8x2x128xf32, #tpu.memory_space<vmem>>, vector<1x2x128xf32>
    %375 = vector.shape_cast %374 : vector<1x2x128xf32> to vector<2x128xf32>
    %376 = vector.shape_cast %345 : vector<2x128xf32> to vector<1x2x128xf32>
    tpu.vector_store %arg15[%373, %c0_193, %c0_194], %376 {strides = array<i32>} : memref<8x2x128xf32, #tpu.memory_space<vmem>>, vector<1x2x128xf32>,
    %377 = arith.index_cast %318 : i32 to index
    %c0_195 = arith.constant 0 : index
    %c0_196 = arith.constant 0 : index
    %378 = vector.load %arg16[%377, %c0_195, %c0_196] : memref<8x2x128xf32, #tpu.memory_space<vmem>>, vector<1x2x128xf32>
    %379 = vector.shape_cast %378 : vector<1x2x128xf32> to vector<2x128xf32>
    %380 = vector.shape_cast %368 : vector<2x128xf32> to vector<1x2x128xf32>
    tpu.vector_store %arg16[%377, %c0_195, %c0_196], %380 {strides = array<i32>} : memref<8x2x128xf32, #tpu.memory_space<vmem>>, vector<1x2x128xf32>,
    %c6_i32 = arith.constant 6 : i32
    %c7_i32_197 = arith.constant 7 : i32
    %381 = arith.subi %c7_i32_197, %c6_i32 : i32
    %c0_198 = arith.constant 0 : index
    %c0_199 = arith.constant 0 : index
    %382 = vector.load %arg11[%c0_198, %c0_199] : memref<2x128xf32, #tpu.memory_space<vmem>>, vector<2x128xf32>
    %c0_200 = arith.constant 0 : index
    %c0_201 = arith.constant 0 : index
    %383 = vector.load %arg12[%c0_200, %c0_201] : memref<2x128xf32, #tpu.memory_space<vmem>>, vector<2x128xf32>
    %c0_202 = arith.constant 0 : index
    %c0_203 = arith.constant 0 : index
    %384 = vector.load %arg13[%c0_202, %c0_203] : memref<2x128xf32, #tpu.memory_space<vmem>>, vector<2x128xf32>
    %c0_204 = arith.constant 0 : index
    %c0_205 = arith.constant 0 : index
    %385 = vector.load %arg14[%c0_204, %c0_205] : memref<2x128xf32, #tpu.memory_space<vmem>>, vector<2x128xf32>
    %386 = arith.index_cast %c6_i32 : i32 to index
    %c0_206 = arith.constant 0 : index
    %c0_207 = arith.constant 0 : index
    %387 = vector.load %arg1[%386, %c0_206, %c0_207] : memref<8x2x512xbf16, #tpu.memory_space<vmem>>, vector<1x2x512xbf16>
    %388 = vector.shape_cast %387 : vector<1x2x512xbf16> to vector<2x512xbf16>
    %389 = arith.extf %388 : vector<2x512xbf16> to vector<2x512xf32>
    %c0_208 = arith.constant 0 : index
    %c0_209 = arith.constant 0 : index
    %390 = vector.load %arg5[%c0_208, %c0_209] : memref<128x512xf32, #tpu.memory_space<vmem>>, vector<128x512xf32>
    %cst_210 = arith.constant dense<0.000000e+00> : vector<2x512xf32>
    %391 = tpu.matmul %382, %390, %cst_210 {dimension_numbers = #tpu.dot_dimension_numbers<[1], [0], [0], [1], [0, 0, 1, 1], [], []>} : vector<2x128xf32>, vector<128x512xf32>, vector<2x512xf32> -> vector<2x512xf32>
    %392 = arith.addf %389, %391 : vector<2x512xf32>
    %393 = vector.extract_strided_slice %392 {offsets = [0, 0], sizes = [2, 384], strides = [1, 1]} : vector<2x512xf32> to vector<2x384xf32>
    %394 = arith.negf %393 : vector<2x384xf32>
    %395 = math.exp %394 : vector<2x384xf32>
    %cst_211 = arith.constant 1.000000e+00 : f32
    %396 = vector.broadcast %cst_211 : f32 to vector<2x384xf32>
    %397 = arith.addf %396, %395 : vector<2x384xf32>
    %398 = arith.divf %396, %397 : vector<2x384xf32>
    %399 = vector.extract_strided_slice %398 {offsets = [0, 0], sizes = [2, 128], strides = [1, 1]} : vector<2x384xf32> to vector<2x128xf32>
    %400 = vector.extract_strided_slice %398 {offsets = [0, 128], sizes = [2, 128], strides = [1, 1]} : vector<2x384xf32> to vector<2x128xf32>
    %401 = vector.extract_strided_slice %398 {offsets = [0, 256], sizes = [2, 128], strides = [1, 1]} : vector<2x384xf32> to vector<2x128xf32>
    %402 = vector.extract_strided_slice %392 {offsets = [0, 384], sizes = [2, 128], strides = [1, 1]} : vector<2x512xf32> to vector<2x128xf32>
    %403 = math.tanh %402 : vector<2x128xf32>
    %404 = arith.mulf %400, %383 : vector<2x128xf32>
    %405 = arith.mulf %399, %403 : vector<2x128xf32>
    %406 = arith.addf %404, %405 : vector<2x128xf32>
    %407 = math.tanh %406 : vector<2x128xf32>
    %408 = arith.mulf %401, %407 : vector<2x128xf32>
    %409 = arith.index_cast %381 : i32 to index
    %c0_212 = arith.constant 0 : index
    %c0_213 = arith.constant 0 : index
    %410 = vector.load %arg2[%409, %c0_212, %c0_213] : memref<8x2x512xbf16, #tpu.memory_space<vmem>>, vector<1x2x512xbf16>
    %411 = vector.shape_cast %410 : vector<1x2x512xbf16> to vector<2x512xbf16>
    %412 = arith.extf %411 : vector<2x512xbf16> to vector<2x512xf32>
    %c0_214 = arith.constant 0 : index
    %c0_215 = arith.constant 0 : index
    %413 = vector.load %arg6[%c0_214, %c0_215] : memref<128x512xf32, #tpu.memory_space<vmem>>, vector<128x512xf32>
    %cst_216 = arith.constant dense<0.000000e+00> : vector<2x512xf32>
    %414 = tpu.matmul %384, %413, %cst_216 {dimension_numbers = #tpu.dot_dimension_numbers<[1], [0], [0], [1], [0, 0, 1, 1], [], []>} : vector<2x128xf32>, vector<128x512xf32>, vector<2x512xf32> -> vector<2x512xf32>
    %415 = arith.addf %412, %414 : vector<2x512xf32>
    %416 = vector.extract_strided_slice %415 {offsets = [0, 0], sizes = [2, 384], strides = [1, 1]} : vector<2x512xf32> to vector<2x384xf32>
    %417 = arith.negf %416 : vector<2x384xf32>
    %418 = math.exp %417 : vector<2x384xf32>
    %cst_217 = arith.constant 1.000000e+00 : f32
    %419 = vector.broadcast %cst_217 : f32 to vector<2x384xf32>
    %420 = arith.addf %419, %418 : vector<2x384xf32>
    %421 = arith.divf %419, %420 : vector<2x384xf32>
    %422 = vector.extract_strided_slice %421 {offsets = [0, 0], sizes = [2, 128], strides = [1, 1]} : vector<2x384xf32> to vector<2x128xf32>
    %423 = vector.extract_strided_slice %421 {offsets = [0, 128], sizes = [2, 128], strides = [1, 1]} : vector<2x384xf32> to vector<2x128xf32>
    %424 = vector.extract_strided_slice %421 {offsets = [0, 256], sizes = [2, 128], strides = [1, 1]} : vector<2x384xf32> to vector<2x128xf32>
    %425 = vector.extract_strided_slice %415 {offsets = [0, 384], sizes = [2, 128], strides = [1, 1]} : vector<2x512xf32> to vector<2x128xf32>
    %426 = math.tanh %425 : vector<2x128xf32>
    %427 = arith.mulf %423, %385 : vector<2x128xf32>
    %428 = arith.mulf %422, %426 : vector<2x128xf32>
    %429 = arith.addf %427, %428 : vector<2x128xf32>
    %430 = math.tanh %429 : vector<2x128xf32>
    %431 = arith.mulf %424, %430 : vector<2x128xf32>
    %c0_218 = arith.constant 0 : index
    %c0_219 = arith.constant 0 : index
    %432 = vector.load %arg11[%c0_218, %c0_219] : memref<2x128xf32, #tpu.memory_space<vmem>>, vector<2x128xf32>
    tpu.vector_store %arg11[%c0_218, %c0_219], %408 {strides = array<i32>} : memref<2x128xf32, #tpu.memory_space<vmem>>, vector<2x128xf32>,
    %c0_220 = arith.constant 0 : index
    %c0_221 = arith.constant 0 : index
    %433 = vector.load %arg12[%c0_220, %c0_221] : memref<2x128xf32, #tpu.memory_space<vmem>>, vector<2x128xf32>
    tpu.vector_store %arg12[%c0_220, %c0_221], %406 {strides = array<i32>} : memref<2x128xf32, #tpu.memory_space<vmem>>, vector<2x128xf32>,
    %c0_222 = arith.constant 0 : index
    %c0_223 = arith.constant 0 : index
    %434 = vector.load %arg13[%c0_222, %c0_223] : memref<2x128xf32, #tpu.memory_space<vmem>>, vector<2x128xf32>
    tpu.vector_store %arg13[%c0_222, %c0_223], %431 {strides = array<i32>} : memref<2x128xf32, #tpu.memory_space<vmem>>, vector<2x128xf32>,
    %c0_224 = arith.constant 0 : index
    %c0_225 = arith.constant 0 : index
    %435 = vector.load %arg14[%c0_224, %c0_225] : memref<2x128xf32, #tpu.memory_space<vmem>>, vector<2x128xf32>
    tpu.vector_store %arg14[%c0_224, %c0_225], %429 {strides = array<i32>} : memref<2x128xf32, #tpu.memory_space<vmem>>, vector<2x128xf32>,
    %436 = arith.index_cast %c6_i32 : i32 to index
    %c0_226 = arith.constant 0 : index
    %c0_227 = arith.constant 0 : index
    %437 = vector.load %arg15[%436, %c0_226, %c0_227] : memref<8x2x128xf32, #tpu.memory_space<vmem>>, vector<1x2x128xf32>
    %438 = vector.shape_cast %437 : vector<1x2x128xf32> to vector<2x128xf32>
    %439 = vector.shape_cast %408 : vector<2x128xf32> to vector<1x2x128xf32>
    tpu.vector_store %arg15[%436, %c0_226, %c0_227], %439 {strides = array<i32>} : memref<8x2x128xf32, #tpu.memory_space<vmem>>, vector<1x2x128xf32>,
    %440 = arith.index_cast %381 : i32 to index
    %c0_228 = arith.constant 0 : index
    %c0_229 = arith.constant 0 : index
    %441 = vector.load %arg16[%440, %c0_228, %c0_229] : memref<8x2x128xf32, #tpu.memory_space<vmem>>, vector<1x2x128xf32>
    %442 = vector.shape_cast %441 : vector<1x2x128xf32> to vector<2x128xf32>
    %443 = vector.shape_cast %431 : vector<2x128xf32> to vector<1x2x128xf32>
    tpu.vector_store %arg16[%440, %c0_228, %c0_229], %443 {strides = array<i32>} : memref<8x2x128xf32, #tpu.memory_space<vmem>>, vector<1x2x128xf32>,
    %c7_i32_230 = arith.constant 7 : i32
    %c7_i32_231 = arith.constant 7 : i32
    %444 = arith.subi %c7_i32_231, %c7_i32_230 : i32
    %c0_232 = arith.constant 0 : index
    %c0_233 = arith.constant 0 : index
    %445 = vector.load %arg11[%c0_232, %c0_233] : memref<2x128xf32, #tpu.memory_space<vmem>>, vector<2x128xf32>
    %c0_234 = arith.constant 0 : index
    %c0_235 = arith.constant 0 : index
    %446 = vector.load %arg12[%c0_234, %c0_235] : memref<2x128xf32, #tpu.memory_space<vmem>>, vector<2x128xf32>
    %c0_236 = arith.constant 0 : index
    %c0_237 = arith.constant 0 : index
    %447 = vector.load %arg13[%c0_236, %c0_237] : memref<2x128xf32, #tpu.memory_space<vmem>>, vector<2x128xf32>
    %c0_238 = arith.constant 0 : index
    %c0_239 = arith.constant 0 : index
    %448 = vector.load %arg14[%c0_238, %c0_239] : memref<2x128xf32, #tpu.memory_space<vmem>>, vector<2x128xf32>
    %449 = arith.index_cast %c7_i32_230 : i32 to index
    %c0_240 = arith.constant 0 : index
    %c0_241 = arith.constant 0 : index
    %450 = vector.load %arg1[%449, %c0_240, %c0_241] : memref<8x2x512xbf16, #tpu.memory_space<vmem>>, vector<1x2x512xbf16>
    %451 = vector.shape_cast %450 : vector<1x2x512xbf16> to vector<2x512xbf16>
    %452 = arith.extf %451 : vector<2x512xbf16> to vector<2x512xf32>
    %c0_242 = arith.constant 0 : index
    %c0_243 = arith.constant 0 : index
    %453 = vector.load %arg5[%c0_242, %c0_243] : memref<128x512xf32, #tpu.memory_space<vmem>>, vector<128x512xf32>
    %cst_244 = arith.constant dense<0.000000e+00> : vector<2x512xf32>
    %454 = tpu.matmul %445, %453, %cst_244 {dimension_numbers = #tpu.dot_dimension_numbers<[1], [0], [0], [1], [0, 0, 1, 1], [], []>} : vector<2x128xf32>, vector<128x512xf32>, vector<2x512xf32> -> vector<2x512xf32>
    %455 = arith.addf %452, %454 : vector<2x512xf32>
    %456 = vector.extract_strided_slice %455 {offsets = [0, 0], sizes = [2, 384], strides = [1, 1]} : vector<2x512xf32> to vector<2x384xf32>
    %457 = arith.negf %456 : vector<2x384xf32>
    %458 = math.exp %457 : vector<2x384xf32>
    %cst_245 = arith.constant 1.000000e+00 : f32
    %459 = vector.broadcast %cst_245 : f32 to vector<2x384xf32>
    %460 = arith.addf %459, %458 : vector<2x384xf32>
    %461 = arith.divf %459, %460 : vector<2x384xf32>
    %462 = vector.extract_strided_slice %461 {offsets = [0, 0], sizes = [2, 128], strides = [1, 1]} : vector<2x384xf32> to vector<2x128xf32>
    %463 = vector.extract_strided_slice %461 {offsets = [0, 128], sizes = [2, 128], strides = [1, 1]} : vector<2x384xf32> to vector<2x128xf32>
    %464 = vector.extract_strided_slice %461 {offsets = [0, 256], sizes = [2, 128], strides = [1, 1]} : vector<2x384xf32> to vector<2x128xf32>
    %465 = vector.extract_strided_slice %455 {offsets = [0, 384], sizes = [2, 128], strides = [1, 1]} : vector<2x512xf32> to vector<2x128xf32>
    %466 = math.tanh %465 : vector<2x128xf32>
    %467 = arith.mulf %463, %446 : vector<2x128xf32>
    %468 = arith.mulf %462, %466 : vector<2x128xf32>
    %469 = arith.addf %467, %468 : vector<2x128xf32>
    %470 = math.tanh %469 : vector<2x128xf32>
    %471 = arith.mulf %464, %470 : vector<2x128xf32>
    %472 = arith.index_cast %444 : i32 to index
    %c0_246 = arith.constant 0 : index
    %c0_247 = arith.constant 0 : index
    %473 = vector.load %arg2[%472, %c0_246, %c0_247] : memref<8x2x512xbf16, #tpu.memory_space<vmem>>, vector<1x2x512xbf16>
    %474 = vector.shape_cast %473 : vector<1x2x512xbf16> to vector<2x512xbf16>
    %475 = arith.extf %474 : vector<2x512xbf16> to vector<2x512xf32>
    %c0_248 = arith.constant 0 : index
    %c0_249 = arith.constant 0 : index
    %476 = vector.load %arg6[%c0_248, %c0_249] : memref<128x512xf32, #tpu.memory_space<vmem>>, vector<128x512xf32>
    %cst_250 = arith.constant dense<0.000000e+00> : vector<2x512xf32>
    %477 = tpu.matmul %447, %476, %cst_250 {dimension_numbers = #tpu.dot_dimension_numbers<[1], [0], [0], [1], [0, 0, 1, 1], [], []>} : vector<2x128xf32>, vector<128x512xf32>, vector<2x512xf32> -> vector<2x512xf32>
    %478 = arith.addf %475, %477 : vector<2x512xf32>
    %479 = vector.extract_strided_slice %478 {offsets = [0, 0], sizes = [2, 384], strides = [1, 1]} : vector<2x512xf32> to vector<2x384xf32>
    %480 = arith.negf %479 : vector<2x384xf32>
    %481 = math.exp %480 : vector<2x384xf32>
    %cst_251 = arith.constant 1.000000e+00 : f32
    %482 = vector.broadcast %cst_251 : f32 to vector<2x384xf32>
    %483 = arith.addf %482, %481 : vector<2x384xf32>
    %484 = arith.divf %482, %483 : vector<2x384xf32>
    %485 = vector.extract_strided_slice %484 {offsets = [0, 0], sizes = [2, 128], strides = [1, 1]} : vector<2x384xf32> to vector<2x128xf32>
    %486 = vector.extract_strided_slice %484 {offsets = [0, 128], sizes = [2, 128], strides = [1, 1]} : vector<2x384xf32> to vector<2x128xf32>
    %487 = vector.extract_strided_slice %484 {offsets = [0, 256], sizes = [2, 128], strides = [1, 1]} : vector<2x384xf32> to vector<2x128xf32>
    %488 = vector.extract_strided_slice %478 {offsets = [0, 384], sizes = [2, 128], strides = [1, 1]} : vector<2x512xf32> to vector<2x128xf32>
    %489 = math.tanh %488 : vector<2x128xf32>
    %490 = arith.mulf %486, %448 : vector<2x128xf32>
    %491 = arith.mulf %485, %489 : vector<2x128xf32>
    %492 = arith.addf %490, %491 : vector<2x128xf32>
    %493 = math.tanh %492 : vector<2x128xf32>
    %494 = arith.mulf %487, %493 : vector<2x128xf32>
    %c0_252 = arith.constant 0 : index
    %c0_253 = arith.constant 0 : index
    %495 = vector.load %arg11[%c0_252, %c0_253] : memref<2x128xf32, #tpu.memory_space<vmem>>, vector<2x128xf32>
    tpu.vector_store %arg11[%c0_252, %c0_253], %471 {strides = array<i32>} : memref<2x128xf32, #tpu.memory_space<vmem>>, vector<2x128xf32>,
    %c0_254 = arith.constant 0 : index
    %c0_255 = arith.constant 0 : index
    %496 = vector.load %arg12[%c0_254, %c0_255] : memref<2x128xf32, #tpu.memory_space<vmem>>, vector<2x128xf32>
    tpu.vector_store %arg12[%c0_254, %c0_255], %469 {strides = array<i32>} : memref<2x128xf32, #tpu.memory_space<vmem>>, vector<2x128xf32>,
    %c0_256 = arith.constant 0 : index
    %c0_257 = arith.constant 0 : index
    %497 = vector.load %arg13[%c0_256, %c0_257] : memref<2x128xf32, #tpu.memory_space<vmem>>, vector<2x128xf32>
    tpu.vector_store %arg13[%c0_256, %c0_257], %494 {strides = array<i32>} : memref<2x128xf32, #tpu.memory_space<vmem>>, vector<2x128xf32>,
    %c0_258 = arith.constant 0 : index
    %c0_259 = arith.constant 0 : index
    %498 = vector.load %arg14[%c0_258, %c0_259] : memref<2x128xf32, #tpu.memory_space<vmem>>, vector<2x128xf32>
    tpu.vector_store %arg14[%c0_258, %c0_259], %492 {strides = array<i32>} : memref<2x128xf32, #tpu.memory_space<vmem>>, vector<2x128xf32>,
    %499 = arith.index_cast %c7_i32_230 : i32 to index
    %c0_260 = arith.constant 0 : index
    %c0_261 = arith.constant 0 : index
    %500 = vector.load %arg15[%499, %c0_260, %c0_261] : memref<8x2x128xf32, #tpu.memory_space<vmem>>, vector<1x2x128xf32>
    %501 = vector.shape_cast %500 : vector<1x2x128xf32> to vector<2x128xf32>
    %502 = vector.shape_cast %471 : vector<2x128xf32> to vector<1x2x128xf32>
    tpu.vector_store %arg15[%499, %c0_260, %c0_261], %502 {strides = array<i32>} : memref<8x2x128xf32, #tpu.memory_space<vmem>>, vector<1x2x128xf32>,
    %503 = arith.index_cast %444 : i32 to index
    %c0_262 = arith.constant 0 : index
    %c0_263 = arith.constant 0 : index
    %504 = vector.load %arg16[%503, %c0_262, %c0_263] : memref<8x2x128xf32, #tpu.memory_space<vmem>>, vector<1x2x128xf32>
    %505 = vector.shape_cast %504 : vector<1x2x128xf32> to vector<2x128xf32>
    %506 = vector.shape_cast %494 : vector<2x128xf32> to vector<1x2x128xf32>
    tpu.vector_store %arg16[%503, %c0_262, %c0_263], %506 {strides = array<i32>} : memref<8x2x128xf32, #tpu.memory_space<vmem>>, vector<1x2x128xf32>,
    %c8_i32 = arith.constant 8 : i32
    %c0_264 = arith.constant 0 : index
    %c0_265 = arith.constant 0 : index
    %c0_266 = arith.constant 0 : index
    %507 = vector.load %arg15[%c0_264, %c0_265, %c0_266] : memref<8x2x128xf32, #tpu.memory_space<vmem>>, vector<8x2x128xf32>
    %508 = arith.truncf %507 : vector<8x2x128xf32> to vector<8x2x128xbf16>
    %c0_267 = arith.constant 0 : index
    %c0_268 = arith.constant 0 : index
    %c0_269 = arith.constant 0 : index
    %509 = vector.load %arg7[%c0_267, %c0_268, %c0_269] : memref<8x2x128xbf16, #tpu.memory_space<vmem>>, vector<8x2x128xbf16>
    tpu.vector_store %arg7[%c0_267, %c0_268, %c0_269], %508 {strides = array<i32>} : memref<8x2x128xbf16, #tpu.memory_space<vmem>>, vector<8x2x128xbf16>,
    %c0_270 = arith.constant 0 : index
    %c0_271 = arith.constant 0 : index
    %c0_272 = arith.constant 0 : index
    %510 = vector.load %arg16[%c0_270, %c0_271, %c0_272] : memref<8x2x128xf32, #tpu.memory_space<vmem>>, vector<8x2x128xf32>
    %511 = arith.truncf %510 : vector<8x2x128xf32> to vector<8x2x128xbf16>
    %c0_273 = arith.constant 0 : index
    %c0_274 = arith.constant 0 : index
    %c0_275 = arith.constant 0 : index
    %512 = vector.load %arg8[%c0_273, %c0_274, %c0_275] : memref<8x2x128xbf16, #tpu.memory_space<vmem>>, vector<8x2x128xbf16>
    tpu.vector_store %arg8[%c0_273, %c0_274, %c0_275], %511 {strides = array<i32>} : memref<8x2x128xbf16, #tpu.memory_space<vmem>>, vector<8x2x128xbf16>,
    %c0_i32_276 = arith.constant 0 : i32
    %513 = arith.cmpi eq, %arg0, %c0_i32_276 : i32
    %514 = arith.extui %513 : i1 to i32
    %c0_i32_277 = arith.constant 0 : i32
    %515 = arith.cmpi ne, %514, %c0_i32_277 : i32
    scf.if %515 {
      %c0_278 = arith.constant 0 : index
      %c0_279 = arith.constant 0 : index
      %516 = vector.load %arg11[%c0_278, %c0_279] : memref<2x128xf32, #tpu.memory_space<vmem>>, vector<2x128xf32>
      %c0_280 = arith.constant 0 : index
      %c0_281 = arith.constant 0 : index
      %c0_282 = arith.constant 0 : index
      %517 = vector.load %arg9[%c0_280, %c0_281, %c0_282] : memref<2x2x128xf32, #tpu.memory_space<vmem>>, vector<1x2x128xf32>
      %518 = vector.shape_cast %517 : vector<1x2x128xf32> to vector<2x128xf32>
      %519 = vector.shape_cast %516 : vector<2x128xf32> to vector<1x2x128xf32>
      tpu.vector_store %arg9[%c0_280, %c0_281, %c0_282], %519 {strides = array<i32>} : memref<2x2x128xf32, #tpu.memory_space<vmem>>, vector<1x2x128xf32>,
      %c0_283 = arith.constant 0 : index
      %c0_284 = arith.constant 0 : index
      %520 = vector.load %arg12[%c0_283, %c0_284] : memref<2x128xf32, #tpu.memory_space<vmem>>, vector<2x128xf32>
      %c0_285 = arith.constant 0 : index
      %c0_286 = arith.constant 0 : index
      %c0_287 = arith.constant 0 : index
      %521 = vector.load %arg10[%c0_285, %c0_286, %c0_287] : memref<2x2x128xf32, #tpu.memory_space<vmem>>, vector<1x2x128xf32>
      %522 = vector.shape_cast %521 : vector<1x2x128xf32> to vector<2x128xf32>
      %523 = vector.shape_cast %520 : vector<2x128xf32> to vector<1x2x128xf32>
      tpu.vector_store %arg10[%c0_285, %c0_286, %c0_287], %523 {strides = array<i32>} : memref<2x2x128xf32, #tpu.memory_space<vmem>>, vector<1x2x128xf32>,
      %c0_288 = arith.constant 0 : index
      %c0_289 = arith.constant 0 : index
      %524 = vector.load %arg13[%c0_288, %c0_289] : memref<2x128xf32, #tpu.memory_space<vmem>>, vector<2x128xf32>
      %c1 = arith.constant 1 : index
      %c0_290 = arith.constant 0 : index
      %c0_291 = arith.constant 0 : index
      %525 = vector.load %arg9[%c1, %c0_290, %c0_291] : memref<2x2x128xf32, #tpu.memory_space<vmem>>, vector<1x2x128xf32>
      %526 = vector.shape_cast %525 : vector<1x2x128xf32> to vector<2x128xf32>
      %527 = vector.shape_cast %524 : vector<2x128xf32> to vector<1x2x128xf32>
      tpu.vector_store %arg9[%c1, %c0_290, %c0_291], %527 {strides = array<i32>} : memref<2x2x128xf32, #tpu.memory_space<vmem>>, vector<1x2x128xf32>,
      %c0_292 = arith.constant 0 : index
      %c0_293 = arith.constant 0 : index
      %528 = vector.load %arg14[%c0_292, %c0_293] : memref<2x128xf32, #tpu.memory_space<vmem>>, vector<2x128xf32>
      %c1_294 = arith.constant 1 : index
      %c0_295 = arith.constant 0 : index
      %c0_296 = arith.constant 0 : index
      %529 = vector.load %arg10[%c1_294, %c0_295, %c0_296] : memref<2x2x128xf32, #tpu.memory_space<vmem>>, vector<1x2x128xf32>
      %530 = vector.shape_cast %529 : vector<1x2x128xf32> to vector<2x128xf32>
      %531 = vector.shape_cast %528 : vector<2x128xf32> to vector<1x2x128xf32>
      tpu.vector_store %arg10[%c1_294, %c0_295, %c0_296], %531 {strides = array<i32>} : memref<2x2x128xf32, #tpu.memory_space<vmem>>, vector<1x2x128xf32>,
    } else {
    }
    return
  }
  func.func @transform_0(%arg0: i32) -> (i32, i32, i32) {
    %c0_i32 = arith.constant 0 : i32
    %c0_i32_0 = arith.constant 0 : i32
    %c0_i32_1 = arith.constant 0 : i32
    return %arg0, %c0_i32, %c0_i32_0 : i32, i32, i32
  }
  func.func @transform_1(%arg0: i32) -> (i32, i32, i32) {
    %c0_i32 = arith.constant 0 : i32
    %0 = arith.subi %c0_i32, %arg0 : i32
    %c0_i32_0 = arith.constant 0 : i32
    %c0_i32_1 = arith.constant 0 : i32
    %c0_i32_2 = arith.constant 0 : i32
    return %0, %c0_i32_0, %c0_i32_1 : i32, i32, i32
  }
  func.func @transform_2(%arg0: i32) -> (i32, i32, i32) {
    %c0_i32 = arith.constant 0 : i32
    %c0_i32_0 = arith.constant 0 : i32
    %c0_i32_1 = arith.constant 0 : i32
    %c0_i32_2 = arith.constant 0 : i32
    return %c0_i32, %c0_i32_0, %c0_i32_1 : i32, i32, i32
  }
  func.func @transform_3(%arg0: i32) -> (i32, i32, i32) {
    %c0_i32 = arith.constant 0 : i32
    %c0_i32_0 = arith.constant 0 : i32
    %c0_i32_1 = arith.constant 0 : i32
    %c0_i32_2 = arith.constant 0 : i32
    return %c0_i32, %c0_i32_0, %c0_i32_1 : i32, i32, i32
  }
  func.func @transform_4(%arg0: i32) -> (i32, i32) {
    %c0_i32 = arith.constant 0 : i32
    %c0_i32_0 = arith.constant 0 : i32
    %c0_i32_1 = arith.constant 0 : i32
    return %c0_i32, %c0_i32_0 : i32, i32
  }
  func.func @transform_5(%arg0: i32) -> (i32, i32) {
    %c0_i32 = arith.constant 0 : i32
    %c0_i32_0 = arith.constant 0 : i32
    %c0_i32_1 = arith.constant 0 : i32
    return %c0_i32, %c0_i32_0 : i32, i32
  }
  func.func @transform_6(%arg0: i32) -> (i32, i32, i32) {
    %c0_i32 = arith.constant 0 : i32
    %c0_i32_0 = arith.constant 0 : i32
    %c0_i32_1 = arith.constant 0 : i32
    return %arg0, %c0_i32, %c0_i32_0 : i32, i32, i32
  }
  func.func @transform_7(%arg0: i32) -> (i32, i32, i32) {
    %c0_i32 = arith.constant 0 : i32
    %0 = arith.subi %c0_i32, %arg0 : i32
    %c0_i32_0 = arith.constant 0 : i32
    %c0_i32_1 = arith.constant 0 : i32
    %c0_i32_2 = arith.constant 0 : i32
    return %0, %c0_i32_0, %c0_i32_1 : i32, i32, i32
  }
  func.func @transform_8(%arg0: i32) -> (i32, i32, i32) {
    %c0_i32 = arith.constant 0 : i32
    %c0_i32_0 = arith.constant 0 : i32
    %c0_i32_1 = arith.constant 0 : i32
    %c0_i32_2 = arith.constant 0 : i32
    return %c0_i32, %c0_i32_0, %c0_i32_1 : i32, i32, i32
  }
  func.func @transform_9(%arg0: i32) -> (i32, i32, i32) {
    %c0_i32 = arith.constant 0 : i32
    %c0_i32_0 = arith.constant 0 : i32
    %c0_i32_1 = arith.constant 0 : i32
    %c0_i32_2 = arith.constant 0 : i32
    return %c0_i32, %c0_i32_0, %c0_i32_1 : i32, i32, i32
  }
}

</mosaic_0001>

<llo_original>
// kernel: lstm_module_forward.3
$region0: #{lstm_module_forward.3}
  #allocation0 [shape = 'u32[]', space=smem, size = 0x4, offset = 0x4, fixed_abs, tag = 'smem constant byte address 0x4 - core index']
  #allocation1 [shape = 'u32[144,128]{1,0:T(1,128)}', space=vmem, size = 0x12000, scoped, tag = 'internal scratch']
  %s0 = inlined_call_operand.hbm [shape: bf16[16,16], index: 0, kind: input, shape index: {}]
  %s1 = inlined_call_operand.hbm [shape: bf16[16,1024], index: 1, kind: input, shape index: {}]
  %s2 = inlined_call_operand.hbm [shape: f32[1,1024], index: 2, kind: input, shape index: {}]
  %s3 = inlined_call_operand.hbm [shape: bf16[16,512], index: 3, kind: output, shape index: {0}]
  %s4 = inlined_call_operand.hbm [shape: bf16[16,512], index: 4, kind: output, shape index: {1}]
  %5 = xla_tuple %s3, %s4
  %s6 = sld [smem:[#allocation0]]
  $region42: #{lstm_module_forward.3} parent=0
    _
  %s8 = ssub.s32 1, %s6
  %s9 = scalar_select 0, %s8, %s6
  $region1: #{lstm_module_forward.3} parent=0
    #allocation2 [shape = 'u8[4096]{0}', space=vmem, size = 0x1000, scoped, tag = 'input window, operand 0, single buffered']
    #allocation3 [shape = 's32[1]{0}', space=sflag, size = 0x4, scoped, tag = 'scoped memory for lstm_module_forward.3']
    #allocation4 [shape = 's32[1]{0}', space=sflag, size = 0x4, scoped, tag = 'scoped memory for lstm_module_forward.3']
    #allocation5 [shape = 'u8[32768]{0}', space=vmem, size = 0x8000, scoped, tag = 'input window, operand 1, single buffered']
    #allocation6 [shape = 's32[1]{0}', space=sflag, size = 0x4, scoped, tag = 'scoped memory for lstm_module_forward.3']
    #allocation7 [shape = 'u8[4096]{0}', space=vmem, size = 0x1000, scoped, tag = 'input window, operand 2, single buffered']
    #allocation8 [shape = 'u8[16384]{0}', space=vmem, size = 0x4000, scoped, tag = 'output window, operand 0, single buffered']
    #allocation9 [shape = 'u8[16384]{0}', space=vmem, size = 0x4000, scoped, tag = 'output window, operand 1, single buffered']
    #allocation10 [shape = 's32[1]{0}', space=sflag, size = 0x4, scoped, tag = 'scoped memory for lstm_module_forward.3']
    %10 = vsyncpa [#allocation3], 0
    %11 = vsyncpa [#allocation6], 0
    %12 = vsyncpa [#allocation4], 0
    %13 = vsyncpa [#allocation10], 0
    // Predicated region
    $region2: #{lstm_module_forward.3} parent=1 // pred_check
      _
    $region3: #{lstm_module_forward.3} parent=1 // pred_check_branch
      %15 = sbr.rel (0) target = $region5
    $region4: #{lstm_module_forward.3} parent=1 // pred_region
      %s17 = ssub.s32 128, 128
      %18 = vsyncadd [#allocation3], %s17
      %s19 = sshll.u32 [#allocation2], 4
      %s20 = int_to_ptr.vmem [resolvable:$true] %s19
      %25 = dma.hbm_to_vmem [thread:$0]  %s0, 128, %s20, [#allocation3], 64, 64, 4
    $region5: #{lstm_module_forward.3} parent=1 // pred_fallthru
      _
    // Predicated region
    $region6: #{lstm_module_forward.3} parent=1 // pred_check
      _
    $region7: #{lstm_module_forward.3} parent=1 // pred_check_branch
      %27 = sbr.rel (0) target = $region9
    $region8: #{lstm_module_forward.3} parent=1 // pred_region
      %s29 = ssub.s32 1024, 1024
      %30 = vsyncadd [#allocation6], %s29
      %s31 = sshll.u32 [#allocation5], 4
      %s32 = int_to_ptr.vmem [resolvable:$true] %s31
      %37 = dma.hbm_to_vmem [thread:$0]  %s1, 1024, %s32, [#allocation6], 512, 512, 32
    $region9: #{lstm_module_forward.3} parent=1 // pred_fallthru
      _
    // Predicated region
    $region10: #{lstm_module_forward.3} parent=1 // pred_check
      _
    $region11: #{lstm_module_forward.3} parent=1 // pred_check_branch
      %39 = sbr.rel (0) target = $region13
    $region12: #{lstm_module_forward.3} parent=1 // pred_region
      %s41 = ssub.s32 128, 128
      %42 = vsyncadd [#allocation6], %s41
      %s44 = sshll.u32 [#allocation7], 4
      %s45 = int_to_ptr.vmem [resolvable:$true] %s44
      %47 = dma.hbm_to_vmem [thread:$0]  %s2, 128, %s45, [#allocation6]
    $region13: #{lstm_module_forward.3} parent=1 // pred_fallthru
      _
    // Predicated region
    $region14: #{lstm_module_forward.3} parent=1 // pred_check
      _
    $region15: #{lstm_module_forward.3} parent=1 // pred_check_branch
      %49 = sbr.rel (0) target = $region17
    $region16: #{lstm_module_forward.3} parent=1 // pred_region
      %50 = dma.done [#allocation3], 128
    $region17: #{lstm_module_forward.3} parent=1 // pred_fallthru
      _
    // Predicated region
    $region18: #{lstm_module_forward.3} parent=1 // pred_check
      _
    $region19: #{lstm_module_forward.3} parent=1 // pred_check_branch
      %52 = sbr.rel (0) target = $region21
    $region20: #{lstm_module_forward.3} parent=1 // pred_region
      %53 = dma.done [#allocation6], 1024
    $region21: #{lstm_module_forward.3} parent=1 // pred_fallthru
      _
    // Predicated region
    $region22: #{lstm_module_forward.3} parent=1 // pred_check
      _
    $region23: #{lstm_module_forward.3} parent=1 // pred_check_branch
      %55 = sbr.rel (0) target = $region25
    $region24: #{lstm_module_forward.3} parent=1 // pred_region
      %56 = dma.done [#allocation6], 128
    $region25: #{lstm_module_forward.3} parent=1 // pred_fallthru
      _
    %v58 = vld [vmem:[#allocation2] sm:$0xf]
    %v59 = vld [vmem:[#allocation2 + $0x4] sm:$0xf]
    %v60 = vld [vmem:[#allocation5] sm:$0xff]
    %v61 = vld [vmem:[#allocation5 + $0x8] sm:$0xff]
    %v62 = vld [vmem:[#allocation5 + $0x10] sm:$0xff]
    %v63 = vld [vmem:[#allocation5 + $0x18] sm:$0xff]
    %v64 = vld [vmem:[#allocation5 + $0x20] sm:$0xff]
    %v65 = vld [vmem:[#allocation5 + $0x28] sm:$0xff]
    %v66 = vld [vmem:[#allocation5 + $0x30] sm:$0xff]
    %v67 = vld [vmem:[#allocation5 + $0x38] sm:$0xff]
    %v68 = vld [vmem:[#allocation7] sm:$0xff]
    %v70 = vlaneseq
    %v71 = vshrl.u32 %v70, 7
    %v72 = vsub.s32 0, %v71
    %v73 = vrot.slane %v68, %v72
    %v74 = vlaneseq
    %v75 = vshrl.u32 %v74, 7
    %v76 = vsub.s32 1, %v75
    %v77 = vrot.slane %v68, %v76
    %v78 = vlaneseq
    %v79 = vshrl.u32 %v78, 7
    %v80 = vsub.s32 2, %v79
    %v81 = vrot.slane %v68, %v80
    %v82 = vlaneseq
    %v83 = vshrl.u32 %v82, 7
    %v84 = vsub.s32 3, %v83
    %v85 = vrot.slane %v68, %v84
    %v86 = vlaneseq
    %v87 = vshrl.u32 %v86, 7
    %v88 = vsub.s32 4, %v87
    %v89 = vrot.slane %v68, %v88
    %v90 = vlaneseq
    %v91 = vshrl.u32 %v90, 7
    %v92 = vsub.s32 5, %v91
    %v93 = vrot.slane %v68, %v92
    %v94 = vlaneseq
    %v95 = vshrl.u32 %v94, 7
    %v96 = vsub.s32 6, %v95
    %v97 = vrot.slane %v68, %v96
    %v98 = vlaneseq
    %v99 = vshrl.u32 %v98, 7
    %v100 = vsub.s32 7, %v99
    %v101 = vrot.slane %v68, %v100
    %v112 = vunpack.c.l.b16 %v58
    %v113 = vunpack.c.l.b16 %v59
    %v114 = vpack.c.b16 %v113, %v112
    %v123 = vunpack.c.l.b16 %v60
    %v124 = vunpack.c.h.b16 %v60
    %v125 = vunpack.c.l.b16 %v61
    %v126 = vunpack.c.h.b16 %v61
    %v127 = vunpack.c.l.b16 %v62
    %v128 = vunpack.c.h.b16 %v62
    %v129 = vunpack.c.l.b16 %v63
    %v130 = vunpack.c.h.b16 %v63
    %v131 = vunpack.c.l.b16 %v64
    %v132 = vunpack.c.h.b16 %v64
    %v133 = vunpack.c.l.b16 %v65
    %v134 = vunpack.c.h.b16 %v65
    %v135 = vunpack.c.l.b16 %v66
    %v136 = vunpack.c.h.b16 %v66
    %v137 = vunpack.c.l.b16 %v67
    %v138 = vunpack.c.h.b16 %v67
    %v139 = vpack.c.b16 %v131, %v123
    %v140 = vpack.c.b16 %v132, %v124
    %v141 = vpack.c.b16 %v133, %v125
    %v142 = vpack.c.b16 %v134, %v126
    %v143 = vpack.c.b16 %v135, %v127
    %v144 = vpack.c.b16 %v136, %v128
    %v145 = vpack.c.b16 %v137, %v129
    %v146 = vpack.c.b16 %v138, %v130
    %vm155 = vcmask 130048
    %v157 = vsel %vm155, %v114, 0
    %159 = vmatprep.subr.bf16.mxu0 %v140
    %160 = vmatpush1.bf16.msra.mxu0 %v139
    %161 = vmatprep.subr.bf16.mxu0 0
    %162 = vmatpush1.bf16.msra.mxu0 0
    %163 = vmatprep.subr.bf16.mxu0 0
    %164 = vmatpush1.bf16.msra.mxu0 0
    %165 = vmatprep.subr.bf16.mxu0 0
    %166 = vmatpush1.bf16.msra.mxu0 0
    %167 = vmatprep.subr.bf16.mxu0 0
    %168 = vmatpush1.bf16.msra.mxu0 0
    %169 = vmatprep.subr.bf16.mxu0 0
    %170 = vmatpush1.bf16.msra.mxu0 0
    %171 = vmatprep.subr.bf16.mxu0 0
    %172 = vmatpush1.bf16.msra.mxu0 0
    %173 = vmatprep.subr.bf16.mxu0 0
    %174 = vmatpush1.bf16.msra.mxu0 0
    %175 = vmatprep.subr.bf16.mxu0 0
    %176 = vmatpush1.bf16.msra.mxu0 0
    %177 = vmatprep.subr.bf16.mxu0 0
    %178 = vmatpush1.bf16.msra.mxu0 0
    %179 = vmatprep.subr.bf16.mxu0 0
    %180 = vmatpush1.bf16.msra.mxu0 0
    %181 = vmatprep.subr.bf16.mxu0 0
    %182 = vmatpush1.bf16.msra.mxu0 0
    %183 = vmatprep.subr.bf16.mxu0 0
    %184 = vmatpush1.bf16.msra.mxu0 0
    %185 = vmatprep.subr.bf16.mxu0 0
    %186 = vmatpush1.bf16.msra.mxu0 0
    %187 = vmatprep.subr.bf16.mxu0 0
    %188 = vmatpush1.bf16.msra.mxu0 0
    %189 = vmatprep.subr.bf16.mxu0 0
    %190 = vmatpush1.bf16.msra.mxu0 0
    %191 = vmatprep.mubr.bf16.mxu0 0
    %192 = vmatmul.mubr.bf16.gmra.mrb[0].mxu0 %v157
    %v193 = vpop.f32.mrb[0].mxu0
    %v194 = vadd.f32 %v73, %v193
    %v195 = vpop.f32.mrb[0].mxu0
    %v196 = vadd.f32 %v77, %v195
    %v197 = vpop.f32.mrb[0].mxu0
    %v198 = vadd.f32 %v73, %v197
    %v199 = vpop.f32.mrb[0].mxu0
    %v200 = vadd.f32 %v77, %v199
    %201 = vdwg.mxu0
    %202 = vmatprep.subr.bf16.mxu0 %v142
    %203 = vmatpush1.bf16.msra.mxu0 %v141
    %204 = vmatprep.subr.bf16.mxu0 0
    %205 = vmatpush1.bf16.msra.mxu0 0
    %206 = vmatprep.subr.bf16.mxu0 0
    %207 = vmatpush1.bf16.msra.mxu0 0
    %208 = vmatprep.subr.bf16.mxu0 0
    %209 = vmatpush1.bf16.msra.mxu0 0
    %210 = vmatprep.subr.bf16.mxu0 0
    %211 = vmatpush1.bf16.msra.mxu0 0
    %212 = vmatprep.subr.bf16.mxu0 0
    %213 = vmatpush1.bf16.msra.mxu0 0
    %214 = vmatprep.subr.bf16.mxu0 0
    %215 = vmatpush1.bf16.msra.mxu0 0
    %216 = vmatprep.subr.bf16.mxu0 0
    %217 = vmatpush1.bf16.msra.mxu0 0
    %218 = vmatprep.subr.bf16.mxu0 0
    %219 = vmatpush1.bf16.msra.mxu0 0
    %220 = vmatprep.subr.bf16.mxu0 0
    %221 = vmatpush1.bf16.msra.mxu0 0
    %222 = vmatprep.subr.bf16.mxu0 0
    %223 = vmatpush1.bf16.msra.mxu0 0
    %224 = vmatprep.subr.bf16.mxu0 0
    %225 = vmatpush1.bf16.msra.mxu0 0
    %226 = vmatprep.subr.bf16.mxu0 0
    %227 = vmatpush1.bf16.msra.mxu0 0
    %228 = vmatprep.subr.bf16.mxu0 0
    %229 = vmatpush1.bf16.msra.mxu0 0
    %230 = vmatprep.subr.bf16.mxu0 0
    %231 = vmatpush1.bf16.msra.mxu0 0
    %232 = vmatprep.subr.bf16.mxu0 0
    %233 = vmatpush1.bf16.msra.mxu0 0
    %234 = vmatprep.mubr.bf16.mxu0 0
    %235 = vmatmul.mubr.bf16.gmra.mrb[0].mxu0 %v157
    %v236 = vpop.f32.mrb[0].mxu0
    %v237 = vadd.f32 %v81, %v236
    %v238 = vpop.f32.mrb[0].mxu0
    %v239 = vadd.f32 %v85, %v238
    %v240 = vpop.f32.mrb[0].mxu0
    %v241 = vadd.f32 %v81, %v240
    %v242 = vpop.f32.mrb[0].mxu0
    %v243 = vadd.f32 %v85, %v242
    %244 = vdwg.mxu0
    %245 = vmatprep.subr.bf16.mxu0 %v144
    %246 = vmatpush1.bf16.msra.mxu0 %v143
    %247 = vmatprep.subr.bf16.mxu0 0
    %248 = vmatpush1.bf16.msra.mxu0 0
    %249 = vmatprep.subr.bf16.mxu0 0
    %250 = vmatpush1.bf16.msra.mxu0 0
    %251 = vmatprep.subr.bf16.mxu0 0
    %252 = vmatpush1.bf16.msra.mxu0 0
    %253 = vmatprep.subr.bf16.mxu0 0
    %254 = vmatpush1.bf16.msra.mxu0 0
    %255 = vmatprep.subr.bf16.mxu0 0
    %256 = vmatpush1.bf16.msra.mxu0 0
    %257 = vmatprep.subr.bf16.mxu0 0
    %258 = vmatpush1.bf16.msra.mxu0 0
    %259 = vmatprep.subr.bf16.mxu0 0
    %260 = vmatpush1.bf16.msra.mxu0 0
    %261 = vmatprep.subr.bf16.mxu0 0
    %262 = vmatpush1.bf16.msra.mxu0 0
    %263 = vmatprep.subr.bf16.mxu0 0
    %264 = vmatpush1.bf16.msra.mxu0 0
    %265 = vmatprep.subr.bf16.mxu0 0
    %266 = vmatpush1.bf16.msra.mxu0 0
    %267 = vmatprep.subr.bf16.mxu0 0
    %268 = vmatpush1.bf16.msra.mxu0 0
    %269 = vmatprep.subr.bf16.mxu0 0
    %270 = vmatpush1.bf16.msra.mxu0 0
    %271 = vmatprep.subr.bf16.mxu0 0
    %272 = vmatpush1.bf16.msra.mxu0 0
    %273 = vmatprep.subr.bf16.mxu0 0
    %274 = vmatpush1.bf16.msra.mxu0 0
    %275 = vmatprep.subr.bf16.mxu0 0
    %276 = vmatpush1.bf16.msra.mxu0 0
    %277 = vmatprep.mubr.bf16.mxu0 0
    %278 = vmatmul.mubr.bf16.gmra.mrb[0].mxu0 %v157
    %v279 = vpop.f32.mrb[0].mxu0
    %v280 = vadd.f32 %v89, %v279
    %v281 = vpop.f32.mrb[0].mxu0
    %v282 = vadd.f32 %v93, %v281
    %v283 = vpop.f32.mrb[0].mxu0
    %v284 = vadd.f32 %v89, %v283
    %v285 = vpop.f32.mrb[0].mxu0
    %v286 = vadd.f32 %v93, %v285
    %287 = vdwg.mxu0
    %288 = vmatprep.subr.bf16.mxu0 %v146
    %289 = vmatpush1.bf16.msra.mxu0 %v145
    %290 = vmatprep.subr.bf16.mxu0 0
    %291 = vmatpush1.bf16.msra.mxu0 0
    %292 = vmatprep.subr.bf16.mxu0 0
    %293 = vmatpush1.bf16.msra.mxu0 0
    %294 = vmatprep.subr.bf16.mxu0 0
    %295 = vmatpush1.bf16.msra.mxu0 0
    %296 = vmatprep.subr.bf16.mxu0 0
    %297 = vmatpush1.bf16.msra.mxu0 0
    %298 = vmatprep.subr.bf16.mxu0 0
    %299 = vmatpush1.bf16.msra.mxu0 0
    %300 = vmatprep.subr.bf16.mxu0 0
    %301 = vmatpush1.bf16.msra.mxu0 0
    %302 = vmatprep.subr.bf16.mxu0 0
    %303 = vmatpush1.bf16.msra.mxu0 0
    %304 = vmatprep.subr.bf16.mxu0 0
    %305 = vmatpush1.bf16.msra.mxu0 0
    %306 = vmatprep.subr.bf16.mxu0 0
    %307 = vmatpush1.bf16.msra.mxu0 0
    %308 = vmatprep.subr.bf16.mxu0 0
    %309 = vmatpush1.bf16.msra.mxu0 0
    %310 = vmatprep.subr.bf16.mxu0 0
    %311 = vmatpush1.bf16.msra.mxu0 0
    %312 = vmatprep.subr.bf16.mxu0 0
    %313 = vmatpush1.bf16.msra.mxu0 0
    %314 = vmatprep.subr.bf16.mxu0 0
    %315 = vmatpush1.bf16.msra.mxu0 0
    %316 = vmatprep.subr.bf16.mxu0 0
    %317 = vmatpush1.bf16.msra.mxu0 0
    %318 = vmatprep.subr.bf16.mxu0 0
    %319 = vmatpush1.bf16.msra.mxu0 0
    %320 = vmatprep.mubr.bf16.mxu0 0
    %321 = vmatmul.mubr.bf16.gmra.mrb[0].mxu0 %v157
    %v322 = vpop.f32.mrb[0].mxu0
    %v323 = vadd.f32 %v97, %v322
    %v324 = vpop.f32.mrb[0].mxu0
    %v325 = vadd.f32 %v101, %v324
    %v326 = vpop.f32.mrb[0].mxu0
    %v327 = vadd.f32 %v97, %v326
    %v328 = vpop.f32.mrb[0].mxu0
    %v329 = vadd.f32 %v101, %v328
    %330 = vdwg.mxu0
    %v331 = vpack.c.bf16 %v198, %v194
    %v332 = vpack.c.bf16 %v200, %v196
    %v333 = vpack.c.bf16 %v241, %v237
    %v334 = vpack.c.bf16 %v243, %v239
    %v339 = vunpack.c.l.b16 %v331
    %v340 = vunpack.c.l.b16 %v332
    %v341 = vunpack.c.l.b16 %v333
    %v342 = vunpack.c.l.b16 %v334
    %v343 = vunpack.c.h.b16 %v331
    %v344 = vunpack.c.h.b16 %v332
    %v345 = vunpack.c.h.b16 %v333
    %v346 = vunpack.c.h.b16 %v334
    %v347 = vpack.c.b16 %v340, %v339
    %v348 = vpack.c.b16 %v342, %v341
    %v349 = vpack.c.b16 %v344, %v343
    %v350 = vpack.c.b16 %v346, %v345
    %355 = vst [vmem:[#allocation8] sm:$0xff] %v347
    %356 = vst [vmem:[#allocation8 + $0x8] sm:$0xff] %v348
    %357 = vst [vmem:[#allocation8 + $0x10] sm:$0xff] %v349
    %358 = vst [vmem:[#allocation8 + $0x18] sm:$0xff] %v350
    %v359 = vpack.c.bf16 %v284, %v280
    %v360 = vpack.c.bf16 %v286, %v282
    %v361 = vpack.c.bf16 %v327, %v323
    %v362 = vpack.c.bf16 %v329, %v325
    %v367 = vunpack.c.l.b16 %v359
    %v368 = vunpack.c.l.b16 %v360
    %v369 = vunpack.c.l.b16 %v361
    %v370 = vunpack.c.l.b16 %v362
    %v371 = vunpack.c.h.b16 %v359
    %v372 = vunpack.c.h.b16 %v360
    %v373 = vunpack.c.h.b16 %v361
    %v374 = vunpack.c.h.b16 %v362
    %v375 = vpack.c.b16 %v368, %v367
    %v376 = vpack.c.b16 %v370, %v369
    %v377 = vpack.c.b16 %v372, %v371
    %v378 = vpack.c.b16 %v374, %v373
    %383 = vst [vmem:[#allocation9] sm:$0xff] %v375
    %384 = vst [vmem:[#allocation9 + $0x8] sm:$0xff] %v376
    %385 = vst [vmem:[#allocation9 + $0x10] sm:$0xff] %v377
    %386 = vst [vmem:[#allocation9 + $0x18] sm:$0xff] %v378
    // Predicated region
    $region26: #{lstm_module_forward.3} parent=1 // pred_check
      _
    $region27: #{lstm_module_forward.3} parent=1 // pred_check_branch
      %388 = sbr.rel (0) target = $region29
    $region28: #{lstm_module_forward.3} parent=1 // pred_region
      %s390 = ssub.s32 512, 512
      %391 = vsyncadd [#allocation4], %s390
      %s392 = sshll.u32 [#allocation8], 4
      %s393 = int_to_ptr.vmem [resolvable:$true] %s392
      %398 = dma.vmem_to_hbm [thread:$0]  %s393, 512, %s3, [#allocation4], 256, 256, 16
    $region29: #{lstm_module_forward.3} parent=1 // pred_fallthru
      _
    // Predicated region
    $region30: #{lstm_module_forward.3} parent=1 // pred_check
      _
    $region31: #{lstm_module_forward.3} parent=1 // pred_check_branch
      %400 = sbr.rel (0) target = $region33
    $region32: #{lstm_module_forward.3} parent=1 // pred_region
      %s402 = ssub.s32 512, 512
      %403 = vsyncadd [#allocation10], %s402
      %s404 = sshll.u32 [#allocation9], 4
      %s405 = int_to_ptr.vmem [resolvable:$true] %s404
      %410 = dma.vmem_to_hbm [thread:$0]  %s405, 512, %s4, [#allocation10], 256, 256, 16
    $region33: #{lstm_module_forward.3} parent=1 // pred_fallthru
      _
    // Predicated region
    $region34: #{lstm_module_forward.3} parent=1 // pred_check
      _
    $region35: #{lstm_module_forward.3} parent=1 // pred_check_branch
      %412 = sbr.rel (0) target = $region37
    $region36: #{lstm_module_forward.3} parent=1 // pred_region
      %413 = dma.done [#allocation4], 512
    $region37: #{lstm_module_forward.3} parent=1 // pred_fallthru
      _
    // Predicated region
    $region38: #{lstm_module_forward.3} parent=1 // pred_check
      _
    $region39: #{lstm_module_forward.3} parent=1 // pred_check_branch
      %415 = sbr.rel (0) target = $region41
    $region40: #{lstm_module_forward.3} parent=1 // pred_region
      %416 = dma.done [#allocation10], 512
    $region41: #{lstm_module_forward.3} parent=1 // pred_fallthru
      _
    %417 = vsyncpa [#allocation3], 1
    %418 = vsyncpa [#allocation6], 1
    %419 = vsyncpa [#allocation4], 1
    %420 = vsyncpa [#allocation10], 1

// kernel: lstm_module_forward.5
$region0: #{lstm_module_forward.5}
  #allocation0 [shape = 'u32[]', space=smem, size = 0x4, offset = 0x4, fixed_abs, tag = 'smem constant byte address 0x4 - core index']
  #allocation1 [shape = 'u32[144,128]{1,0:T(1,128)}', space=vmem, size = 0x12000, scoped, tag = 'internal scratch']
  %s0 = inlined_call_operand.hbm [shape: bf16[16,128], index: 0, kind: input, shape index: {}]
  %s1 = inlined_call_operand.hbm [shape: bf16[16,128], index: 1, kind: input, shape index: {}]
  %s2 = inlined_call_operand.hbm [shape: bf16[128,128], index: 2, kind: input, shape index: {}]
  %s3 = inlined_call_operand.hbm [shape: bf16[128,128], index: 3, kind: input, shape index: {}]
  %s4 = inlined_call_operand.hbm [shape: f32[1,128], index: 4, kind: input, shape index: {}]
  %s5 = inlined_call_operand.hbm [shape: f32[16,128], index: 5, kind: output, shape index: {}]
  %s6 = sld [smem:[#allocation0]]
  $region50: #{lstm_module_forward.5} parent=0
    _
  %s8 = ssub.s32 1, %s6
  %s9 = scalar_select 0, %s8, %s6
  $region1: #{lstm_module_forward.5} parent=0
    #allocation2 [shape = 'u8[4096]{0}', space=vmem, size = 0x1000, scoped, tag = 'input window, operand 0, single buffered']
    #allocation3 [shape = 's32[1]{0}', space=sflag, size = 0x4, scoped, tag = 'scoped memory for lstm_module_forward.5']
    #allocation4 [shape = 's32[1]{0}', space=sflag, size = 0x4, scoped, tag = 'scoped memory for lstm_module_forward.5']
    #allocation5 [shape = 'u8[4096]{0}', space=vmem, size = 0x1000, scoped, tag = 'input window, operand 1, single buffered']
    #allocation6 [shape = 's32[1]{0}', space=sflag, size = 0x4, scoped, tag = 'scoped memory for lstm_module_forward.5']
    #allocation7 [shape = 'u8[32768]{0}', space=vmem, size = 0x8000, scoped, tag = 'input window, operand 2, single buffered']
    #allocation8 [shape = 'u8[32768]{0}', space=vmem, size = 0x8000, scoped, tag = 'input window, operand 3, single buffered']
    #allocation9 [shape = 's32[1]{0}', space=sflag, size = 0x4, scoped, tag = 'scoped memory for lstm_module_forward.5']
    #allocation10 [shape = 'u8[512]{0}', space=vmem, size = 0x400, scoped, tag = 'input window, operand 4, single buffered']
    #allocation11 [shape = 'u8[8192]{0}', space=vmem, size = 0x2000, scoped, tag = 'output window, operand 0, single buffered']
    %10 = vsyncpa [#allocation3], 0
    %11 = vsyncpa [#allocation6], 0
    %12 = vsyncpa [#allocation9], 0
    %13 = vsyncpa [#allocation4], 0
    // Predicated region
    $region2: #{lstm_module_forward.5} parent=1 // pred_check
      _
    $region3: #{lstm_module_forward.5} parent=1 // pred_check_branch
      %15 = sbr.rel (0) target = $region5
    $region4: #{lstm_module_forward.5} parent=1 // pred_region
      %s17 = ssub.s32 128, 128
      %18 = vsyncadd [#allocation3], %s17
      %s19 = sshll.u32 [#allocation2], 4
      %s20 = int_to_ptr.vmem [resolvable:$true] %s19
      %25 = dma.hbm_to_vmem [thread:$0]  %s0, 128, %s20, [#allocation3], 64, 64, 4
    $region5: #{lstm_module_forward.5} parent=1 // pred_fallthru
      _
    // Predicated region
    $region6: #{lstm_module_forward.5} parent=1 // pred_check
      _
    $region7: #{lstm_module_forward.5} parent=1 // pred_check_branch
      %27 = sbr.rel (0) target = $region9
    $region8: #{lstm_module_forward.5} parent=1 // pred_region
      %s29 = ssub.s32 128, 128
      %30 = vsyncadd [#allocation6], %s29
      %s31 = sshll.u32 [#allocation5], 4
      %s32 = int_to_ptr.vmem [resolvable:$true] %s31
      %37 = dma.hbm_to_vmem [thread:$0]  %s1, 128, %s32, [#allocation6], 64, 64, 4
    $region9: #{lstm_module_forward.5} parent=1 // pred_fallthru
      _
    // Predicated region
    $region10: #{lstm_module_forward.5} parent=1 // pred_check
      _
    $region11: #{lstm_module_forward.5} parent=1 // pred_check_branch
      %39 = sbr.rel (0) target = $region13
    $region12: #{lstm_module_forward.5} parent=1 // pred_region
      %s41 = ssub.s32 1024, 1024
      %42 = vsyncadd [#allocation6], %s41
      %s43 = sshll.u32 [#allocation7], 4
      %s44 = int_to_ptr.vmem [resolvable:$true] %s43
      %49 = dma.hbm_to_vmem [thread:$0]  %s2, 1024, %s44, [#allocation6], 64, 64, 4
    $region13: #{lstm_module_forward.5} parent=1 // pred_fallthru
      _
    // Predicated region
    $region14: #{lstm_module_forward.5} parent=1 // pred_check
      _
    $region15: #{lstm_module_forward.5} parent=1 // pred_check_branch
      %51 = sbr.rel (0) target = $region17
    $region16: #{lstm_module_forward.5} parent=1 // pred_region
      %s53 = ssub.s32 1024, 1024
      %54 = vsyncadd [#allocation9], %s53
      %s55 = sshll.u32 [#allocation8], 4
      %s56 = int_to_ptr.vmem [resolvable:$true] %s55
      %61 = dma.hbm_to_vmem [thread:$0]  %s3, 1024, %s56, [#allocation9], 64, 64, 4
    $region17: #{lstm_module_forward.5} parent=1 // pred_fallthru
      _
    // Predicated region
    $region18: #{lstm_module_forward.5} parent=1 // pred_check
      _
    $region19: #{lstm_module_forward.5} parent=1 // pred_check_branch
      %63 = sbr.rel (0) target = $region21
    $region20: #{lstm_module_forward.5} parent=1 // pred_region
      %s65 = ssub.s32 16, 16
      %66 = vsyncadd [#allocation9], %s65
      %s68 = sshll.u32 [#allocation10], 4
      %s69 = int_to_ptr.vmem [resolvable:$true] %s68
      %71 = dma.hbm_to_vmem [thread:$0]  %s4, 16, %s69, [#allocation9]
    $region21: #{lstm_module_forward.5} parent=1 // pred_fallthru
      _
    // Predicated region
    $region22: #{lstm_module_forward.5} parent=1 // pred_check
      _
    $region23: #{lstm_module_forward.5} parent=1 // pred_check_branch
      %73 = sbr.rel (0) target = $region25
    $region24: #{lstm_module_forward.5} parent=1 // pred_region
      %74 = dma.done [#allocation3], 128
    $region25: #{lstm_module_forward.5} parent=1 // pred_fallthru
      _
    // Predicated region
    $region26: #{lstm_module_forward.5} parent=1 // pred_check
      _
    $region27: #{lstm_module_forward.5} parent=1 // pred_check_branch
      %76 = sbr.rel (0) target = $region29
    $region28: #{lstm_module_forward.5} parent=1 // pred_region
      %77 = dma.done [#allocation6], 128
    $region29: #{lstm_module_forward.5} parent=1 // pred_fallthru
      _
    // Predicated region
    $region30: #{lstm_module_forward.5} parent=1 // pred_check
      _
    $region31: #{lstm_module_forward.5} parent=1 // pred_check_branch
      %79 = sbr.rel (0) target = $region33
    $region32: #{lstm_module_forward.5} parent=1 // pred_region
      %80 = dma.done [#allocation6], 1024
    $region33: #{lstm_module_forward.5} parent=1 // pred_fallthru
      _
    // Predicated region
    $region34: #{lstm_module_forward.5} parent=1 // pred_check
      _
    $region35: #{lstm_module_forward.5} parent=1 // pred_check_branch
      %82 = sbr.rel (0) target = $region37
    $region36: #{lstm_module_forward.5} parent=1 // pred_region
      %83 = dma.done [#allocation9], 1024
    $region37: #{lstm_module_forward.5} parent=1 // pred_fallthru
      _
    // Predicated region
    $region38: #{lstm_module_forward.5} parent=1 // pred_check
      _
    $region39: #{lstm_module_forward.5} parent=1 // pred_check_branch
      %85 = sbr.rel (0) target = $region41
    $region40: #{lstm_module_forward.5} parent=1 // pred_region
      %86 = dma.done [#allocation9], 16
    $region41: #{lstm_module_forward.5} parent=1 // pred_fallthru
      _
    %v88 = vld [vmem:[#allocation2] sm:$0xf]
    %v89 = vld [vmem:[#allocation2 + $0x4] sm:$0xf]
    %v90 = vld [vmem:[#allocation7] sm:$0xf]
    %v91 = vld [vmem:[#allocation7 + $0x4] sm:$0xf]
    %v92 = vld [vmem:[#allocation7 + $0x8] sm:$0xf]
    %v93 = vld [vmem:[#allocation7 + $0xc] sm:$0xf]
    %v94 = vld [vmem:[#allocation7 + $0x10] sm:$0xf]
    %v95 = vld [vmem:[#allocation7 + $0x14] sm:$0xf]
    %v96 = vld [vmem:[#allocation7 + $0x18] sm:$0xf]
    %v97 = vld [vmem:[#allocation7 + $0x1c] sm:$0xf]
    %v98 = vld [vmem:[#allocation7 + $0x20] sm:$0xf]
    %v99 = vld [vmem:[#allocation7 + $0x24] sm:$0xf]
    %v100 = vld [vmem:[#allocation7 + $0x28] sm:$0xf]
    %v101 = vld [vmem:[#allocation7 + $0x2c] sm:$0xf]
    %v102 = vld [vmem:[#allocation7 + $0x30] sm:$0xf]
    %v103 = vld [vmem:[#allocation7 + $0x34] sm:$0xf]
    %v104 = vld [vmem:[#allocation7 + $0x38] sm:$0xf]
    %v105 = vld [vmem:[#allocation7 + $0x3c] sm:$0xf]
    %v106 = vld [vmem:[#allocation5] sm:$0xf]
    %v107 = vld [vmem:[#allocation5 + $0x4] sm:$0xf]
    %v108 = vld [vmem:[#allocation8] sm:$0xf]
    %v109 = vld [vmem:[#allocation8 + $0x4] sm:$0xf]
    %v110 = vld [vmem:[#allocation8 + $0x8] sm:$0xf]
    %v111 = vld [vmem:[#allocation8 + $0xc] sm:$0xf]
    %v112 = vld [vmem:[#allocation8 + $0x10] sm:$0xf]
    %v113 = vld [vmem:[#allocation8 + $0x14] sm:$0xf]
    %v114 = vld [vmem:[#allocation8 + $0x18] sm:$0xf]
    %v115 = vld [vmem:[#allocation8 + $0x1c] sm:$0xf]
    %v116 = vld [vmem:[#allocation8 + $0x20] sm:$0xf]
    %v117 = vld [vmem:[#allocation8 + $0x24] sm:$0xf]
    %v118 = vld [vmem:[#allocation8 + $0x28] sm:$0xf]
    %v119 = vld [vmem:[#allocation8 + $0x2c] sm:$0xf]
    %v120 = vld [vmem:[#allocation8 + $0x30] sm:$0xf]
    %v121 = vld [vmem:[#allocation8 + $0x34] sm:$0xf]
    %v122 = vld [vmem:[#allocation8 + $0x38] sm:$0xf]
    %v123 = vld [vmem:[#allocation8 + $0x3c] sm:$0xf]
    %v126 = vunpack.c.l.b16 %v106
    %v127 = vunpack.c.l.b16 %v107
    %v128 = vpack.c.b16 %v127, %v126
    %v146 = vunpack.c.l.b16 %v108
    %v147 = vunpack.c.l.b16 %v109
    %v148 = vunpack.c.l.b16 %v110
    %v149 = vunpack.c.l.b16 %v111
    %v150 = vunpack.c.l.b16 %v112
    %v151 = vunpack.c.l.b16 %v113
    %v152 = vunpack.c.l.b16 %v114
    %v153 = vunpack.c.l.b16 %v115
    %v154 = vunpack.c.l.b16 %v116
    %v155 = vunpack.c.l.b16 %v117
    %v156 = vunpack.c.l.b16 %v118
    %v157 = vunpack.c.l.b16 %v119
    %v158 = vunpack.c.l.b16 %v120
    %v159 = vunpack.c.l.b16 %v121
    %v160 = vunpack.c.l.b16 %v122
    %v161 = vunpack.c.l.b16 %v123
    %v162 = vpack.c.b16 %v147, %v146
    %v163 = vpack.c.b16 %v149, %v148
    %v164 = vpack.c.b16 %v151, %v150
    %v165 = vpack.c.b16 %v153, %v152
    %v166 = vpack.c.b16 %v155, %v154
    %v167 = vpack.c.b16 %v157, %v156
    %v168 = vpack.c.b16 %v159, %v158
    %v169 = vpack.c.b16 %v161, %v160
    %178 = vmatprep.subr.bf16.mxu0 0
    %179 = vmatpush1.bf16.msra.mxu0 %v162
    %180 = vmatprep.subr.bf16.mxu0 0
    %181 = vmatpush1.bf16.msra.mxu0 %v163
    %182 = vmatprep.subr.bf16.mxu0 0
    %183 = vmatpush1.bf16.msra.mxu0 %v164
    %184 = vmatprep.subr.bf16.mxu0 0
    %185 = vmatpush1.bf16.msra.mxu0 %v165
    %186 = vmatprep.subr.bf16.mxu0 0
    %187 = vmatpush1.bf16.msra.mxu0 %v166
    %188 = vmatprep.subr.bf16.mxu0 0
    %189 = vmatpush1.bf16.msra.mxu0 %v167
    %190 = vmatprep.subr.bf16.mxu0 0
    %191 = vmatpush1.bf16.msra.mxu0 %v168
    %192 = vmatprep.subr.bf16.mxu0 0
    %193 = vmatpush1.bf16.msra.mxu0 %v169
    %194 = vmatprep.subr.bf16.mxu0 0
    %195 = vmatpush1.bf16.msra.mxu0 0
    %196 = vmatprep.subr.bf16.mxu0 0
    %197 = vmatpush1.bf16.msra.mxu0 0
    %198 = vmatprep.subr.bf16.mxu0 0
    %199 = vmatpush1.bf16.msra.mxu0 0
    %200 = vmatprep.subr.bf16.mxu0 0
    %201 = vmatpush1.bf16.msra.mxu0 0
    %202 = vmatprep.subr.bf16.mxu0 0
    %203 = vmatpush1.bf16.msra.mxu0 0
    %204 = vmatprep.subr.bf16.mxu0 0
    %205 = vmatpush1.bf16.msra.mxu0 0
    %206 = vmatprep.subr.bf16.mxu0 0
    %207 = vmatpush1.bf16.msra.mxu0 0
    %208 = vmatprep.subr.bf16.mxu0 0
    %209 = vmatpush1.bf16.msra.mxu0 0
    %210 = vmatprep.mubr.bf16.mxu0 0
    %211 = vmatmul.mubr.bf16.gmra.mrb[0].mxu0 %v128
    %v212 = vpop.f32.mrb[0].mxu0
    %v213 = vadd.f32 0.0, %v212
    %v214 = vpop.f32.mrb[0].mxu0
    %v215 = vpop.f32.mrb[0].mxu0
    %v216 = vadd.f32 0.0, %v215
    %v217 = vpop.f32.mrb[0].mxu0
    %218 = vdwg.mxu0
    %v221 = vunpack.c.l.b16 %v88
    %v222 = vunpack.c.l.b16 %v89
    %v223 = vpack.c.b16 %v222, %v221
    %v241 = vunpack.c.l.b16 %v90
    %v242 = vunpack.c.l.b16 %v91
    %v243 = vunpack.c.l.b16 %v92
    %v244 = vunpack.c.l.b16 %v93
    %v245 = vunpack.c.l.b16 %v94
    %v246 = vunpack.c.l.b16 %v95
    %v247 = vunpack.c.l.b16 %v96
    %v248 = vunpack.c.l.b16 %v97
    %v249 = vunpack.c.l.b16 %v98
    %v250 = vunpack.c.l.b16 %v99
    %v251 = vunpack.c.l.b16 %v100
    %v252 = vunpack.c.l.b16 %v101
    %v253 = vunpack.c.l.b16 %v102
    %v254 = vunpack.c.l.b16 %v103
    %v255 = vunpack.c.l.b16 %v104
    %v256 = vunpack.c.l.b16 %v105
    %v257 = vpack.c.b16 %v242, %v241
    %v258 = vpack.c.b16 %v244, %v243
    %v259 = vpack.c.b16 %v246, %v245
    %v260 = vpack.c.b16 %v248, %v247
    %v261 = vpack.c.b16 %v250, %v249
    %v262 = vpack.c.b16 %v252, %v251
    %v263 = vpack.c.b16 %v254, %v253
    %v264 = vpack.c.b16 %v256, %v255
    %273 = vmatprep.subr.bf16.mxu0 0
    %274 = vmatpush1.bf16.msra.mxu0 %v257
    %275 = vmatprep.subr.bf16.mxu0 0
    %276 = vmatpush1.bf16.msra.mxu0 %v258
    %277 = vmatprep.subr.bf16.mxu0 0
    %278 = vmatpush1.bf16.msra.mxu0 %v259
    %279 = vmatprep.subr.bf16.mxu0 0
    %280 = vmatpush1.bf16.msra.mxu0 %v260
    %281 = vmatprep.subr.bf16.mxu0 0
    %282 = vmatpush1.bf16.msra.mxu0 %v261
    %283 = vmatprep.subr.bf16.mxu0 0
    %284 = vmatpush1.bf16.msra.mxu0 %v262
    %285 = vmatprep.subr.bf16.mxu0 0
    %286 = vmatpush1.bf16.msra.mxu0 %v263
    %287 = vmatprep.subr.bf16.mxu0 0
    %288 = vmatpush1.bf16.msra.mxu0 %v264
    %289 = vmatprep.subr.bf16.mxu0 0
    %290 = vmatpush1.bf16.msra.mxu0 0
    %291 = vmatprep.subr.bf16.mxu0 0
    %292 = vmatpush1.bf16.msra.mxu0 0
    %293 = vmatprep.subr.bf16.mxu0 0
    %294 = vmatpush1.bf16.msra.mxu0 0
    %295 = vmatprep.subr.bf16.mxu0 0
    %296 = vmatpush1.bf16.msra.mxu0 0
    %297 = vmatprep.subr.bf16.mxu0 0
    %298 = vmatpush1.bf16.msra.mxu0 0
    %299 = vmatprep.subr.bf16.mxu0 0
    %300 = vmatpush1.bf16.msra.mxu0 0
    %301 = vmatprep.subr.bf16.mxu0 0
    %302 = vmatpush1.bf16.msra.mxu0 0
    %303 = vmatprep.subr.bf16.mxu0 0
    %304 = vmatpush1.bf16.msra.mxu0 0
    %305 = vmatprep.mubr.bf16.mxu0 0
    %306 = vmatmul.mubr.bf16.gmra.mrb[0].mxu0 %v223
    %v307 = vpop.f32.mrb[0].mxu0
    %v308 = vadd.f32 %v213, %v307
    %v309 = vpop.f32.mrb[0].mxu0
    %v310 = vpop.f32.mrb[0].mxu0
    %v311 = vadd.f32 %v216, %v310
    %v312 = vpop.f32.mrb[0].mxu0
    %313 = vdwg.mxu0
    %v314 = vld [vmem:[#allocation10] sm:$0x1]
    %v316 = vlaneseq
    %v317 = vshrl.u32 %v316, 7
    %v318 = vsub.s32 0, %v317
    %v319 = vrot.slane %v314, %v318
    %v321 = vadd.f32 %v308, %v319
    %v322 = vadd.f32 %v311, %v319
    %v323 = vmax.f32 %v321, 0.0
    %v324 = vmax.f32 %v322, 0.0
    %325 = vst [vmem:[#allocation11] sm:$0xff] %v323
    %326 = vst [vmem:[#allocation11 + $0x8] sm:$0xff] %v324
    // Predicated region
    $region42: #{lstm_module_forward.5} parent=1 // pred_check
      _
    $region43: #{lstm_module_forward.5} parent=1 // pred_check_branch
      %328 = sbr.rel (0) target = $region45
    $region44: #{lstm_module_forward.5} parent=1 // pred_region
      %s330 = ssub.s32 256, 256
      %331 = vsyncadd [#allocation4], %s330
      %s332 = sshll.u32 [#allocation11], 4
      %s333 = int_to_ptr.vmem [resolvable:$true] %s332
      %338 = dma.vmem_to_hbm [thread:$0]  %s333, 256, %s5, [#allocation4], 128, 128, 8
    $region45: #{lstm_module_forward.5} parent=1 // pred_fallthru
      _
    // Predicated region
    $region46: #{lstm_module_forward.5} parent=1 // pred_check
      _
    $region47: #{lstm_module_forward.5} parent=1 // pred_check_branch
      %340 = sbr.rel (0) target = $region49
    $region48: #{lstm_module_forward.5} parent=1 // pred_region
      %341 = dma.done [#allocation4], 256
    $region49: #{lstm_module_forward.5} parent=1 // pred_fallthru
      _
    %342 = vsyncpa [#allocation3], 1
    %343 = vsyncpa [#allocation6], 1
    %344 = vsyncpa [#allocation9], 1
    %345 = vsyncpa [#allocation4], 1

// kernel: lstm_module_forward.4
$region0: #{lstm_module_forward.4}
  #allocation0 [shape = 'u32[]', space=smem, size = 0x4, offset = 0x4, fixed_abs, tag = 'smem constant byte address 0x4 - core index']
  #allocation1 [shape = 'u32[144,128]{1,0:T(1,128)}', space=vmem, size = 0x12000, scoped, tag = 'internal scratch']
  #allocation2 [shape = 'f32[2,128]{1,0:T(2,128)}', space=vmem, size = 0x400, scoped, tag = 'scratch operand']
  #allocation3 [shape = 'f32[2,128]{1,0:T(2,128)}', space=vmem, size = 0x400, scoped, tag = 'scratch operand']
  #allocation4 [shape = 'f32[2,128]{1,0:T(2,128)}', space=vmem, size = 0x400, scoped, tag = 'scratch operand']
  #allocation5 [shape = 'f32[2,128]{1,0:T(2,128)}', space=vmem, size = 0x400, scoped, tag = 'scratch operand']
  #allocation6 [shape = 'f32[8,2,128]{2,1,0:T(2,128)}', space=vmem, size = 0x2000, scoped, tag = 'scratch operand']
  #allocation7 [shape = 'f32[8,2,128]{2,1,0:T(2,128)}', space=vmem, size = 0x2000, scoped, tag = 'scratch operand']
  %s0 = inlined_call_operand.hbm [shape: bf16[8,2,512], index: 0, kind: input, shape index: {}]
  %s1 = inlined_call_operand.hbm [shape: bf16[8,2,512], index: 1, kind: input, shape index: {}]
  %s2 = inlined_call_operand.hbm [shape: f32[2,2,128], index: 2, kind: input, shape index: {}]
  %s3 = inlined_call_operand.hbm [shape: f32[2,2,128], index: 3, kind: input, shape index: {}]
  %s4 = inlined_call_operand.hbm [shape: f32[128,512], index: 4, kind: input, shape index: {}]
  %s5 = inlined_call_operand.hbm [shape: f32[128,512], index: 5, kind: input, shape index: {}]
  %s6 = inlined_call_operand.hbm [shape: bf16[8,2,128], index: 6, kind: output, shape index: {0}]
  %s7 = inlined_call_operand.hbm [shape: bf16[8,2,128], index: 7, kind: output, shape index: {1}]
  %s8 = inlined_call_operand.hbm [shape: f32[2,2,128], index: 8, kind: output, shape index: {2}]
  %s9 = inlined_call_operand.hbm [shape: f32[2,2,128], index: 9, kind: output, shape index: {3}]
  %10 = xla_tuple %s6, %s7, %s8, %s9
  %s11 = sld [smem:[#allocation0]]
  $region90: #{lstm_module_forward.4} parent=0
    _
  %s13 = ssub.s32 1, %s11
  %s14 = scalar_select 0, %s13, %s11
  $region1: #{lstm_module_forward.4} parent=0
    #allocation8 [shape = 'u8[16384]{0}', space=vmem, size = 0x4000, scoped, tag = 'input window, operand 0, single buffered']
    #allocation9 [shape = 's32[1]{0}', space=sflag, size = 0x4, scoped, tag = 'scoped memory for lstm_module_forward.4']
    #allocation10 [shape = 's32[1]{0}', space=sflag, size = 0x4, scoped, tag = 'scoped memory for lstm_module_forward.4']
    #allocation11 [shape = 'u8[16384]{0}', space=vmem, size = 0x4000, scoped, tag = 'input window, operand 1, single buffered']
    #allocation12 [shape = 's32[1]{0}', space=sflag, size = 0x4, scoped, tag = 'scoped memory for lstm_module_forward.4']
    #allocation13 [shape = 'u8[2048]{0}', space=vmem, size = 0x800, scoped, tag = 'input window, operand 2, single buffered']
    #allocation14 [shape = 'u8[2048]{0}', space=vmem, size = 0x800, scoped, tag = 'input window, operand 3, single buffered']
    #allocation15 [shape = 's32[1]{0}', space=sflag, size = 0x4, scoped, tag = 'scoped memory for lstm_module_forward.4']
    #allocation16 [shape = 'u8[262144]{0}', space=vmem, size = 0x40000, scoped, tag = 'input window, operand 4, single buffered']
    #allocation17 [shape = 'u8[262144]{0}', space=vmem, size = 0x40000, scoped, tag = 'input window, operand 5, single buffered']
    #allocation18 [shape = 's32[1]{0}', space=sflag, size = 0x4, scoped, tag = 'scoped memory for lstm_module_forward.4']
    #allocation19 [shape = 'u8[4096]{0}', space=vmem, size = 0x1000, scoped, tag = 'output window, operand 0, single buffered']
    #allocation20 [shape = 'u8[4096]{0}', space=vmem, size = 0x1000, scoped, tag = 'output window, operand 1, single buffered']
    #allocation21 [shape = 's32[1]{0}', space=sflag, size = 0x4, scoped, tag = 'scoped memory for lstm_module_forward.4']
    #allocation22 [shape = 'u8[2048]{0}', space=vmem, size = 0x800, scoped, tag = 'output window, operand 2, single buffered']
    #allocation23 [shape = 'u8[2048]{0}', space=vmem, size = 0x800, scoped, tag = 'output window, operand 3, single buffered']
    #allocation24 [shape = 's32[1]{0}', space=sflag, size = 0x4, scoped, tag = 'scoped memory for lstm_module_forward.4']
    %15 = vsyncpa [#allocation9], 0
    %16 = vsyncpa [#allocation12], 0
    %17 = vsyncpa [#allocation15], 0
    %18 = vsyncpa [#allocation18], 0
    %19 = vsyncpa [#allocation10], 0
    %20 = vsyncpa [#allocation21], 0
    %21 = vsyncpa [#allocation24], 0
    // Predicated region
    $region2: #{lstm_module_forward.4} parent=1 // pred_check
      _
    $region3: #{lstm_module_forward.4} parent=1 // pred_check_branch
      %23 = sbr.rel (0) target = $region5
    $region4: #{lstm_module_forward.4} parent=1 // pred_region
      %s25 = ssub.s32 512, 512
      %26 = vsyncadd [#allocation9], %s25
      %s27 = sshll.u32 [#allocation8], 4
      %s28 = int_to_ptr.vmem [resolvable:$true] %s27
      %33 = dma.hbm_to_vmem [thread:$0]  %s0, 512, %s28, [#allocation9], 64, 64, 4
    $region5: #{lstm_module_forward.4} parent=1 // pred_fallthru
      _
    // Predicated region
    $region6: #{lstm_module_forward.4} parent=1 // pred_check
      _
    $region7: #{lstm_module_forward.4} parent=1 // pred_check_branch
      %35 = sbr.rel (0) target = $region9
    $region8: #{lstm_module_forward.4} parent=1 // pred_region
      %s36 = ssub.s32 0, 0
      %s37 = smul.u32 8, %s36
      %s39 = ssub.s32 512, 512
      %40 = vsyncadd [#allocation12], %s39
      %s41 = smul.addr %s37, 4
      %s42 = smul.addr %s41, 16
      %s43 = scalar_lea.hbm %s1, %s42
      %s44 = sshll.u32 [#allocation11], 4
      %s45 = int_to_ptr.vmem [resolvable:$true] %s44
      %50 = dma.hbm_to_vmem [thread:$0]  %s43, 512, %s45, [#allocation12], 64, 64, 4
    $region9: #{lstm_module_forward.4} parent=1 // pred_fallthru
      _
    // Predicated region
    $region10: #{lstm_module_forward.4} parent=1 // pred_check
      _
    $region11: #{lstm_module_forward.4} parent=1 // pred_check_branch
      %52 = sbr.rel (0) target = $region13
    $region12: #{lstm_module_forward.4} parent=1 // pred_region
      %s54 = ssub.s32 64, 64
      %55 = vsyncadd [#allocation12], %s54
      %s56 = sshll.u32 [#allocation13], 4
      %s57 = int_to_ptr.vmem [resolvable:$true] %s56
      %62 = dma.hbm_to_vmem [thread:$0]  %s2, 64, %s57, [#allocation12], 32, 32, 2
    $region13: #{lstm_module_forward.4} parent=1 // pred_fallthru
      _
    // Predicated region
    $region14: #{lstm_module_forward.4} parent=1 // pred_check
      _
    $region15: #{lstm_module_forward.4} parent=1 // pred_check_branch
      %64 = sbr.rel (0) target = $region17
    $region16: #{lstm_module_forward.4} parent=1 // pred_region
      %s66 = ssub.s32 64, 64
      %67 = vsyncadd [#allocation15], %s66
      %s68 = sshll.u32 [#allocation14], 4
      %s69 = int_to_ptr.vmem [resolvable:$true] %s68
      %74 = dma.hbm_to_vmem [thread:$0]  %s3, 64, %s69, [#allocation15], 32, 32, 2
    $region17: #{lstm_module_forward.4} parent=1 // pred_fallthru
      _
    // Predicated region
    $region18: #{lstm_module_forward.4} parent=1 // pred_check
      _
    $region19: #{lstm_module_forward.4} parent=1 // pred_check_branch
      %76 = sbr.rel (0) target = $region21
    $region20: #{lstm_module_forward.4} parent=1 // pred_region
      %s78 = ssub.s32 8192, 8192
      %79 = vsyncadd [#allocation15], %s78
      %s80 = sshll.u32 [#allocation16], 4
      %s81 = int_to_ptr.vmem [resolvable:$true] %s80
      %86 = dma.hbm_to_vmem [thread:$0]  %s4, 8192, %s81, [#allocation15], 512, 512, 32
    $region21: #{lstm_module_forward.4} parent=1 // pred_fallthru
      _
    // Predicated region
    $region22: #{lstm_module_forward.4} parent=1 // pred_check
      _
    $region23: #{lstm_module_forward.4} parent=1 // pred_check_branch
      %88 = sbr.rel (0) target = $region25
    $region24: #{lstm_module_forward.4} parent=1 // pred_region
      %s90 = ssub.s32 8192, 8192
      %91 = vsyncadd [#allocation18], %s90
      %s92 = sshll.u32 [#allocation17], 4
      %s93 = int_to_ptr.vmem [resolvable:$true] %s92
      %98 = dma.hbm_to_vmem [thread:$0]  %s5, 8192, %s93, [#allocation18], 512, 512, 32
    $region25: #{lstm_module_forward.4} parent=1 // pred_fallthru
      _
    // Predicated region
    $region26: #{lstm_module_forward.4} parent=1 // pred_check
      _
    $region27: #{lstm_module_forward.4} parent=1 // pred_check_branch
      %100 = sbr.rel (0) target = $region29
    $region28: #{lstm_module_forward.4} parent=1 // pred_region
      %101 = dma.done [#allocation9], 512
    $region29: #{lstm_module_forward.4} parent=1 // pred_fallthru
      _
    // Predicated region
    $region30: #{lstm_module_forward.4} parent=1 // pred_check
      _
    $region31: #{lstm_module_forward.4} parent=1 // pred_check_branch
      %103 = sbr.rel (0) target = $region33
    $region32: #{lstm_module_forward.4} parent=1 // pred_region
      %104 = dma.done [#allocation12], 512
    $region33: #{lstm_module_forward.4} parent=1 // pred_fallthru
      _
    // Predicated region
    $region34: #{lstm_module_forward.4} parent=1 // pred_check
      _
    $region35: #{lstm_module_forward.4} parent=1 // pred_check_branch
      %106 = sbr.rel (0) target = $region37
    $region36: #{lstm_module_forward.4} parent=1 // pred_region
      %107 = dma.done [#allocation12], 64
    $region37: #{lstm_module_forward.4} parent=1 // pred_fallthru
      _
    // Predicated region
    $region38: #{lstm_module_forward.4} parent=1 // pred_check
      _
    $region39: #{lstm_module_forward.4} parent=1 // pred_check_branch
      %109 = sbr.rel (0) target = $region41
    $region40: #{lstm_module_forward.4} parent=1 // pred_region
      %110 = dma.done [#allocation15], 64
    $region41: #{lstm_module_forward.4} parent=1 // pred_fallthru
      _
    // Predicated region
    $region42: #{lstm_module_forward.4} parent=1 // pred_check
      _
    $region43: #{lstm_module_forward.4} parent=1 // pred_check_branch
      %112 = sbr.rel (0) target = $region45
    $region44: #{lstm_module_forward.4} parent=1 // pred_region
      %113 = dma.done [#allocation15], 8192
    $region45: #{lstm_module_forward.4} parent=1 // pred_fallthru
      _
    // Predicated region
    $region46: #{lstm_module_forward.4} parent=1 // pred_check
      _
    $region47: #{lstm_module_forward.4} parent=1 // pred_check_branch
      %115 = sbr.rel (0) target = $region49
    $region48: #{lstm_module_forward.4} parent=1 // pred_region
      %116 = dma.done [#allocation18], 8192
    $region49: #{lstm_module_forward.4} parent=1 // pred_fallthru
      _
    %s117 = ssub.s32 0, 0
    %s118 = smul.u32 8, %s117
    %s119 = ssub.s32 0, 0
    %s120 = smul.u32 8, %s119
    %p121 = scmp.eq.s32.totalorder 0, 0
    // Predicated region
    $region50: #{lstm_module_forward.4} parent=1 // pred_check
      %p122 = pneg %p121
    $region51: #{lstm_module_forward.4} parent=1 // pred_check_branch
      %124 = sbr.rel (%p122) target = $region53
    $region52: #{lstm_module_forward.4} parent=1 // pred_region
      %v125 = vld [vmem:[#allocation13] sm:$0x3]
      %126 = vst [vmem:[#allocation2] sm:$0x3] %v125
      %v127 = vld [vmem:[#allocation14] sm:$0x3]
      %128 = vst [vmem:[#allocation3] sm:$0x3] %v127
      %s129 = scalar_lea.vmem [#allocation13], 2
      %v130 = vld [vmem:[%s129] sm:$0x3]
      %131 = vst [vmem:[#allocation4] sm:$0x3] %v130
      %s132 = scalar_lea.vmem [#allocation14], 2
      %v133 = vld [vmem:[%s132] sm:$0x3]
      %134 = vst [vmem:[#allocation5] sm:$0x3] %v133
    $region53: #{lstm_module_forward.4} parent=1 // pred_fallthru
      _
    %v135 = vld [vmem:[#allocation2] sm:$0x3]
    %v136 = vld [vmem:[#allocation3] sm:$0x3]
    %v137 = vld [vmem:[#allocation4] sm:$0x3]
    %v138 = vld [vmem:[#allocation5] sm:$0x3]
    %v139 = vld [vmem:[#allocation8] sm:$0xf]
    %v140 = vunpack.c.l.bf16 %v139
    %v141 = vld [vmem:[#allocation16] sm:$0xff]
    %v142 = vld [vmem:[#allocation16 + $0x8] sm:$0xff]
    %v143 = vld [vmem:[#allocation16 + $0x10] sm:$0xff]
    %v144 = vld [vmem:[#allocation16 + $0x18] sm:$0xff]
    %v145 = vld [vmem:[#allocation16 + $0x20] sm:$0xff]
    %v146 = vld [vmem:[#allocation16 + $0x28] sm:$0xff]
    %v147 = vld [vmem:[#allocation16 + $0x30] sm:$0xff]
    %v148 = vld [vmem:[#allocation16 + $0x38] sm:$0xff]
    %v149 = vld [vmem:[#allocation16 + $0x40] sm:$0xff]
    %v150 = vld [vmem:[#allocation16 + $0x48] sm:$0xff]
    %v151 = vld [vmem:[#allocation16 + $0x50] sm:$0xff]
    %v152 = vld [vmem:[#allocation16 + $0x58] sm:$0xff]
    %v153 = vld [vmem:[#allocation16 + $0x60] sm:$0xff]
    %v154 = vld [vmem:[#allocation16 + $0x68] sm:$0xff]
    %v155 = vld [vmem:[#allocation16 + $0x70] sm:$0xff]
    %v156 = vld [vmem:[#allocation16 + $0x78] sm:$0xff]
    %v157 = vld [vmem:[#allocation16 + $0x80] sm:$0xff]
    %v158 = vld [vmem:[#allocation16 + $0x88] sm:$0xff]
    %v159 = vld [vmem:[#allocation16 + $0x90] sm:$0xff]
    %v160 = vld [vmem:[#allocation16 + $0x98] sm:$0xff]
    %v161 = vld [vmem:[#allocation16 + $0xa0] sm:$0xff]
    %v162 = vld [vmem:[#allocation16 + $0xa8] sm:$0xff]
    %v163 = vld [vmem:[#allocation16 + $0xb0] sm:$0xff]
    %v164 = vld [vmem:[#allocation16 + $0xb8] sm:$0xff]
    %v165 = vld [vmem:[#allocation16 + $0xc0] sm:$0xff]
    %v166 = vld [vmem:[#allocation16 + $0xc8] sm:$0xff]
    %v167 = vld [vmem:[#allocation16 + $0xd0] sm:$0xff]
    %v168 = vld [vmem:[#allocation16 + $0xd8] sm:$0xff]
    %v169 = vld [vmem:[#allocation16 + $0xe0] sm:$0xff]
    %v170 = vld [vmem:[#allocation16 + $0xe8] sm:$0xff]
    %v171 = vld [vmem:[#allocation16 + $0xf0] sm:$0xff]
    %v172 = vld [vmem:[#allocation16 + $0xf8] sm:$0xff]
    %v173 = vld [vmem:[#allocation16 + $0x100] sm:$0xff]
    %v174 = vld [vmem:[#allocation16 + $0x108] sm:$0xff]
    %v175 = vld [vmem:[#allocation16 + $0x110] sm:$0xff]
    %v176 = vld [vmem:[#allocation16 + $0x118] sm:$0xff]
    %v177 = vld [vmem:[#allocation16 + $0x120] sm:$0xff]
    %v178 = vld [vmem:[#allocation16 + $0x128] sm:$0xff]
    %v179 = vld [vmem:[#allocation16 + $0x130] sm:$0xff]
    %v180 = vld [vmem:[#allocation16 + $0x138] sm:$0xff]
    %v181 = vld [vmem:[#allocation16 + $0x140] sm:$0xff]
    %v182 = vld [vmem:[#allocation16 + $0x148] sm:$0xff]
    %v183 = vld [vmem:[#allocation16 + $0x150] sm:$0xff]
    %v184 = vld [vmem:[#allocation16 + $0x158] sm:$0xff]
    %v185 = vld [vmem:[#allocation16 + $0x160] sm:$0xff]
    %v186 = vld [vmem:[#allocation16 + $0x168] sm:$0xff]
    %v187 = vld [vmem:[#allocation16 + $0x170] sm:$0xff]
    %v188 = vld [vmem:[#allocation16 + $0x178] sm:$0xff]
    %v189 = vld [vmem:[#allocation16 + $0x180] sm:$0xff]
    %v190 = vld [vmem:[#allocation16 + $0x188] sm:$0xff]
    %v191 = vld [vmem:[#allocation16 + $0x190] sm:$0xff]
    %v192 = vld [vmem:[#allocation16 + $0x198] sm:$0xff]
    %v193 = vld [vmem:[#allocation16 + $0x1a0] sm:$0xff]
    %v194 = vld [vmem:[#allocation16 + $0x1a8] sm:$0xff]
    %v195 = vld [vmem:[#allocation16 + $0x1b0] sm:$0xff]
    %v196 = vld [vmem:[#allocation16 + $0x1b8] sm:$0xff]
    %v197 = vld [vmem:[#allocation16 + $0x1c0] sm:$0xff]
    %v198 = vld [vmem:[#allocation16 + $0x1c8] sm:$0xff]
    %v199 = vld [vmem:[#allocation16 + $0x1d0] sm:$0xff]
    %v200 = vld [vmem:[#allocation16 + $0x1d8] sm:$0xff]
    %v201 = vld [vmem:[#allocation16 + $0x1e0] sm:$0xff]
    %v202 = vld [vmem:[#allocation16 + $0x1e8] sm:$0xff]
    %v203 = vld [vmem:[#allocation16 + $0x1f0] sm:$0xff]
    %v204 = vld [vmem:[#allocation16 + $0x1f8] sm:$0xff]
    %205 = vmatprep.subr.mxu0 %v142
    %206 = vmatpush1.msra.mxu0 %v141
    %207 = vmatprep.subr.mxu0 %v146
    %208 = vmatpush1.msra.mxu0 %v145
    %209 = vmatprep.subr.mxu0 %v150
    %210 = vmatpush1.msra.mxu0 %v149
    %211 = vmatprep.subr.mxu0 %v154
    %212 = vmatpush1.msra.mxu0 %v153
    %213 = vmatprep.subr.mxu0 %v158
    %214 = vmatpush1.msra.mxu0 %v157
    %215 = vmatprep.subr.mxu0 %v162
    %216 = vmatpush1.msra.mxu0 %v161
    %217 = vmatprep.subr.mxu0 %v166
    %218 = vmatpush1.msra.mxu0 %v165
    %219 = vmatprep.subr.mxu0 %v170
    %220 = vmatpush1.msra.mxu0 %v169
    %221 = vmatprep.subr.mxu0 %v174
    %222 = vmatpush1.msra.mxu0 %v173
    %223 = vmatprep.subr.mxu0 %v178
    %224 = vmatpush1.msra.mxu0 %v177
    %225 = vmatprep.subr.mxu0 %v182
    %226 = vmatpush1.msra.mxu0 %v181
    %227 = vmatprep.subr.mxu0 %v186
    %228 = vmatpush1.msra.mxu0 %v185
    %229 = vmatprep.subr.mxu0 %v190
    %230 = vmatpush1.msra.mxu0 %v189
    %231 = vmatprep.subr.mxu0 %v194
    %232 = vmatpush1.msra.mxu0 %v193
    %233 = vmatprep.subr.mxu0 %v198
    %234 = vmatpush1.msra.mxu0 %v197
    %235 = vmatprep.subr.mxu0 %v202
    %236 = vmatpush1.msra.mxu0 %v201
    %237 = vmatprep.subr.mxu0 0.0
    %238 = vmatpush1.msra.mxu0 0.0
    %239 = vmatprep.subr.mxu0 0.0
    %240 = vmatpush1.msra.mxu0 0.0
    %241 = vmatprep.subr.mxu0 0.0
    %242 = vmatpush1.msra.mxu0 0.0
    %243 = vmatprep.subr.mxu0 0.0
    %244 = vmatpush1.msra.mxu0 0.0
    %245 = vmatprep.subr.mxu0 0.0
    %246 = vmatpush1.msra.mxu0 0.0
    %247 = vmatprep.subr.mxu0 0.0
    %248 = vmatpush1.msra.mxu0 0.0
    %249 = vmatprep.subr.mxu0 0.0
    %250 = vmatpush1.msra.mxu0 0.0
    %251 = vmatprep.subr.mxu0 0.0
    %252 = vmatpush1.msra.mxu0 0.0
    %253 = vmatprep.subr.mxu0 0.0
    %254 = vmatpush1.msra.mxu0 0.0
    %255 = vmatprep.subr.mxu0 0.0
    %256 = vmatpush1.msra.mxu0 0.0
    %257 = vmatprep.subr.mxu0 0.0
    %258 = vmatpush1.msra.mxu0 0.0
    %259 = vmatprep.subr.mxu0 0.0
    %260 = vmatpush1.msra.mxu0 0.0
    %261 = vmatprep.subr.mxu0 0.0
    %262 = vmatpush1.msra.mxu0 0.0
    %263 = vmatprep.subr.mxu0 0.0
    %264 = vmatpush1.msra.mxu0 0.0
    %265 = vmatprep.subr.mxu0 0.0
    %266 = vmatpush1.msra.mxu0 0.0
    %267 = vmatprep.subr.mxu0 0.0
    %268 = vmatpush1.msra.mxu0 0.0
    %269 = vmatprep.mubr.f32.mxu0 0.0
    %270 = vmatmul.mubr.f32.gmra.mrb[0].mxu0 %v135
    %v271 = vpop.f32.mrb[0].mxu0
    %v272 = vadd.f32 0.0, %v271
    %v273 = vpop.f32.mrb[0].mxu0
    %v274 = vadd.f32 0.0, %v273
    %275 = vdwg.mxu0
    %276 = vmatprep.subr.mxu0 %v144
    %277 = vmatpush1.msra.mxu0 %v143
    %278 = vmatprep.subr.mxu0 %v148
    %279 = vmatpush1.msra.mxu0 %v147
    %280 = vmatprep.subr.mxu0 %v152
    %281 = vmatpush1.msra.mxu0 %v151
    %282 = vmatprep.subr.mxu0 %v156
    %283 = vmatpush1.msra.mxu0 %v155
    %284 = vmatprep.subr.mxu0 %v160
    %285 = vmatpush1.msra.mxu0 %v159
    %286 = vmatprep.subr.mxu0 %v164
    %287 = vmatpush1.msra.mxu0 %v163
    %288 = vmatprep.subr.mxu0 %v168
    %289 = vmatpush1.msra.mxu0 %v167
    %290 = vmatprep.subr.mxu0 %v172
    %291 = vmatpush1.msra.mxu0 %v171
    %292 = vmatprep.subr.mxu0 %v176
    %293 = vmatpush1.msra.mxu0 %v175
    %294 = vmatprep.subr.mxu0 %v180
    %295 = vmatpush1.msra.mxu0 %v179
    %296 = vmatprep.subr.mxu0 %v184
    %297 = vmatpush1.msra.mxu0 %v183
    %298 = vmatprep.subr.mxu0 %v188
    %299 = vmatpush1.msra.mxu0 %v187
    %300 = vmatprep.subr.mxu0 %v192
    %301 = vmatpush1.msra.mxu0 %v191
    %302 = vmatprep.subr.mxu0 %v196
    %303 = vmatpush1.msra.mxu0 %v195
    %304 = vmatprep.subr.mxu0 %v200
    %305 = vmatpush1.msra.mxu0 %v199
    %306 = vmatprep.subr.mxu0 %v204
    %307 = vmatpush1.msra.mxu0 %v203
    %308 = vmatprep.subr.mxu0 0.0
    %309 = vmatpush1.msra.mxu0 0.0
    %310 = vmatprep.subr.mxu0 0.0
    %311 = vmatpush1.msra.mxu0 0.0
    %312 = vmatprep.subr.mxu0 0.0
    %313 = vmatpush1.msra.mxu0 0.0
    %314 = vmatprep.subr.mxu0 0.0
    %315 = vmatpush1.msra.mxu0 0.0
    %316 = vmatprep.subr.mxu0 0.0
    %317 = vmatpush1.msra.mxu0 0.0
    %318 = vmatprep.subr.mxu0 0.0
    %319 = vmatpush1.msra.mxu0 0.0
    %320 = vmatprep.subr.mxu0 0.0
    %321 = vmatpush1.msra.mxu0 0.0
    %322 = vmatprep.subr.mxu0 0.0
    %323 = vmatpush1.msra.mxu0 0.0
    %324 = vmatprep.subr.mxu0 0.0
    %325 = vmatpush1.msra.mxu0 0.0
    %326 = vmatprep.subr.mxu0 0.0
    %327 = vmatpush1.msra.mxu0 0.0
    %328 = vmatprep.subr.mxu0 0.0
    %329 = vmatpush1.msra.mxu0 0.0
    %330 = vmatprep.subr.mxu0 0.0
    %331 = vmatpush1.msra.mxu0 0.0
    %332 = vmatprep.subr.mxu0 0.0
    %333 = vmatpush1.msra.mxu0 0.0
    %334 = vmatprep.subr.mxu0 0.0
    %335 = vmatpush1.msra.mxu0 0.0
    %336 = vmatprep.subr.mxu0 0.0
    %337 = vmatpush1.msra.mxu0 0.0
    %338 = vmatprep.subr.mxu0 0.0
    %339 = vmatpush1.msra.mxu0 0.0
    %340 = vmatprep.mubr.f32.mxu0 0.0
    %341 = vmatmul.mubr.f32.gmra.mrb[0].mxu0 %v135
    %v342 = vpop.f32.mrb[0].mxu0
    %v343 = vadd.f32 0.0, %v342
    %v344 = vpop.f32.mrb[0].mxu0
    %v345 = vadd.f32 0.0, %v344
    %346 = vdwg.mxu0
    %v351 = vcombine.low %v272, %v274
    %v352 = vcombine.low %v343, %v345
    %v354 = vunpack.c.l.s4 1983009808
    %v355 = vunpack.c.0.s8 %v354
    %v356 = vlaneseq
    %v357 = vshrl.u32 %v356, 7
    %v358 = vsub.s32 %v355, %v357
    %v359 = vrot.slane %v351, %v358
    %v361 = vunpack.c.l.s4 1983009808
    %v362 = vunpack.c.0.s8 %v361
    %v363 = vlaneseq
    %v364 = vshrl.u32 %v363, 7
    %v365 = vsub.s32 %v362, %v364
    %v366 = vrot.slane %v352, %v365
    %v367 = vcombine.low %v359, %v366
    %v369 = vadd.f32 %v140, %v367
    %v370 = vxor.u32 %v369, 2147483648
    %v371 = vmul.f32 %v370, 1.442695
    %v372 = vpow.pop %v371
    %v373 = vadd.f32 %v372, 1.0
    %v374 = vrcp.pop %v373
    %v375 = vmul.f32 1.0, %v374
    %v377 = vrot.slane %v369, 6
    %v379 = vtanh.pop %v377
    %v381 = vrot.slane %v375, 2
    %v383 = vmul.f32 %v381, %v136
    %v384 = vmul.f32 %v375, %v379
    %v385 = vadd.f32 %v383, %v384
    %v386 = vtanh.pop %v385
    %v387 = vrot.slane %v375, 4
    %v389 = vmul.f32 %v387, %v386
    %s390 = scalar_lea.vmem [#allocation11], 28
    %v391 = vld [vmem:[%s390] sm:$0xf]
    %v392 = vunpack.c.l.bf16 %v391
    %v393 = vld [vmem:[#allocation17] sm:$0xff]
    %v394 = vld [vmem:[#allocation17 + $0x8] sm:$0xff]
    %v395 = vld [vmem:[#allocation17 + $0x10] sm:$0xff]
    %v396 = vld [vmem:[#allocation17 + $0x18] sm:$0xff]
    %v397 = vld [vmem:[#allocation17 + $0x20] sm:$0xff]
    %v398 = vld [vmem:[#allocation17 + $0x28] sm:$0xff]
    %v399 = vld [vmem:[#allocation17 + $0x30] sm:$0xff]
    %v400 = vld [vmem:[#allocation17 + $0x38] sm:$0xff]
    %v401 = vld [vmem:[#allocation17 + $0x40] sm:$0xff]
    %v402 = vld [vmem:[#allocation17 + $0x48] sm:$0xff]
    %v403 = vld [vmem:[#allocation17 + $0x50] sm:$0xff]
    %v404 = vld [vmem:[#allocation17 + $0x58] sm:$0xff]
    %v405 = vld [vmem:[#allocation17 + $0x60] sm:$0xff]
    %v406 = vld [vmem:[#allocation17 + $0x68] sm:$0xff]
    %v407 = vld [vmem:[#allocation17 + $0x70] sm:$0xff]
    %v408 = vld [vmem:[#allocation17 + $0x78] sm:$0xff]
    %v409 = vld [vmem:[#allocation17 + $0x80] sm:$0xff]
    %v410 = vld [vmem:[#allocation17 + $0x88] sm:$0xff]
    %v411 = vld [vmem:[#allocation17 + $0x90] sm:$0xff]
    %v412 = vld [vmem:[#allocation17 + $0x98] sm:$0xff]
    %v413 = vld [vmem:[#allocation17 + $0xa0] sm:$0xff]
    %v414 = vld [vmem:[#allocation17 + $0xa8] sm:$0xff]
    %v415 = vld [vmem:[#allocation17 + $0xb0] sm:$0xff]
    %v416 = vld [vmem:[#allocation17 + $0xb8] sm:$0xff]
    %v417 = vld [vmem:[#allocation17 + $0xc0] sm:$0xff]
    %v418 = vld [vmem:[#allocation17 + $0xc8] sm:$0xff]
    %v419 = vld [vmem:[#allocation17 + $0xd0] sm:$0xff]
    %v420 = vld [vmem:[#allocation17 + $0xd8] sm:$0xff]
    %v421 = vld [vmem:[#allocation17 + $0xe0] sm:$0xff]
    %v422 = vld [vmem:[#allocation17 + $0xe8] sm:$0xff]
    %v423 = vld [vmem:[#allocation17 + $0xf0] sm:$0xff]
    %v424 = vld [vmem:[#allocation17 + $0xf8] sm:$0xff]
    %v425 = vld [vmem:[#allocation17 + $0x100] sm:$0xff]
    %v426 = vld [vmem:[#allocation17 + $0x108] sm:$0xff]
    %v427 = vld [vmem:[#allocation17 + $0x110] sm:$0xff]
    %v428 = vld [vmem:[#allocation17 + $0x118] sm:$0xff]
    %v429 = vld [vmem:[#allocation17 + $0x120] sm:$0xff]
    %v430 = vld [vmem:[#allocation17 + $0x128] sm:$0xff]
    %v431 = vld [vmem:[#allocation17 + $0x130] sm:$0xff]
    %v432 = vld [vmem:[#allocation17 + $0x138] sm:$0xff]
    %v433 = vld [vmem:[#allocation17 + $0x140] sm:$0xff]
    %v434 = vld [vmem:[#allocation17 + $0x148] sm:$0xff]
    %v435 = vld [vmem:[#allocation17 + $0x150] sm:$0xff]
    %v436 = vld [vmem:[#allocation17 + $0x158] sm:$0xff]
    %v437 = vld [vmem:[#allocation17 + $0x160] sm:$0xff]
    %v438 = vld [vmem:[#allocation17 + $0x168] sm:$0xff]
    %v439 = vld [vmem:[#allocation17 + $0x170] sm:$0xff]
    %v440 = vld [vmem:[#allocation17 + $0x178] sm:$0xff]
    %v441 = vld [vmem:[#allocation17 + $0x180] sm:$0xff]
    %v442 = vld [vmem:[#allocation17 + $0x188] sm:$0xff]
    %v443 = vld [vmem:[#allocation17 + $0x190] sm:$0xff]
    %v444 = vld [vmem:[#allocation17 + $0x198] sm:$0xff]
    %v445 = vld [vmem:[#allocation17 + $0x1a0] sm:$0xff]
    %v446 = vld [vmem:[#allocation17 + $0x1a8] sm:$0xff]
    %v447 = vld [vmem:[#allocation17 + $0x1b0] sm:$0xff]
    %v448 = vld [vmem:[#allocation17 + $0x1b8] sm:$0xff]
    %v449 = vld [vmem:[#allocation17 + $0x1c0] sm:$0xff]
    %v450 = vld [vmem:[#allocation17 + $0x1c8] sm:$0xff]
    %v451 = vld [vmem:[#allocation17 + $0x1d0] sm:$0xff]
    %v452 = vld [vmem:[#allocation17 + $0x1d8] sm:$0xff]
    %v453 = vld [vmem:[#allocation17 + $0x1e0] sm:$0xff]
    %v454 = vld [vmem:[#allocation17 + $0x1e8] sm:$0xff]
    %v455 = vld [vmem:[#allocation17 + $0x1f0] sm:$0xff]
    %v456 = vld [vmem:[#allocation17 + $0x1f8] sm:$0xff]
    %457 = vmatprep.subr.mxu0 %v394
    %458 = vmatpush1.msra.mxu0 %v393
    %459 = vmatprep.subr.mxu0 %v398
    %460 = vmatpush1.msra.mxu0 %v397
    %461 = vmatprep.subr.mxu0 %v402
    %462 = vmatpush1.msra.mxu0 %v401
    %463 = vmatprep.subr.mxu0 %v406
    %464 = vmatpush1.msra.mxu0 %v405
    %465 = vmatprep.subr.mxu0 %v410
    %466 = vmatpush1.msra.mxu0 %v409
    %467 = vmatprep.subr.mxu0 %v414
    %468 = vmatpush1.msra.mxu0 %v413
    %469 = vmatprep.subr.mxu0 %v418
    %470 = vmatpush1.msra.mxu0 %v417
    %471 = vmatprep.subr.mxu0 %v422
    %472 = vmatpush1.msra.mxu0 %v421
    %473 = vmatprep.subr.mxu0 %v426
    %474 = vmatpush1.msra.mxu0 %v425
    %475 = vmatprep.subr.mxu0 %v430
    %476 = vmatpush1.msra.mxu0 %v429
    %477 = vmatprep.subr.mxu0 %v434
    %478 = vmatpush1.msra.mxu0 %v433
    %479 = vmatprep.subr.mxu0 %v438
    %480 = vmatpush1.msra.mxu0 %v437
    %481 = vmatprep.subr.mxu0 %v442
    %482 = vmatpush1.msra.mxu0 %v441
    %483 = vmatprep.subr.mxu0 %v446
    %484 = vmatpush1.msra.mxu0 %v445
    %485 = vmatprep.subr.mxu0 %v450
    %486 = vmatpush1.msra.mxu0 %v449
    %487 = vmatprep.subr.mxu0 %v454
    %488 = vmatpush1.msra.mxu0 %v453
    %489 = vmatprep.subr.mxu0 0.0
    %490 = vmatpush1.msra.mxu0 0.0
    %491 = vmatprep.subr.mxu0 0.0
    %492 = vmatpush1.msra.mxu0 0.0
    %493 = vmatprep.subr.mxu0 0.0
    %494 = vmatpush1.msra.mxu0 0.0
    %495 = vmatprep.subr.mxu0 0.0
    %496 = vmatpush1.msra.mxu0 0.0
    %497 = vmatprep.subr.mxu0 0.0
    %498 = vmatpush1.msra.mxu0 0.0
    %499 = vmatprep.subr.mxu0 0.0
    %500 = vmatpush1.msra.mxu0 0.0
    %501 = vmatprep.subr.mxu0 0.0
    %502 = vmatpush1.msra.mxu0 0.0
    %503 = vmatprep.subr.mxu0 0.0
    %504 = vmatpush1.msra.mxu0 0.0
    %505 = vmatprep.subr.mxu0 0.0
    %506 = vmatpush1.msra.mxu0 0.0
    %507 = vmatprep.subr.mxu0 0.0
    %508 = vmatpush1.msra.mxu0 0.0
    %509 = vmatprep.subr.mxu0 0.0
    %510 = vmatpush1.msra.mxu0 0.0
    %511 = vmatprep.subr.mxu0 0.0
    %512 = vmatpush1.msra.mxu0 0.0
    %513 = vmatprep.subr.mxu0 0.0
    %514 = vmatpush1.msra.mxu0 0.0
    %515 = vmatprep.subr.mxu0 0.0
    %516 = vmatpush1.msra.mxu0 0.0
    %517 = vmatprep.subr.mxu0 0.0
    %518 = vmatpush1.msra.mxu0 0.0
    %519 = vmatprep.subr.mxu0 0.0
    %520 = vmatpush1.msra.mxu0 0.0
    %521 = vmatprep.mubr.f32.mxu0 0.0
    %522 = vmatmul.mubr.f32.gmra.mrb[0].mxu0 %v137
    %v523 = vpop.f32.mrb[0].mxu0
    %v524 = vadd.f32 0.0, %v523
    %v525 = vpop.f32.mrb[0].mxu0
    %v526 = vadd.f32 0.0, %v525
    %527 = vdwg.mxu0
    %528 = vmatprep.subr.mxu0 %v396
    %529 = vmatpush1.msra.mxu0 %v395
    %530 = vmatprep.subr.mxu0 %v400
    %531 = vmatpush1.msra.mxu0 %v399
    %532 = vmatprep.subr.mxu0 %v404
    %533 = vmatpush1.msra.mxu0 %v403
    %534 = vmatprep.subr.mxu0 %v408
    %535 = vmatpush1.msra.mxu0 %v407
    %536 = vmatprep.subr.mxu0 %v412
    %537 = vmatpush1.msra.mxu0 %v411
    %538 = vmatprep.subr.mxu0 %v416
    %539 = vmatpush1.msra.mxu0 %v415
    %540 = vmatprep.subr.mxu0 %v420
    %541 = vmatpush1.msra.mxu0 %v419
    %542 = vmatprep.subr.mxu0 %v424
    %543 = vmatpush1.msra.mxu0 %v423
    %544 = vmatprep.subr.mxu0 %v428
    %545 = vmatpush1.msra.mxu0 %v427
    %546 = vmatprep.subr.mxu0 %v432
    %547 = vmatpush1.msra.mxu0 %v431
    %548 = vmatprep.subr.mxu0 %v436
    %549 = vmatpush1.msra.mxu0 %v435
    %550 = vmatprep.subr.mxu0 %v440
    %551 = vmatpush1.msra.mxu0 %v439
    %552 = vmatprep.subr.mxu0 %v444
    %553 = vmatpush1.msra.mxu0 %v443
    %554 = vmatprep.subr.mxu0 %v448
    %555 = vmatpush1.msra.mxu0 %v447
    %556 = vmatprep.subr.mxu0 %v452
    %557 = vmatpush1.msra.mxu0 %v451
    %558 = vmatprep.subr.mxu0 %v456
    %559 = vmatpush1.msra.mxu0 %v455
    %560 = vmatprep.subr.mxu0 0.0
    %561 = vmatpush1.msra.mxu0 0.0
    %562 = vmatprep.subr.mxu0 0.0
    %563 = vmatpush1.msra.mxu0 0.0
    %564 = vmatprep.subr.mxu0 0.0
    %565 = vmatpush1.msra.mxu0 0.0
    %566 = vmatprep.subr.mxu0 0.0
    %567 = vmatpush1.msra.mxu0 0.0
    %568 = vmatprep.subr.mxu0 0.0
    %569 = vmatpush1.msra.mxu0 0.0
    %570 = vmatprep.subr.mxu0 0.0
    %571 = vmatpush1.msra.mxu0 0.0
    %572 = vmatprep.subr.mxu0 0.0
    %573 = vmatpush1.msra.mxu0 0.0
    %574 = vmatprep.subr.mxu0 0.0
    %575 = vmatpush1.msra.mxu0 0.0
    %576 = vmatprep.subr.mxu0 0.0
    %577 = vmatpush1.msra.mxu0 0.0
    %578 = vmatprep.subr.mxu0 0.0
    %579 = vmatpush1.msra.mxu0 0.0
    %580 = vmatprep.subr.mxu0 0.0
    %581 = vmatpush1.msra.mxu0 0.0
    %582 = vmatprep.subr.mxu0 0.0
    %583 = vmatpush1.msra.mxu0 0.0
    %584 = vmatprep.subr.mxu0 0.0
    %585 = vmatpush1.msra.mxu0 0.0
    %586 = vmatprep.subr.mxu0 0.0
    %587 = vmatpush1.msra.mxu0 0.0
    %588 = vmatprep.subr.mxu0 0.0
    %589 = vmatpush1.msra.mxu0 0.0
    %590 = vmatprep.subr.mxu0 0.0
    %591 = vmatpush1.msra.mxu0 0.0
    %592 = vmatprep.mubr.f32.mxu0 0.0
    %593 = vmatmul.mubr.f32.gmra.mrb[0].mxu0 %v137
    %v594 = vpop.f32.mrb[0].mxu0
    %v595 = vadd.f32 0.0, %v594
    %v596 = vpop.f32.mrb[0].mxu0
    %v597 = vadd.f32 0.0, %v596
    %598 = vdwg.mxu0
    %v603 = vcombine.low %v524, %v526
    %v604 = vcombine.low %v595, %v597
    %v606 = vunpack.c.l.s4 1983009808
    %v607 = vunpack.c.0.s8 %v606
    %v608 = vlaneseq
    %v609 = vshrl.u32 %v608, 7
    %v610 = vsub.s32 %v607, %v609
    %v611 = vrot.slane %v603, %v610
    %v613 = vunpack.c.l.s4 1983009808
    %v614 = vunpack.c.0.s8 %v613
    %v615 = vlaneseq
    %v616 = vshrl.u32 %v615, 7
    %v617 = vsub.s32 %v614, %v616
    %v618 = vrot.slane %v604, %v617
    %v619 = vcombine.low %v611, %v618
    %v621 = vadd.f32 %v392, %v619
    %v622 = vxor.u32 %v621, 2147483648
    %v623 = vmul.f32 %v622, 1.442695
    %v624 = vpow.pop %v623
    %v625 = vadd.f32 %v624, 1.0
    %v626 = vrcp.pop %v625
    %v627 = vmul.f32 1.0, %v626
    %v629 = vrot.slane %v621, 6
    %v631 = vtanh.pop %v629
    %v633 = vrot.slane %v627, 2
    %v635 = vmul.f32 %v633, %v138
    %v636 = vmul.f32 %v627, %v631
    %v637 = vadd.f32 %v635, %v636
    %v638 = vtanh.pop %v637
    %v639 = vrot.slane %v627, 4
    %v641 = vmul.f32 %v639, %v638
    %642 = vst [vmem:[#allocation2] sm:$0x3] %v389
    %643 = vst [vmem:[#allocation3] sm:$0x3] %v385
    %644 = vst [vmem:[#allocation4] sm:$0x3] %v641
    %645 = vst [vmem:[#allocation5] sm:$0x3] %v637
    %646 = vst [vmem:[#allocation6] sm:$0x3] %v389
    %s647 = scalar_lea.vmem [#allocation7], 14
    %648 = vst [vmem:[%s647] sm:$0x3] %v641
    %v649 = vld [vmem:[#allocation2] sm:$0x3]
    %v650 = vld [vmem:[#allocation3] sm:$0x3]
    %v651 = vld [vmem:[#allocation4] sm:$0x3]
    %v652 = vld [vmem:[#allocation5] sm:$0x3]
    %s653 = scalar_lea.vmem [#allocation8], 4
    %v654 = vld [vmem:[%s653] sm:$0xf]
    %v655 = vunpack.c.l.bf16 %v654
    %v656 = vld [vmem:[#allocation16] sm:$0xff]
    %v657 = vld [vmem:[#allocation16 + $0x8] sm:$0xff]
    %v658 = vld [vmem:[#allocation16 + $0x10] sm:$0xff]
    %v659 = vld [vmem:[#allocation16 + $0x18] sm:$0xff]
    %v660 = vld [vmem:[#allocation16 + $0x20] sm:$0xff]
    %v661 = vld [vmem:[#allocation16 + $0x28] sm:$0xff]
    %v662 = vld [vmem:[#allocation16 + $0x30] sm:$0xff]
    %v663 = vld [vmem:[#allocation16 + $0x38] sm:$0xff]
    %v664 = vld [vmem:[#allocation16 + $0x40] sm:$0xff]
    %v665 = vld [vmem:[#allocation16 + $0x48] sm:$0xff]
    %v666 = vld [vmem:[#allocation16 + $0x50] sm:$0xff]
    %v667 = vld [vmem:[#allocation16 + $0x58] sm:$0xff]
    %v668 = vld [vmem:[#allocation16 + $0x60] sm:$0xff]
    %v669 = vld [vmem:[#allocation16 + $0x68] sm:$0xff]
    %v670 = vld [vmem:[#allocation16 + $0x70] sm:$0xff]
    %v671 = vld [vmem:[#allocation16 + $0x78] sm:$0xff]
    %v672 = vld [vmem:[#allocation16 + $0x80] sm:$0xff]
    %v673 = vld [vmem:[#allocation16 + $0x88] sm:$0xff]
    %v674 = vld [vmem:[#allocation16 + $0x90] sm:$0xff]
    %v675 = vld [vmem:[#allocation16 + $0x98] sm:$0xff]
    %v676 = vld [vmem:[#allocation16 + $0xa0] sm:$0xff]
    %v677 = vld [vmem:[#allocation16 + $0xa8] sm:$0xff]
    %v678 = vld [vmem:[#allocation16 + $0xb0] sm:$0xff]
    %v679 = vld [vmem:[#allocation16 + $0xb8] sm:$0xff]
    %v680 = vld [vmem:[#allocation16 + $0xc0] sm:$0xff]
    %v681 = vld [vmem:[#allocation16 + $0xc8] sm:$0xff]
    %v682 = vld [vmem:[#allocation16 + $0xd0] sm:$0xff]
    %v683 = vld [vmem:[#allocation16 + $0xd8] sm:$0xff]
    %v684 = vld [vmem:[#allocation16 + $0xe0] sm:$0xff]
    %v685 = vld [vmem:[#allocation16 + $0xe8] sm:$0xff]
    %v686 = vld [vmem:[#allocation16 + $0xf0] sm:$0xff]
    %v687 = vld [vmem:[#allocation16 + $0xf8] sm:$0xff]
    %v688 = vld [vmem:[#allocation16 + $0x100] sm:$0xff]
    %v689 = vld [vmem:[#allocation16 + $0x108] sm:$0xff]
    %v690 = vld [vmem:[#allocation16 + $0x110] sm:$0xff]
    %v691 = vld [vmem:[#allocation16 + $0x118] sm:$0xff]
    %v692 = vld [vmem:[#allocation16 + $0x120] sm:$0xff]
    %v693 = vld [vmem:[#allocation16 + $0x128] sm:$0xff]
    %v694 = vld [vmem:[#allocation16 + $0x130] sm:$0xff]
    %v695 = vld [vmem:[#allocation16 + $0x138] sm:$0xff]
    %v696 = vld [vmem:[#allocation16 + $0x140] sm:$0xff]
    %v697 = vld [vmem:[#allocation16 + $0x148] sm:$0xff]
    %v698 = vld [vmem:[#allocation16 + $0x150] sm:$0xff]
    %v699 = vld [vmem:[#allocation16 + $0x158] sm:$0xff]
    %v700 = vld [vmem:[#allocation16 + $0x160] sm:$0xff]
    %v701 = vld [vmem:[#allocation16 + $0x168] sm:$0xff]
    %v702 = vld [vmem:[#allocation16 + $0x170] sm:$0xff]
    %v703 = vld [vmem:[#allocation16 + $0x178] sm:$0xff]
    %v704 = vld [vmem:[#allocation16 + $0x180] sm:$0xff]
    %v705 = vld [vmem:[#allocation16 + $0x188] sm:$0xff]
    %v706 = vld [vmem:[#allocation16 + $0x190] sm:$0xff]
    %v707 = vld [vmem:[#allocation16 + $0x198] sm:$0xff]
    %v708 = vld [vmem:[#allocation16 + $0x1a0] sm:$0xff]
    %v709 = vld [vmem:[#allocation16 + $0x1a8] sm:$0xff]
    %v710 = vld [vmem:[#allocation16 + $0x1b0] sm:$0xff]
    %v711 = vld [vmem:[#allocation16 + $0x1b8] sm:$0xff]
    %v712 = vld [vmem:[#allocation16 + $0x1c0] sm:$0xff]
    %v713 = vld [vmem:[#allocation16 + $0x1c8] sm:$0xff]
    %v714 = vld [vmem:[#allocation16 + $0x1d0] sm:$0xff]
    %v715 = vld [vmem:[#allocation16 + $0x1d8] sm:$0xff]
    %v716 = vld [vmem:[#allocation16 + $0x1e0] sm:$0xff]
    %v717 = vld [vmem:[#allocation16 + $0x1e8] sm:$0xff]
    %v718 = vld [vmem:[#allocation16 + $0x1f0] sm:$0xff]
    %v719 = vld [vmem:[#allocation16 + $0x1f8] sm:$0xff]
    %720 = vmatprep.subr.mxu0 %v657
    %721 = vmatpush1.msra.mxu0 %v656
    %722 = vmatprep.subr.mxu0 %v661
    %723 = vmatpush1.msra.mxu0 %v660
    %724 = vmatprep.subr.mxu0 %v665
    %725 = vmatpush1.msra.mxu0 %v664
    %726 = vmatprep.subr.mxu0 %v669
    %727 = vmatpush1.msra.mxu0 %v668
    %728 = vmatprep.subr.mxu0 %v673
    %729 = vmatpush1.msra.mxu0 %v672
    %730 = vmatprep.subr.mxu0 %v677
    %731 = vmatpush1.msra.mxu0 %v676
    %732 = vmatprep.subr.mxu0 %v681
    %733 = vmatpush1.msra.mxu0 %v680
    %734 = vmatprep.subr.mxu0 %v685
    %735 = vmatpush1.msra.mxu0 %v684
    %736 = vmatprep.subr.mxu0 %v689
    %737 = vmatpush1.msra.mxu0 %v688
    %738 = vmatprep.subr.mxu0 %v693
    %739 = vmatpush1.msra.mxu0 %v692
    %740 = vmatprep.subr.mxu0 %v697
    %741 = vmatpush1.msra.mxu0 %v696
    %742 = vmatprep.subr.mxu0 %v701
    %743 = vmatpush1.msra.mxu0 %v700
    %744 = vmatprep.subr.mxu0 %v705
    %745 = vmatpush1.msra.mxu0 %v704
    %746 = vmatprep.subr.mxu0 %v709
    %747 = vmatpush1.msra.mxu0 %v708
    %748 = vmatprep.subr.mxu0 %v713
    %749 = vmatpush1.msra.mxu0 %v712
    %750 = vmatprep.subr.mxu0 %v717
    %751 = vmatpush1.msra.mxu0 %v716
    %752 = vmatprep.subr.mxu0 0.0
    %753 = vmatpush1.msra.mxu0 0.0
    %754 = vmatprep.subr.mxu0 0.0
    %755 = vmatpush1.msra.mxu0 0.0
    %756 = vmatprep.subr.mxu0 0.0
    %757 = vmatpush1.msra.mxu0 0.0
    %758 = vmatprep.subr.mxu0 0.0
    %759 = vmatpush1.msra.mxu0 0.0
    %760 = vmatprep.subr.mxu0 0.0
    %761 = vmatpush1.msra.mxu0 0.0
    %762 = vmatprep.subr.mxu0 0.0
    %763 = vmatpush1.msra.mxu0 0.0
    %764 = vmatprep.subr.mxu0 0.0
    %765 = vmatpush1.msra.mxu0 0.0
    %766 = vmatprep.subr.mxu0 0.0
    %767 = vmatpush1.msra.mxu0 0.0
    %768 = vmatprep.subr.mxu0 0.0
    %769 = vmatpush1.msra.mxu0 0.0
    %770 = vmatprep.subr.mxu0 0.0
    %771 = vmatpush1.msra.mxu0 0.0
    %772 = vmatprep.subr.mxu0 0.0
    %773 = vmatpush1.msra.mxu0 0.0
    %774 = vmatprep.subr.mxu0 0.0
    %775 = vmatpush1.msra.mxu0 0.0
    %776 = vmatprep.subr.mxu0 0.0
    %777 = vmatpush1.msra.mxu0 0.0
    %778 = vmatprep.subr.mxu0 0.0
    %779 = vmatpush1.msra.mxu0 0.0
    %780 = vmatprep.subr.mxu0 0.0
    %781 = vmatpush1.msra.mxu0 0.0
    %782 = vmatprep.subr.mxu0 0.0
    %783 = vmatpush1.msra.mxu0 0.0
    %784 = vmatprep.mubr.f32.mxu0 0.0
    %785 = vmatmul.mubr.f32.gmra.mrb[0].mxu0 %v649
    %v786 = vpop.f32.mrb[0].mxu0
    %v787 = vadd.f32 0.0, %v786
    %v788 = vpop.f32.mrb[0].mxu0
    %v789 = vadd.f32 0.0, %v788
    %790 = vdwg.mxu0
    %791 = vmatprep.subr.mxu0 %v659
    %792 = vmatpush1.msra.mxu0 %v658
    %793 = vmatprep.subr.mxu0 %v663
    %794 = vmatpush1.msra.mxu0 %v662
    %795 = vmatprep.subr.mxu0 %v667
    %796 = vmatpush1.msra.mxu0 %v666
    %797 = vmatprep.subr.mxu0 %v671
    %798 = vmatpush1.msra.mxu0 %v670
    %799 = vmatprep.subr.mxu0 %v675
    %800 = vmatpush1.msra.mxu0 %v674
    %801 = vmatprep.subr.mxu0 %v679
    %802 = vmatpush1.msra.mxu0 %v678
    %803 = vmatprep.subr.mxu0 %v683
    %804 = vmatpush1.msra.mxu0 %v682
    %805 = vmatprep.subr.mxu0 %v687
    %806 = vmatpush1.msra.mxu0 %v686
    %807 = vmatprep.subr.mxu0 %v691
    %808 = vmatpush1.msra.mxu0 %v690
    %809 = vmatprep.subr.mxu0 %v695
    %810 = vmatpush1.msra.mxu0 %v694
    %811 = vmatprep.subr.mxu0 %v699
    %812 = vmatpush1.msra.mxu0 %v698
    %813 = vmatprep.subr.mxu0 %v703
    %814 = vmatpush1.msra.mxu0 %v702
    %815 = vmatprep.subr.mxu0 %v707
    %816 = vmatpush1.msra.mxu0 %v706
    %817 = vmatprep.subr.mxu0 %v711
    %818 = vmatpush1.msra.mxu0 %v710
    %819 = vmatprep.subr.mxu0 %v715
    %820 = vmatpush1.msra.mxu0 %v714
    %821 = vmatprep.subr.mxu0 %v719
    %822 = vmatpush1.msra.mxu0 %v718
    %823 = vmatprep.subr.mxu0 0.0
    %824 = vmatpush1.msra.mxu0 0.0
    %825 = vmatprep.subr.mxu0 0.0
    %826 = vmatpush1.msra.mxu0 0.0
    %827 = vmatprep.subr.mxu0 0.0
    %828 = vmatpush1.msra.mxu0 0.0
    %829 = vmatprep.subr.mxu0 0.0
    %830 = vmatpush1.msra.mxu0 0.0
    %831 = vmatprep.subr.mxu0 0.0
    %832 = vmatpush1.msra.mxu0 0.0
    %833 = vmatprep.subr.mxu0 0.0
    %834 = vmatpush1.msra.mxu0 0.0
    %835 = vmatprep.subr.mxu0 0.0
    %836 = vmatpush1.msra.mxu0 0.0
    %837 = vmatprep.subr.mxu0 0.0
    %838 = vmatpush1.msra.mxu0 0.0
    %839 = vmatprep.subr.mxu0 0.0
    %840 = vmatpush1.msra.mxu0 0.0
    %841 = vmatprep.subr.mxu0 0.0
    %842 = vmatpush1.msra.mxu0 0.0
    %843 = vmatprep.subr.mxu0 0.0
    %844 = vmatpush1.msra.mxu0 0.0
    %845 = vmatprep.subr.mxu0 0.0
    %846 = vmatpush1.msra.mxu0 0.0
    %847 = vmatprep.subr.mxu0 0.0
    %848 = vmatpush1.msra.mxu0 0.0
    %849 = vmatprep.subr.mxu0 0.0
    %850 = vmatpush1.msra.mxu0 0.0
    %851 = vmatprep.subr.mxu0 0.0
    %852 = vmatpush1.msra.mxu0 0.0
    %853 = vmatprep.subr.mxu0 0.0
    %854 = vmatpush1.msra.mxu0 0.0
    %855 = vmatprep.mubr.f32.mxu0 0.0
    %856 = vmatmul.mubr.f32.gmra.mrb[0].mxu0 %v649
    %v857 = vpop.f32.mrb[0].mxu0
    %v858 = vadd.f32 0.0, %v857
    %v859 = vpop.f32.mrb[0].mxu0
    %v860 = vadd.f32 0.0, %v859
    %861 = vdwg.mxu0
    %v866 = vcombine.low %v787, %v789
    %v867 = vcombine.low %v858, %v860
    %v869 = vunpack.c.l.s4 1983009808
    %v870 = vunpack.c.0.s8 %v869
    %v871 = vlaneseq
    %v872 = vshrl.u32 %v871, 7
    %v873 = vsub.s32 %v870, %v872
    %v874 = vrot.slane %v866, %v873
    %v876 = vunpack.c.l.s4 1983009808
    %v877 = vunpack.c.0.s8 %v876
    %v878 = vlaneseq
    %v879 = vshrl.u32 %v878, 7
    %v880 = vsub.s32 %v877, %v879
    %v881 = vrot.slane %v867, %v880
    %v882 = vcombine.low %v874, %v881
    %v884 = vadd.f32 %v655, %v882
    %v885 = vxor.u32 %v884, 2147483648
    %v886 = vmul.f32 %v885, 1.442695
    %v887 = vpow.pop %v886
    %v888 = vadd.f32 %v887, 1.0
    %v889 = vrcp.pop %v888
    %v890 = vmul.f32 1.0, %v889
    %v892 = vrot.slane %v884, 6
    %v894 = vtanh.pop %v892
    %v896 = vrot.slane %v890, 2
    %v898 = vmul.f32 %v896, %v650
    %v899 = vmul.f32 %v890, %v894
    %v900 = vadd.f32 %v898, %v899
    %v901 = vtanh.pop %v900
    %v902 = vrot.slane %v890, 4
    %v904 = vmul.f32 %v902, %v901
    %s905 = scalar_lea.vmem [#allocation11], 24
    %v906 = vld [vmem:[%s905] sm:$0xf]
    %v907 = vunpack.c.l.bf16 %v906
    %v908 = vld [vmem:[#allocation17] sm:$0xff]
    %v909 = vld [vmem:[#allocation17 + $0x8] sm:$0xff]
    %v910 = vld [vmem:[#allocation17 + $0x10] sm:$0xff]
    %v911 = vld [vmem:[#allocation17 + $0x18] sm:$0xff]
    %v912 = vld [vmem:[#allocation17 + $0x20] sm:$0xff]
    %v913 = vld [vmem:[#allocation17 + $0x28] sm:$0xff]
    %v914 = vld [vmem:[#allocation17 + $0x30] sm:$0xff]
    %v915 = vld [vmem:[#allocation17 + $0x38] sm:$0xff]
    %v916 = vld [vmem:[#allocation17 + $0x40] sm:$0xff]
    %v917 = vld [vmem:[#allocation17 + $0x48] sm:$0xff]
    %v918 = vld [vmem:[#allocation17 + $0x50] sm:$0xff]
    %v919 = vld [vmem:[#allocation17 + $0x58] sm:$0xff]
    %v920 = vld [vmem:[#allocation17 + $0x60] sm:$0xff]
    %v921 = vld [vmem:[#allocation17 + $0x68] sm:$0xff]
    %v922 = vld [vmem:[#allocation17 + $0x70] sm:$0xff]
    %v923 = vld [vmem:[#allocation17 + $0x78] sm:$0xff]
    %v924 = vld [vmem:[#allocation17 + $0x80] sm:$0xff]
    %v925 = vld [vmem:[#allocation17 + $0x88] sm:$0xff]
    %v926 = vld [vmem:[#allocation17 + $0x90] sm:$0xff]
    %v927 = vld [vmem:[#allocation17 + $0x98] sm:$0xff]
    %v928 = vld [vmem:[#allocation17 + $0xa0] sm:$0xff]
    %v929 = vld [vmem:[#allocation17 + $0xa8] sm:$0xff]
    %v930 = vld [vmem:[#allocation17 + $0xb0] sm:$0xff]
    %v931 = vld [vmem:[#allocation17 + $0xb8] sm:$0xff]
    %v932 = vld [vmem:[#allocation17 + $0xc0] sm:$0xff]
    %v933 = vld [vmem:[#allocation17 + $0xc8] sm:$0xff]
    %v934 = vld [vmem:[#allocation17 + $0xd0] sm:$0xff]
    %v935 = vld [vmem:[#allocation17 + $0xd8] sm:$0xff]
    %v936 = vld [vmem:[#allocation17 + $0xe0] sm:$0xff]
    %v937 = vld [vmem:[#allocation17 + $0xe8] sm:$0xff]
    %v938 = vld [vmem:[#allocation17 + $0xf0] sm:$0xff]
    %v939 = vld [vmem:[#allocation17 + $0xf8] sm:$0xff]
    %v940 = vld [vmem:[#allocation17 + $0x100] sm:$0xff]
    %v941 = vld [vmem:[#allocation17 + $0x108] sm:$0xff]
    %v942 = vld [vmem:[#allocation17 + $0x110] sm:$0xff]
    %v943 = vld [vmem:[#allocation17 + $0x118] sm:$0xff]
    %v944 = vld [vmem:[#allocation17 + $0x120] sm:$0xff]
    %v945 = vld [vmem:[#allocation17 + $0x128] sm:$0xff]
    %v946 = vld [vmem:[#allocation17 + $0x130] sm:$0xff]
    %v947 = vld [vmem:[#allocation17 + $0x138] sm:$0xff]
    %v948 = vld [vmem:[#allocation17 + $0x140] sm:$0xff]
    %v949 = vld [vmem:[#allocation17 + $0x148] sm:$0xff]
    %v950 = vld [vmem:[#allocation17 + $0x150] sm:$0xff]
    %v951 = vld [vmem:[#allocation17 + $0x158] sm:$0xff]
    %v952 = vld [vmem:[#allocation17 + $0x160] sm:$0xff]
    %v953 = vld [vmem:[#allocation17 + $0x168] sm:$0xff]
    %v954 = vld [vmem:[#allocation17 + $0x170] sm:$0xff]
    %v955 = vld [vmem:[#allocation17 + $0x178] sm:$0xff]
    %v956 = vld [vmem:[#allocation17 + $0x180] sm:$0xff]
    %v957 = vld [vmem:[#allocation17 + $0x188] sm:$0xff]
    %v958 = vld [vmem:[#allocation17 + $0x190] sm:$0xff]
    %v959 = vld [vmem:[#allocation17 + $0x198] sm:$0xff]
    %v960 = vld [vmem:[#allocation17 + $0x1a0] sm:$0xff]
    %v961 = vld [vmem:[#allocation17 + $0x1a8] sm:$0xff]
    %v962 = vld [vmem:[#allocation17 + $0x1b0] sm:$0xff]
    %v963 = vld [vmem:[#allocation17 + $0x1b8] sm:$0xff]
    %v964 = vld [vmem:[#allocation17 + $0x1c0] sm:$0xff]
    %v965 = vld [vmem:[#allocation17 + $0x1c8] sm:$0xff]
    %v966 = vld [vmem:[#allocation17 + $0x1d0] sm:$0xff]
    %v967 = vld [vmem:[#allocation17 + $0x1d8] sm:$0xff]
    %v968 = vld [vmem:[#allocation17 + $0x1e0] sm:$0xff]
    %v969 = vld [vmem:[#allocation17 + $0x1e8] sm:$0xff]
    %v970 = vld [vmem:[#allocation17 + $0x1f0] sm:$0xff]
    %v971 = vld [vmem:[#allocation17 + $0x1f8] sm:$0xff]
    %972 = vmatprep.subr.mxu0 %v909
    %973 = vmatpush1.msra.mxu0 %v908
    %974 = vmatprep.subr.mxu0 %v913
    %975 = vmatpush1.msra.mxu0 %v912
    %976 = vmatprep.subr.mxu0 %v917
    %977 = vmatpush1.msra.mxu0 %v916
    %978 = vmatprep.subr.mxu0 %v921
    %979 = vmatpush1.msra.mxu0 %v920
    %980 = vmatprep.subr.mxu0 %v925
    %981 = vmatpush1.msra.mxu0 %v924
    %982 = vmatprep.subr.mxu0 %v929
    %983 = vmatpush1.msra.mxu0 %v928
    %984 = vmatprep.subr.mxu0 %v933
    %985 = vmatpush1.msra.mxu0 %v932
    %986 = vmatprep.subr.mxu0 %v937
    %987 = vmatpush1.msra.mxu0 %v936
    %988 = vmatprep.subr.mxu0 %v941
    %989 = vmatpush1.msra.mxu0 %v940
    %990 = vmatprep.subr.mxu0 %v945
    %991 = vmatpush1.msra.mxu0 %v944
    %992 = vmatprep.subr.mxu0 %v949
    %993 = vmatpush1.msra.mxu0 %v948
    %994 = vmatprep.subr.mxu0 %v953
    %995 = vmatpush1.msra.mxu0 %v952
    %996 = vmatprep.subr.mxu0 %v957
    %997 = vmatpush1.msra.mxu0 %v956
    %998 = vmatprep.subr.mxu0 %v961
    %999 = vmatpush1.msra.mxu0 %v960
    %1000 = vmatprep.subr.mxu0 %v965
    %1001 = vmatpush1.msra.mxu0 %v964
    %1002 = vmatprep.subr.mxu0 %v969
    %1003 = vmatpush1.msra.mxu0 %v968
    %1004 = vmatprep.subr.mxu0 0.0
    %1005 = vmatpush1.msra.mxu0 0.0
    %1006 = vmatprep.subr.mxu0 0.0
    %1007 = vmatpush1.msra.mxu0 0.0
    %1008 = vmatprep.subr.mxu0 0.0
    %1009 = vmatpush1.msra.mxu0 0.0
    %1010 = vmatprep.subr.mxu0 0.0
    %1011 = vmatpush1.msra.mxu0 0.0
    %1012 = vmatprep.subr.mxu0 0.0
    %1013 = vmatpush1.msra.mxu0 0.0
    %1014 = vmatprep.subr.mxu0 0.0
    %1015 = vmatpush1.msra.mxu0 0.0
    %1016 = vmatprep.subr.mxu0 0.0
    %1017 = vmatpush1.msra.mxu0 0.0
    %1018 = vmatprep.subr.mxu0 0.0
    %1019 = vmatpush1.msra.mxu0 0.0
    %1020 = vmatprep.subr.mxu0 0.0
    %1021 = vmatpush1.msra.mxu0 0.0
    %1022 = vmatprep.subr.mxu0 0.0
    %1023 = vmatpush1.msra.mxu0 0.0
    %1024 = vmatprep.subr.mxu0 0.0
    %1025 = vmatpush1.msra.mxu0 0.0
    %1026 = vmatprep.subr.mxu0 0.0
    %1027 = vmatpush1.msra.mxu0 0.0
    %1028 = vmatprep.subr.mxu0 0.0
    %1029 = vmatpush1.msra.mxu0 0.0
    %1030 = vmatprep.subr.mxu0 0.0
    %1031 = vmatpush1.msra.mxu0 0.0
    %1032 = vmatprep.subr.mxu0 0.0
    %1033 = vmatpush1.msra.mxu0 0.0
    %1034 = vmatprep.subr.mxu0 0.0
    %1035 = vmatpush1.msra.mxu0 0.0
    %1036 = vmatprep.mubr.f32.mxu0 0.0
    %1037 = vmatmul.mubr.f32.gmra.mrb[0].mxu0 %v651
    %v1038 = vpop.f32.mrb[0].mxu0
    %v1039 = vadd.f32 0.0, %v1038
    %v1040 = vpop.f32.mrb[0].mxu0
    %v1041 = vadd.f32 0.0, %v1040
    %1042 = vdwg.mxu0
    %1043 = vmatprep.subr.mxu0 %v911
    %1044 = vmatpush1.msra.mxu0 %v910
    %1045 = vmatprep.subr.mxu0 %v915
    %1046 = vmatpush1.msra.mxu0 %v914
    %1047 = vmatprep.subr.mxu0 %v919
    %1048 = vmatpush1.msra.mxu0 %v918
    %1049 = vmatprep.subr.mxu0 %v923
    %1050 = vmatpush1.msra.mxu0 %v922
    %1051 = vmatprep.subr.mxu0 %v927
    %1052 = vmatpush1.msra.mxu0 %v926
    %1053 = vmatprep.subr.mxu0 %v931
    %1054 = vmatpush1.msra.mxu0 %v930
    %1055 = vmatprep.subr.mxu0 %v935
    %1056 = vmatpush1.msra.mxu0 %v934
    %1057 = vmatprep.subr.mxu0 %v939
    %1058 = vmatpush1.msra.mxu0 %v938
    %1059 = vmatprep.subr.mxu0 %v943
    %1060 = vmatpush1.msra.mxu0 %v942
    %1061 = vmatprep.subr.mxu0 %v947
    %1062 = vmatpush1.msra.mxu0 %v946
    %1063 = vmatprep.subr.mxu0 %v951
    %1064 = vmatpush1.msra.mxu0 %v950
    %1065 = vmatprep.subr.mxu0 %v955
    %1066 = vmatpush1.msra.mxu0 %v954
    %1067 = vmatprep.subr.mxu0 %v959
    %1068 = vmatpush1.msra.mxu0 %v958
    %1069 = vmatprep.subr.mxu0 %v963
    %1070 = vmatpush1.msra.mxu0 %v962
    %1071 = vmatprep.subr.mxu0 %v967
    %1072 = vmatpush1.msra.mxu0 %v966
    %1073 = vmatprep.subr.mxu0 %v971
    %1074 = vmatpush1.msra.mxu0 %v970
    %1075 = vmatprep.subr.mxu0 0.0
    %1076 = vmatpush1.msra.mxu0 0.0
    %1077 = vmatprep.subr.mxu0 0.0
    %1078 = vmatpush1.msra.mxu0 0.0
    %1079 = vmatprep.subr.mxu0 0.0
    %1080 = vmatpush1.msra.mxu0 0.0
    %1081 = vmatprep.subr.mxu0 0.0
    %1082 = vmatpush1.msra.mxu0 0.0
    %1083 = vmatprep.subr.mxu0 0.0
    %1084 = vmatpush1.msra.mxu0 0.0
    %1085 = vmatprep.subr.mxu0 0.0
    %1086 = vmatpush1.msra.mxu0 0.0
    %1087 = vmatprep.subr.mxu0 0.0
    %1088 = vmatpush1.msra.mxu0 0.0
    %1089 = vmatprep.subr.mxu0 0.0
    %1090 = vmatpush1.msra.mxu0 0.0
    %1091 = vmatprep.subr.mxu0 0.0
    %1092 = vmatpush1.msra.mxu0 0.0
    %1093 = vmatprep.subr.mxu0 0.0
    %1094 = vmatpush1.msra.mxu0 0.0
    %1095 = vmatprep.subr.mxu0 0.0
    %1096 = vmatpush1.msra.mxu0 0.0
    %1097 = vmatprep.subr.mxu0 0.0
    %1098 = vmatpush1.msra.mxu0 0.0
    %1099 = vmatprep.subr.mxu0 0.0
    %1100 = vmatpush1.msra.mxu0 0.0
    %1101 = vmatprep.subr.mxu0 0.0
    %1102 = vmatpush1.msra.mxu0 0.0
    %1103 = vmatprep.subr.mxu0 0.0
    %1104 = vmatpush1.msra.mxu0 0.0
    %1105 = vmatprep.subr.mxu0 0.0
    %1106 = vmatpush1.msra.mxu0 0.0
    %1107 = vmatprep.mubr.f32.mxu0 0.0
    %1108 = vmatmul.mubr.f32.gmra.mrb[0].mxu0 %v651
    %v1109 = vpop.f32.mrb[0].mxu0
    %v1110 = vadd.f32 0.0, %v1109
    %v1111 = vpop.f32.mrb[0].mxu0
    %v1112 = vadd.f32 0.0, %v1111
    %1113 = vdwg.mxu0
    %v1118 = vcombine.low %v1039, %v1041
    %v1119 = vcombine.low %v1110, %v1112
    %v1121 = vunpack.c.l.s4 1983009808
    %v1122 = vunpack.c.0.s8 %v1121
    %v1123 = vlaneseq
    %v1124 = vshrl.u32 %v1123, 7
    %v1125 = vsub.s32 %v1122, %v1124
    %v1126 = vrot.slane %v1118, %v1125
    %v1128 = vunpack.c.l.s4 1983009808
    %v1129 = vunpack.c.0.s8 %v1128
    %v1130 = vlaneseq
    %v1131 = vshrl.u32 %v1130, 7
    %v1132 = vsub.s32 %v1129, %v1131
    %v1133 = vrot.slane %v1119, %v1132
    %v1134 = vcombine.low %v1126, %v1133
    %v1136 = vadd.f32 %v907, %v1134
    %v1137 = vxor.u32 %v1136, 2147483648
    %v1138 = vmul.f32 %v1137, 1.442695
    %v1139 = vpow.pop %v1138
    %v1140 = vadd.f32 %v1139, 1.0
    %v1141 = vrcp.pop %v1140
    %v1142 = vmul.f32 1.0, %v1141
    %v1144 = vrot.slane %v1136, 6
    %v1146 = vtanh.pop %v1144
    %v1148 = vrot.slane %v1142, 2
    %v1150 = vmul.f32 %v1148, %v652
    %v1151 = vmul.f32 %v1142, %v1146
    %v1152 = vadd.f32 %v1150, %v1151
    %v1153 = vtanh.pop %v1152
    %v1154 = vrot.slane %v1142, 4
    %v1156 = vmul.f32 %v1154, %v1153
    %1157 = vst [vmem:[#allocation2] sm:$0x3] %v904
    %1158 = vst [vmem:[#allocation3] sm:$0x3] %v900
    %1159 = vst [vmem:[#allocation4] sm:$0x3] %v1156
    %1160 = vst [vmem:[#allocation5] sm:$0x3] %v1152
    %s1161 = scalar_lea.vmem [#allocation6], 2
    %1162 = vst [vmem:[%s1161] sm:$0x3] %v904
    %s1163 = scalar_lea.vmem [#allocation7], 12
    %1164 = vst [vmem:[%s1163] sm:$0x3] %v1156
    %v1165 = vld [vmem:[#allocation2] sm:$0x3]
    %v1166 = vld [vmem:[#allocation3] sm:$0x3]
    %v1167 = vld [vmem:[#allocation4] sm:$0x3]
    %v1168 = vld [vmem:[#allocation5] sm:$0x3]
    %s1169 = scalar_lea.vmem [#allocation8], 8
    %v1170 = vld [vmem:[%s1169] sm:$0xf]
    %v1171 = vunpack.c.l.bf16 %v1170
    %v1172 = vld [vmem:[#allocation16] sm:$0xff]
    %v1173 = vld [vmem:[#allocation16 + $0x8] sm:$0xff]
    %v1174 = vld [vmem:[#allocation16 + $0x10] sm:$0xff]
    %v1175 = vld [vmem:[#allocation16 + $0x18] sm:$0xff]
    %v1176 = vld [vmem:[#allocation16 + $0x20] sm:$0xff]
    %v1177 = vld [vmem:[#allocation16 + $0x28] sm:$0xff]
    %v1178 = vld [vmem:[#allocation16 + $0x30] sm:$0xff]
    %v1179 = vld [vmem:[#allocation16 + $0x38] sm:$0xff]
    %v1180 = vld [vmem:[#allocation16 + $0x40] sm:$0xff]
    %v1181 = vld [vmem:[#allocation16 + $0x48] sm:$0xff]
    %v1182 = vld [vmem:[#allocation16 + $0x50] sm:$0xff]
    %v1183 = vld [vmem:[#allocation16 + $0x58] sm:$0xff]
    %v1184 = vld [vmem:[#allocation16 + $0x60] sm:$0xff]
    %v1185 = vld [vmem:[#allocation16 + $0x68] sm:$0xff]
    %v1186 = vld [vmem:[#allocation16 + $0x70] sm:$0xff]
    %v1187 = vld [vmem:[#allocation16 + $0x78] sm:$0xff]
    %v1188 = vld [vmem:[#allocation16 + $0x80] sm:$0xff]
    %v1189 = vld [vmem:[#allocation16 + $0x88] sm:$0xff]
    %v1190 = vld [vmem:[#allocation16 + $0x90] sm:$0xff]
    %v1191 = vld [vmem:[#allocation16 + $0x98] sm:$0xff]
    %v1192 = vld [vmem:[#allocation16 + $0xa0] sm:$0xff]
    %v1193 = vld [vmem:[#allocation16 + $0xa8] sm:$0xff]
    %v1194 = vld [vmem:[#allocation16 + $0xb0] sm:$0xff]
    %v1195 = vld [vmem:[#allocation16 + $0xb8] sm:$0xff]
    %v1196 = vld [vmem:[#allocation16 + $0xc0] sm:$0xff]
    %v1197 = vld [vmem:[#allocation16 + $0xc8] sm:$0xff]
    %v1198 = vld [vmem:[#allocation16 + $0xd0] sm:$0xff]
    %v1199 = vld [vmem:[#allocation16 + $0xd8] sm:$0xff]
    %v1200 = vld [vmem:[#allocation16 + $0xe0] sm:$0xff]
    %v1201 = vld [vmem:[#allocation16 + $0xe8] sm:$0xff]
    %v1202 = vld [vmem:[#allocation16 + $0xf0] sm:$0xff]
    %v1203 = vld [vmem:[#allocation16 + $0xf8] sm:$0xff]
    %v1204 = vld [vmem:[#allocation16 + $0x100] sm:$0xff]
    %v1205 = vld [vmem:[#allocation16 + $0x108] sm:$0xff]
    %v1206 = vld [vmem:[#allocation16 + $0x110] sm:$0xff]
    %v1207 = vld [vmem:[#allocation16 + $0x118] sm:$0xff]
    %v1208 = vld [vmem:[#allocation16 + $0x120] sm:$0xff]
    %v1209 = vld [vmem:[#allocation16 + $0x128] sm:$0xff]
    %v1210 = vld [vmem:[#allocation16 + $0x130] sm:$0xff]
    %v1211 = vld [vmem:[#allocation16 + $0x138] sm:$0xff]
    %v1212 = vld [vmem:[#allocation16 + $0x140] sm:$0xff]
    %v1213 = vld [vmem:[#allocation16 + $0x148] sm:$0xff]
    %v1214 = vld [vmem:[#allocation16 + $0x150] sm:$0xff]
    %v1215 = vld [vmem:[#allocation16 + $0x158] sm:$0xff]
    %v1216 = vld [vmem:[#allocation16 + $0x160] sm:$0xff]
    %v1217 = vld [vmem:[#allocation16 + $0x168] sm:$0xff]
    %v1218 = vld [vmem:[#allocation16 + $0x170] sm:$0xff]
    %v1219 = vld [vmem:[#allocation16 + $0x178] sm:$0xff]
    %v1220 = vld [vmem:[#allocation16 + $0x180] sm:$0xff]
    %v1221 = vld [vmem:[#allocation16 + $0x188] sm:$0xff]
    %v1222 = vld [vmem:[#allocation16 + $0x190] sm:$0xff]
    %v1223 = vld [vmem:[#allocation16 + $0x198] sm:$0xff]
    %v1224 = vld [vmem:[#allocation16 + $0x1a0] sm:$0xff]
    %v1225 = vld [vmem:[#allocation16 + $0x1a8] sm:$0xff]
    %v1226 = vld [vmem:[#allocation16 + $0x1b0] sm:$0xff]
    %v1227 = vld [vmem:[#allocation16 + $0x1b8] sm:$0xff]
    %v1228 = vld [vmem:[#allocation16 + $0x1c0] sm:$0xff]
    %v1229 = vld [vmem:[#allocation16 + $0x1c8] sm:$0xff]
    %v1230 = vld [vmem:[#allocation16 + $0x1d0] sm:$0xff]
    %v1231 = vld [vmem:[#allocation16 + $0x1d8] sm:$0xff]
    %v1232 = vld [vmem:[#allocation16 + $0x1e0] sm:$0xff]
    %v1233 = vld [vmem:[#allocation16 + $0x1e8] sm:$0xff]
    %v1234 = vld [vmem:[#allocation16 + $0x1f0] sm:$0xff]
    %v1235 = vld [vmem:[#allocation16 + $0x1f8] sm:$0xff]
    %1236 = vmatprep.subr.mxu0 %v1173
    %1237 = vmatpush1.msra.mxu0 %v1172
    %1238 = vmatprep.subr.mxu0 %v1177
    %1239 = vmatpush1.msra.mxu0 %v1176
    %1240 = vmatprep.subr.mxu0 %v1181
    %1241 = vmatpush1.msra.mxu0 %v1180
    %1242 = vmatprep.subr.mxu0 %v1185
    %1243 = vmatpush1.msra.mxu0 %v1184
    %1244 = vmatprep.subr.mxu0 %v1189
    %1245 = vmatpush1.msra.mxu0 %v1188
    %1246 = vmatprep.subr.mxu0 %v1193
    %1247 = vmatpush1.msra.mxu0 %v1192
    %1248 = vmatprep.subr.mxu0 %v1197
    %1249 = vmatpush1.msra.mxu0 %v1196
    %1250 = vmatprep.subr.mxu0 %v1201
    %1251 = vmatpush1.msra.mxu0 %v1200
    %1252 = vmatprep.subr.mxu0 %v1205
    %1253 = vmatpush1.msra.mxu0 %v1204
    %1254 = vmatprep.subr.mxu0 %v1209
    %1255 = vmatpush1.msra.mxu0 %v1208
    %1256 = vmatprep.subr.mxu0 %v1213
    %1257 = vmatpush1.msra.mxu0 %v1212
    %1258 = vmatprep.subr.mxu0 %v1217
    %1259 = vmatpush1.msra.mxu0 %v1216
    %1260 = vmatprep.subr.mxu0 %v1221
    %1261 = vmatpush1.msra.mxu0 %v1220
    %1262 = vmatprep.subr.mxu0 %v1225
    %1263 = vmatpush1.msra.mxu0 %v1224
    %1264 = vmatprep.subr.mxu0 %v1229
    %1265 = vmatpush1.msra.mxu0 %v1228
    %1266 = vmatprep.subr.mxu0 %v1233
    %1267 = vmatpush1.msra.mxu0 %v1232
    %1268 = vmatprep.subr.mxu0 0.0
    %1269 = vmatpush1.msra.mxu0 0.0
    %1270 = vmatprep.subr.mxu0 0.0
    %1271 = vmatpush1.msra.mxu0 0.0
    %1272 = vmatprep.subr.mxu0 0.0
    %1273 = vmatpush1.msra.mxu0 0.0
    %1274 = vmatprep.subr.mxu0 0.0
    %1275 = vmatpush1.msra.mxu0 0.0
    %1276 = vmatprep.subr.mxu0 0.0
    %1277 = vmatpush1.msra.mxu0 0.0
    %1278 = vmatprep.subr.mxu0 0.0
    %1279 = vmatpush1.msra.mxu0 0.0
    %1280 = vmatprep.subr.mxu0 0.0
    %1281 = vmatpush1.msra.mxu0 0.0
    %1282 = vmatprep.subr.mxu0 0.0
    %1283 = vmatpush1.msra.mxu0 0.0
    %1284 = vmatprep.subr.mxu0 0.0
    %1285 = vmatpush1.msra.mxu0 0.0
    %1286 = vmatprep.subr.mxu0 0.0
    %1287 = vmatpush1.msra.mxu0 0.0
    %1288 = vmatprep.subr.mxu0 0.0
    %1289 = vmatpush1.msra.mxu0 0.0
    %1290 = vmatprep.subr.mxu0 0.0
    %1291 = vmatpush1.msra.mxu0 0.0
    %1292 = vmatprep.subr.mxu0 0.0
    %1293 = vmatpush1.msra.mxu0 0.0
    %1294 = vmatprep.subr.mxu0 0.0
    %1295 = vmatpush1.msra.mxu0 0.0
    %1296 = vmatprep.subr.mxu0 0.0
    %1297 = vmatpush1.msra.mxu0 0.0
    %1298 = vmatprep.subr.mxu0 0.0
    %1299 = vmatpush1.msra.mxu0 0.0
    %1300 = vmatprep.mubr.f32.mxu0 0.0
    %1301 = vmatmul.mubr.f32.gmra.mrb[0].mxu0 %v1165
    %v1302 = vpop.f32.mrb[0].mxu0
    %v1303 = vadd.f32 0.0, %v1302
    %v1304 = vpop.f32.mrb[0].mxu0
    %v1305 = vadd.f32 0.0, %v1304
    %1306 = vdwg.mxu0
    %1307 = vmatprep.subr.mxu0 %v1175
    %1308 = vmatpush1.msra.mxu0 %v1174
    %1309 = vmatprep.subr.mxu0 %v1179
    %1310 = vmatpush1.msra.mxu0 %v1178
    %1311 = vmatprep.subr.mxu0 %v1183
    %1312 = vmatpush1.msra.mxu0 %v1182
    %1313 = vmatprep.subr.mxu0 %v1187
    %1314 = vmatpush1.msra.mxu0 %v1186
    %1315 = vmatprep.subr.mxu0 %v1191
    %1316 = vmatpush1.msra.mxu0 %v1190
    %1317 = vmatprep.subr.mxu0 %v1195
    %1318 = vmatpush1.msra.mxu0 %v1194
    %1319 = vmatprep.subr.mxu0 %v1199
    %1320 = vmatpush1.msra.mxu0 %v1198
    %1321 = vmatprep.subr.mxu0 %v1203
    %1322 = vmatpush1.msra.mxu0 %v1202
    %1323 = vmatprep.subr.mxu0 %v1207
    %1324 = vmatpush1.msra.mxu0 %v1206
    %1325 = vmatprep.subr.mxu0 %v1211
    %1326 = vmatpush1.msra.mxu0 %v1210
    %1327 = vmatprep.subr.mxu0 %v1215
    %1328 = vmatpush1.msra.mxu0 %v1214
    %1329 = vmatprep.subr.mxu0 %v1219
    %1330 = vmatpush1.msra.mxu0 %v1218
    %1331 = vmatprep.subr.mxu0 %v1223
    %1332 = vmatpush1.msra.mxu0 %v1222
    %1333 = vmatprep.subr.mxu0 %v1227
    %1334 = vmatpush1.msra.mxu0 %v1226
    %1335 = vmatprep.subr.mxu0 %v1231
    %1336 = vmatpush1.msra.mxu0 %v1230
    %1337 = vmatprep.subr.mxu0 %v1235
    %1338 = vmatpush1.msra.mxu0 %v1234
    %1339 = vmatprep.subr.mxu0 0.0
    %1340 = vmatpush1.msra.mxu0 0.0
    %1341 = vmatprep.subr.mxu0 0.0
    %1342 = vmatpush1.msra.mxu0 0.0
    %1343 = vmatprep.subr.mxu0 0.0
    %1344 = vmatpush1.msra.mxu0 0.0
    %1345 = vmatprep.subr.mxu0 0.0
    %1346 = vmatpush1.msra.mxu0 0.0
    %1347 = vmatprep.subr.mxu0 0.0
    %1348 = vmatpush1.msra.mxu0 0.0
    %1349 = vmatprep.subr.mxu0 0.0
    %1350 = vmatpush1.msra.mxu0 0.0
    %1351 = vmatprep.subr.mxu0 0.0
    %1352 = vmatpush1.msra.mxu0 0.0
    %1353 = vmatprep.subr.mxu0 0.0
    %1354 = vmatpush1.msra.mxu0 0.0
    %1355 = vmatprep.subr.mxu0 0.0
    %1356 = vmatpush1.msra.mxu0 0.0
    %1357 = vmatprep.subr.mxu0 0.0
    %1358 = vmatpush1.msra.mxu0 0.0
    %1359 = vmatprep.subr.mxu0 0.0
    %1360 = vmatpush1.msra.mxu0 0.0
    %1361 = vmatprep.subr.mxu0 0.0
    %1362 = vmatpush1.msra.mxu0 0.0
    %1363 = vmatprep.subr.mxu0 0.0
    %1364 = vmatpush1.msra.mxu0 0.0
    %1365 = vmatprep.subr.mxu0 0.0
    %1366 = vmatpush1.msra.mxu0 0.0
    %1367 = vmatprep.subr.mxu0 0.0
    %1368 = vmatpush1.msra.mxu0 0.0
    %1369 = vmatprep.subr.mxu0 0.0
    %1370 = vmatpush1.msra.mxu0 0.0
    %1371 = vmatprep.mubr.f32.mxu0 0.0
    %1372 = vmatmul.mubr.f32.gmra.mrb[0].mxu0 %v1165
    %v1373 = vpop.f32.mrb[0].mxu0
    %v1374 = vadd.f32 0.0, %v1373
    %v1375 = vpop.f32.mrb[0].mxu0
    %v1376 = vadd.f32 0.0, %v1375
    %1377 = vdwg.mxu0
    %v1382 = vcombine.low %v1303, %v1305
    %v1383 = vcombine.low %v1374, %v1376
    %v1385 = vunpack.c.l.s4 1983009808
    %v1386 = vunpack.c.0.s8 %v1385
    %v1387 = vlaneseq
    %v1388 = vshrl.u32 %v1387, 7
    %v1389 = vsub.s32 %v1386, %v1388
    %v1390 = vrot.slane %v1382, %v1389
    %v1392 = vunpack.c.l.s4 1983009808
    %v1393 = vunpack.c.0.s8 %v1392
    %v1394 = vlaneseq
    %v1395 = vshrl.u32 %v1394, 7
    %v1396 = vsub.s32 %v1393, %v1395
    %v1397 = vrot.slane %v1383, %v1396
    %v1398 = vcombine.low %v1390, %v1397
    %v1400 = vadd.f32 %v1171, %v1398
    %v1401 = vxor.u32 %v1400, 2147483648
    %v1402 = vmul.f32 %v1401, 1.442695
    %v1403 = vpow.pop %v1402
    %v1404 = vadd.f32 %v1403, 1.0
    %v1405 = vrcp.pop %v1404
    %v1406 = vmul.f32 1.0, %v1405
    %v1408 = vrot.slane %v1400, 6
    %v1410 = vtanh.pop %v1408
    %v1412 = vrot.slane %v1406, 2
    %v1414 = vmul.f32 %v1412, %v1166
    %v1415 = vmul.f32 %v1406, %v1410
    %v1416 = vadd.f32 %v1414, %v1415
    %v1417 = vtanh.pop %v1416
    %v1418 = vrot.slane %v1406, 4
    %v1420 = vmul.f32 %v1418, %v1417
    %s1421 = scalar_lea.vmem [#allocation11], 20
    %v1422 = vld [vmem:[%s1421] sm:$0xf]
    %v1423 = vunpack.c.l.bf16 %v1422
    %v1424 = vld [vmem:[#allocation17] sm:$0xff]
    %v1425 = vld [vmem:[#allocation17 + $0x8] sm:$0xff]
    %v1426 = vld [vmem:[#allocation17 + $0x10] sm:$0xff]
    %v1427 = vld [vmem:[#allocation17 + $0x18] sm:$0xff]
    %v1428 = vld [vmem:[#allocation17 + $0x20] sm:$0xff]
    %v1429 = vld [vmem:[#allocation17 + $0x28] sm:$0xff]
    %v1430 = vld [vmem:[#allocation17 + $0x30] sm:$0xff]
    %v1431 = vld [vmem:[#allocation17 + $0x38] sm:$0xff]
    %v1432 = vld [vmem:[#allocation17 + $0x40] sm:$0xff]
    %v1433 = vld [vmem:[#allocation17 + $0x48] sm:$0xff]
    %v1434 = vld [vmem:[#allocation17 + $0x50] sm:$0xff]
    %v1435 = vld [vmem:[#allocation17 + $0x58] sm:$0xff]
    %v1436 = vld [vmem:[#allocation17 + $0x60] sm:$0xff]
    %v1437 = vld [vmem:[#allocation17 + $0x68] sm:$0xff]
    %v1438 = vld [vmem:[#allocation17 + $0x70] sm:$0xff]
    %v1439 = vld [vmem:[#allocation17 + $0x78] sm:$0xff]
    %v1440 = vld [vmem:[#allocation17 + $0x80] sm:$0xff]
    %v1441 = vld [vmem:[#allocation17 + $0x88] sm:$0xff]
    %v1442 = vld [vmem:[#allocation17 + $0x90] sm:$0xff]
    %v1443 = vld [vmem:[#allocation17 + $0x98] sm:$0xff]
    %v1444 = vld [vmem:[#allocation17 + $0xa0] sm:$0xff]
    %v1445 = vld [vmem:[#allocation17 + $0xa8] sm:$0xff]
    %v1446 = vld [vmem:[#allocation17 + $0xb0] sm:$0xff]
    %v1447 = vld [vmem:[#allocation17 + $0xb8] sm:$0xff]
    %v1448 = vld [vmem:[#allocation17 + $0xc0] sm:$0xff]
    %v1449 = vld [vmem:[#allocation17 + $0xc8] sm:$0xff]
    %v1450 = vld [vmem:[#allocation17 + $0xd0] sm:$0xff]
    %v1451 = vld [vmem:[#allocation17 + $0xd8] sm:$0xff]
    %v1452 = vld [vmem:[#allocation17 + $0xe0] sm:$0xff]
    %v1453 = vld [vmem:[#allocation17 + $0xe8] sm:$0xff]
    %v1454 = vld [vmem:[#allocation17 + $0xf0] sm:$0xff]
    %v1455 = vld [vmem:[#allocation17 + $0xf8] sm:$0xff]
    %v1456 = vld [vmem:[#allocation17 + $0x100] sm:$0xff]
    %v1457 = vld [vmem:[#allocation17 + $0x108] sm:$0xff]
    %v1458 = vld [vmem:[#allocation17 + $0x110] sm:$0xff]
    %v1459 = vld [vmem:[#allocation17 + $0x118] sm:$0xff]
    %v1460 = vld [vmem:[#allocation17 + $0x120] sm:$0xff]
    %v1461 = vld [vmem:[#allocation17 + $0x128] sm:$0xff]
    %v1462 = vld [vmem:[#allocation17 + $0x130] sm:$0xff]
    %v1463 = vld [vmem:[#allocation17 + $0x138] sm:$0xff]
    %v1464 = vld [vmem:[#allocation17 + $0x140] sm:$0xff]
    %v1465 = vld [vmem:[#allocation17 + $0x148] sm:$0xff]
    %v1466 = vld [vmem:[#allocation17 + $0x150] sm:$0xff]
    %v1467 = vld [vmem:[#allocation17 + $0x158] sm:$0xff]
    %v1468 = vld [vmem:[#allocation17 + $0x160] sm:$0xff]
    %v1469 = vld [vmem:[#allocation17 + $0x168] sm:$0xff]
    %v1470 = vld [vmem:[#allocation17 + $0x170] sm:$0xff]
    %v1471 = vld [vmem:[#allocation17 + $0x178] sm:$0xff]
    %v1472 = vld [vmem:[#allocation17 + $0x180] sm:$0xff]
    %v1473 = vld [vmem:[#allocation17 + $0x188] sm:$0xff]
    %v1474 = vld [vmem:[#allocation17 + $0x190] sm:$0xff]
    %v1475 = vld [vmem:[#allocation17 + $0x198] sm:$0xff]
    %v1476 = vld [vmem:[#allocation17 + $0x1a0] sm:$0xff]
    %v1477 = vld [vmem:[#allocation17 + $0x1a8] sm:$0xff]
    %v1478 = vld [vmem:[#allocation17 + $0x1b0] sm:$0xff]
    %v1479 = vld [vmem:[#allocation17 + $0x1b8] sm:$0xff]
    %v1480 = vld [vmem:[#allocation17 + $0x1c0] sm:$0xff]
    %v1481 = vld [vmem:[#allocation17 + $0x1c8] sm:$0xff]
    %v1482 = vld [vmem:[#allocation17 + $0x1d0] sm:$0xff]
    %v1483 = vld [vmem:[#allocation17 + $0x1d8] sm:$0xff]
    %v1484 = vld [vmem:[#allocation17 + $0x1e0] sm:$0xff]
    %v1485 = vld [vmem:[#allocation17 + $0x1e8] sm:$0xff]
    %v1486 = vld [vmem:[#allocation17 + $0x1f0] sm:$0xff]
    %v1487 = vld [vmem:[#allocation17 + $0x1f8] sm:$0xff]
    %1488 = vmatprep.subr.mxu0 %v1425
    %1489 = vmatpush1.msra.mxu0 %v1424
    %1490 = vmatprep.subr.mxu0 %v1429
    %1491 = vmatpush1.msra.mxu0 %v1428
    %1492 = vmatprep.subr.mxu0 %v1433
    %1493 = vmatpush1.msra.mxu0 %v1432
    %1494 = vmatprep.subr.mxu0 %v1437
    %1495 = vmatpush1.msra.mxu0 %v1436
    %1496 = vmatprep.subr.mxu0 %v1441
    %1497 = vmatpush1.msra.mxu0 %v1440
    %1498 = vmatprep.subr.mxu0 %v1445
    %1499 = vmatpush1.msra.mxu0 %v1444
    %1500 = vmatprep.subr.mxu0 %v1449
    %1501 = vmatpush1.msra.mxu0 %v1448
    %1502 = vmatprep.subr.mxu0 %v1453
    %1503 = vmatpush1.msra.mxu0 %v1452
    %1504 = vmatprep.subr.mxu0 %v1457
    %1505 = vmatpush1.msra.mxu0 %v1456
    %1506 = vmatprep.subr.mxu0 %v1461
    %1507 = vmatpush1.msra.mxu0 %v1460
    %1508 = vmatprep.subr.mxu0 %v1465
    %1509 = vmatpush1.msra.mxu0 %v1464
    %1510 = vmatprep.subr.mxu0 %v1469
    %1511 = vmatpush1.msra.mxu0 %v1468
    %1512 = vmatprep.subr.mxu0 %v1473
    %1513 = vmatpush1.msra.mxu0 %v1472
    %1514 = vmatprep.subr.mxu0 %v1477
    %1515 = vmatpush1.msra.mxu0 %v1476
    %1516 = vmatprep.subr.mxu0 %v1481
    %1517 = vmatpush1.msra.mxu0 %v1480
    %1518 = vmatprep.subr.mxu0 %v1485
    %1519 = vmatpush1.msra.mxu0 %v1484
    %1520 = vmatprep.subr.mxu0 0.0
    %1521 = vmatpush1.msra.mxu0 0.0
    %1522 = vmatprep.subr.mxu0 0.0
    %1523 = vmatpush1.msra.mxu0 0.0
    %1524 = vmatprep.subr.mxu0 0.0
    %1525 = vmatpush1.msra.mxu0 0.0
    %1526 = vmatprep.subr.mxu0 0.0
    %1527 = vmatpush1.msra.mxu0 0.0
    %1528 = vmatprep.subr.mxu0 0.0
    %1529 = vmatpush1.msra.mxu0 0.0
    %1530 = vmatprep.subr.mxu0 0.0
    %1531 = vmatpush1.msra.mxu0 0.0
    %1532 = vmatprep.subr.mxu0 0.0
    %1533 = vmatpush1.msra.mxu0 0.0
    %1534 = vmatprep.subr.mxu0 0.0
    %1535 = vmatpush1.msra.mxu0 0.0
    %1536 = vmatprep.subr.mxu0 0.0
    %1537 = vmatpush1.msra.mxu0 0.0
    %1538 = vmatprep.subr.mxu0 0.0
    %1539 = vmatpush1.msra.mxu0 0.0
    %1540 = vmatprep.subr.mxu0 0.0
    %1541 = vmatpush1.msra.mxu0 0.0
    %1542 = vmatprep.subr.mxu0 0.0
    %1543 = vmatpush1.msra.mxu0 0.0
    %1544 = vmatprep.subr.mxu0 0.0
    %1545 = vmatpush1.msra.mxu0 0.0
    %1546 = vmatprep.subr.mxu0 0.0
    %1547 = vmatpush1.msra.mxu0 0.0
    %1548 = vmatprep.subr.mxu0 0.0
    %1549 = vmatpush1.msra.mxu0 0.0
    %1550 = vmatprep.subr.mxu0 0.0
    %1551 = vmatpush1.msra.mxu0 0.0
    %1552 = vmatprep.mubr.f32.mxu0 0.0
    %1553 = vmatmul.mubr.f32.gmra.mrb[0].mxu0 %v1167
    %v1554 = vpop.f32.mrb[0].mxu0
    %v1555 = vadd.f32 0.0, %v1554
    %v1556 = vpop.f32.mrb[0].mxu0
    %v1557 = vadd.f32 0.0, %v1556
    %1558 = vdwg.mxu0
    %1559 = vmatprep.subr.mxu0 %v1427
    %1560 = vmatpush1.msra.mxu0 %v1426
    %1561 = vmatprep.subr.mxu0 %v1431
    %1562 = vmatpush1.msra.mxu0 %v1430
    %1563 = vmatprep.subr.mxu0 %v1435
    %1564 = vmatpush1.msra.mxu0 %v1434
    %1565 = vmatprep.subr.mxu0 %v1439
    %1566 = vmatpush1.msra.mxu0 %v1438
    %1567 = vmatprep.subr.mxu0 %v1443
    %1568 = vmatpush1.msra.mxu0 %v1442
    %1569 = vmatprep.subr.mxu0 %v1447
    %1570 = vmatpush1.msra.mxu0 %v1446
    %1571 = vmatprep.subr.mxu0 %v1451
    %1572 = vmatpush1.msra.mxu0 %v1450
    %1573 = vmatprep.subr.mxu0 %v1455
    %1574 = vmatpush1.msra.mxu0 %v1454
    %1575 = vmatprep.subr.mxu0 %v1459
    %1576 = vmatpush1.msra.mxu0 %v1458
    %1577 = vmatprep.subr.mxu0 %v1463
    %1578 = vmatpush1.msra.mxu0 %v1462
    %1579 = vmatprep.subr.mxu0 %v1467
    %1580 = vmatpush1.msra.mxu0 %v1466
    %1581 = vmatprep.subr.mxu0 %v1471
    %1582 = vmatpush1.msra.mxu0 %v1470
    %1583 = vmatprep.subr.mxu0 %v1475
    %1584 = vmatpush1.msra.mxu0 %v1474
    %1585 = vmatprep.subr.mxu0 %v1479
    %1586 = vmatpush1.msra.mxu0 %v1478
    %1587 = vmatprep.subr.mxu0 %v1483
    %1588 = vmatpush1.msra.mxu0 %v1482
    %1589 = vmatprep.subr.mxu0 %v1487
    %1590 = vmatpush1.msra.mxu0 %v1486
    %1591 = vmatprep.subr.mxu0 0.0
    %1592 = vmatpush1.msra.mxu0 0.0
    %1593 = vmatprep.subr.mxu0 0.0
    %1594 = vmatpush1.msra.mxu0 0.0
    %1595 = vmatprep.subr.mxu0 0.0
    %1596 = vmatpush1.msra.mxu0 0.0
    %1597 = vmatprep.subr.mxu0 0.0
    %1598 = vmatpush1.msra.mxu0 0.0
    %1599 = vmatprep.subr.mxu0 0.0
    %1600 = vmatpush1.msra.mxu0 0.0
    %1601 = vmatprep.subr.mxu0 0.0
    %1602 = vmatpush1.msra.mxu0 0.0
    %1603 = vmatprep.subr.mxu0 0.0
    %1604 = vmatpush1.msra.mxu0 0.0
    %1605 = vmatprep.subr.mxu0 0.0
    %1606 = vmatpush1.msra.mxu0 0.0
    %1607 = vmatprep.subr.mxu0 0.0
    %1608 = vmatpush1.msra.mxu0 0.0
    %1609 = vmatprep.subr.mxu0 0.0
    %1610 = vmatpush1.msra.mxu0 0.0
    %1611 = vmatprep.subr.mxu0 0.0
    %1612 = vmatpush1.msra.mxu0 0.0
    %1613 = vmatprep.subr.mxu0 0.0
    %1614 = vmatpush1.msra.mxu0 0.0
    %1615 = vmatprep.subr.mxu0 0.0
    %1616 = vmatpush1.msra.mxu0 0.0
    %1617 = vmatprep.subr.mxu0 0.0
    %1618 = vmatpush1.msra.mxu0 0.0
    %1619 = vmatprep.subr.mxu0 0.0
    %1620 = vmatpush1.msra.mxu0 0.0
    %1621 = vmatprep.subr.mxu0 0.0
    %1622 = vmatpush1.msra.mxu0 0.0
    %1623 = vmatprep.mubr.f32.mxu0 0.0
    %1624 = vmatmul.mubr.f32.gmra.mrb[0].mxu0 %v1167
    %v1625 = vpop.f32.mrb[0].mxu0
    %v1626 = vadd.f32 0.0, %v1625
    %v1627 = vpop.f32.mrb[0].mxu0
    %v1628 = vadd.f32 0.0, %v1627
    %1629 = vdwg.mxu0
    %v1634 = vcombine.low %v1555, %v1557
    %v1635 = vcombine.low %v1626, %v1628
    %v1637 = vunpack.c.l.s4 1983009808
    %v1638 = vunpack.c.0.s8 %v1637
    %v1639 = vlaneseq
    %v1640 = vshrl.u32 %v1639, 7
    %v1641 = vsub.s32 %v1638, %v1640
    %v1642 = vrot.slane %v1634, %v1641
    %v1644 = vunpack.c.l.s4 1983009808
    %v1645 = vunpack.c.0.s8 %v1644
    %v1646 = vlaneseq
    %v1647 = vshrl.u32 %v1646, 7
    %v1648 = vsub.s32 %v1645, %v1647
    %v1649 = vrot.slane %v1635, %v1648
    %v1650 = vcombine.low %v1642, %v1649
    %v1652 = vadd.f32 %v1423, %v1650
    %v1653 = vxor.u32 %v1652, 2147483648
    %v1654 = vmul.f32 %v1653, 1.442695
    %v1655 = vpow.pop %v1654
    %v1656 = vadd.f32 %v1655, 1.0
    %v1657 = vrcp.pop %v1656
    %v1658 = vmul.f32 1.0, %v1657
    %v1660 = vrot.slane %v1652, 6
    %v1662 = vtanh.pop %v1660
    %v1664 = vrot.slane %v1658, 2
    %v1666 = vmul.f32 %v1664, %v1168
    %v1667 = vmul.f32 %v1658, %v1662
    %v1668 = vadd.f32 %v1666, %v1667
    %v1669 = vtanh.pop %v1668
    %v1670 = vrot.slane %v1658, 4
    %v1672 = vmul.f32 %v1670, %v1669
    %1673 = vst [vmem:[#allocation2] sm:$0x3] %v1420
    %1674 = vst [vmem:[#allocation3] sm:$0x3] %v1416
    %1675 = vst [vmem:[#allocation4] sm:$0x3] %v1672
    %1676 = vst [vmem:[#allocation5] sm:$0x3] %v1668
    %s1677 = scalar_lea.vmem [#allocation6], 4
    %1678 = vst [vmem:[%s1677] sm:$0x3] %v1420
    %s1679 = scalar_lea.vmem [#allocation7], 10
    %1680 = vst [vmem:[%s1679] sm:$0x3] %v1672
    %v1681 = vld [vmem:[#allocation2] sm:$0x3]
    %v1682 = vld [vmem:[#allocation3] sm:$0x3]
    %v1683 = vld [vmem:[#allocation4] sm:$0x3]
    %v1684 = vld [vmem:[#allocation5] sm:$0x3]
    %s1685 = scalar_lea.vmem [#allocation8], 12
    %v1686 = vld [vmem:[%s1685] sm:$0xf]
    %v1687 = vunpack.c.l.bf16 %v1686
    %v1688 = vld [vmem:[#allocation16] sm:$0xff]
    %v1689 = vld [vmem:[#allocation16 + $0x8] sm:$0xff]
    %v1690 = vld [vmem:[#allocation16 + $0x10] sm:$0xff]
    %v1691 = vld [vmem:[#allocation16 + $0x18] sm:$0xff]
    %v1692 = vld [vmem:[#allocation16 + $0x20] sm:$0xff]
    %v1693 = vld [vmem:[#allocation16 + $0x28] sm:$0xff]
    %v1694 = vld [vmem:[#allocation16 + $0x30] sm:$0xff]
    %v1695 = vld [vmem:[#allocation16 + $0x38] sm:$0xff]
    %v1696 = vld [vmem:[#allocation16 + $0x40] sm:$0xff]
    %v1697 = vld [vmem:[#allocation16 + $0x48] sm:$0xff]
    %v1698 = vld [vmem:[#allocation16 + $0x50] sm:$0xff]
    %v1699 = vld [vmem:[#allocation16 + $0x58] sm:$0xff]
    %v1700 = vld [vmem:[#allocation16 + $0x60] sm:$0xff]
    %v1701 = vld [vmem:[#allocation16 + $0x68] sm:$0xff]
    %v1702 = vld [vmem:[#allocation16 + $0x70] sm:$0xff]
    %v1703 = vld [vmem:[#allocation16 + $0x78] sm:$0xff]
    %v1704 = vld [vmem:[#allocation16 + $0x80] sm:$0xff]
    %v1705 = vld [vmem:[#allocation16 + $0x88] sm:$0xff]
    %v1706 = vld [vmem:[#allocation16 + $0x90] sm:$0xff]
    %v1707 = vld [vmem:[#allocation16 + $0x98] sm:$0xff]
    %v1708 = vld [vmem:[#allocation16 + $0xa0] sm:$0xff]
    %v1709 = vld [vmem:[#allocation16 + $0xa8] sm:$0xff]
    %v1710 = vld [vmem:[#allocation16 + $0xb0] sm:$0xff]
    %v1711 = vld [vmem:[#allocation16 + $0xb8] sm:$0xff]
    %v1712 = vld [vmem:[#allocation16 + $0xc0] sm:$0xff]
    %v1713 = vld [vmem:[#allocation16 + $0xc8] sm:$0xff]
    %v1714 = vld [vmem:[#allocation16 + $0xd0] sm:$0xff]
    %v1715 = vld [vmem:[#allocation16 + $0xd8] sm:$0xff]
    %v1716 = vld [vmem:[#allocation16 + $0xe0] sm:$0xff]
    %v1717 = vld [vmem:[#allocation16 + $0xe8] sm:$0xff]
    %v1718 = vld [vmem:[#allocation16 + $0xf0] sm:$0xff]
    %v1719 = vld [vmem:[#allocation16 + $0xf8] sm:$0xff]
    %v1720 = vld [vmem:[#allocation16 + $0x100] sm:$0xff]
    %v1721 = vld [vmem:[#allocation16 + $0x108] sm:$0xff]
    %v1722 = vld [vmem:[#allocation16 + $0x110] sm:$0xff]
    %v1723 = vld [vmem:[#allocation16 + $0x118] sm:$0xff]
    %v1724 = vld [vmem:[#allocation16 + $0x120] sm:$0xff]
    %v1725 = vld [vmem:[#allocation16 + $0x128] sm:$0xff]
    %v1726 = vld [vmem:[#allocation16 + $0x130] sm:$0xff]
    %v1727 = vld [vmem:[#allocation16 + $0x138] sm:$0xff]
    %v1728 = vld [vmem:[#allocation16 + $0x140] sm:$0xff]
    %v1729 = vld [vmem:[#allocation16 + $0x148] sm:$0xff]
    %v1730 = vld [vmem:[#allocation16 + $0x150] sm:$0xff]
    %v1731 = vld [vmem:[#allocation16 + $0x158] sm:$0xff]
    %v1732 = vld [vmem:[#allocation16 + $0x160] sm:$0xff]
    %v1733 = vld [vmem:[#allocation16 + $0x168] sm:$0xff]
    %v1734 = vld [vmem:[#allocation16 + $0x170] sm:$0xff]
    %v1735 = vld [vmem:[#allocation16 + $0x178] sm:$0xff]
    %v1736 = vld [vmem:[#allocation16 + $0x180] sm:$0xff]
    %v1737 = vld [vmem:[#allocation16 + $0x188] sm:$0xff]
    %v1738 = vld [vmem:[#allocation16 + $0x190] sm:$0xff]
    %v1739 = vld [vmem:[#allocation16 + $0x198] sm:$0xff]
    %v1740 = vld [vmem:[#allocation16 + $0x1a0] sm:$0xff]
    %v1741 = vld [vmem:[#allocation16 + $0x1a8] sm:$0xff]
    %v1742 = vld [vmem:[#allocation16 + $0x1b0] sm:$0xff]
    %v1743 = vld [vmem:[#allocation16 + $0x1b8] sm:$0xff]
    %v1744 = vld [vmem:[#allocation16 + $0x1c0] sm:$0xff]
    %v1745 = vld [vmem:[#allocation16 + $0x1c8] sm:$0xff]
    %v1746 = vld [vmem:[#allocation16 + $0x1d0] sm:$0xff]
    %v1747 = vld [vmem:[#allocation16 + $0x1d8] sm:$0xff]
    %v1748 = vld [vmem:[#allocation16 + $0x1e0] sm:$0xff]
    %v1749 = vld [vmem:[#allocation16 + $0x1e8] sm:$0xff]
    %v1750 = vld [vmem:[#allocation16 + $0x1f0] sm:$0xff]
    %v1751 = vld [vmem:[#allocation16 + $0x1f8] sm:$0xff]
    %1752 = vmatprep.subr.mxu0 %v1689
    %1753 = vmatpush1.msra.mxu0 %v1688
    %1754 = vmatprep.subr.mxu0 %v1693
    %1755 = vmatpush1.msra.mxu0 %v1692
    %1756 = vmatprep.subr.mxu0 %v1697
    %1757 = vmatpush1.msra.mxu0 %v1696
    %1758 = vmatprep.subr.mxu0 %v1701
    %1759 = vmatpush1.msra.mxu0 %v1700
    %1760 = vmatprep.subr.mxu0 %v1705
    %1761 = vmatpush1.msra.mxu0 %v1704
    %1762 = vmatprep.subr.mxu0 %v1709
    %1763 = vmatpush1.msra.mxu0 %v1708
    %1764 = vmatprep.subr.mxu0 %v1713
    %1765 = vmatpush1.msra.mxu0 %v1712
    %1766 = vmatprep.subr.mxu0 %v1717
    %1767 = vmatpush1.msra.mxu0 %v1716
    %1768 = vmatprep.subr.mxu0 %v1721
    %1769 = vmatpush1.msra.mxu0 %v1720
    %1770 = vmatprep.subr.mxu0 %v1725
    %1771 = vmatpush1.msra.mxu0 %v1724
    %1772 = vmatprep.subr.mxu0 %v1729
    %1773 = vmatpush1.msra.mxu0 %v1728
    %1774 = vmatprep.subr.mxu0 %v1733
    %1775 = vmatpush1.msra.mxu0 %v1732
    %1776 = vmatprep.subr.mxu0 %v1737
    %1777 = vmatpush1.msra.mxu0 %v1736
    %1778 = vmatprep.subr.mxu0 %v1741
    %1779 = vmatpush1.msra.mxu0 %v1740
    %1780 = vmatprep.subr.mxu0 %v1745
    %1781 = vmatpush1.msra.mxu0 %v1744
    %1782 = vmatprep.subr.mxu0 %v1749
    %1783 = vmatpush1.msra.mxu0 %v1748
    %1784 = vmatprep.subr.mxu0 0.0
    %1785 = vmatpush1.msra.mxu0 0.0
    %1786 = vmatprep.subr.mxu0 0.0
    %1787 = vmatpush1.msra.mxu0 0.0
    %1788 = vmatprep.subr.mxu0 0.0
    %1789 = vmatpush1.msra.mxu0 0.0
    %1790 = vmatprep.subr.mxu0 0.0
    %1791 = vmatpush1.msra.mxu0 0.0
    %1792 = vmatprep.subr.mxu0 0.0
    %1793 = vmatpush1.msra.mxu0 0.0
    %1794 = vmatprep.subr.mxu0 0.0
    %1795 = vmatpush1.msra.mxu0 0.0
    %1796 = vmatprep.subr.mxu0 0.0
    %1797 = vmatpush1.msra.mxu0 0.0
    %1798 = vmatprep.subr.mxu0 0.0
    %1799 = vmatpush1.msra.mxu0 0.0
    %1800 = vmatprep.subr.mxu0 0.0
    %1801 = vmatpush1.msra.mxu0 0.0
    %1802 = vmatprep.subr.mxu0 0.0
    %1803 = vmatpush1.msra.mxu0 0.0
    %1804 = vmatprep.subr.mxu0 0.0
    %1805 = vmatpush1.msra.mxu0 0.0
    %1806 = vmatprep.subr.mxu0 0.0
    %1807 = vmatpush1.msra.mxu0 0.0
    %1808 = vmatprep.subr.mxu0 0.0
    %1809 = vmatpush1.msra.mxu0 0.0
    %1810 = vmatprep.subr.mxu0 0.0
    %1811 = vmatpush1.msra.mxu0 0.0
    %1812 = vmatprep.subr.mxu0 0.0
    %1813 = vmatpush1.msra.mxu0 0.0
    %1814 = vmatprep.subr.mxu0 0.0
    %1815 = vmatpush1.msra.mxu0 0.0
    %1816 = vmatprep.mubr.f32.mxu0 0.0
    %1817 = vmatmul.mubr.f32.gmra.mrb[0].mxu0 %v1681
    %v1818 = vpop.f32.mrb[0].mxu0
    %v1819 = vadd.f32 0.0, %v1818
    %v1820 = vpop.f32.mrb[0].mxu0
    %v1821 = vadd.f32 0.0, %v1820
    %1822 = vdwg.mxu0
    %1823 = vmatprep.subr.mxu0 %v1691
    %1824 = vmatpush1.msra.mxu0 %v1690
    %1825 = vmatprep.subr.mxu0 %v1695
    %1826 = vmatpush1.msra.mxu0 %v1694
    %1827 = vmatprep.subr.mxu0 %v1699
    %1828 = vmatpush1.msra.mxu0 %v1698
    %1829 = vmatprep.subr.mxu0 %v1703
    %1830 = vmatpush1.msra.mxu0 %v1702
    %1831 = vmatprep.subr.mxu0 %v1707
    %1832 = vmatpush1.msra.mxu0 %v1706
    %1833 = vmatprep.subr.mxu0 %v1711
    %1834 = vmatpush1.msra.mxu0 %v1710
    %1835 = vmatprep.subr.mxu0 %v1715
    %1836 = vmatpush1.msra.mxu0 %v1714
    %1837 = vmatprep.subr.mxu0 %v1719
    %1838 = vmatpush1.msra.mxu0 %v1718
    %1839 = vmatprep.subr.mxu0 %v1723
    %1840 = vmatpush1.msra.mxu0 %v1722
    %1841 = vmatprep.subr.mxu0 %v1727
    %1842 = vmatpush1.msra.mxu0 %v1726
    %1843 = vmatprep.subr.mxu0 %v1731
    %1844 = vmatpush1.msra.mxu0 %v1730
    %1845 = vmatprep.subr.mxu0 %v1735
    %1846 = vmatpush1.msra.mxu0 %v1734
    %1847 = vmatprep.subr.mxu0 %v1739
    %1848 = vmatpush1.msra.mxu0 %v1738
    %1849 = vmatprep.subr.mxu0 %v1743
    %1850 = vmatpush1.msra.mxu0 %v1742
    %1851 = vmatprep.subr.mxu0 %v1747
    %1852 = vmatpush1.msra.mxu0 %v1746
    %1853 = vmatprep.subr.mxu0 %v1751
    %1854 = vmatpush1.msra.mxu0 %v1750
    %1855 = vmatprep.subr.mxu0 0.0
    %1856 = vmatpush1.msra.mxu0 0.0
    %1857 = vmatprep.subr.mxu0 0.0
    %1858 = vmatpush1.msra.mxu0 0.0
    %1859 = vmatprep.subr.mxu0 0.0
    %1860 = vmatpush1.msra.mxu0 0.0
    %1861 = vmatprep.subr.mxu0 0.0
    %1862 = vmatpush1.msra.mxu0 0.0
    %1863 = vmatprep.subr.mxu0 0.0
    %1864 = vmatpush1.msra.mxu0 0.0
    %1865 = vmatprep.subr.mxu0 0.0
    %1866 = vmatpush1.msra.mxu0 0.0
    %1867 = vmatprep.subr.mxu0 0.0
    %1868 = vmatpush1.msra.mxu0 0.0
    %1869 = vmatprep.subr.mxu0 0.0
    %1870 = vmatpush1.msra.mxu0 0.0
    %1871 = vmatprep.subr.mxu0 0.0
    %1872 = vmatpush1.msra.mxu0 0.0
    %1873 = vmatprep.subr.mxu0 0.0
    %1874 = vmatpush1.msra.mxu0 0.0
    %1875 = vmatprep.subr.mxu0 0.0
    %1876 = vmatpush1.msra.mxu0 0.0
    %1877 = vmatprep.subr.mxu0 0.0
    %1878 = vmatpush1.msra.mxu0 0.0
    %1879 = vmatprep.subr.mxu0 0.0
    %1880 = vmatpush1.msra.mxu0 0.0
    %1881 = vmatprep.subr.mxu0 0.0
    %1882 = vmatpush1.msra.mxu0 0.0
    %1883 = vmatprep.subr.mxu0 0.0
    %1884 = vmatpush1.msra.mxu0 0.0
    %1885 = vmatprep.subr.mxu0 0.0
    %1886 = vmatpush1.msra.mxu0 0.0
    %1887 = vmatprep.mubr.f32.mxu0 0.0
    %1888 = vmatmul.mubr.f32.gmra.mrb[0].mxu0 %v1681
    %v1889 = vpop.f32.mrb[0].mxu0
    %v1890 = vadd.f32 0.0, %v1889
    %v1891 = vpop.f32.mrb[0].mxu0
    %v1892 = vadd.f32 0.0, %v1891
    %1893 = vdwg.mxu0
    %v1898 = vcombine.low %v1819, %v1821
    %v1899 = vcombine.low %v1890, %v1892
    %v1901 = vunpack.c.l.s4 1983009808
    %v1902 = vunpack.c.0.s8 %v1901
    %v1903 = vlaneseq
    %v1904 = vshrl.u32 %v1903, 7
    %v1905 = vsub.s32 %v1902, %v1904
    %v1906 = vrot.slane %v1898, %v1905
    %v1908 = vunpack.c.l.s4 1983009808
    %v1909 = vunpack.c.0.s8 %v1908
    %v1910 = vlaneseq
    %v1911 = vshrl.u32 %v1910, 7
    %v1912 = vsub.s32 %v1909, %v1911
    %v1913 = vrot.slane %v1899, %v1912
    %v1914 = vcombine.low %v1906, %v1913
    %v1916 = vadd.f32 %v1687, %v1914
    %v1917 = vxor.u32 %v1916, 2147483648
    %v1918 = vmul.f32 %v1917, 1.442695
    %v1919 = vpow.pop %v1918
    %v1920 = vadd.f32 %v1919, 1.0
    %v1921 = vrcp.pop %v1920
    %v1922 = vmul.f32 1.0, %v1921
    %v1924 = vrot.slane %v1916, 6
    %v1926 = vtanh.pop %v1924
    %v1928 = vrot.slane %v1922, 2
    %v1930 = vmul.f32 %v1928, %v1682
    %v1931 = vmul.f32 %v1922, %v1926
    %v1932 = vadd.f32 %v1930, %v1931
    %v1933 = vtanh.pop %v1932
    %v1934 = vrot.slane %v1922, 4
    %v1936 = vmul.f32 %v1934, %v1933
    %s1937 = scalar_lea.vmem [#allocation11], 16
    %v1938 = vld [vmem:[%s1937] sm:$0xf]
    %v1939 = vunpack.c.l.bf16 %v1938
    %v1940 = vld [vmem:[#allocation17] sm:$0xff]
    %v1941 = vld [vmem:[#allocation17 + $0x8] sm:$0xff]
    %v1942 = vld [vmem:[#allocation17 + $0x10] sm:$0xff]
    %v1943 = vld [vmem:[#allocation17 + $0x18] sm:$0xff]
    %v1944 = vld [vmem:[#allocation17 + $0x20] sm:$0xff]
    %v1945 = vld [vmem:[#allocation17 + $0x28] sm:$0xff]
    %v1946 = vld [vmem:[#allocation17 + $0x30] sm:$0xff]
    %v1947 = vld [vmem:[#allocation17 + $0x38] sm:$0xff]
    %v1948 = vld [vmem:[#allocation17 + $0x40] sm:$0xff]
    %v1949 = vld [vmem:[#allocation17 + $0x48] sm:$0xff]
    %v1950 = vld [vmem:[#allocation17 + $0x50] sm:$0xff]
    %v1951 = vld [vmem:[#allocation17 + $0x58] sm:$0xff]
    %v1952 = vld [vmem:[#allocation17 + $0x60] sm:$0xff]
    %v1953 = vld [vmem:[#allocation17 + $0x68] sm:$0xff]
    %v1954 = vld [vmem:[#allocation17 + $0x70] sm:$0xff]
    %v1955 = vld [vmem:[#allocation17 + $0x78] sm:$0xff]
    %v1956 = vld [vmem:[#allocation17 + $0x80] sm:$0xff]
    %v1957 = vld [vmem:[#allocation17 + $0x88] sm:$0xff]
    %v1958 = vld [vmem:[#allocation17 + $0x90] sm:$0xff]
    %v1959 = vld [vmem:[#allocation17 + $0x98] sm:$0xff]
    %v1960 = vld [vmem:[#allocation17 + $0xa0] sm:$0xff]
    %v1961 = vld [vmem:[#allocation17 + $0xa8] sm:$0xff]
    %v1962 = vld [vmem:[#allocation17 + $0xb0] sm:$0xff]
    %v1963 = vld [vmem:[#allocation17 + $0xb8] sm:$0xff]
    %v1964 = vld [vmem:[#allocation17 + $0xc0] sm:$0xff]
    %v1965 = vld [vmem:[#allocation17 + $0xc8] sm:$0xff]
    %v1966 = vld [vmem:[#allocation17 + $0xd0] sm:$0xff]
    %v1967 = vld [vmem:[#allocation17 + $0xd8] sm:$0xff]
    %v1968 = vld [vmem:[#allocation17 + $0xe0] sm:$0xff]
    %v1969 = vld [vmem:[#allocation17 + $0xe8] sm:$0xff]
    %v1970 = vld [vmem:[#allocation17 + $0xf0] sm:$0xff]
    %v1971 = vld [vmem:[#allocation17 + $0xf8] sm:$0xff]
    %v1972 = vld [vmem:[#allocation17 + $0x100] sm:$0xff]
    %v1973 = vld [vmem:[#allocation17 + $0x108] sm:$0xff]
    %v1974 = vld [vmem:[#allocation17 + $0x110] sm:$0xff]
    %v1975 = vld [vmem:[#allocation17 + $0x118] sm:$0xff]
    %v1976 = vld [vmem:[#allocation17 + $0x120] sm:$0xff]
    %v1977 = vld [vmem:[#allocation17 + $0x128] sm:$0xff]
    %v1978 = vld [vmem:[#allocation17 + $0x130] sm:$0xff]
    %v1979 = vld [vmem:[#allocation17 + $0x138] sm:$0xff]
    %v1980 = vld [vmem:[#allocation17 + $0x140] sm:$0xff]
    %v1981 = vld [vmem:[#allocation17 + $0x148] sm:$0xff]
    %v1982 = vld [vmem:[#allocation17 + $0x150] sm:$0xff]
    %v1983 = vld [vmem:[#allocation17 + $0x158] sm:$0xff]
    %v1984 = vld [vmem:[#allocation17 + $0x160] sm:$0xff]
    %v1985 = vld [vmem:[#allocation17 + $0x168] sm:$0xff]
    %v1986 = vld [vmem:[#allocation17 + $0x170] sm:$0xff]
    %v1987 = vld [vmem:[#allocation17 + $0x178] sm:$0xff]
    %v1988 = vld [vmem:[#allocation17 + $0x180] sm:$0xff]
    %v1989 = vld [vmem:[#allocation17 + $0x188] sm:$0xff]
    %v1990 = vld [vmem:[#allocation17 + $0x190] sm:$0xff]
    %v1991 = vld [vmem:[#allocation17 + $0x198] sm:$0xff]
    %v1992 = vld [vmem:[#allocation17 + $0x1a0] sm:$0xff]
    %v1993 = vld [vmem:[#allocation17 + $0x1a8] sm:$0xff]
    %v1994 = vld [vmem:[#allocation17 + $0x1b0] sm:$0xff]
    %v1995 = vld [vmem:[#allocation17 + $0x1b8] sm:$0xff]
    %v1996 = vld [vmem:[#allocation17 + $0x1c0] sm:$0xff]
    %v1997 = vld [vmem:[#allocation17 + $0x1c8] sm:$0xff]
    %v1998 = vld [vmem:[#allocation17 + $0x1d0] sm:$0xff]
    %v1999 = vld [vmem:[#allocation17 + $0x1d8] sm:$0xff]
    %v2000 = vld [vmem:[#allocation17 + $0x1e0] sm:$0xff]
    %v2001 = vld [vmem:[#allocation17 + $0x1e8] sm:$0xff]
    %v2002 = vld [vmem:[#allocation17 + $0x1f0] sm:$0xff]
    %v2003 = vld [vmem:[#allocation17 + $0x1f8] sm:$0xff]
    %2004 = vmatprep.subr.mxu0 %v1941
    %2005 = vmatpush1.msra.mxu0 %v1940
    %2006 = vmatprep.subr.mxu0 %v1945
    %2007 = vmatpush1.msra.mxu0 %v1944
    %2008 = vmatprep.subr.mxu0 %v1949
    %2009 = vmatpush1.msra.mxu0 %v1948
    %2010 = vmatprep.subr.mxu0 %v1953
    %2011 = vmatpush1.msra.mxu0 %v1952
    %2012 = vmatprep.subr.mxu0 %v1957
    %2013 = vmatpush1.msra.mxu0 %v1956
    %2014 = vmatprep.subr.mxu0 %v1961
    %2015 = vmatpush1.msra.mxu0 %v1960
    %2016 = vmatprep.subr.mxu0 %v1965
    %2017 = vmatpush1.msra.mxu0 %v1964
    %2018 = vmatprep.subr.mxu0 %v1969
    %2019 = vmatpush1.msra.mxu0 %v1968
    %2020 = vmatprep.subr.mxu0 %v1973
    %2021 = vmatpush1.msra.mxu0 %v1972
    %2022 = vmatprep.subr.mxu0 %v1977
    %2023 = vmatpush1.msra.mxu0 %v1976
    %2024 = vmatprep.subr.mxu0 %v1981
    %2025 = vmatpush1.msra.mxu0 %v1980
    %2026 = vmatprep.subr.mxu0 %v1985
    %2027 = vmatpush1.msra.mxu0 %v1984
    %2028 = vmatprep.subr.mxu0 %v1989
    %2029 = vmatpush1.msra.mxu0 %v1988
    %2030 = vmatprep.subr.mxu0 %v1993
    %2031 = vmatpush1.msra.mxu0 %v1992
    %2032 = vmatprep.subr.mxu0 %v1997
    %2033 = vmatpush1.msra.mxu0 %v1996
    %2034 = vmatprep.subr.mxu0 %v2001
    %2035 = vmatpush1.msra.mxu0 %v2000
    %2036 = vmatprep.subr.mxu0 0.0
    %2037 = vmatpush1.msra.mxu0 0.0
    %2038 = vmatprep.subr.mxu0 0.0
    %2039 = vmatpush1.msra.mxu0 0.0
    %2040 = vmatprep.subr.mxu0 0.0
    %2041 = vmatpush1.msra.mxu0 0.0
    %2042 = vmatprep.subr.mxu0 0.0
    %2043 = vmatpush1.msra.mxu0 0.0
    %2044 = vmatprep.subr.mxu0 0.0
    %2045 = vmatpush1.msra.mxu0 0.0
    %2046 = vmatprep.subr.mxu0 0.0
    %2047 = vmatpush1.msra.mxu0 0.0
    %2048 = vmatprep.subr.mxu0 0.0
    %2049 = vmatpush1.msra.mxu0 0.0
    %2050 = vmatprep.subr.mxu0 0.0
    %2051 = vmatpush1.msra.mxu0 0.0
    %2052 = vmatprep.subr.mxu0 0.0
    %2053 = vmatpush1.msra.mxu0 0.0
    %2054 = vmatprep.subr.mxu0 0.0
    %2055 = vmatpush1.msra.mxu0 0.0
    %2056 = vmatprep.subr.mxu0 0.0
    %2057 = vmatpush1.msra.mxu0 0.0
    %2058 = vmatprep.subr.mxu0 0.0
    %2059 = vmatpush1.msra.mxu0 0.0
    %2060 = vmatprep.subr.mxu0 0.0
    %2061 = vmatpush1.msra.mxu0 0.0
    %2062 = vmatprep.subr.mxu0 0.0
    %2063 = vmatpush1.msra.mxu0 0.0
    %2064 = vmatprep.subr.mxu0 0.0
    %2065 = vmatpush1.msra.mxu0 0.0
    %2066 = vmatprep.subr.mxu0 0.0
    %2067 = vmatpush1.msra.mxu0 0.0
    %2068 = vmatprep.mubr.f32.mxu0 0.0
    %2069 = vmatmul.mubr.f32.gmra.mrb[0].mxu0 %v1683
    %v2070 = vpop.f32.mrb[0].mxu0
    %v2071 = vadd.f32 0.0, %v2070
    %v2072 = vpop.f32.mrb[0].mxu0
    %v2073 = vadd.f32 0.0, %v2072
    %2074 = vdwg.mxu0
    %2075 = vmatprep.subr.mxu0 %v1943
    %2076 = vmatpush1.msra.mxu0 %v1942
    %2077 = vmatprep.subr.mxu0 %v1947
    %2078 = vmatpush1.msra.mxu0 %v1946
    %2079 = vmatprep.subr.mxu0 %v1951
    %2080 = vmatpush1.msra.mxu0 %v1950
    %2081 = vmatprep.subr.mxu0 %v1955
    %2082 = vmatpush1.msra.mxu0 %v1954
    %2083 = vmatprep.subr.mxu0 %v1959
    %2084 = vmatpush1.msra.mxu0 %v1958
    %2085 = vmatprep.subr.mxu0 %v1963
    %2086 = vmatpush1.msra.mxu0 %v1962
    %2087 = vmatprep.subr.mxu0 %v1967
    %2088 = vmatpush1.msra.mxu0 %v1966
    %2089 = vmatprep.subr.mxu0 %v1971
    %2090 = vmatpush1.msra.mxu0 %v1970
    %2091 = vmatprep.subr.mxu0 %v1975
    %2092 = vmatpush1.msra.mxu0 %v1974
    %2093 = vmatprep.subr.mxu0 %v1979
    %2094 = vmatpush1.msra.mxu0 %v1978
    %2095 = vmatprep.subr.mxu0 %v1983
    %2096 = vmatpush1.msra.mxu0 %v1982
    %2097 = vmatprep.subr.mxu0 %v1987
    %2098 = vmatpush1.msra.mxu0 %v1986
    %2099 = vmatprep.subr.mxu0 %v1991
    %2100 = vmatpush1.msra.mxu0 %v1990
    %2101 = vmatprep.subr.mxu0 %v1995
    %2102 = vmatpush1.msra.mxu0 %v1994
    %2103 = vmatprep.subr.mxu0 %v1999
    %2104 = vmatpush1.msra.mxu0 %v1998
    %2105 = vmatprep.subr.mxu0 %v2003
    %2106 = vmatpush1.msra.mxu0 %v2002
    %2107 = vmatprep.subr.mxu0 0.0
    %2108 = vmatpush1.msra.mxu0 0.0
    %2109 = vmatprep.subr.mxu0 0.0
    %2110 = vmatpush1.msra.mxu0 0.0
    %2111 = vmatprep.subr.mxu0 0.0
    %2112 = vmatpush1.msra.mxu0 0.0
    %2113 = vmatprep.subr.mxu0 0.0
    %2114 = vmatpush1.msra.mxu0 0.0
    %2115 = vmatprep.subr.mxu0 0.0
    %2116 = vmatpush1.msra.mxu0 0.0
    %2117 = vmatprep.subr.mxu0 0.0
    %2118 = vmatpush1.msra.mxu0 0.0
    %2119 = vmatprep.subr.mxu0 0.0
    %2120 = vmatpush1.msra.mxu0 0.0
    %2121 = vmatprep.subr.mxu0 0.0
    %2122 = vmatpush1.msra.mxu0 0.0
    %2123 = vmatprep.subr.mxu0 0.0
    %2124 = vmatpush1.msra.mxu0 0.0
    %2125 = vmatprep.subr.mxu0 0.0
    %2126 = vmatpush1.msra.mxu0 0.0
    %2127 = vmatprep.subr.mxu0 0.0
    %2128 = vmatpush1.msra.mxu0 0.0
    %2129 = vmatprep.subr.mxu0 0.0
    %2130 = vmatpush1.msra.mxu0 0.0
    %2131 = vmatprep.subr.mxu0 0.0
    %2132 = vmatpush1.msra.mxu0 0.0
    %2133 = vmatprep.subr.mxu0 0.0
    %2134 = vmatpush1.msra.mxu0 0.0
    %2135 = vmatprep.subr.mxu0 0.0
    %2136 = vmatpush1.msra.mxu0 0.0
    %2137 = vmatprep.subr.mxu0 0.0
    %2138 = vmatpush1.msra.mxu0 0.0
    %2139 = vmatprep.mubr.f32.mxu0 0.0
    %2140 = vmatmul.mubr.f32.gmra.mrb[0].mxu0 %v1683
    %v2141 = vpop.f32.mrb[0].mxu0
    %v2142 = vadd.f32 0.0, %v2141
    %v2143 = vpop.f32.mrb[0].mxu0
    %v2144 = vadd.f32 0.0, %v2143
    %2145 = vdwg.mxu0
    %v2150 = vcombine.low %v2071, %v2073
    %v2151 = vcombine.low %v2142, %v2144
    %v2153 = vunpack.c.l.s4 1983009808
    %v2154 = vunpack.c.0.s8 %v2153
    %v2155 = vlaneseq
    %v2156 = vshrl.u32 %v2155, 7
    %v2157 = vsub.s32 %v2154, %v2156
    %v2158 = vrot.slane %v2150, %v2157
    %v2160 = vunpack.c.l.s4 1983009808
    %v2161 = vunpack.c.0.s8 %v2160
    %v2162 = vlaneseq
    %v2163 = vshrl.u32 %v2162, 7
    %v2164 = vsub.s32 %v2161, %v2163
    %v2165 = vrot.slane %v2151, %v2164
    %v2166 = vcombine.low %v2158, %v2165
    %v2168 = vadd.f32 %v1939, %v2166
    %v2169 = vxor.u32 %v2168, 2147483648
    %v2170 = vmul.f32 %v2169, 1.442695
    %v2171 = vpow.pop %v2170
    %v2172 = vadd.f32 %v2171, 1.0
    %v2173 = vrcp.pop %v2172
    %v2174 = vmul.f32 1.0, %v2173
    %v2176 = vrot.slane %v2168, 6
    %v2178 = vtanh.pop %v2176
    %v2180 = vrot.slane %v2174, 2
    %v2182 = vmul.f32 %v2180, %v1684
    %v2183 = vmul.f32 %v2174, %v2178
    %v2184 = vadd.f32 %v2182, %v2183
    %v2185 = vtanh.pop %v2184
    %v2186 = vrot.slane %v2174, 4
    %v2188 = vmul.f32 %v2186, %v2185
    %2189 = vst [vmem:[#allocation2] sm:$0x3] %v1936
    %2190 = vst [vmem:[#allocation3] sm:$0x3] %v1932
    %2191 = vst [vmem:[#allocation4] sm:$0x3] %v2188
    %2192 = vst [vmem:[#allocation5] sm:$0x3] %v2184
    %s2193 = scalar_lea.vmem [#allocation6], 6
    %2194 = vst [vmem:[%s2193] sm:$0x3] %v1936
    %s2195 = scalar_lea.vmem [#allocation7], 8
    %2196 = vst [vmem:[%s2195] sm:$0x3] %v2188
    %v2197 = vld [vmem:[#allocation2] sm:$0x3]
    %v2198 = vld [vmem:[#allocation3] sm:$0x3]
    %v2199 = vld [vmem:[#allocation4] sm:$0x3]
    %v2200 = vld [vmem:[#allocation5] sm:$0x3]
    %s2201 = scalar_lea.vmem [#allocation8], 16
    %v2202 = vld [vmem:[%s2201] sm:$0xf]
    %v2203 = vunpack.c.l.bf16 %v2202
    %v2204 = vld [vmem:[#allocation16] sm:$0xff]
    %v2205 = vld [vmem:[#allocation16 + $0x8] sm:$0xff]
    %v2206 = vld [vmem:[#allocation16 + $0x10] sm:$0xff]
    %v2207 = vld [vmem:[#allocation16 + $0x18] sm:$0xff]
    %v2208 = vld [vmem:[#allocation16 + $0x20] sm:$0xff]
    %v2209 = vld [vmem:[#allocation16 + $0x28] sm:$0xff]
    %v2210 = vld [vmem:[#allocation16 + $0x30] sm:$0xff]
    %v2211 = vld [vmem:[#allocation16 + $0x38] sm:$0xff]
    %v2212 = vld [vmem:[#allocation16 + $0x40] sm:$0xff]
    %v2213 = vld [vmem:[#allocation16 + $0x48] sm:$0xff]
    %v2214 = vld [vmem:[#allocation16 + $0x50] sm:$0xff]
    %v2215 = vld [vmem:[#allocation16 + $0x58] sm:$0xff]
    %v2216 = vld [vmem:[#allocation16 + $0x60] sm:$0xff]
    %v2217 = vld [vmem:[#allocation16 + $0x68] sm:$0xff]
    %v2218 = vld [vmem:[#allocation16 + $0x70] sm:$0xff]
    %v2219 = vld [vmem:[#allocation16 + $0x78] sm:$0xff]
    %v2220 = vld [vmem:[#allocation16 + $0x80] sm:$0xff]
    %v2221 = vld [vmem:[#allocation16 + $0x88] sm:$0xff]
    %v2222 = vld [vmem:[#allocation16 + $0x90] sm:$0xff]
    %v2223 = vld [vmem:[#allocation16 + $0x98] sm:$0xff]
    %v2224 = vld [vmem:[#allocation16 + $0xa0] sm:$0xff]
    %v2225 = vld [vmem:[#allocation16 + $0xa8] sm:$0xff]
    %v2226 = vld [vmem:[#allocation16 + $0xb0] sm:$0xff]
    %v2227 = vld [vmem:[#allocation16 + $0xb8] sm:$0xff]
    %v2228 = vld [vmem:[#allocation16 + $0xc0] sm:$0xff]
    %v2229 = vld [vmem:[#allocation16 + $0xc8] sm:$0xff]
    %v2230 = vld [vmem:[#allocation16 + $0xd0] sm:$0xff]
    %v2231 = vld [vmem:[#allocation16 + $0xd8] sm:$0xff]
    %v2232 = vld [vmem:[#allocation16 + $0xe0] sm:$0xff]
    %v2233 = vld [vmem:[#allocation16 + $0xe8] sm:$0xff]
    %v2234 = vld [vmem:[#allocation16 + $0xf0] sm:$0xff]
    %v2235 = vld [vmem:[#allocation16 + $0xf8] sm:$0xff]
    %v2236 = vld [vmem:[#allocation16 + $0x100] sm:$0xff]
    %v2237 = vld [vmem:[#allocation16 + $0x108] sm:$0xff]
    %v2238 = vld [vmem:[#allocation16 + $0x110] sm:$0xff]
    %v2239 = vld [vmem:[#allocation16 + $0x118] sm:$0xff]
    %v2240 = vld [vmem:[#allocation16 + $0x120] sm:$0xff]
    %v2241 = vld [vmem:[#allocation16 + $0x128] sm:$0xff]
    %v2242 = vld [vmem:[#allocation16 + $0x130] sm:$0xff]
    %v2243 = vld [vmem:[#allocation16 + $0x138] sm:$0xff]
    %v2244 = vld [vmem:[#allocation16 + $0x140] sm:$0xff]
    %v2245 = vld [vmem:[#allocation16 + $0x148] sm:$0xff]
    %v2246 = vld [vmem:[#allocation16 + $0x150] sm:$0xff]
    %v2247 = vld [vmem:[#allocation16 + $0x158] sm:$0xff]
    %v2248 = vld [vmem:[#allocation16 + $0x160] sm:$0xff]
    %v2249 = vld [vmem:[#allocation16 + $0x168] sm:$0xff]
    %v2250 = vld [vmem:[#allocation16 + $0x170] sm:$0xff]
    %v2251 = vld [vmem:[#allocation16 + $0x178] sm:$0xff]
    %v2252 = vld [vmem:[#allocation16 + $0x180] sm:$0xff]
    %v2253 = vld [vmem:[#allocation16 + $0x188] sm:$0xff]
    %v2254 = vld [vmem:[#allocation16 + $0x190] sm:$0xff]
    %v2255 = vld [vmem:[#allocation16 + $0x198] sm:$0xff]
    %v2256 = vld [vmem:[#allocation16 + $0x1a0] sm:$0xff]
    %v2257 = vld [vmem:[#allocation16 + $0x1a8] sm:$0xff]
    %v2258 = vld [vmem:[#allocation16 + $0x1b0] sm:$0xff]
    %v2259 = vld [vmem:[#allocation16 + $0x1b8] sm:$0xff]
    %v2260 = vld [vmem:[#allocation16 + $0x1c0] sm:$0xff]
    %v2261 = vld [vmem:[#allocation16 + $0x1c8] sm:$0xff]
    %v2262 = vld [vmem:[#allocation16 + $0x1d0] sm:$0xff]
    %v2263 = vld [vmem:[#allocation16 + $0x1d8] sm:$0xff]
    %v2264 = vld [vmem:[#allocation16 + $0x1e0] sm:$0xff]
    %v2265 = vld [vmem:[#allocation16 + $0x1e8] sm:$0xff]
    %v2266 = vld [vmem:[#allocation16 + $0x1f0] sm:$0xff]
    %v2267 = vld [vmem:[#allocation16 + $0x1f8] sm:$0xff]
    %2268 = vmatprep.subr.mxu0 %v2205
    %2269 = vmatpush1.msra.mxu0 %v2204
    %2270 = vmatprep.subr.mxu0 %v2209
    %2271 = vmatpush1.msra.mxu0 %v2208
    %2272 = vmatprep.subr.mxu0 %v2213
    %2273 = vmatpush1.msra.mxu0 %v2212
    %2274 = vmatprep.subr.mxu0 %v2217
    %2275 = vmatpush1.msra.mxu0 %v2216
    %2276 = vmatprep.subr.mxu0 %v2221
    %2277 = vmatpush1.msra.mxu0 %v2220
    %2278 = vmatprep.subr.mxu0 %v2225
    %2279 = vmatpush1.msra.mxu0 %v2224
    %2280 = vmatprep.subr.mxu0 %v2229
    %2281 = vmatpush1.msra.mxu0 %v2228
    %2282 = vmatprep.subr.mxu0 %v2233
    %2283 = vmatpush1.msra.mxu0 %v2232
    %2284 = vmatprep.subr.mxu0 %v2237
    %2285 = vmatpush1.msra.mxu0 %v2236
    %2286 = vmatprep.subr.mxu0 %v2241
    %2287 = vmatpush1.msra.mxu0 %v2240
    %2288 = vmatprep.subr.mxu0 %v2245
    %2289 = vmatpush1.msra.mxu0 %v2244
    %2290 = vmatprep.subr.mxu0 %v2249
    %2291 = vmatpush1.msra.mxu0 %v2248
    %2292 = vmatprep.subr.mxu0 %v2253
    %2293 = vmatpush1.msra.mxu0 %v2252
    %2294 = vmatprep.subr.mxu0 %v2257
    %2295 = vmatpush1.msra.mxu0 %v2256
    %2296 = vmatprep.subr.mxu0 %v2261
    %2297 = vmatpush1.msra.mxu0 %v2260
    %2298 = vmatprep.subr.mxu0 %v2265
    %2299 = vmatpush1.msra.mxu0 %v2264
    %2300 = vmatprep.subr.mxu0 0.0
    %2301 = vmatpush1.msra.mxu0 0.0
    %2302 = vmatprep.subr.mxu0 0.0
    %2303 = vmatpush1.msra.mxu0 0.0
    %2304 = vmatprep.subr.mxu0 0.0
    %2305 = vmatpush1.msra.mxu0 0.0
    %2306 = vmatprep.subr.mxu0 0.0
    %2307 = vmatpush1.msra.mxu0 0.0
    %2308 = vmatprep.subr.mxu0 0.0
    %2309 = vmatpush1.msra.mxu0 0.0
    %2310 = vmatprep.subr.mxu0 0.0
    %2311 = vmatpush1.msra.mxu0 0.0
    %2312 = vmatprep.subr.mxu0 0.0
    %2313 = vmatpush1.msra.mxu0 0.0
    %2314 = vmatprep.subr.mxu0 0.0
    %2315 = vmatpush1.msra.mxu0 0.0
    %2316 = vmatprep.subr.mxu0 0.0
    %2317 = vmatpush1.msra.mxu0 0.0
    %2318 = vmatprep.subr.mxu0 0.0
    %2319 = vmatpush1.msra.mxu0 0.0
    %2320 = vmatprep.subr.mxu0 0.0
    %2321 = vmatpush1.msra.mxu0 0.0
    %2322 = vmatprep.subr.mxu0 0.0
    %2323 = vmatpush1.msra.mxu0 0.0
    %2324 = vmatprep.subr.mxu0 0.0
    %2325 = vmatpush1.msra.mxu0 0.0
    %2326 = vmatprep.subr.mxu0 0.0
    %2327 = vmatpush1.msra.mxu0 0.0
    %2328 = vmatprep.subr.mxu0 0.0
    %2329 = vmatpush1.msra.mxu0 0.0
    %2330 = vmatprep.subr.mxu0 0.0
    %2331 = vmatpush1.msra.mxu0 0.0
    %2332 = vmatprep.mubr.f32.mxu0 0.0
    %2333 = vmatmul.mubr.f32.gmra.mrb[0].mxu0 %v2197
    %v2334 = vpop.f32.mrb[0].mxu0
    %v2335 = vadd.f32 0.0, %v2334
    %v2336 = vpop.f32.mrb[0].mxu0
    %v2337 = vadd.f32 0.0, %v2336
    %2338 = vdwg.mxu0
    %2339 = vmatprep.subr.mxu0 %v2207
    %2340 = vmatpush1.msra.mxu0 %v2206
    %2341 = vmatprep.subr.mxu0 %v2211
    %2342 = vmatpush1.msra.mxu0 %v2210
    %2343 = vmatprep.subr.mxu0 %v2215
    %2344 = vmatpush1.msra.mxu0 %v2214
    %2345 = vmatprep.subr.mxu0 %v2219
    %2346 = vmatpush1.msra.mxu0 %v2218
    %2347 = vmatprep.subr.mxu0 %v2223
    %2348 = vmatpush1.msra.mxu0 %v2222
    %2349 = vmatprep.subr.mxu0 %v2227
    %2350 = vmatpush1.msra.mxu0 %v2226
    %2351 = vmatprep.subr.mxu0 %v2231
    %2352 = vmatpush1.msra.mxu0 %v2230
    %2353 = vmatprep.subr.mxu0 %v2235
    %2354 = vmatpush1.msra.mxu0 %v2234
    %2355 = vmatprep.subr.mxu0 %v2239
    %2356 = vmatpush1.msra.mxu0 %v2238
    %2357 = vmatprep.subr.mxu0 %v2243
    %2358 = vmatpush1.msra.mxu0 %v2242
    %2359 = vmatprep.subr.mxu0 %v2247
    %2360 = vmatpush1.msra.mxu0 %v2246
    %2361 = vmatprep.subr.mxu0 %v2251
    %2362 = vmatpush1.msra.mxu0 %v2250
    %2363 = vmatprep.subr.mxu0 %v2255
    %2364 = vmatpush1.msra.mxu0 %v2254
    %2365 = vmatprep.subr.mxu0 %v2259
    %2366 = vmatpush1.msra.mxu0 %v2258
    %2367 = vmatprep.subr.mxu0 %v2263
    %2368 = vmatpush1.msra.mxu0 %v2262
    %2369 = vmatprep.subr.mxu0 %v2267
    %2370 = vmatpush1.msra.mxu0 %v2266
    %2371 = vmatprep.subr.mxu0 0.0
    %2372 = vmatpush1.msra.mxu0 0.0
    %2373 = vmatprep.subr.mxu0 0.0
    %2374 = vmatpush1.msra.mxu0 0.0
    %2375 = vmatprep.subr.mxu0 0.0
    %2376 = vmatpush1.msra.mxu0 0.0
    %2377 = vmatprep.subr.mxu0 0.0
    %2378 = vmatpush1.msra.mxu0 0.0
    %2379 = vmatprep.subr.mxu0 0.0
    %2380 = vmatpush1.msra.mxu0 0.0
    %2381 = vmatprep.subr.mxu0 0.0
    %2382 = vmatpush1.msra.mxu0 0.0
    %2383 = vmatprep.subr.mxu0 0.0
    %2384 = vmatpush1.msra.mxu0 0.0
    %2385 = vmatprep.subr.mxu0 0.0
    %2386 = vmatpush1.msra.mxu0 0.0
    %2387 = vmatprep.subr.mxu0 0.0
    %2388 = vmatpush1.msra.mxu0 0.0
    %2389 = vmatprep.subr.mxu0 0.0
    %2390 = vmatpush1.msra.mxu0 0.0
    %2391 = vmatprep.subr.mxu0 0.0
    %2392 = vmatpush1.msra.mxu0 0.0
    %2393 = vmatprep.subr.mxu0 0.0
    %2394 = vmatpush1.msra.mxu0 0.0
    %2395 = vmatprep.subr.mxu0 0.0
    %2396 = vmatpush1.msra.mxu0 0.0
    %2397 = vmatprep.subr.mxu0 0.0
    %2398 = vmatpush1.msra.mxu0 0.0
    %2399 = vmatprep.subr.mxu0 0.0
    %2400 = vmatpush1.msra.mxu0 0.0
    %2401 = vmatprep.subr.mxu0 0.0
    %2402 = vmatpush1.msra.mxu0 0.0
    %2403 = vmatprep.mubr.f32.mxu0 0.0
    %2404 = vmatmul.mubr.f32.gmra.mrb[0].mxu0 %v2197
    %v2405 = vpop.f32.mrb[0].mxu0
    %v2406 = vadd.f32 0.0, %v2405
    %v2407 = vpop.f32.mrb[0].mxu0
    %v2408 = vadd.f32 0.0, %v2407
    %2409 = vdwg.mxu0
    %v2414 = vcombine.low %v2335, %v2337
    %v2415 = vcombine.low %v2406, %v2408
    %v2417 = vunpack.c.l.s4 1983009808
    %v2418 = vunpack.c.0.s8 %v2417
    %v2419 = vlaneseq
    %v2420 = vshrl.u32 %v2419, 7
    %v2421 = vsub.s32 %v2418, %v2420
    %v2422 = vrot.slane %v2414, %v2421
    %v2424 = vunpack.c.l.s4 1983009808
    %v2425 = vunpack.c.0.s8 %v2424
    %v2426 = vlaneseq
    %v2427 = vshrl.u32 %v2426, 7
    %v2428 = vsub.s32 %v2425, %v2427
    %v2429 = vrot.slane %v2415, %v2428
    %v2430 = vcombine.low %v2422, %v2429
    %v2432 = vadd.f32 %v2203, %v2430
    %v2433 = vxor.u32 %v2432, 2147483648
    %v2434 = vmul.f32 %v2433, 1.442695
    %v2435 = vpow.pop %v2434
    %v2436 = vadd.f32 %v2435, 1.0
    %v2437 = vrcp.pop %v2436
    %v2438 = vmul.f32 1.0, %v2437
    %v2440 = vrot.slane %v2432, 6
    %v2442 = vtanh.pop %v2440
    %v2444 = vrot.slane %v2438, 2
    %v2446 = vmul.f32 %v2444, %v2198
    %v2447 = vmul.f32 %v2438, %v2442
    %v2448 = vadd.f32 %v2446, %v2447
    %v2449 = vtanh.pop %v2448
    %v2450 = vrot.slane %v2438, 4
    %v2452 = vmul.f32 %v2450, %v2449
    %s2453 = scalar_lea.vmem [#allocation11], 12
    %v2454 = vld [vmem:[%s2453] sm:$0xf]
    %v2455 = vunpack.c.l.bf16 %v2454
    %v2456 = vld [vmem:[#allocation17] sm:$0xff]
    %v2457 = vld [vmem:[#allocation17 + $0x8] sm:$0xff]
    %v2458 = vld [vmem:[#allocation17 + $0x10] sm:$0xff]
    %v2459 = vld [vmem:[#allocation17 + $0x18] sm:$0xff]
    %v2460 = vld [vmem:[#allocation17 + $0x20] sm:$0xff]
    %v2461 = vld [vmem:[#allocation17 + $0x28] sm:$0xff]
    %v2462 = vld [vmem:[#allocation17 + $0x30] sm:$0xff]
    %v2463 = vld [vmem:[#allocation17 + $0x38] sm:$0xff]
    %v2464 = vld [vmem:[#allocation17 + $0x40] sm:$0xff]
    %v2465 = vld [vmem:[#allocation17 + $0x48] sm:$0xff]
    %v2466 = vld [vmem:[#allocation17 + $0x50] sm:$0xff]
    %v2467 = vld [vmem:[#allocation17 + $0x58] sm:$0xff]
    %v2468 = vld [vmem:[#allocation17 + $0x60] sm:$0xff]
    %v2469 = vld [vmem:[#allocation17 + $0x68] sm:$0xff]
    %v2470 = vld [vmem:[#allocation17 + $0x70] sm:$0xff]
    %v2471 = vld [vmem:[#allocation17 + $0x78] sm:$0xff]
    %v2472 = vld [vmem:[#allocation17 + $0x80] sm:$0xff]
    %v2473 = vld [vmem:[#allocation17 + $0x88] sm:$0xff]
    %v2474 = vld [vmem:[#allocation17 + $0x90] sm:$0xff]
    %v2475 = vld [vmem:[#allocation17 + $0x98] sm:$0xff]
    %v2476 = vld [vmem:[#allocation17 + $0xa0] sm:$0xff]
    %v2477 = vld [vmem:[#allocation17 + $0xa8] sm:$0xff]
    %v2478 = vld [vmem:[#allocation17 + $0xb0] sm:$0xff]
    %v2479 = vld [vmem:[#allocation17 + $0xb8] sm:$0xff]
    %v2480 = vld [vmem:[#allocation17 + $0xc0] sm:$0xff]
    %v2481 = vld [vmem:[#allocation17 + $0xc8] sm:$0xff]
    %v2482 = vld [vmem:[#allocation17 + $0xd0] sm:$0xff]
    %v2483 = vld [vmem:[#allocation17 + $0xd8] sm:$0xff]
    %v2484 = vld [vmem:[#allocation17 + $0xe0] sm:$0xff]
    %v2485 = vld [vmem:[#allocation17 + $0xe8] sm:$0xff]
    %v2486 = vld [vmem:[#allocation17 + $0xf0] sm:$0xff]
    %v2487 = vld [vmem:[#allocation17 + $0xf8] sm:$0xff]
    %v2488 = vld [vmem:[#allocation17 + $0x100] sm:$0xff]
    %v2489 = vld [vmem:[#allocation17 + $0x108] sm:$0xff]
    %v2490 = vld [vmem:[#allocation17 + $0x110] sm:$0xff]
    %v2491 = vld [vmem:[#allocation17 + $0x118] sm:$0xff]
    %v2492 = vld [vmem:[#allocation17 + $0x120] sm:$0xff]
    %v2493 = vld [vmem:[#allocation17 + $0x128] sm:$0xff]
    %v2494 = vld [vmem:[#allocation17 + $0x130] sm:$0xff]
    %v2495 = vld [vmem:[#allocation17 + $0x138] sm:$0xff]
    %v2496 = vld [vmem:[#allocation17 + $0x140] sm:$0xff]
    %v2497 = vld [vmem:[#allocation17 + $0x148] sm:$0xff]
    %v2498 = vld [vmem:[#allocation17 + $0x150] sm:$0xff]
    %v2499 = vld [vmem:[#allocation17 + $0x158] sm:$0xff]
    %v2500 = vld [vmem:[#allocation17 + $0x160] sm:$0xff]
    %v2501 = vld [vmem:[#allocation17 + $0x168] sm:$0xff]
    %v2502 = vld [vmem:[#allocation17 + $0x170] sm:$0xff]
    %v2503 = vld [vmem:[#allocation17 + $0x178] sm:$0xff]
    %v2504 = vld [vmem:[#allocation17 + $0x180] sm:$0xff]
    %v2505 = vld [vmem:[#allocation17 + $0x188] sm:$0xff]
    %v2506 = vld [vmem:[#allocation17 + $0x190] sm:$0xff]
    %v2507 = vld [vmem:[#allocation17 + $0x198] sm:$0xff]
    %v2508 = vld [vmem:[#allocation17 + $0x1a0] sm:$0xff]
    %v2509 = vld [vmem:[#allocation17 + $0x1a8] sm:$0xff]
    %v2510 = vld [vmem:[#allocation17 + $0x1b0] sm:$0xff]
    %v2511 = vld [vmem:[#allocation17 + $0x1b8] sm:$0xff]
    %v2512 = vld [vmem:[#allocation17 + $0x1c0] sm:$0xff]
    %v2513 = vld [vmem:[#allocation17 + $0x1c8] sm:$0xff]
    %v2514 = vld [vmem:[#allocation17 + $0x1d0] sm:$0xff]
    %v2515 = vld [vmem:[#allocation17 + $0x1d8] sm:$0xff]
    %v2516 = vld [vmem:[#allocation17 + $0x1e0] sm:$0xff]
    %v2517 = vld [vmem:[#allocation17 + $0x1e8] sm:$0xff]
    %v2518 = vld [vmem:[#allocation17 + $0x1f0] sm:$0xff]
    %v2519 = vld [vmem:[#allocation17 + $0x1f8] sm:$0xff]
    %2520 = vmatprep.subr.mxu0 %v2457
    %2521 = vmatpush1.msra.mxu0 %v2456
    %2522 = vmatprep.subr.mxu0 %v2461
    %2523 = vmatpush1.msra.mxu0 %v2460
    %2524 = vmatprep.subr.mxu0 %v2465
    %2525 = vmatpush1.msra.mxu0 %v2464
    %2526 = vmatprep.subr.mxu0 %v2469
    %2527 = vmatpush1.msra.mxu0 %v2468
    %2528 = vmatprep.subr.mxu0 %v2473
    %2529 = vmatpush1.msra.mxu0 %v2472
    %2530 = vmatprep.subr.mxu0 %v2477
    %2531 = vmatpush1.msra.mxu0 %v2476
    %2532 = vmatprep.subr.mxu0 %v2481
    %2533 = vmatpush1.msra.mxu0 %v2480
    %2534 = vmatprep.subr.mxu0 %v2485
    %2535 = vmatpush1.msra.mxu0 %v2484
    %2536 = vmatprep.subr.mxu0 %v2489
    %2537 = vmatpush1.msra.mxu0 %v2488
    %2538 = vmatprep.subr.mxu0 %v2493
    %2539 = vmatpush1.msra.mxu0 %v2492
    %2540 = vmatprep.subr.mxu0 %v2497
    %2541 = vmatpush1.msra.mxu0 %v2496
    %2542 = vmatprep.subr.mxu0 %v2501
    %2543 = vmatpush1.msra.mxu0 %v2500
    %2544 = vmatprep.subr.mxu0 %v2505
    %2545 = vmatpush1.msra.mxu0 %v2504
    %2546 = vmatprep.subr.mxu0 %v2509
    %2547 = vmatpush1.msra.mxu0 %v2508
    %2548 = vmatprep.subr.mxu0 %v2513
    %2549 = vmatpush1.msra.mxu0 %v2512
    %2550 = vmatprep.subr.mxu0 %v2517
    %2551 = vmatpush1.msra.mxu0 %v2516
    %2552 = vmatprep.subr.mxu0 0.0
    %2553 = vmatpush1.msra.mxu0 0.0
    %2554 = vmatprep.subr.mxu0 0.0
    %2555 = vmatpush1.msra.mxu0 0.0
    %2556 = vmatprep.subr.mxu0 0.0
    %2557 = vmatpush1.msra.mxu0 0.0
    %2558 = vmatprep.subr.mxu0 0.0
    %2559 = vmatpush1.msra.mxu0 0.0
    %2560 = vmatprep.subr.mxu0 0.0
    %2561 = vmatpush1.msra.mxu0 0.0
    %2562 = vmatprep.subr.mxu0 0.0
    %2563 = vmatpush1.msra.mxu0 0.0
    %2564 = vmatprep.subr.mxu0 0.0
    %2565 = vmatpush1.msra.mxu0 0.0
    %2566 = vmatprep.subr.mxu0 0.0
    %2567 = vmatpush1.msra.mxu0 0.0
    %2568 = vmatprep.subr.mxu0 0.0
    %2569 = vmatpush1.msra.mxu0 0.0
    %2570 = vmatprep.subr.mxu0 0.0
    %2571 = vmatpush1.msra.mxu0 0.0
    %2572 = vmatprep.subr.mxu0 0.0
    %2573 = vmatpush1.msra.mxu0 0.0
    %2574 = vmatprep.subr.mxu0 0.0
    %2575 = vmatpush1.msra.mxu0 0.0
    %2576 = vmatprep.subr.mxu0 0.0
    %2577 = vmatpush1.msra.mxu0 0.0
    %2578 = vmatprep.subr.mxu0 0.0
    %2579 = vmatpush1.msra.mxu0 0.0
    %2580 = vmatprep.subr.mxu0 0.0
    %2581 = vmatpush1.msra.mxu0 0.0
    %2582 = vmatprep.subr.mxu0 0.0
    %2583 = vmatpush1.msra.mxu0 0.0
    %2584 = vmatprep.mubr.f32.mxu0 0.0
    %2585 = vmatmul.mubr.f32.gmra.mrb[0].mxu0 %v2199
    %v2586 = vpop.f32.mrb[0].mxu0
    %v2587 = vadd.f32 0.0, %v2586
    %v2588 = vpop.f32.mrb[0].mxu0
    %v2589 = vadd.f32 0.0, %v2588
    %2590 = vdwg.mxu0
    %2591 = vmatprep.subr.mxu0 %v2459
    %2592 = vmatpush1.msra.mxu0 %v2458
    %2593 = vmatprep.subr.mxu0 %v2463
    %2594 = vmatpush1.msra.mxu0 %v2462
    %2595 = vmatprep.subr.mxu0 %v2467
    %2596 = vmatpush1.msra.mxu0 %v2466
    %2597 = vmatprep.subr.mxu0 %v2471
    %2598 = vmatpush1.msra.mxu0 %v2470
    %2599 = vmatprep.subr.mxu0 %v2475
    %2600 = vmatpush1.msra.mxu0 %v2474
    %2601 = vmatprep.subr.mxu0 %v2479
    %2602 = vmatpush1.msra.mxu0 %v2478
    %2603 = vmatprep.subr.mxu0 %v2483
    %2604 = vmatpush1.msra.mxu0 %v2482
    %2605 = vmatprep.subr.mxu0 %v2487
    %2606 = vmatpush1.msra.mxu0 %v2486
    %2607 = vmatprep.subr.mxu0 %v2491
    %2608 = vmatpush1.msra.mxu0 %v2490
    %2609 = vmatprep.subr.mxu0 %v2495
    %2610 = vmatpush1.msra.mxu0 %v2494
    %2611 = vmatprep.subr.mxu0 %v2499
    %2612 = vmatpush1.msra.mxu0 %v2498
    %2613 = vmatprep.subr.mxu0 %v2503
    %2614 = vmatpush1.msra.mxu0 %v2502
    %2615 = vmatprep.subr.mxu0 %v2507
    %2616 = vmatpush1.msra.mxu0 %v2506
    %2617 = vmatprep.subr.mxu0 %v2511
    %2618 = vmatpush1.msra.mxu0 %v2510
    %2619 = vmatprep.subr.mxu0 %v2515
    %2620 = vmatpush1.msra.mxu0 %v2514
    %2621 = vmatprep.subr.mxu0 %v2519
    %2622 = vmatpush1.msra.mxu0 %v2518
    %2623 = vmatprep.subr.mxu0 0.0
    %2624 = vmatpush1.msra.mxu0 0.0
    %2625 = vmatprep.subr.mxu0 0.0
    %2626 = vmatpush1.msra.mxu0 0.0
    %2627 = vmatprep.subr.mxu0 0.0
    %2628 = vmatpush1.msra.mxu0 0.0
    %2629 = vmatprep.subr.mxu0 0.0
    %2630 = vmatpush1.msra.mxu0 0.0
    %2631 = vmatprep.subr.mxu0 0.0
    %2632 = vmatpush1.msra.mxu0 0.0
    %2633 = vmatprep.subr.mxu0 0.0
    %2634 = vmatpush1.msra.mxu0 0.0
    %2635 = vmatprep.subr.mxu0 0.0
    %2636 = vmatpush1.msra.mxu0 0.0
    %2637 = vmatprep.subr.mxu0 0.0
    %2638 = vmatpush1.msra.mxu0 0.0
    %2639 = vmatprep.subr.mxu0 0.0
    %2640 = vmatpush1.msra.mxu0 0.0
    %2641 = vmatprep.subr.mxu0 0.0
    %2642 = vmatpush1.msra.mxu0 0.0
    %2643 = vmatprep.subr.mxu0 0.0
    %2644 = vmatpush1.msra.mxu0 0.0
    %2645 = vmatprep.subr.mxu0 0.0
    %2646 = vmatpush1.msra.mxu0 0.0
    %2647 = vmatprep.subr.mxu0 0.0
    %2648 = vmatpush1.msra.mxu0 0.0
    %2649 = vmatprep.subr.mxu0 0.0
    %2650 = vmatpush1.msra.mxu0 0.0
    %2651 = vmatprep.subr.mxu0 0.0
    %2652 = vmatpush1.msra.mxu0 0.0
    %2653 = vmatprep.subr.mxu0 0.0
    %2654 = vmatpush1.msra.mxu0 0.0
    %2655 = vmatprep.mubr.f32.mxu0 0.0
    %2656 = vmatmul.mubr.f32.gmra.mrb[0].mxu0 %v2199
    %v2657 = vpop.f32.mrb[0].mxu0
    %v2658 = vadd.f32 0.0, %v2657
    %v2659 = vpop.f32.mrb[0].mxu0
    %v2660 = vadd.f32 0.0, %v2659
    %2661 = vdwg.mxu0
    %v2666 = vcombine.low %v2587, %v2589
    %v2667 = vcombine.low %v2658, %v2660
    %v2669 = vunpack.c.l.s4 1983009808
    %v2670 = vunpack.c.0.s8 %v2669
    %v2671 = vlaneseq
    %v2672 = vshrl.u32 %v2671, 7
    %v2673 = vsub.s32 %v2670, %v2672
    %v2674 = vrot.slane %v2666, %v2673
    %v2676 = vunpack.c.l.s4 1983009808
    %v2677 = vunpack.c.0.s8 %v2676
    %v2678 = vlaneseq
    %v2679 = vshrl.u32 %v2678, 7
    %v2680 = vsub.s32 %v2677, %v2679
    %v2681 = vrot.slane %v2667, %v2680
    %v2682 = vcombine.low %v2674, %v2681
    %v2684 = vadd.f32 %v2455, %v2682
    %v2685 = vxor.u32 %v2684, 2147483648
    %v2686 = vmul.f32 %v2685, 1.442695
    %v2687 = vpow.pop %v2686
    %v2688 = vadd.f32 %v2687, 1.0
    %v2689 = vrcp.pop %v2688
    %v2690 = vmul.f32 1.0, %v2689
    %v2692 = vrot.slane %v2684, 6
    %v2694 = vtanh.pop %v2692
    %v2696 = vrot.slane %v2690, 2
    %v2698 = vmul.f32 %v2696, %v2200
    %v2699 = vmul.f32 %v2690, %v2694
    %v2700 = vadd.f32 %v2698, %v2699
    %v2701 = vtanh.pop %v2700
    %v2702 = vrot.slane %v2690, 4
    %v2704 = vmul.f32 %v2702, %v2701
    %2705 = vst [vmem:[#allocation2] sm:$0x3] %v2452
    %2706 = vst [vmem:[#allocation3] sm:$0x3] %v2448
    %2707 = vst [vmem:[#allocation4] sm:$0x3] %v2704
    %2708 = vst [vmem:[#allocation5] sm:$0x3] %v2700
    %s2709 = scalar_lea.vmem [#allocation6], 8
    %2710 = vst [vmem:[%s2709] sm:$0x3] %v2452
    %s2711 = scalar_lea.vmem [#allocation7], 6
    %2712 = vst [vmem:[%s2711] sm:$0x3] %v2704
    %v2713 = vld [vmem:[#allocation2] sm:$0x3]
    %v2714 = vld [vmem:[#allocation3] sm:$0x3]
    %v2715 = vld [vmem:[#allocation4] sm:$0x3]
    %v2716 = vld [vmem:[#allocation5] sm:$0x3]
    %s2717 = scalar_lea.vmem [#allocation8], 20
    %v2718 = vld [vmem:[%s2717] sm:$0xf]
    %v2719 = vunpack.c.l.bf16 %v2718
    %v2720 = vld [vmem:[#allocation16] sm:$0xff]
    %v2721 = vld [vmem:[#allocation16 + $0x8] sm:$0xff]
    %v2722 = vld [vmem:[#allocation16 + $0x10] sm:$0xff]
    %v2723 = vld [vmem:[#allocation16 + $0x18] sm:$0xff]
    %v2724 = vld [vmem:[#allocation16 + $0x20] sm:$0xff]
    %v2725 = vld [vmem:[#allocation16 + $0x28] sm:$0xff]
    %v2726 = vld [vmem:[#allocation16 + $0x30] sm:$0xff]
    %v2727 = vld [vmem:[#allocation16 + $0x38] sm:$0xff]
    %v2728 = vld [vmem:[#allocation16 + $0x40] sm:$0xff]
    %v2729 = vld [vmem:[#allocation16 + $0x48] sm:$0xff]
    %v2730 = vld [vmem:[#allocation16 + $0x50] sm:$0xff]
    %v2731 = vld [vmem:[#allocation16 + $0x58] sm:$0xff]
    %v2732 = vld [vmem:[#allocation16 + $0x60] sm:$0xff]
    %v2733 = vld [vmem:[#allocation16 + $0x68] sm:$0xff]
    %v2734 = vld [vmem:[#allocation16 + $0x70] sm:$0xff]
    %v2735 = vld [vmem:[#allocation16 + $0x78] sm:$0xff]
    %v2736 = vld [vmem:[#allocation16 + $0x80] sm:$0xff]
    %v2737 = vld [vmem:[#allocation16 + $0x88] sm:$0xff]
    %v2738 = vld [vmem:[#allocation16 + $0x90] sm:$0xff]
    %v2739 = vld [vmem:[#allocation16 + $0x98] sm:$0xff]
    %v2740 = vld [vmem:[#allocation16 + $0xa0] sm:$0xff]
    %v2741 = vld [vmem:[#allocation16 + $0xa8] sm:$0xff]
    %v2742 = vld [vmem:[#allocation16 + $0xb0] sm:$0xff]
    %v2743 = vld [vmem:[#allocation16 + $0xb8] sm:$0xff]
    %v2744 = vld [vmem:[#allocation16 + $0xc0] sm:$0xff]
    %v2745 = vld [vmem:[#allocation16 + $0xc8] sm:$0xff]
    %v2746 = vld [vmem:[#allocation16 + $0xd0] sm:$0xff]
    %v2747 = vld [vmem:[#allocation16 + $0xd8] sm:$0xff]
    %v2748 = vld [vmem:[#allocation16 + $0xe0] sm:$0xff]
    %v2749 = vld [vmem:[#allocation16 + $0xe8] sm:$0xff]
    %v2750 = vld [vmem:[#allocation16 + $0xf0] sm:$0xff]
    %v2751 = vld [vmem:[#allocation16 + $0xf8] sm:$0xff]
    %v2752 = vld [vmem:[#allocation16 + $0x100] sm:$0xff]
    %v2753 = vld [vmem:[#allocation16 + $0x108] sm:$0xff]
    %v2754 = vld [vmem:[#allocation16 + $0x110] sm:$0xff]
    %v2755 = vld [vmem:[#allocation16 + $0x118] sm:$0xff]
    %v2756 = vld [vmem:[#allocation16 + $0x120] sm:$0xff]
    %v2757 = vld [vmem:[#allocation16 + $0x128] sm:$0xff]
    %v2758 = vld [vmem:[#allocation16 + $0x130] sm:$0xff]
    %v2759 = vld [vmem:[#allocation16 + $0x138] sm:$0xff]
    %v2760 = vld [vmem:[#allocation16 + $0x140] sm:$0xff]
    %v2761 = vld [vmem:[#allocation16 + $0x148] sm:$0xff]
    %v2762 = vld [vmem:[#allocation16 + $0x150] sm:$0xff]
    %v2763 = vld [vmem:[#allocation16 + $0x158] sm:$0xff]
    %v2764 = vld [vmem:[#allocation16 + $0x160] sm:$0xff]
    %v2765 = vld [vmem:[#allocation16 + $0x168] sm:$0xff]
    %v2766 = vld [vmem:[#allocation16 + $0x170] sm:$0xff]
    %v2767 = vld [vmem:[#allocation16 + $0x178] sm:$0xff]
    %v2768 = vld [vmem:[#allocation16 + $0x180] sm:$0xff]
    %v2769 = vld [vmem:[#allocation16 + $0x188] sm:$0xff]
    %v2770 = vld [vmem:[#allocation16 + $0x190] sm:$0xff]
    %v2771 = vld [vmem:[#allocation16 + $0x198] sm:$0xff]
    %v2772 = vld [vmem:[#allocation16 + $0x1a0] sm:$0xff]
    %v2773 = vld [vmem:[#allocation16 + $0x1a8] sm:$0xff]
    %v2774 = vld [vmem:[#allocation16 + $0x1b0] sm:$0xff]
    %v2775 = vld [vmem:[#allocation16 + $0x1b8] sm:$0xff]
    %v2776 = vld [vmem:[#allocation16 + $0x1c0] sm:$0xff]
    %v2777 = vld [vmem:[#allocation16 + $0x1c8] sm:$0xff]
    %v2778 = vld [vmem:[#allocation16 + $0x1d0] sm:$0xff]
    %v2779 = vld [vmem:[#allocation16 + $0x1d8] sm:$0xff]
    %v2780 = vld [vmem:[#allocation16 + $0x1e0] sm:$0xff]
    %v2781 = vld [vmem:[#allocation16 + $0x1e8] sm:$0xff]
    %v2782 = vld [vmem:[#allocation16 + $0x1f0] sm:$0xff]
    %v2783 = vld [vmem:[#allocation16 + $0x1f8] sm:$0xff]
    %2784 = vmatprep.subr.mxu0 %v2721
    %2785 = vmatpush1.msra.mxu0 %v2720
    %2786 = vmatprep.subr.mxu0 %v2725
    %2787 = vmatpush1.msra.mxu0 %v2724
    %2788 = vmatprep.subr.mxu0 %v2729
    %2789 = vmatpush1.msra.mxu0 %v2728
    %2790 = vmatprep.subr.mxu0 %v2733
    %2791 = vmatpush1.msra.mxu0 %v2732
    %2792 = vmatprep.subr.mxu0 %v2737
    %2793 = vmatpush1.msra.mxu0 %v2736
    %2794 = vmatprep.subr.mxu0 %v2741
    %2795 = vmatpush1.msra.mxu0 %v2740
    %2796 = vmatprep.subr.mxu0 %v2745
    %2797 = vmatpush1.msra.mxu0 %v2744
    %2798 = vmatprep.subr.mxu0 %v2749
    %2799 = vmatpush1.msra.mxu0 %v2748
    %2800 = vmatprep.subr.mxu0 %v2753
    %2801 = vmatpush1.msra.mxu0 %v2752
    %2802 = vmatprep.subr.mxu0 %v2757
    %2803 = vmatpush1.msra.mxu0 %v2756
    %2804 = vmatprep.subr.mxu0 %v2761
    %2805 = vmatpush1.msra.mxu0 %v2760
    %2806 = vmatprep.subr.mxu0 %v2765
    %2807 = vmatpush1.msra.mxu0 %v2764
    %2808 = vmatprep.subr.mxu0 %v2769
    %2809 = vmatpush1.msra.mxu0 %v2768
    %2810 = vmatprep.subr.mxu0 %v2773
    %2811 = vmatpush1.msra.mxu0 %v2772
    %2812 = vmatprep.subr.mxu0 %v2777
    %2813 = vmatpush1.msra.mxu0 %v2776
    %2814 = vmatprep.subr.mxu0 %v2781
    %2815 = vmatpush1.msra.mxu0 %v2780
    %2816 = vmatprep.subr.mxu0 0.0
    %2817 = vmatpush1.msra.mxu0 0.0
    %2818 = vmatprep.subr.mxu0 0.0
    %2819 = vmatpush1.msra.mxu0 0.0
    %2820 = vmatprep.subr.mxu0 0.0
    %2821 = vmatpush1.msra.mxu0 0.0
    %2822 = vmatprep.subr.mxu0 0.0
    %2823 = vmatpush1.msra.mxu0 0.0
    %2824 = vmatprep.subr.mxu0 0.0
    %2825 = vmatpush1.msra.mxu0 0.0
    %2826 = vmatprep.subr.mxu0 0.0
    %2827 = vmatpush1.msra.mxu0 0.0
    %2828 = vmatprep.subr.mxu0 0.0
    %2829 = vmatpush1.msra.mxu0 0.0
    %2830 = vmatprep.subr.mxu0 0.0
    %2831 = vmatpush1.msra.mxu0 0.0
    %2832 = vmatprep.subr.mxu0 0.0
    %2833 = vmatpush1.msra.mxu0 0.0
    %2834 = vmatprep.subr.mxu0 0.0
    %2835 = vmatpush1.msra.mxu0 0.0
    %2836 = vmatprep.subr.mxu0 0.0
    %2837 = vmatpush1.msra.mxu0 0.0
    %2838 = vmatprep.subr.mxu0 0.0
    %2839 = vmatpush1.msra.mxu0 0.0
    %2840 = vmatprep.subr.mxu0 0.0
    %2841 = vmatpush1.msra.mxu0 0.0
    %2842 = vmatprep.subr.mxu0 0.0
    %2843 = vmatpush1.msra.mxu0 0.0
    %2844 = vmatprep.subr.mxu0 0.0
    %2845 = vmatpush1.msra.mxu0 0.0
    %2846 = vmatprep.subr.mxu0 0.0
    %2847 = vmatpush1.msra.mxu0 0.0
    %2848 = vmatprep.mubr.f32.mxu0 0.0
    %2849 = vmatmul.mubr.f32.gmra.mrb[0].mxu0 %v2713
    %v2850 = vpop.f32.mrb[0].mxu0
    %v2851 = vadd.f32 0.0, %v2850
    %v2852 = vpop.f32.mrb[0].mxu0
    %v2853 = vadd.f32 0.0, %v2852
    %2854 = vdwg.mxu0
    %2855 = vmatprep.subr.mxu0 %v2723
    %2856 = vmatpush1.msra.mxu0 %v2722
    %2857 = vmatprep.subr.mxu0 %v2727
    %2858 = vmatpush1.msra.mxu0 %v2726
    %2859 = vmatprep.subr.mxu0 %v2731
    %2860 = vmatpush1.msra.mxu0 %v2730
    %2861 = vmatprep.subr.mxu0 %v2735
    %2862 = vmatpush1.msra.mxu0 %v2734
    %2863 = vmatprep.subr.mxu0 %v2739
    %2864 = vmatpush1.msra.mxu0 %v2738
    %2865 = vmatprep.subr.mxu0 %v2743
    %2866 = vmatpush1.msra.mxu0 %v2742
    %2867 = vmatprep.subr.mxu0 %v2747
    %2868 = vmatpush1.msra.mxu0 %v2746
    %2869 = vmatprep.subr.mxu0 %v2751
    %2870 = vmatpush1.msra.mxu0 %v2750
    %2871 = vmatprep.subr.mxu0 %v2755
    %2872 = vmatpush1.msra.mxu0 %v2754
    %2873 = vmatprep.subr.mxu0 %v2759
    %2874 = vmatpush1.msra.mxu0 %v2758
    %2875 = vmatprep.subr.mxu0 %v2763
    %2876 = vmatpush1.msra.mxu0 %v2762
    %2877 = vmatprep.subr.mxu0 %v2767
    %2878 = vmatpush1.msra.mxu0 %v2766
    %2879 = vmatprep.subr.mxu0 %v2771
    %2880 = vmatpush1.msra.mxu0 %v2770
    %2881 = vmatprep.subr.mxu0 %v2775
    %2882 = vmatpush1.msra.mxu0 %v2774
    %2883 = vmatprep.subr.mxu0 %v2779
    %2884 = vmatpush1.msra.mxu0 %v2778
    %2885 = vmatprep.subr.mxu0 %v2783
    %2886 = vmatpush1.msra.mxu0 %v2782
    %2887 = vmatprep.subr.mxu0 0.0
    %2888 = vmatpush1.msra.mxu0 0.0
    %2889 = vmatprep.subr.mxu0 0.0
    %2890 = vmatpush1.msra.mxu0 0.0
    %2891 = vmatprep.subr.mxu0 0.0
    %2892 = vmatpush1.msra.mxu0 0.0
    %2893 = vmatprep.subr.mxu0 0.0
    %2894 = vmatpush1.msra.mxu0 0.0
    %2895 = vmatprep.subr.mxu0 0.0
    %2896 = vmatpush1.msra.mxu0 0.0
    %2897 = vmatprep.subr.mxu0 0.0
    %2898 = vmatpush1.msra.mxu0 0.0
    %2899 = vmatprep.subr.mxu0 0.0
    %2900 = vmatpush1.msra.mxu0 0.0
    %2901 = vmatprep.subr.mxu0 0.0
    %2902 = vmatpush1.msra.mxu0 0.0
    %2903 = vmatprep.subr.mxu0 0.0
    %2904 = vmatpush1.msra.mxu0 0.0
    %2905 = vmatprep.subr.mxu0 0.0
    %2906 = vmatpush1.msra.mxu0 0.0
    %2907 = vmatprep.subr.mxu0 0.0
    %2908 = vmatpush1.msra.mxu0 0.0
    %2909 = vmatprep.subr.mxu0 0.0
    %2910 = vmatpush1.msra.mxu0 0.0
    %2911 = vmatprep.subr.mxu0 0.0
    %2912 = vmatpush1.msra.mxu0 0.0
    %2913 = vmatprep.subr.mxu0 0.0
    %2914 = vmatpush1.msra.mxu0 0.0
    %2915 = vmatprep.subr.mxu0 0.0
    %2916 = vmatpush1.msra.mxu0 0.0
    %2917 = vmatprep.subr.mxu0 0.0
    %2918 = vmatpush1.msra.mxu0 0.0
    %2919 = vmatprep.mubr.f32.mxu0 0.0
    %2920 = vmatmul.mubr.f32.gmra.mrb[0].mxu0 %v2713
    %v2921 = vpop.f32.mrb[0].mxu0
    %v2922 = vadd.f32 0.0, %v2921
    %v2923 = vpop.f32.mrb[0].mxu0
    %v2924 = vadd.f32 0.0, %v2923
    %2925 = vdwg.mxu0
    %v2930 = vcombine.low %v2851, %v2853
    %v2931 = vcombine.low %v2922, %v2924
    %v2933 = vunpack.c.l.s4 1983009808
    %v2934 = vunpack.c.0.s8 %v2933
    %v2935 = vlaneseq
    %v2936 = vshrl.u32 %v2935, 7
    %v2937 = vsub.s32 %v2934, %v2936
    %v2938 = vrot.slane %v2930, %v2937
    %v2940 = vunpack.c.l.s4 1983009808
    %v2941 = vunpack.c.0.s8 %v2940
    %v2942 = vlaneseq
    %v2943 = vshrl.u32 %v2942, 7
    %v2944 = vsub.s32 %v2941, %v2943
    %v2945 = vrot.slane %v2931, %v2944
    %v2946 = vcombine.low %v2938, %v2945
    %v2948 = vadd.f32 %v2719, %v2946
    %v2949 = vxor.u32 %v2948, 2147483648
    %v2950 = vmul.f32 %v2949, 1.442695
    %v2951 = vpow.pop %v2950
    %v2952 = vadd.f32 %v2951, 1.0
    %v2953 = vrcp.pop %v2952
    %v2954 = vmul.f32 1.0, %v2953
    %v2956 = vrot.slane %v2948, 6
    %v2958 = vtanh.pop %v2956
    %v2960 = vrot.slane %v2954, 2
    %v2962 = vmul.f32 %v2960, %v2714
    %v2963 = vmul.f32 %v2954, %v2958
    %v2964 = vadd.f32 %v2962, %v2963
    %v2965 = vtanh.pop %v2964
    %v2966 = vrot.slane %v2954, 4
    %v2968 = vmul.f32 %v2966, %v2965
    %s2969 = scalar_lea.vmem [#allocation11], 8
    %v2970 = vld [vmem:[%s2969] sm:$0xf]
    %v2971 = vunpack.c.l.bf16 %v2970
    %v2972 = vld [vmem:[#allocation17] sm:$0xff]
    %v2973 = vld [vmem:[#allocation17 + $0x8] sm:$0xff]
    %v2974 = vld [vmem:[#allocation17 + $0x10] sm:$0xff]
    %v2975 = vld [vmem:[#allocation17 + $0x18] sm:$0xff]
    %v2976 = vld [vmem:[#allocation17 + $0x20] sm:$0xff]
    %v2977 = vld [vmem:[#allocation17 + $0x28] sm:$0xff]
    %v2978 = vld [vmem:[#allocation17 + $0x30] sm:$0xff]
    %v2979 = vld [vmem:[#allocation17 + $0x38] sm:$0xff]
    %v2980 = vld [vmem:[#allocation17 + $0x40] sm:$0xff]
    %v2981 = vld [vmem:[#allocation17 + $0x48] sm:$0xff]
    %v2982 = vld [vmem:[#allocation17 + $0x50] sm:$0xff]
    %v2983 = vld [vmem:[#allocation17 + $0x58] sm:$0xff]
    %v2984 = vld [vmem:[#allocation17 + $0x60] sm:$0xff]
    %v2985 = vld [vmem:[#allocation17 + $0x68] sm:$0xff]
    %v2986 = vld [vmem:[#allocation17 + $0x70] sm:$0xff]
    %v2987 = vld [vmem:[#allocation17 + $0x78] sm:$0xff]
    %v2988 = vld [vmem:[#allocation17 + $0x80] sm:$0xff]
    %v2989 = vld [vmem:[#allocation17 + $0x88] sm:$0xff]
    %v2990 = vld [vmem:[#allocation17 + $0x90] sm:$0xff]
    %v2991 = vld [vmem:[#allocation17 + $0x98] sm:$0xff]
    %v2992 = vld [vmem:[#allocation17 + $0xa0] sm:$0xff]
    %v2993 = vld [vmem:[#allocation17 + $0xa8] sm:$0xff]
    %v2994 = vld [vmem:[#allocation17 + $0xb0] sm:$0xff]
    %v2995 = vld [vmem:[#allocation17 + $0xb8] sm:$0xff]
    %v2996 = vld [vmem:[#allocation17 + $0xc0] sm:$0xff]
    %v2997 = vld [vmem:[#allocation17 + $0xc8] sm:$0xff]
    %v2998 = vld [vmem:[#allocation17 + $0xd0] sm:$0xff]
    %v2999 = vld [vmem:[#allocation17 + $0xd8] sm:$0xff]
    %v3000 = vld [vmem:[#allocation17 + $0xe0] sm:$0xff]
    %v3001 = vld [vmem:[#allocation17 + $0xe8] sm:$0xff]
    %v3002 = vld [vmem:[#allocation17 + $0xf0] sm:$0xff]
    %v3003 = vld [vmem:[#allocation17 + $0xf8] sm:$0xff]
    %v3004 = vld [vmem:[#allocation17 + $0x100] sm:$0xff]
    %v3005 = vld [vmem:[#allocation17 + $0x108] sm:$0xff]
    %v3006 = vld [vmem:[#allocation17 + $0x110] sm:$0xff]
    %v3007 = vld [vmem:[#allocation17 + $0x118] sm:$0xff]
    %v3008 = vld [vmem:[#allocation17 + $0x120] sm:$0xff]
    %v3009 = vld [vmem:[#allocation17 + $0x128] sm:$0xff]
    %v3010 = vld [vmem:[#allocation17 + $0x130] sm:$0xff]
    %v3011 = vld [vmem:[#allocation17 + $0x138] sm:$0xff]
    %v3012 = vld [vmem:[#allocation17 + $0x140] sm:$0xff]
    %v3013 = vld [vmem:[#allocation17 + $0x148] sm:$0xff]
    %v3014 = vld [vmem:[#allocation17 + $0x150] sm:$0xff]
    %v3015 = vld [vmem:[#allocation17 + $0x158] sm:$0xff]
    %v3016 = vld [vmem:[#allocation17 + $0x160] sm:$0xff]
    %v3017 = vld [vmem:[#allocation17 + $0x168] sm:$0xff]
    %v3018 = vld [vmem:[#allocation17 + $0x170] sm:$0xff]
    %v3019 = vld [vmem:[#allocation17 + $0x178] sm:$0xff]
    %v3020 = vld [vmem:[#allocation17 + $0x180] sm:$0xff]
    %v3021 = vld [vmem:[#allocation17 + $0x188] sm:$0xff]
    %v3022 = vld [vmem:[#allocation17 + $0x190] sm:$0xff]
    %v3023 = vld [vmem:[#allocation17 + $0x198] sm:$0xff]
    %v3024 = vld [vmem:[#allocation17 + $0x1a0] sm:$0xff]
    %v3025 = vld [vmem:[#allocation17 + $0x1a8] sm:$0xff]
    %v3026 = vld [vmem:[#allocation17 + $0x1b0] sm:$0xff]
    %v3027 = vld [vmem:[#allocation17 + $0x1b8] sm:$0xff]
    %v3028 = vld [vmem:[#allocation17 + $0x1c0] sm:$0xff]
    %v3029 = vld [vmem:[#allocation17 + $0x1c8] sm:$0xff]
    %v3030 = vld [vmem:[#allocation17 + $0x1d0] sm:$0xff]
    %v3031 = vld [vmem:[#allocation17 + $0x1d8] sm:$0xff]
    %v3032 = vld [vmem:[#allocation17 + $0x1e0] sm:$0xff]
    %v3033 = vld [vmem:[#allocation17 + $0x1e8] sm:$0xff]
    %v3034 = vld [vmem:[#allocation17 + $0x1f0] sm:$0xff]
    %v3035 = vld [vmem:[#allocation17 + $0x1f8] sm:$0xff]
    %3036 = vmatprep.subr.mxu0 %v2973
    %3037 = vmatpush1.msra.mxu0 %v2972
    %3038 = vmatprep.subr.mxu0 %v2977
    %3039 = vmatpush1.msra.mxu0 %v2976
    %3040 = vmatprep.subr.mxu0 %v2981
    %3041 = vmatpush1.msra.mxu0 %v2980
    %3042 = vmatprep.subr.mxu0 %v2985
    %3043 = vmatpush1.msra.mxu0 %v2984
    %3044 = vmatprep.subr.mxu0 %v2989
    %3045 = vmatpush1.msra.mxu0 %v2988
    %3046 = vmatprep.subr.mxu0 %v2993
    %3047 = vmatpush1.msra.mxu0 %v2992
    %3048 = vmatprep.subr.mxu0 %v2997
    %3049 = vmatpush1.msra.mxu0 %v2996
    %3050 = vmatprep.subr.mxu0 %v3001
    %3051 = vmatpush1.msra.mxu0 %v3000
    %3052 = vmatprep.subr.mxu0 %v3005
    %3053 = vmatpush1.msra.mxu0 %v3004
    %3054 = vmatprep.subr.mxu0 %v3009
    %3055 = vmatpush1.msra.mxu0 %v3008
    %3056 = vmatprep.subr.mxu0 %v3013
    %3057 = vmatpush1.msra.mxu0 %v3012
    %3058 = vmatprep.subr.mxu0 %v3017
    %3059 = vmatpush1.msra.mxu0 %v3016
    %3060 = vmatprep.subr.mxu0 %v3021
    %3061 = vmatpush1.msra.mxu0 %v3020
    %3062 = vmatprep.subr.mxu0 %v3025
    %3063 = vmatpush1.msra.mxu0 %v3024
    %3064 = vmatprep.subr.mxu0 %v3029
    %3065 = vmatpush1.msra.mxu0 %v3028
    %3066 = vmatprep.subr.mxu0 %v3033
    %3067 = vmatpush1.msra.mxu0 %v3032
    %3068 = vmatprep.subr.mxu0 0.0
    %3069 = vmatpush1.msra.mxu0 0.0
    %3070 = vmatprep.subr.mxu0 0.0
    %3071 = vmatpush1.msra.mxu0 0.0
    %3072 = vmatprep.subr.mxu0 0.0
    %3073 = vmatpush1.msra.mxu0 0.0
    %3074 = vmatprep.subr.mxu0 0.0
    %3075 = vmatpush1.msra.mxu0 0.0
    %3076 = vmatprep.subr.mxu0 0.0
    %3077 = vmatpush1.msra.mxu0 0.0
    %3078 = vmatprep.subr.mxu0 0.0
    %3079 = vmatpush1.msra.mxu0 0.0
    %3080 = vmatprep.subr.mxu0 0.0
    %3081 = vmatpush1.msra.mxu0 0.0
    %3082 = vmatprep.subr.mxu0 0.0
    %3083 = vmatpush1.msra.mxu0 0.0
    %3084 = vmatprep.subr.mxu0 0.0
    %3085 = vmatpush1.msra.mxu0 0.0
    %3086 = vmatprep.subr.mxu0 0.0
    %3087 = vmatpush1.msra.mxu0 0.0
    %3088 = vmatprep.subr.mxu0 0.0
    %3089 = vmatpush1.msra.mxu0 0.0
    %3090 = vmatprep.subr.mxu0 0.0
    %3091 = vmatpush1.msra.mxu0 0.0
    %3092 = vmatprep.subr.mxu0 0.0
    %3093 = vmatpush1.msra.mxu0 0.0
    %3094 = vmatprep.subr.mxu0 0.0
    %3095 = vmatpush1.msra.mxu0 0.0
    %3096 = vmatprep.subr.mxu0 0.0
    %3097 = vmatpush1.msra.mxu0 0.0
    %3098 = vmatprep.subr.mxu0 0.0
    %3099 = vmatpush1.msra.mxu0 0.0
    %3100 = vmatprep.mubr.f32.mxu0 0.0
    %3101 = vmatmul.mubr.f32.gmra.mrb[0].mxu0 %v2715
    %v3102 = vpop.f32.mrb[0].mxu0
    %v3103 = vadd.f32 0.0, %v3102
    %v3104 = vpop.f32.mrb[0].mxu0
    %v3105 = vadd.f32 0.0, %v3104
    %3106 = vdwg.mxu0
    %3107 = vmatprep.subr.mxu0 %v2975
    %3108 = vmatpush1.msra.mxu0 %v2974
    %3109 = vmatprep.subr.mxu0 %v2979
    %3110 = vmatpush1.msra.mxu0 %v2978
    %3111 = vmatprep.subr.mxu0 %v2983
    %3112 = vmatpush1.msra.mxu0 %v2982
    %3113 = vmatprep.subr.mxu0 %v2987
    %3114 = vmatpush1.msra.mxu0 %v2986
    %3115 = vmatprep.subr.mxu0 %v2991
    %3116 = vmatpush1.msra.mxu0 %v2990
    %3117 = vmatprep.subr.mxu0 %v2995
    %3118 = vmatpush1.msra.mxu0 %v2994
    %3119 = vmatprep.subr.mxu0 %v2999
    %3120 = vmatpush1.msra.mxu0 %v2998
    %3121 = vmatprep.subr.mxu0 %v3003
    %3122 = vmatpush1.msra.mxu0 %v3002
    %3123 = vmatprep.subr.mxu0 %v3007
    %3124 = vmatpush1.msra.mxu0 %v3006
    %3125 = vmatprep.subr.mxu0 %v3011
    %3126 = vmatpush1.msra.mxu0 %v3010
    %3127 = vmatprep.subr.mxu0 %v3015
    %3128 = vmatpush1.msra.mxu0 %v3014
    %3129 = vmatprep.subr.mxu0 %v3019
    %3130 = vmatpush1.msra.mxu0 %v3018
    %3131 = vmatprep.subr.mxu0 %v3023
    %3132 = vmatpush1.msra.mxu0 %v3022
    %3133 = vmatprep.subr.mxu0 %v3027
    %3134 = vmatpush1.msra.mxu0 %v3026
    %3135 = vmatprep.subr.mxu0 %v3031
    %3136 = vmatpush1.msra.mxu0 %v3030
    %3137 = vmatprep.subr.mxu0 %v3035
    %3138 = vmatpush1.msra.mxu0 %v3034
    %3139 = vmatprep.subr.mxu0 0.0
    %3140 = vmatpush1.msra.mxu0 0.0
    %3141 = vmatprep.subr.mxu0 0.0
    %3142 = vmatpush1.msra.mxu0 0.0
    %3143 = vmatprep.subr.mxu0 0.0
    %3144 = vmatpush1.msra.mxu0 0.0
    %3145 = vmatprep.subr.mxu0 0.0
    %3146 = vmatpush1.msra.mxu0 0.0
    %3147 = vmatprep.subr.mxu0 0.0
    %3148 = vmatpush1.msra.mxu0 0.0
    %3149 = vmatprep.subr.mxu0 0.0
    %3150 = vmatpush1.msra.mxu0 0.0
    %3151 = vmatprep.subr.mxu0 0.0
    %3152 = vmatpush1.msra.mxu0 0.0
    %3153 = vmatprep.subr.mxu0 0.0
    %3154 = vmatpush1.msra.mxu0 0.0
    %3155 = vmatprep.subr.mxu0 0.0
    %3156 = vmatpush1.msra.mxu0 0.0
    %3157 = vmatprep.subr.mxu0 0.0
    %3158 = vmatpush1.msra.mxu0 0.0
    %3159 = vmatprep.subr.mxu0 0.0
    %3160 = vmatpush1.msra.mxu0 0.0
    %3161 = vmatprep.subr.mxu0 0.0
    %3162 = vmatpush1.msra.mxu0 0.0
    %3163 = vmatprep.subr.mxu0 0.0
    %3164 = vmatpush1.msra.mxu0 0.0
    %3165 = vmatprep.subr.mxu0 0.0
    %3166 = vmatpush1.msra.mxu0 0.0
    %3167 = vmatprep.subr.mxu0 0.0
    %3168 = vmatpush1.msra.mxu0 0.0
    %3169 = vmatprep.subr.mxu0 0.0
    %3170 = vmatpush1.msra.mxu0 0.0
    %3171 = vmatprep.mubr.f32.mxu0 0.0
    %3172 = vmatmul.mubr.f32.gmra.mrb[0].mxu0 %v2715
    %v3173 = vpop.f32.mrb[0].mxu0
    %v3174 = vadd.f32 0.0, %v3173
    %v3175 = vpop.f32.mrb[0].mxu0
    %v3176 = vadd.f32 0.0, %v3175
    %3177 = vdwg.mxu0
    %v3182 = vcombine.low %v3103, %v3105
    %v3183 = vcombine.low %v3174, %v3176
    %v3185 = vunpack.c.l.s4 1983009808
    %v3186 = vunpack.c.0.s8 %v3185
    %v3187 = vlaneseq
    %v3188 = vshrl.u32 %v3187, 7
    %v3189 = vsub.s32 %v3186, %v3188
    %v3190 = vrot.slane %v3182, %v3189
    %v3192 = vunpack.c.l.s4 1983009808
    %v3193 = vunpack.c.0.s8 %v3192
    %v3194 = vlaneseq
    %v3195 = vshrl.u32 %v3194, 7
    %v3196 = vsub.s32 %v3193, %v3195
    %v3197 = vrot.slane %v3183, %v3196
    %v3198 = vcombine.low %v3190, %v3197
    %v3200 = vadd.f32 %v2971, %v3198
    %v3201 = vxor.u32 %v3200, 2147483648
    %v3202 = vmul.f32 %v3201, 1.442695
    %v3203 = vpow.pop %v3202
    %v3204 = vadd.f32 %v3203, 1.0
    %v3205 = vrcp.pop %v3204
    %v3206 = vmul.f32 1.0, %v3205
    %v3208 = vrot.slane %v3200, 6
    %v3210 = vtanh.pop %v3208
    %v3212 = vrot.slane %v3206, 2
    %v3214 = vmul.f32 %v3212, %v2716
    %v3215 = vmul.f32 %v3206, %v3210
    %v3216 = vadd.f32 %v3214, %v3215
    %v3217 = vtanh.pop %v3216
    %v3218 = vrot.slane %v3206, 4
    %v3220 = vmul.f32 %v3218, %v3217
    %3221 = vst [vmem:[#allocation2] sm:$0x3] %v2968
    %3222 = vst [vmem:[#allocation3] sm:$0x3] %v2964
    %3223 = vst [vmem:[#allocation4] sm:$0x3] %v3220
    %3224 = vst [vmem:[#allocation5] sm:$0x3] %v3216
    %s3225 = scalar_lea.vmem [#allocation6], 10
    %3226 = vst [vmem:[%s3225] sm:$0x3] %v2968
    %s3227 = scalar_lea.vmem [#allocation7], 4
    %3228 = vst [vmem:[%s3227] sm:$0x3] %v3220
    %v3229 = vld [vmem:[#allocation2] sm:$0x3]
    %v3230 = vld [vmem:[#allocation3] sm:$0x3]
    %v3231 = vld [vmem:[#allocation4] sm:$0x3]
    %v3232 = vld [vmem:[#allocation5] sm:$0x3]
    %s3233 = scalar_lea.vmem [#allocation8], 24
    %v3234 = vld [vmem:[%s3233] sm:$0xf]
    %v3235 = vunpack.c.l.bf16 %v3234
    %v3236 = vld [vmem:[#allocation16] sm:$0xff]
    %v3237 = vld [vmem:[#allocation16 + $0x8] sm:$0xff]
    %v3238 = vld [vmem:[#allocation16 + $0x10] sm:$0xff]
    %v3239 = vld [vmem:[#allocation16 + $0x18] sm:$0xff]
    %v3240 = vld [vmem:[#allocation16 + $0x20] sm:$0xff]
    %v3241 = vld [vmem:[#allocation16 + $0x28] sm:$0xff]
    %v3242 = vld [vmem:[#allocation16 + $0x30] sm:$0xff]
    %v3243 = vld [vmem:[#allocation16 + $0x38] sm:$0xff]
    %v3244 = vld [vmem:[#allocation16 + $0x40] sm:$0xff]
    %v3245 = vld [vmem:[#allocation16 + $0x48] sm:$0xff]
    %v3246 = vld [vmem:[#allocation16 + $0x50] sm:$0xff]
    %v3247 = vld [vmem:[#allocation16 + $0x58] sm:$0xff]
    %v3248 = vld [vmem:[#allocation16 + $0x60] sm:$0xff]
    %v3249 = vld [vmem:[#allocation16 + $0x68] sm:$0xff]
    %v3250 = vld [vmem:[#allocation16 + $0x70] sm:$0xff]
    %v3251 = vld [vmem:[#allocation16 + $0x78] sm:$0xff]
    %v3252 = vld [vmem:[#allocation16 + $0x80] sm:$0xff]
    %v3253 = vld [vmem:[#allocation16 + $0x88] sm:$0xff]
    %v3254 = vld [vmem:[#allocation16 + $0x90] sm:$0xff]
    %v3255 = vld [vmem:[#allocation16 + $0x98] sm:$0xff]
    %v3256 = vld [vmem:[#allocation16 + $0xa0] sm:$0xff]
    %v3257 = vld [vmem:[#allocation16 + $0xa8] sm:$0xff]
    %v3258 = vld [vmem:[#allocation16 + $0xb0] sm:$0xff]
    %v3259 = vld [vmem:[#allocation16 + $0xb8] sm:$0xff]
    %v3260 = vld [vmem:[#allocation16 + $0xc0] sm:$0xff]
    %v3261 = vld [vmem:[#allocation16 + $0xc8] sm:$0xff]
    %v3262 = vld [vmem:[#allocation16 + $0xd0] sm:$0xff]
    %v3263 = vld [vmem:[#allocation16 + $0xd8] sm:$0xff]
    %v3264 = vld [vmem:[#allocation16 + $0xe0] sm:$0xff]
    %v3265 = vld [vmem:[#allocation16 + $0xe8] sm:$0xff]
    %v3266 = vld [vmem:[#allocation16 + $0xf0] sm:$0xff]
    %v3267 = vld [vmem:[#allocation16 + $0xf8] sm:$0xff]
    %v3268 = vld [vmem:[#allocation16 + $0x100] sm:$0xff]
    %v3269 = vld [vmem:[#allocation16 + $0x108] sm:$0xff]
    %v3270 = vld [vmem:[#allocation16 + $0x110] sm:$0xff]
    %v3271 = vld [vmem:[#allocation16 + $0x118] sm:$0xff]
    %v3272 = vld [vmem:[#allocation16 + $0x120] sm:$0xff]
    %v3273 = vld [vmem:[#allocation16 + $0x128] sm:$0xff]
    %v3274 = vld [vmem:[#allocation16 + $0x130] sm:$0xff]
    %v3275 = vld [vmem:[#allocation16 + $0x138] sm:$0xff]
    %v3276 = vld [vmem:[#allocation16 + $0x140] sm:$0xff]
    %v3277 = vld [vmem:[#allocation16 + $0x148] sm:$0xff]
    %v3278 = vld [vmem:[#allocation16 + $0x150] sm:$0xff]
    %v3279 = vld [vmem:[#allocation16 + $0x158] sm:$0xff]
    %v3280 = vld [vmem:[#allocation16 + $0x160] sm:$0xff]
    %v3281 = vld [vmem:[#allocation16 + $0x168] sm:$0xff]
    %v3282 = vld [vmem:[#allocation16 + $0x170] sm:$0xff]
    %v3283 = vld [vmem:[#allocation16 + $0x178] sm:$0xff]
    %v3284 = vld [vmem:[#allocation16 + $0x180] sm:$0xff]
    %v3285 = vld [vmem:[#allocation16 + $0x188] sm:$0xff]
    %v3286 = vld [vmem:[#allocation16 + $0x190] sm:$0xff]
    %v3287 = vld [vmem:[#allocation16 + $0x198] sm:$0xff]
    %v3288 = vld [vmem:[#allocation16 + $0x1a0] sm:$0xff]
    %v3289 = vld [vmem:[#allocation16 + $0x1a8] sm:$0xff]
    %v3290 = vld [vmem:[#allocation16 + $0x1b0] sm:$0xff]
    %v3291 = vld [vmem:[#allocation16 + $0x1b8] sm:$0xff]
    %v3292 = vld [vmem:[#allocation16 + $0x1c0] sm:$0xff]
    %v3293 = vld [vmem:[#allocation16 + $0x1c8] sm:$0xff]
    %v3294 = vld [vmem:[#allocation16 + $0x1d0] sm:$0xff]
    %v3295 = vld [vmem:[#allocation16 + $0x1d8] sm:$0xff]
    %v3296 = vld [vmem:[#allocation16 + $0x1e0] sm:$0xff]
    %v3297 = vld [vmem:[#allocation16 + $0x1e8] sm:$0xff]
    %v3298 = vld [vmem:[#allocation16 + $0x1f0] sm:$0xff]
    %v3299 = vld [vmem:[#allocation16 + $0x1f8] sm:$0xff]
    %3300 = vmatprep.subr.mxu0 %v3237
    %3301 = vmatpush1.msra.mxu0 %v3236
    %3302 = vmatprep.subr.mxu0 %v3241
    %3303 = vmatpush1.msra.mxu0 %v3240
    %3304 = vmatprep.subr.mxu0 %v3245
    %3305 = vmatpush1.msra.mxu0 %v3244
    %3306 = vmatprep.subr.mxu0 %v3249
    %3307 = vmatpush1.msra.mxu0 %v3248
    %3308 = vmatprep.subr.mxu0 %v3253
    %3309 = vmatpush1.msra.mxu0 %v3252
    %3310 = vmatprep.subr.mxu0 %v3257
    %3311 = vmatpush1.msra.mxu0 %v3256
    %3312 = vmatprep.subr.mxu0 %v3261
    %3313 = vmatpush1.msra.mxu0 %v3260
    %3314 = vmatprep.subr.mxu0 %v3265
    %3315 = vmatpush1.msra.mxu0 %v3264
    %3316 = vmatprep.subr.mxu0 %v3269
    %3317 = vmatpush1.msra.mxu0 %v3268
    %3318 = vmatprep.subr.mxu0 %v3273
    %3319 = vmatpush1.msra.mxu0 %v3272
    %3320 = vmatprep.subr.mxu0 %v3277
    %3321 = vmatpush1.msra.mxu0 %v3276
    %3322 = vmatprep.subr.mxu0 %v3281
    %3323 = vmatpush1.msra.mxu0 %v3280
    %3324 = vmatprep.subr.mxu0 %v3285
    %3325 = vmatpush1.msra.mxu0 %v3284
    %3326 = vmatprep.subr.mxu0 %v3289
    %3327 = vmatpush1.msra.mxu0 %v3288
    %3328 = vmatprep.subr.mxu0 %v3293
    %3329 = vmatpush1.msra.mxu0 %v3292
    %3330 = vmatprep.subr.mxu0 %v3297
    %3331 = vmatpush1.msra.mxu0 %v3296
    %3332 = vmatprep.subr.mxu0 0.0
    %3333 = vmatpush1.msra.mxu0 0.0
    %3334 = vmatprep.subr.mxu0 0.0
    %3335 = vmatpush1.msra.mxu0 0.0
    %3336 = vmatprep.subr.mxu0 0.0
    %3337 = vmatpush1.msra.mxu0 0.0
    %3338 = vmatprep.subr.mxu0 0.0
    %3339 = vmatpush1.msra.mxu0 0.0
    %3340 = vmatprep.subr.mxu0 0.0
    %3341 = vmatpush1.msra.mxu0 0.0
    %3342 = vmatprep.subr.mxu0 0.0
    %3343 = vmatpush1.msra.mxu0 0.0
    %3344 = vmatprep.subr.mxu0 0.0
    %3345 = vmatpush1.msra.mxu0 0.0
    %3346 = vmatprep.subr.mxu0 0.0
    %3347 = vmatpush1.msra.mxu0 0.0
    %3348 = vmatprep.subr.mxu0 0.0
    %3349 = vmatpush1.msra.mxu0 0.0
    %3350 = vmatprep.subr.mxu0 0.0
    %3351 = vmatpush1.msra.mxu0 0.0
    %3352 = vmatprep.subr.mxu0 0.0
    %3353 = vmatpush1.msra.mxu0 0.0
    %3354 = vmatprep.subr.mxu0 0.0
    %3355 = vmatpush1.msra.mxu0 0.0
    %3356 = vmatprep.subr.mxu0 0.0
    %3357 = vmatpush1.msra.mxu0 0.0
    %3358 = vmatprep.subr.mxu0 0.0
    %3359 = vmatpush1.msra.mxu0 0.0
    %3360 = vmatprep.subr.mxu0 0.0
    %3361 = vmatpush1.msra.mxu0 0.0
    %3362 = vmatprep.subr.mxu0 0.0
    %3363 = vmatpush1.msra.mxu0 0.0
    %3364 = vmatprep.mubr.f32.mxu0 0.0
    %3365 = vmatmul.mubr.f32.gmra.mrb[0].mxu0 %v3229
    %v3366 = vpop.f32.mrb[0].mxu0
    %v3367 = vadd.f32 0.0, %v3366
    %v3368 = vpop.f32.mrb[0].mxu0
    %v3369 = vadd.f32 0.0, %v3368
    %3370 = vdwg.mxu0
    %3371 = vmatprep.subr.mxu0 %v3239
    %3372 = vmatpush1.msra.mxu0 %v3238
    %3373 = vmatprep.subr.mxu0 %v3243
    %3374 = vmatpush1.msra.mxu0 %v3242
    %3375 = vmatprep.subr.mxu0 %v3247
    %3376 = vmatpush1.msra.mxu0 %v3246
    %3377 = vmatprep.subr.mxu0 %v3251
    %3378 = vmatpush1.msra.mxu0 %v3250
    %3379 = vmatprep.subr.mxu0 %v3255
    %3380 = vmatpush1.msra.mxu0 %v3254
    %3381 = vmatprep.subr.mxu0 %v3259
    %3382 = vmatpush1.msra.mxu0 %v3258
    %3383 = vmatprep.subr.mxu0 %v3263
    %3384 = vmatpush1.msra.mxu0 %v3262
    %3385 = vmatprep.subr.mxu0 %v3267
    %3386 = vmatpush1.msra.mxu0 %v3266
    %3387 = vmatprep.subr.mxu0 %v3271
    %3388 = vmatpush1.msra.mxu0 %v3270
    %3389 = vmatprep.subr.mxu0 %v3275
    %3390 = vmatpush1.msra.mxu0 %v3274
    %3391 = vmatprep.subr.mxu0 %v3279
    %3392 = vmatpush1.msra.mxu0 %v3278
    %3393 = vmatprep.subr.mxu0 %v3283
    %3394 = vmatpush1.msra.mxu0 %v3282
    %3395 = vmatprep.subr.mxu0 %v3287
    %3396 = vmatpush1.msra.mxu0 %v3286
    %3397 = vmatprep.subr.mxu0 %v3291
    %3398 = vmatpush1.msra.mxu0 %v3290
    %3399 = vmatprep.subr.mxu0 %v3295
    %3400 = vmatpush1.msra.mxu0 %v3294
    %3401 = vmatprep.subr.mxu0 %v3299
    %3402 = vmatpush1.msra.mxu0 %v3298
    %3403 = vmatprep.subr.mxu0 0.0
    %3404 = vmatpush1.msra.mxu0 0.0
    %3405 = vmatprep.subr.mxu0 0.0
    %3406 = vmatpush1.msra.mxu0 0.0
    %3407 = vmatprep.subr.mxu0 0.0
    %3408 = vmatpush1.msra.mxu0 0.0
    %3409 = vmatprep.subr.mxu0 0.0
    %3410 = vmatpush1.msra.mxu0 0.0
    %3411 = vmatprep.subr.mxu0 0.0
    %3412 = vmatpush1.msra.mxu0 0.0
    %3413 = vmatprep.subr.mxu0 0.0
    %3414 = vmatpush1.msra.mxu0 0.0
    %3415 = vmatprep.subr.mxu0 0.0
    %3416 = vmatpush1.msra.mxu0 0.0
    %3417 = vmatprep.subr.mxu0 0.0
    %3418 = vmatpush1.msra.mxu0 0.0
    %3419 = vmatprep.subr.mxu0 0.0
    %3420 = vmatpush1.msra.mxu0 0.0
    %3421 = vmatprep.subr.mxu0 0.0
    %3422 = vmatpush1.msra.mxu0 0.0
    %3423 = vmatprep.subr.mxu0 0.0
    %3424 = vmatpush1.msra.mxu0 0.0
    %3425 = vmatprep.subr.mxu0 0.0
    %3426 = vmatpush1.msra.mxu0 0.0
    %3427 = vmatprep.subr.mxu0 0.0
    %3428 = vmatpush1.msra.mxu0 0.0
    %3429 = vmatprep.subr.mxu0 0.0
    %3430 = vmatpush1.msra.mxu0 0.0
    %3431 = vmatprep.subr.mxu0 0.0
    %3432 = vmatpush1.msra.mxu0 0.0
    %3433 = vmatprep.subr.mxu0 0.0
    %3434 = vmatpush1.msra.mxu0 0.0
    %3435 = vmatprep.mubr.f32.mxu0 0.0
    %3436 = vmatmul.mubr.f32.gmra.mrb[0].mxu0 %v3229
    %v3437 = vpop.f32.mrb[0].mxu0
    %v3438 = vadd.f32 0.0, %v3437
    %v3439 = vpop.f32.mrb[0].mxu0
    %v3440 = vadd.f32 0.0, %v3439
    %3441 = vdwg.mxu0
    %v3446 = vcombine.low %v3367, %v3369
    %v3447 = vcombine.low %v3438, %v3440
    %v3449 = vunpack.c.l.s4 1983009808
    %v3450 = vunpack.c.0.s8 %v3449
    %v3451 = vlaneseq
    %v3452 = vshrl.u32 %v3451, 7
    %v3453 = vsub.s32 %v3450, %v3452
    %v3454 = vrot.slane %v3446, %v3453
    %v3456 = vunpack.c.l.s4 1983009808
    %v3457 = vunpack.c.0.s8 %v3456
    %v3458 = vlaneseq
    %v3459 = vshrl.u32 %v3458, 7
    %v3460 = vsub.s32 %v3457, %v3459
    %v3461 = vrot.slane %v3447, %v3460
    %v3462 = vcombine.low %v3454, %v3461
    %v3464 = vadd.f32 %v3235, %v3462
    %v3465 = vxor.u32 %v3464, 2147483648
    %v3466 = vmul.f32 %v3465, 1.442695
    %v3467 = vpow.pop %v3466
    %v3468 = vadd.f32 %v3467, 1.0
    %v3469 = vrcp.pop %v3468
    %v3470 = vmul.f32 1.0, %v3469
    %v3472 = vrot.slane %v3464, 6
    %v3474 = vtanh.pop %v3472
    %v3476 = vrot.slane %v3470, 2
    %v3478 = vmul.f32 %v3476, %v3230
    %v3479 = vmul.f32 %v3470, %v3474
    %v3480 = vadd.f32 %v3478, %v3479
    %v3481 = vtanh.pop %v3480
    %v3482 = vrot.slane %v3470, 4
    %v3484 = vmul.f32 %v3482, %v3481
    %s3485 = scalar_lea.vmem [#allocation11], 4
    %v3486 = vld [vmem:[%s3485] sm:$0xf]
    %v3487 = vunpack.c.l.bf16 %v3486
    %v3488 = vld [vmem:[#allocation17] sm:$0xff]
    %v3489 = vld [vmem:[#allocation17 + $0x8] sm:$0xff]
    %v3490 = vld [vmem:[#allocation17 + $0x10] sm:$0xff]
    %v3491 = vld [vmem:[#allocation17 + $0x18] sm:$0xff]
    %v3492 = vld [vmem:[#allocation17 + $0x20] sm:$0xff]
    %v3493 = vld [vmem:[#allocation17 + $0x28] sm:$0xff]
    %v3494 = vld [vmem:[#allocation17 + $0x30] sm:$0xff]
    %v3495 = vld [vmem:[#allocation17 + $0x38] sm:$0xff]
    %v3496 = vld [vmem:[#allocation17 + $0x40] sm:$0xff]
    %v3497 = vld [vmem:[#allocation17 + $0x48] sm:$0xff]
    %v3498 = vld [vmem:[#allocation17 + $0x50] sm:$0xff]
    %v3499 = vld [vmem:[#allocation17 + $0x58] sm:$0xff]
    %v3500 = vld [vmem:[#allocation17 + $0x60] sm:$0xff]
    %v3501 = vld [vmem:[#allocation17 + $0x68] sm:$0xff]
    %v3502 = vld [vmem:[#allocation17 + $0x70] sm:$0xff]
    %v3503 = vld [vmem:[#allocation17 + $0x78] sm:$0xff]
    %v3504 = vld [vmem:[#allocation17 + $0x80] sm:$0xff]
    %v3505 = vld [vmem:[#allocation17 + $0x88] sm:$0xff]
    %v3506 = vld [vmem:[#allocation17 + $0x90] sm:$0xff]
    %v3507 = vld [vmem:[#allocation17 + $0x98] sm:$0xff]
    %v3508 = vld [vmem:[#allocation17 + $0xa0] sm:$0xff]
    %v3509 = vld [vmem:[#allocation17 + $0xa8] sm:$0xff]
    %v3510 = vld [vmem:[#allocation17 + $0xb0] sm:$0xff]
    %v3511 = vld [vmem:[#allocation17 + $0xb8] sm:$0xff]
    %v3512 = vld [vmem:[#allocation17 + $0xc0] sm:$0xff]
    %v3513 = vld [vmem:[#allocation17 + $0xc8] sm:$0xff]
    %v3514 = vld [vmem:[#allocation17 + $0xd0] sm:$0xff]
    %v3515 = vld [vmem:[#allocation17 + $0xd8] sm:$0xff]
    %v3516 = vld [vmem:[#allocation17 + $0xe0] sm:$0xff]
    %v3517 = vld [vmem:[#allocation17 + $0xe8] sm:$0xff]
    %v3518 = vld [vmem:[#allocation17 + $0xf0] sm:$0xff]
    %v3519 = vld [vmem:[#allocation17 + $0xf8] sm:$0xff]
    %v3520 = vld [vmem:[#allocation17 + $0x100] sm:$0xff]
    %v3521 = vld [vmem:[#allocation17 + $0x108] sm:$0xff]
    %v3522 = vld [vmem:[#allocation17 + $0x110] sm:$0xff]
    %v3523 = vld [vmem:[#allocation17 + $0x118] sm:$0xff]
    %v3524 = vld [vmem:[#allocation17 + $0x120] sm:$0xff]
    %v3525 = vld [vmem:[#allocation17 + $0x128] sm:$0xff]
    %v3526 = vld [vmem:[#allocation17 + $0x130] sm:$0xff]
    %v3527 = vld [vmem:[#allocation17 + $0x138] sm:$0xff]
    %v3528 = vld [vmem:[#allocation17 + $0x140] sm:$0xff]
    %v3529 = vld [vmem:[#allocation17 + $0x148] sm:$0xff]
    %v3530 = vld [vmem:[#allocation17 + $0x150] sm:$0xff]
    %v3531 = vld [vmem:[#allocation17 + $0x158] sm:$0xff]
    %v3532 = vld [vmem:[#allocation17 + $0x160] sm:$0xff]
    %v3533 = vld [vmem:[#allocation17 + $0x168] sm:$0xff]
    %v3534 = vld [vmem:[#allocation17 + $0x170] sm:$0xff]
    %v3535 = vld [vmem:[#allocation17 + $0x178] sm:$0xff]
    %v3536 = vld [vmem:[#allocation17 + $0x180] sm:$0xff]
    %v3537 = vld [vmem:[#allocation17 + $0x188] sm:$0xff]
    %v3538 = vld [vmem:[#allocation17 + $0x190] sm:$0xff]
    %v3539 = vld [vmem:[#allocation17 + $0x198] sm:$0xff]
    %v3540 = vld [vmem:[#allocation17 + $0x1a0] sm:$0xff]
    %v3541 = vld [vmem:[#allocation17 + $0x1a8] sm:$0xff]
    %v3542 = vld [vmem:[#allocation17 + $0x1b0] sm:$0xff]
    %v3543 = vld [vmem:[#allocation17 + $0x1b8] sm:$0xff]
    %v3544 = vld [vmem:[#allocation17 + $0x1c0] sm:$0xff]
    %v3545 = vld [vmem:[#allocation17 + $0x1c8] sm:$0xff]
    %v3546 = vld [vmem:[#allocation17 + $0x1d0] sm:$0xff]
    %v3547 = vld [vmem:[#allocation17 + $0x1d8] sm:$0xff]
    %v3548 = vld [vmem:[#allocation17 + $0x1e0] sm:$0xff]
    %v3549 = vld [vmem:[#allocation17 + $0x1e8] sm:$0xff]
    %v3550 = vld [vmem:[#allocation17 + $0x1f0] sm:$0xff]
    %v3551 = vld [vmem:[#allocation17 + $0x1f8] sm:$0xff]
    %3552 = vmatprep.subr.mxu0 %v3489
    %3553 = vmatpush1.msra.mxu0 %v3488
    %3554 = vmatprep.subr.mxu0 %v3493
    %3555 = vmatpush1.msra.mxu0 %v3492
    %3556 = vmatprep.subr.mxu0 %v3497
    %3557 = vmatpush1.msra.mxu0 %v3496
    %3558 = vmatprep.subr.mxu0 %v3501
    %3559 = vmatpush1.msra.mxu0 %v3500
    %3560 = vmatprep.subr.mxu0 %v3505
    %3561 = vmatpush1.msra.mxu0 %v3504
    %3562 = vmatprep.subr.mxu0 %v3509
    %3563 = vmatpush1.msra.mxu0 %v3508
    %3564 = vmatprep.subr.mxu0 %v3513
    %3565 = vmatpush1.msra.mxu0 %v3512
    %3566 = vmatprep.subr.mxu0 %v3517
    %3567 = vmatpush1.msra.mxu0 %v3516
    %3568 = vmatprep.subr.mxu0 %v3521
    %3569 = vmatpush1.msra.mxu0 %v3520
    %3570 = vmatprep.subr.mxu0 %v3525
    %3571 = vmatpush1.msra.mxu0 %v3524
    %3572 = vmatprep.subr.mxu0 %v3529
    %3573 = vmatpush1.msra.mxu0 %v3528
    %3574 = vmatprep.subr.mxu0 %v3533
    %3575 = vmatpush1.msra.mxu0 %v3532
    %3576 = vmatprep.subr.mxu0 %v3537
    %3577 = vmatpush1.msra.mxu0 %v3536
    %3578 = vmatprep.subr.mxu0 %v3541
    %3579 = vmatpush1.msra.mxu0 %v3540
    %3580 = vmatprep.subr.mxu0 %v3545
    %3581 = vmatpush1.msra.mxu0 %v3544
    %3582 = vmatprep.subr.mxu0 %v3549
    %3583 = vmatpush1.msra.mxu0 %v3548
    %3584 = vmatprep.subr.mxu0 0.0
    %3585 = vmatpush1.msra.mxu0 0.0
    %3586 = vmatprep.subr.mxu0 0.0
    %3587 = vmatpush1.msra.mxu0 0.0
    %3588 = vmatprep.subr.mxu0 0.0
    %3589 = vmatpush1.msra.mxu0 0.0
    %3590 = vmatprep.subr.mxu0 0.0
    %3591 = vmatpush1.msra.mxu0 0.0
    %3592 = vmatprep.subr.mxu0 0.0
    %3593 = vmatpush1.msra.mxu0 0.0
    %3594 = vmatprep.subr.mxu0 0.0
    %3595 = vmatpush1.msra.mxu0 0.0
    %3596 = vmatprep.subr.mxu0 0.0
    %3597 = vmatpush1.msra.mxu0 0.0
    %3598 = vmatprep.subr.mxu0 0.0
    %3599 = vmatpush1.msra.mxu0 0.0
    %3600 = vmatprep.subr.mxu0 0.0
    %3601 = vmatpush1.msra.mxu0 0.0
    %3602 = vmatprep.subr.mxu0 0.0
    %3603 = vmatpush1.msra.mxu0 0.0
    %3604 = vmatprep.subr.mxu0 0.0
    %3605 = vmatpush1.msra.mxu0 0.0
    %3606 = vmatprep.subr.mxu0 0.0
    %3607 = vmatpush1.msra.mxu0 0.0
    %3608 = vmatprep.subr.mxu0 0.0
    %3609 = vmatpush1.msra.mxu0 0.0
    %3610 = vmatprep.subr.mxu0 0.0
    %3611 = vmatpush1.msra.mxu0 0.0
    %3612 = vmatprep.subr.mxu0 0.0
    %3613 = vmatpush1.msra.mxu0 0.0
    %3614 = vmatprep.subr.mxu0 0.0
    %3615 = vmatpush1.msra.mxu0 0.0
    %3616 = vmatprep.mubr.f32.mxu0 0.0
    %3617 = vmatmul.mubr.f32.gmra.mrb[0].mxu0 %v3231
    %v3618 = vpop.f32.mrb[0].mxu0
    %v3619 = vadd.f32 0.0, %v3618
    %v3620 = vpop.f32.mrb[0].mxu0
    %v3621 = vadd.f32 0.0, %v3620
    %3622 = vdwg.mxu0
    %3623 = vmatprep.subr.mxu0 %v3491
    %3624 = vmatpush1.msra.mxu0 %v3490
    %3625 = vmatprep.subr.mxu0 %v3495
    %3626 = vmatpush1.msra.mxu0 %v3494
    %3627 = vmatprep.subr.mxu0 %v3499
    %3628 = vmatpush1.msra.mxu0 %v3498
    %3629 = vmatprep.subr.mxu0 %v3503
    %3630 = vmatpush1.msra.mxu0 %v3502
    %3631 = vmatprep.subr.mxu0 %v3507
    %3632 = vmatpush1.msra.mxu0 %v3506
    %3633 = vmatprep.subr.mxu0 %v3511
    %3634 = vmatpush1.msra.mxu0 %v3510
    %3635 = vmatprep.subr.mxu0 %v3515
    %3636 = vmatpush1.msra.mxu0 %v3514
    %3637 = vmatprep.subr.mxu0 %v3519
    %3638 = vmatpush1.msra.mxu0 %v3518
    %3639 = vmatprep.subr.mxu0 %v3523
    %3640 = vmatpush1.msra.mxu0 %v3522
    %3641 = vmatprep.subr.mxu0 %v3527
    %3642 = vmatpush1.msra.mxu0 %v3526
    %3643 = vmatprep.subr.mxu0 %v3531
    %3644 = vmatpush1.msra.mxu0 %v3530
    %3645 = vmatprep.subr.mxu0 %v3535
    %3646 = vmatpush1.msra.mxu0 %v3534
    %3647 = vmatprep.subr.mxu0 %v3539
    %3648 = vmatpush1.msra.mxu0 %v3538
    %3649 = vmatprep.subr.mxu0 %v3543
    %3650 = vmatpush1.msra.mxu0 %v3542
    %3651 = vmatprep.subr.mxu0 %v3547
    %3652 = vmatpush1.msra.mxu0 %v3546
    %3653 = vmatprep.subr.mxu0 %v3551
    %3654 = vmatpush1.msra.mxu0 %v3550
    %3655 = vmatprep.subr.mxu0 0.0
    %3656 = vmatpush1.msra.mxu0 0.0
    %3657 = vmatprep.subr.mxu0 0.0
    %3658 = vmatpush1.msra.mxu0 0.0
    %3659 = vmatprep.subr.mxu0 0.0
    %3660 = vmatpush1.msra.mxu0 0.0
    %3661 = vmatprep.subr.mxu0 0.0
    %3662 = vmatpush1.msra.mxu0 0.0
    %3663 = vmatprep.subr.mxu0 0.0
    %3664 = vmatpush1.msra.mxu0 0.0
    %3665 = vmatprep.subr.mxu0 0.0
    %3666 = vmatpush1.msra.mxu0 0.0
    %3667 = vmatprep.subr.mxu0 0.0
    %3668 = vmatpush1.msra.mxu0 0.0
    %3669 = vmatprep.subr.mxu0 0.0
    %3670 = vmatpush1.msra.mxu0 0.0
    %3671 = vmatprep.subr.mxu0 0.0
    %3672 = vmatpush1.msra.mxu0 0.0
    %3673 = vmatprep.subr.mxu0 0.0
    %3674 = vmatpush1.msra.mxu0 0.0
    %3675 = vmatprep.subr.mxu0 0.0
    %3676 = vmatpush1.msra.mxu0 0.0
    %3677 = vmatprep.subr.mxu0 0.0
    %3678 = vmatpush1.msra.mxu0 0.0
    %3679 = vmatprep.subr.mxu0 0.0
    %3680 = vmatpush1.msra.mxu0 0.0
    %3681 = vmatprep.subr.mxu0 0.0
    %3682 = vmatpush1.msra.mxu0 0.0
    %3683 = vmatprep.subr.mxu0 0.0
    %3684 = vmatpush1.msra.mxu0 0.0
    %3685 = vmatprep.subr.mxu0 0.0
    %3686 = vmatpush1.msra.mxu0 0.0
    %3687 = vmatprep.mubr.f32.mxu0 0.0
    %3688 = vmatmul.mubr.f32.gmra.mrb[0].mxu0 %v3231
    %v3689 = vpop.f32.mrb[0].mxu0
    %v3690 = vadd.f32 0.0, %v3689
    %v3691 = vpop.f32.mrb[0].mxu0
    %v3692 = vadd.f32 0.0, %v3691
    %3693 = vdwg.mxu0
    %v3698 = vcombine.low %v3619, %v3621
    %v3699 = vcombine.low %v3690, %v3692
    %v3701 = vunpack.c.l.s4 1983009808
    %v3702 = vunpack.c.0.s8 %v3701
    %v3703 = vlaneseq
    %v3704 = vshrl.u32 %v3703, 7
    %v3705 = vsub.s32 %v3702, %v3704
    %v3706 = vrot.slane %v3698, %v3705
    %v3708 = vunpack.c.l.s4 1983009808
    %v3709 = vunpack.c.0.s8 %v3708
    %v3710 = vlaneseq
    %v3711 = vshrl.u32 %v3710, 7
    %v3712 = vsub.s32 %v3709, %v3711
    %v3713 = vrot.slane %v3699, %v3712
    %v3714 = vcombine.low %v3706, %v3713
    %v3716 = vadd.f32 %v3487, %v3714
    %v3717 = vxor.u32 %v3716, 2147483648
    %v3718 = vmul.f32 %v3717, 1.442695
    %v3719 = vpow.pop %v3718
    %v3720 = vadd.f32 %v3719, 1.0
    %v3721 = vrcp.pop %v3720
    %v3722 = vmul.f32 1.0, %v3721
    %v3724 = vrot.slane %v3716, 6
    %v3726 = vtanh.pop %v3724
    %v3728 = vrot.slane %v3722, 2
    %v3730 = vmul.f32 %v3728, %v3232
    %v3731 = vmul.f32 %v3722, %v3726
    %v3732 = vadd.f32 %v3730, %v3731
    %v3733 = vtanh.pop %v3732
    %v3734 = vrot.slane %v3722, 4
    %v3736 = vmul.f32 %v3734, %v3733
    %3737 = vst [vmem:[#allocation2] sm:$0x3] %v3484
    %3738 = vst [vmem:[#allocation3] sm:$0x3] %v3480
    %3739 = vst [vmem:[#allocation4] sm:$0x3] %v3736
    %3740 = vst [vmem:[#allocation5] sm:$0x3] %v3732
    %s3741 = scalar_lea.vmem [#allocation6], 12
    %3742 = vst [vmem:[%s3741] sm:$0x3] %v3484
    %s3743 = scalar_lea.vmem [#allocation7], 2
    %3744 = vst [vmem:[%s3743] sm:$0x3] %v3736
    %v3745 = vld [vmem:[#allocation2] sm:$0x3]
    %v3746 = vld [vmem:[#allocation3] sm:$0x3]
    %v3747 = vld [vmem:[#allocation4] sm:$0x3]
    %v3748 = vld [vmem:[#allocation5] sm:$0x3]
    %s3749 = scalar_lea.vmem [#allocation8], 28
    %v3750 = vld [vmem:[%s3749] sm:$0xf]
    %v3751 = vunpack.c.l.bf16 %v3750
    %v3752 = vld [vmem:[#allocation16] sm:$0xff]
    %v3753 = vld [vmem:[#allocation16 + $0x8] sm:$0xff]
    %v3754 = vld [vmem:[#allocation16 + $0x10] sm:$0xff]
    %v3755 = vld [vmem:[#allocation16 + $0x18] sm:$0xff]
    %v3756 = vld [vmem:[#allocation16 + $0x20] sm:$0xff]
    %v3757 = vld [vmem:[#allocation16 + $0x28] sm:$0xff]
    %v3758 = vld [vmem:[#allocation16 + $0x30] sm:$0xff]
    %v3759 = vld [vmem:[#allocation16 + $0x38] sm:$0xff]
    %v3760 = vld [vmem:[#allocation16 + $0x40] sm:$0xff]
    %v3761 = vld [vmem:[#allocation16 + $0x48] sm:$0xff]
    %v3762 = vld [vmem:[#allocation16 + $0x50] sm:$0xff]
    %v3763 = vld [vmem:[#allocation16 + $0x58] sm:$0xff]
    %v3764 = vld [vmem:[#allocation16 + $0x60] sm:$0xff]
    %v3765 = vld [vmem:[#allocation16 + $0x68] sm:$0xff]
    %v3766 = vld [vmem:[#allocation16 + $0x70] sm:$0xff]
    %v3767 = vld [vmem:[#allocation16 + $0x78] sm:$0xff]
    %v3768 = vld [vmem:[#allocation16 + $0x80] sm:$0xff]
    %v3769 = vld [vmem:[#allocation16 + $0x88] sm:$0xff]
    %v3770 = vld [vmem:[#allocation16 + $0x90] sm:$0xff]
    %v3771 = vld [vmem:[#allocation16 + $0x98] sm:$0xff]
    %v3772 = vld [vmem:[#allocation16 + $0xa0] sm:$0xff]
    %v3773 = vld [vmem:[#allocation16 + $0xa8] sm:$0xff]
    %v3774 = vld [vmem:[#allocation16 + $0xb0] sm:$0xff]
    %v3775 = vld [vmem:[#allocation16 + $0xb8] sm:$0xff]
    %v3776 = vld [vmem:[#allocation16 + $0xc0] sm:$0xff]
    %v3777 = vld [vmem:[#allocation16 + $0xc8] sm:$0xff]
    %v3778 = vld [vmem:[#allocation16 + $0xd0] sm:$0xff]
    %v3779 = vld [vmem:[#allocation16 + $0xd8] sm:$0xff]
    %v3780 = vld [vmem:[#allocation16 + $0xe0] sm:$0xff]
    %v3781 = vld [vmem:[#allocation16 + $0xe8] sm:$0xff]
    %v3782 = vld [vmem:[#allocation16 + $0xf0] sm:$0xff]
    %v3783 = vld [vmem:[#allocation16 + $0xf8] sm:$0xff]
    %v3784 = vld [vmem:[#allocation16 + $0x100] sm:$0xff]
    %v3785 = vld [vmem:[#allocation16 + $0x108] sm:$0xff]
    %v3786 = vld [vmem:[#allocation16 + $0x110] sm:$0xff]
    %v3787 = vld [vmem:[#allocation16 + $0x118] sm:$0xff]
    %v3788 = vld [vmem:[#allocation16 + $0x120] sm:$0xff]
    %v3789 = vld [vmem:[#allocation16 + $0x128] sm:$0xff]
    %v3790 = vld [vmem:[#allocation16 + $0x130] sm:$0xff]
    %v3791 = vld [vmem:[#allocation16 + $0x138] sm:$0xff]
    %v3792 = vld [vmem:[#allocation16 + $0x140] sm:$0xff]
    %v3793 = vld [vmem:[#allocation16 + $0x148] sm:$0xff]
    %v3794 = vld [vmem:[#allocation16 + $0x150] sm:$0xff]
    %v3795 = vld [vmem:[#allocation16 + $0x158] sm:$0xff]
    %v3796 = vld [vmem:[#allocation16 + $0x160] sm:$0xff]
    %v3797 = vld [vmem:[#allocation16 + $0x168] sm:$0xff]
    %v3798 = vld [vmem:[#allocation16 + $0x170] sm:$0xff]
    %v3799 = vld [vmem:[#allocation16 + $0x178] sm:$0xff]
    %v3800 = vld [vmem:[#allocation16 + $0x180] sm:$0xff]
    %v3801 = vld [vmem:[#allocation16 + $0x188] sm:$0xff]
    %v3802 = vld [vmem:[#allocation16 + $0x190] sm:$0xff]
    %v3803 = vld [vmem:[#allocation16 + $0x198] sm:$0xff]
    %v3804 = vld [vmem:[#allocation16 + $0x1a0] sm:$0xff]
    %v3805 = vld [vmem:[#allocation16 + $0x1a8] sm:$0xff]
    %v3806 = vld [vmem:[#allocation16 + $0x1b0] sm:$0xff]
    %v3807 = vld [vmem:[#allocation16 + $0x1b8] sm:$0xff]
    %v3808 = vld [vmem:[#allocation16 + $0x1c0] sm:$0xff]
    %v3809 = vld [vmem:[#allocation16 + $0x1c8] sm:$0xff]
    %v3810 = vld [vmem:[#allocation16 + $0x1d0] sm:$0xff]
    %v3811 = vld [vmem:[#allocation16 + $0x1d8] sm:$0xff]
    %v3812 = vld [vmem:[#allocation16 + $0x1e0] sm:$0xff]
    %v3813 = vld [vmem:[#allocation16 + $0x1e8] sm:$0xff]
    %v3814 = vld [vmem:[#allocation16 + $0x1f0] sm:$0xff]
    %v3815 = vld [vmem:[#allocation16 + $0x1f8] sm:$0xff]
    %3816 = vmatprep.subr.mxu0 %v3753
    %3817 = vmatpush1.msra.mxu0 %v3752
    %3818 = vmatprep.subr.mxu0 %v3757
    %3819 = vmatpush1.msra.mxu0 %v3756
    %3820 = vmatprep.subr.mxu0 %v3761
    %3821 = vmatpush1.msra.mxu0 %v3760
    %3822 = vmatprep.subr.mxu0 %v3765
    %3823 = vmatpush1.msra.mxu0 %v3764
    %3824 = vmatprep.subr.mxu0 %v3769
    %3825 = vmatpush1.msra.mxu0 %v3768
    %3826 = vmatprep.subr.mxu0 %v3773
    %3827 = vmatpush1.msra.mxu0 %v3772
    %3828 = vmatprep.subr.mxu0 %v3777
    %3829 = vmatpush1.msra.mxu0 %v3776
    %3830 = vmatprep.subr.mxu0 %v3781
    %3831 = vmatpush1.msra.mxu0 %v3780
    %3832 = vmatprep.subr.mxu0 %v3785
    %3833 = vmatpush1.msra.mxu0 %v3784
    %3834 = vmatprep.subr.mxu0 %v3789
    %3835 = vmatpush1.msra.mxu0 %v3788
    %3836 = vmatprep.subr.mxu0 %v3793
    %3837 = vmatpush1.msra.mxu0 %v3792
    %3838 = vmatprep.subr.mxu0 %v3797
    %3839 = vmatpush1.msra.mxu0 %v3796
    %3840 = vmatprep.subr.mxu0 %v3801
    %3841 = vmatpush1.msra.mxu0 %v3800
    %3842 = vmatprep.subr.mxu0 %v3805
    %3843 = vmatpush1.msra.mxu0 %v3804
    %3844 = vmatprep.subr.mxu0 %v3809
    %3845 = vmatpush1.msra.mxu0 %v3808
    %3846 = vmatprep.subr.mxu0 %v3813
    %3847 = vmatpush1.msra.mxu0 %v3812
    %3848 = vmatprep.subr.mxu0 0.0
    %3849 = vmatpush1.msra.mxu0 0.0
    %3850 = vmatprep.subr.mxu0 0.0
    %3851 = vmatpush1.msra.mxu0 0.0
    %3852 = vmatprep.subr.mxu0 0.0
    %3853 = vmatpush1.msra.mxu0 0.0
    %3854 = vmatprep.subr.mxu0 0.0
    %3855 = vmatpush1.msra.mxu0 0.0
    %3856 = vmatprep.subr.mxu0 0.0
    %3857 = vmatpush1.msra.mxu0 0.0
    %3858 = vmatprep.subr.mxu0 0.0
    %3859 = vmatpush1.msra.mxu0 0.0
    %3860 = vmatprep.subr.mxu0 0.0
    %3861 = vmatpush1.msra.mxu0 0.0
    %3862 = vmatprep.subr.mxu0 0.0
    %3863 = vmatpush1.msra.mxu0 0.0
    %3864 = vmatprep.subr.mxu0 0.0
    %3865 = vmatpush1.msra.mxu0 0.0
    %3866 = vmatprep.subr.mxu0 0.0
    %3867 = vmatpush1.msra.mxu0 0.0
    %3868 = vmatprep.subr.mxu0 0.0
    %3869 = vmatpush1.msra.mxu0 0.0
    %3870 = vmatprep.subr.mxu0 0.0
    %3871 = vmatpush1.msra.mxu0 0.0
    %3872 = vmatprep.subr.mxu0 0.0
    %3873 = vmatpush1.msra.mxu0 0.0
    %3874 = vmatprep.subr.mxu0 0.0
    %3875 = vmatpush1.msra.mxu0 0.0
    %3876 = vmatprep.subr.mxu0 0.0
    %3877 = vmatpush1.msra.mxu0 0.0
    %3878 = vmatprep.subr.mxu0 0.0
    %3879 = vmatpush1.msra.mxu0 0.0
    %3880 = vmatprep.mubr.f32.mxu0 0.0
    %3881 = vmatmul.mubr.f32.gmra.mrb[0].mxu0 %v3745
    %v3882 = vpop.f32.mrb[0].mxu0
    %v3883 = vadd.f32 0.0, %v3882
    %v3884 = vpop.f32.mrb[0].mxu0
    %v3885 = vadd.f32 0.0, %v3884
    %3886 = vdwg.mxu0
    %3887 = vmatprep.subr.mxu0 %v3755
    %3888 = vmatpush1.msra.mxu0 %v3754
    %3889 = vmatprep.subr.mxu0 %v3759
    %3890 = vmatpush1.msra.mxu0 %v3758
    %3891 = vmatprep.subr.mxu0 %v3763
    %3892 = vmatpush1.msra.mxu0 %v3762
    %3893 = vmatprep.subr.mxu0 %v3767
    %3894 = vmatpush1.msra.mxu0 %v3766
    %3895 = vmatprep.subr.mxu0 %v3771
    %3896 = vmatpush1.msra.mxu0 %v3770
    %3897 = vmatprep.subr.mxu0 %v3775
    %3898 = vmatpush1.msra.mxu0 %v3774
    %3899 = vmatprep.subr.mxu0 %v3779
    %3900 = vmatpush1.msra.mxu0 %v3778
    %3901 = vmatprep.subr.mxu0 %v3783
    %3902 = vmatpush1.msra.mxu0 %v3782
    %3903 = vmatprep.subr.mxu0 %v3787
    %3904 = vmatpush1.msra.mxu0 %v3786
    %3905 = vmatprep.subr.mxu0 %v3791
    %3906 = vmatpush1.msra.mxu0 %v3790
    %3907 = vmatprep.subr.mxu0 %v3795
    %3908 = vmatpush1.msra.mxu0 %v3794
    %3909 = vmatprep.subr.mxu0 %v3799
    %3910 = vmatpush1.msra.mxu0 %v3798
    %3911 = vmatprep.subr.mxu0 %v3803
    %3912 = vmatpush1.msra.mxu0 %v3802
    %3913 = vmatprep.subr.mxu0 %v3807
    %3914 = vmatpush1.msra.mxu0 %v3806
    %3915 = vmatprep.subr.mxu0 %v3811
    %3916 = vmatpush1.msra.mxu0 %v3810
    %3917 = vmatprep.subr.mxu0 %v3815
    %3918 = vmatpush1.msra.mxu0 %v3814
    %3919 = vmatprep.subr.mxu0 0.0
    %3920 = vmatpush1.msra.mxu0 0.0
    %3921 = vmatprep.subr.mxu0 0.0
    %3922 = vmatpush1.msra.mxu0 0.0
    %3923 = vmatprep.subr.mxu0 0.0
    %3924 = vmatpush1.msra.mxu0 0.0
    %3925 = vmatprep.subr.mxu0 0.0
    %3926 = vmatpush1.msra.mxu0 0.0
    %3927 = vmatprep.subr.mxu0 0.0
    %3928 = vmatpush1.msra.mxu0 0.0
    %3929 = vmatprep.subr.mxu0 0.0
    %3930 = vmatpush1.msra.mxu0 0.0
    %3931 = vmatprep.subr.mxu0 0.0
    %3932 = vmatpush1.msra.mxu0 0.0
    %3933 = vmatprep.subr.mxu0 0.0
    %3934 = vmatpush1.msra.mxu0 0.0
    %3935 = vmatprep.subr.mxu0 0.0
    %3936 = vmatpush1.msra.mxu0 0.0
    %3937 = vmatprep.subr.mxu0 0.0
    %3938 = vmatpush1.msra.mxu0 0.0
    %3939 = vmatprep.subr.mxu0 0.0
    %3940 = vmatpush1.msra.mxu0 0.0
    %3941 = vmatprep.subr.mxu0 0.0
    %3942 = vmatpush1.msra.mxu0 0.0
    %3943 = vmatprep.subr.mxu0 0.0
    %3944 = vmatpush1.msra.mxu0 0.0
    %3945 = vmatprep.subr.mxu0 0.0
    %3946 = vmatpush1.msra.mxu0 0.0
    %3947 = vmatprep.subr.mxu0 0.0
    %3948 = vmatpush1.msra.mxu0 0.0
    %3949 = vmatprep.subr.mxu0 0.0
    %3950 = vmatpush1.msra.mxu0 0.0
    %3951 = vmatprep.mubr.f32.mxu0 0.0
    %3952 = vmatmul.mubr.f32.gmra.mrb[0].mxu0 %v3745
    %v3953 = vpop.f32.mrb[0].mxu0
    %v3954 = vadd.f32 0.0, %v3953
    %v3955 = vpop.f32.mrb[0].mxu0
    %v3956 = vadd.f32 0.0, %v3955
    %3957 = vdwg.mxu0
    %v3962 = vcombine.low %v3883, %v3885
    %v3963 = vcombine.low %v3954, %v3956
    %v3965 = vunpack.c.l.s4 1983009808
    %v3966 = vunpack.c.0.s8 %v3965
    %v3967 = vlaneseq
    %v3968 = vshrl.u32 %v3967, 7
    %v3969 = vsub.s32 %v3966, %v3968
    %v3970 = vrot.slane %v3962, %v3969
    %v3972 = vunpack.c.l.s4 1983009808
    %v3973 = vunpack.c.0.s8 %v3972
    %v3974 = vlaneseq
    %v3975 = vshrl.u32 %v3974, 7
    %v3976 = vsub.s32 %v3973, %v3975
    %v3977 = vrot.slane %v3963, %v3976
    %v3978 = vcombine.low %v3970, %v3977
    %v3980 = vadd.f32 %v3751, %v3978
    %v3981 = vxor.u32 %v3980, 2147483648
    %v3982 = vmul.f32 %v3981, 1.442695
    %v3983 = vpow.pop %v3982
    %v3984 = vadd.f32 %v3983, 1.0
    %v3985 = vrcp.pop %v3984
    %v3986 = vmul.f32 1.0, %v3985
    %v3988 = vrot.slane %v3980, 6
    %v3990 = vtanh.pop %v3988
    %v3992 = vrot.slane %v3986, 2
    %v3994 = vmul.f32 %v3992, %v3746
    %v3995 = vmul.f32 %v3986, %v3990
    %v3996 = vadd.f32 %v3994, %v3995
    %v3997 = vtanh.pop %v3996
    %v3998 = vrot.slane %v3986, 4
    %v4000 = vmul.f32 %v3998, %v3997
    %v4001 = vld [vmem:[#allocation11] sm:$0xf]
    %v4002 = vunpack.c.l.bf16 %v4001
    %v4003 = vld [vmem:[#allocation17] sm:$0xff]
    %v4004 = vld [vmem:[#allocation17 + $0x8] sm:$0xff]
    %v4005 = vld [vmem:[#allocation17 + $0x10] sm:$0xff]
    %v4006 = vld [vmem:[#allocation17 + $0x18] sm:$0xff]
    %v4007 = vld [vmem:[#allocation17 + $0x20] sm:$0xff]
    %v4008 = vld [vmem:[#allocation17 + $0x28] sm:$0xff]
    %v4009 = vld [vmem:[#allocation17 + $0x30] sm:$0xff]
    %v4010 = vld [vmem:[#allocation17 + $0x38] sm:$0xff]
    %v4011 = vld [vmem:[#allocation17 + $0x40] sm:$0xff]
    %v4012 = vld [vmem:[#allocation17 + $0x48] sm:$0xff]
    %v4013 = vld [vmem:[#allocation17 + $0x50] sm:$0xff]
    %v4014 = vld [vmem:[#allocation17 + $0x58] sm:$0xff]
    %v4015 = vld [vmem:[#allocation17 + $0x60] sm:$0xff]
    %v4016 = vld [vmem:[#allocation17 + $0x68] sm:$0xff]
    %v4017 = vld [vmem:[#allocation17 + $0x70] sm:$0xff]
    %v4018 = vld [vmem:[#allocation17 + $0x78] sm:$0xff]
    %v4019 = vld [vmem:[#allocation17 + $0x80] sm:$0xff]
    %v4020 = vld [vmem:[#allocation17 + $0x88] sm:$0xff]
    %v4021 = vld [vmem:[#allocation17 + $0x90] sm:$0xff]
    %v4022 = vld [vmem:[#allocation17 + $0x98] sm:$0xff]
    %v4023 = vld [vmem:[#allocation17 + $0xa0] sm:$0xff]
    %v4024 = vld [vmem:[#allocation17 + $0xa8] sm:$0xff]
    %v4025 = vld [vmem:[#allocation17 + $0xb0] sm:$0xff]
    %v4026 = vld [vmem:[#allocation17 + $0xb8] sm:$0xff]
    %v4027 = vld [vmem:[#allocation17 + $0xc0] sm:$0xff]
    %v4028 = vld [vmem:[#allocation17 + $0xc8] sm:$0xff]
    %v4029 = vld [vmem:[#allocation17 + $0xd0] sm:$0xff]
    %v4030 = vld [vmem:[#allocation17 + $0xd8] sm:$0xff]
    %v4031 = vld [vmem:[#allocation17 + $0xe0] sm:$0xff]
    %v4032 = vld [vmem:[#allocation17 + $0xe8] sm:$0xff]
    %v4033 = vld [vmem:[#allocation17 + $0xf0] sm:$0xff]
    %v4034 = vld [vmem:[#allocation17 + $0xf8] sm:$0xff]
    %v4035 = vld [vmem:[#allocation17 + $0x100] sm:$0xff]
    %v4036 = vld [vmem:[#allocation17 + $0x108] sm:$0xff]
    %v4037 = vld [vmem:[#allocation17 + $0x110] sm:$0xff]
    %v4038 = vld [vmem:[#allocation17 + $0x118] sm:$0xff]
    %v4039 = vld [vmem:[#allocation17 + $0x120] sm:$0xff]
    %v4040 = vld [vmem:[#allocation17 + $0x128] sm:$0xff]
    %v4041 = vld [vmem:[#allocation17 + $0x130] sm:$0xff]
    %v4042 = vld [vmem:[#allocation17 + $0x138] sm:$0xff]
    %v4043 = vld [vmem:[#allocation17 + $0x140] sm:$0xff]
    %v4044 = vld [vmem:[#allocation17 + $0x148] sm:$0xff]
    %v4045 = vld [vmem:[#allocation17 + $0x150] sm:$0xff]
    %v4046 = vld [vmem:[#allocation17 + $0x158] sm:$0xff]
    %v4047 = vld [vmem:[#allocation17 + $0x160] sm:$0xff]
    %v4048 = vld [vmem:[#allocation17 + $0x168] sm:$0xff]
    %v4049 = vld [vmem:[#allocation17 + $0x170] sm:$0xff]
    %v4050 = vld [vmem:[#allocation17 + $0x178] sm:$0xff]
    %v4051 = vld [vmem:[#allocation17 + $0x180] sm:$0xff]
    %v4052 = vld [vmem:[#allocation17 + $0x188] sm:$0xff]
    %v4053 = vld [vmem:[#allocation17 + $0x190] sm:$0xff]
    %v4054 = vld [vmem:[#allocation17 + $0x198] sm:$0xff]
    %v4055 = vld [vmem:[#allocation17 + $0x1a0] sm:$0xff]
    %v4056 = vld [vmem:[#allocation17 + $0x1a8] sm:$0xff]
    %v4057 = vld [vmem:[#allocation17 + $0x1b0] sm:$0xff]
    %v4058 = vld [vmem:[#allocation17 + $0x1b8] sm:$0xff]
    %v4059 = vld [vmem:[#allocation17 + $0x1c0] sm:$0xff]
    %v4060 = vld [vmem:[#allocation17 + $0x1c8] sm:$0xff]
    %v4061 = vld [vmem:[#allocation17 + $0x1d0] sm:$0xff]
    %v4062 = vld [vmem:[#allocation17 + $0x1d8] sm:$0xff]
    %v4063 = vld [vmem:[#allocation17 + $0x1e0] sm:$0xff]
    %v4064 = vld [vmem:[#allocation17 + $0x1e8] sm:$0xff]
    %v4065 = vld [vmem:[#allocation17 + $0x1f0] sm:$0xff]
    %v4066 = vld [vmem:[#allocation17 + $0x1f8] sm:$0xff]
    %4067 = vmatprep.subr.mxu0 %v4004
    %4068 = vmatpush1.msra.mxu0 %v4003
    %4069 = vmatprep.subr.mxu0 %v4008
    %4070 = vmatpush1.msra.mxu0 %v4007
    %4071 = vmatprep.subr.mxu0 %v4012
    %4072 = vmatpush1.msra.mxu0 %v4011
    %4073 = vmatprep.subr.mxu0 %v4016
    %4074 = vmatpush1.msra.mxu0 %v4015
    %4075 = vmatprep.subr.mxu0 %v4020
    %4076 = vmatpush1.msra.mxu0 %v4019
    %4077 = vmatprep.subr.mxu0 %v4024
    %4078 = vmatpush1.msra.mxu0 %v4023
    %4079 = vmatprep.subr.mxu0 %v4028
    %4080 = vmatpush1.msra.mxu0 %v4027
    %4081 = vmatprep.subr.mxu0 %v4032
    %4082 = vmatpush1.msra.mxu0 %v4031
    %4083 = vmatprep.subr.mxu0 %v4036
    %4084 = vmatpush1.msra.mxu0 %v4035
    %4085 = vmatprep.subr.mxu0 %v4040
    %4086 = vmatpush1.msra.mxu0 %v4039
    %4087 = vmatprep.subr.mxu0 %v4044
    %4088 = vmatpush1.msra.mxu0 %v4043
    %4089 = vmatprep.subr.mxu0 %v4048
    %4090 = vmatpush1.msra.mxu0 %v4047
    %4091 = vmatprep.subr.mxu0 %v4052
    %4092 = vmatpush1.msra.mxu0 %v4051
    %4093 = vmatprep.subr.mxu0 %v4056
    %4094 = vmatpush1.msra.mxu0 %v4055
    %4095 = vmatprep.subr.mxu0 %v4060
    %4096 = vmatpush1.msra.mxu0 %v4059
    %4097 = vmatprep.subr.mxu0 %v4064
    %4098 = vmatpush1.msra.mxu0 %v4063
    %4099 = vmatprep.subr.mxu0 0.0
    %4100 = vmatpush1.msra.mxu0 0.0
    %4101 = vmatprep.subr.mxu0 0.0
    %4102 = vmatpush1.msra.mxu0 0.0
    %4103 = vmatprep.subr.mxu0 0.0
    %4104 = vmatpush1.msra.mxu0 0.0
    %4105 = vmatprep.subr.mxu0 0.0
    %4106 = vmatpush1.msra.mxu0 0.0
    %4107 = vmatprep.subr.mxu0 0.0
    %4108 = vmatpush1.msra.mxu0 0.0
    %4109 = vmatprep.subr.mxu0 0.0
    %4110 = vmatpush1.msra.mxu0 0.0
    %4111 = vmatprep.subr.mxu0 0.0
    %4112 = vmatpush1.msra.mxu0 0.0
    %4113 = vmatprep.subr.mxu0 0.0
    %4114 = vmatpush1.msra.mxu0 0.0
    %4115 = vmatprep.subr.mxu0 0.0
    %4116 = vmatpush1.msra.mxu0 0.0
    %4117 = vmatprep.subr.mxu0 0.0
    %4118 = vmatpush1.msra.mxu0 0.0
    %4119 = vmatprep.subr.mxu0 0.0
    %4120 = vmatpush1.msra.mxu0 0.0
    %4121 = vmatprep.subr.mxu0 0.0
    %4122 = vmatpush1.msra.mxu0 0.0
    %4123 = vmatprep.subr.mxu0 0.0
    %4124 = vmatpush1.msra.mxu0 0.0
    %4125 = vmatprep.subr.mxu0 0.0
    %4126 = vmatpush1.msra.mxu0 0.0
    %4127 = vmatprep.subr.mxu0 0.0
    %4128 = vmatpush1.msra.mxu0 0.0
    %4129 = vmatprep.subr.mxu0 0.0
    %4130 = vmatpush1.msra.mxu0 0.0
    %4131 = vmatprep.mubr.f32.mxu0 0.0
    %4132 = vmatmul.mubr.f32.gmra.mrb[0].mxu0 %v3747
    %v4133 = vpop.f32.mrb[0].mxu0
    %v4134 = vadd.f32 0.0, %v4133
    %v4135 = vpop.f32.mrb[0].mxu0
    %v4136 = vadd.f32 0.0, %v4135
    %4137 = vdwg.mxu0
    %4138 = vmatprep.subr.mxu0 %v4006
    %4139 = vmatpush1.msra.mxu0 %v4005
    %4140 = vmatprep.subr.mxu0 %v4010
    %4141 = vmatpush1.msra.mxu0 %v4009
    %4142 = vmatprep.subr.mxu0 %v4014
    %4143 = vmatpush1.msra.mxu0 %v4013
    %4144 = vmatprep.subr.mxu0 %v4018
    %4145 = vmatpush1.msra.mxu0 %v4017
    %4146 = vmatprep.subr.mxu0 %v4022
    %4147 = vmatpush1.msra.mxu0 %v4021
    %4148 = vmatprep.subr.mxu0 %v4026
    %4149 = vmatpush1.msra.mxu0 %v4025
    %4150 = vmatprep.subr.mxu0 %v4030
    %4151 = vmatpush1.msra.mxu0 %v4029
    %4152 = vmatprep.subr.mxu0 %v4034
    %4153 = vmatpush1.msra.mxu0 %v4033
    %4154 = vmatprep.subr.mxu0 %v4038
    %4155 = vmatpush1.msra.mxu0 %v4037
    %4156 = vmatprep.subr.mxu0 %v4042
    %4157 = vmatpush1.msra.mxu0 %v4041
    %4158 = vmatprep.subr.mxu0 %v4046
    %4159 = vmatpush1.msra.mxu0 %v4045
    %4160 = vmatprep.subr.mxu0 %v4050
    %4161 = vmatpush1.msra.mxu0 %v4049
    %4162 = vmatprep.subr.mxu0 %v4054
    %4163 = vmatpush1.msra.mxu0 %v4053
    %4164 = vmatprep.subr.mxu0 %v4058
    %4165 = vmatpush1.msra.mxu0 %v4057
    %4166 = vmatprep.subr.mxu0 %v4062
    %4167 = vmatpush1.msra.mxu0 %v4061
    %4168 = vmatprep.subr.mxu0 %v4066
    %4169 = vmatpush1.msra.mxu0 %v4065
    %4170 = vmatprep.subr.mxu0 0.0
    %4171 = vmatpush1.msra.mxu0 0.0
    %4172 = vmatprep.subr.mxu0 0.0
    %4173 = vmatpush1.msra.mxu0 0.0
    %4174 = vmatprep.subr.mxu0 0.0
    %4175 = vmatpush1.msra.mxu0 0.0
    %4176 = vmatprep.subr.mxu0 0.0
    %4177 = vmatpush1.msra.mxu0 0.0
    %4178 = vmatprep.subr.mxu0 0.0
    %4179 = vmatpush1.msra.mxu0 0.0
    %4180 = vmatprep.subr.mxu0 0.0
    %4181 = vmatpush1.msra.mxu0 0.0
    %4182 = vmatprep.subr.mxu0 0.0
    %4183 = vmatpush1.msra.mxu0 0.0
    %4184 = vmatprep.subr.mxu0 0.0
    %4185 = vmatpush1.msra.mxu0 0.0
    %4186 = vmatprep.subr.mxu0 0.0
    %4187 = vmatpush1.msra.mxu0 0.0
    %4188 = vmatprep.subr.mxu0 0.0
    %4189 = vmatpush1.msra.mxu0 0.0
    %4190 = vmatprep.subr.mxu0 0.0
    %4191 = vmatpush1.msra.mxu0 0.0
    %4192 = vmatprep.subr.mxu0 0.0
    %4193 = vmatpush1.msra.mxu0 0.0
    %4194 = vmatprep.subr.mxu0 0.0
    %4195 = vmatpush1.msra.mxu0 0.0
    %4196 = vmatprep.subr.mxu0 0.0
    %4197 = vmatpush1.msra.mxu0 0.0
    %4198 = vmatprep.subr.mxu0 0.0
    %4199 = vmatpush1.msra.mxu0 0.0
    %4200 = vmatprep.subr.mxu0 0.0
    %4201 = vmatpush1.msra.mxu0 0.0
    %4202 = vmatprep.mubr.f32.mxu0 0.0
    %4203 = vmatmul.mubr.f32.gmra.mrb[0].mxu0 %v3747
    %v4204 = vpop.f32.mrb[0].mxu0
    %v4205 = vadd.f32 0.0, %v4204
    %v4206 = vpop.f32.mrb[0].mxu0
    %v4207 = vadd.f32 0.0, %v4206
    %4208 = vdwg.mxu0
    %v4213 = vcombine.low %v4134, %v4136
    %v4214 = vcombine.low %v4205, %v4207
    %v4216 = vunpack.c.l.s4 1983009808
    %v4217 = vunpack.c.0.s8 %v4216
    %v4218 = vlaneseq
    %v4219 = vshrl.u32 %v4218, 7
    %v4220 = vsub.s32 %v4217, %v4219
    %v4221 = vrot.slane %v4213, %v4220
    %v4223 = vunpack.c.l.s4 1983009808
    %v4224 = vunpack.c.0.s8 %v4223
    %v4225 = vlaneseq
    %v4226 = vshrl.u32 %v4225, 7
    %v4227 = vsub.s32 %v4224, %v4226
    %v4228 = vrot.slane %v4214, %v4227
    %v4229 = vcombine.low %v4221, %v4228
    %v4231 = vadd.f32 %v4002, %v4229
    %v4232 = vxor.u32 %v4231, 2147483648
    %v4233 = vmul.f32 %v4232, 1.442695
    %v4234 = vpow.pop %v4233
    %v4235 = vadd.f32 %v4234, 1.0
    %v4236 = vrcp.pop %v4235
    %v4237 = vmul.f32 1.0, %v4236
    %v4239 = vrot.slane %v4231, 6
    %v4241 = vtanh.pop %v4239
    %v4243 = vrot.slane %v4237, 2
    %v4245 = vmul.f32 %v4243, %v3748
    %v4246 = vmul.f32 %v4237, %v4241
    %v4247 = vadd.f32 %v4245, %v4246
    %v4248 = vtanh.pop %v4247
    %v4249 = vrot.slane %v4237, 4
    %v4251 = vmul.f32 %v4249, %v4248
    %4252 = vst [vmem:[#allocation2] sm:$0x3] %v4000
    %4253 = vst [vmem:[#allocation3] sm:$0x3] %v3996
    %4254 = vst [vmem:[#allocation4] sm:$0x3] %v4251
    %4255 = vst [vmem:[#allocation5] sm:$0x3] %v4247
    %s4256 = scalar_lea.vmem [#allocation6], 14
    %4257 = vst [vmem:[%s4256] sm:$0x3] %v4000
    %4258 = vst [vmem:[#allocation7] sm:$0x3] %v4251
    %v4259 = vld [vmem:[#allocation6] sm:$0x3]
    %v4260 = vld [vmem:[#allocation6 + $0x2] sm:$0x3]
    %v4261 = vld [vmem:[#allocation6 + $0x4] sm:$0x3]
    %v4262 = vld [vmem:[#allocation6 + $0x6] sm:$0x3]
    %v4263 = vld [vmem:[#allocation6 + $0x8] sm:$0x3]
    %v4264 = vld [vmem:[#allocation6 + $0xa] sm:$0x3]
    %v4265 = vld [vmem:[#allocation6 + $0xc] sm:$0x3]
    %v4266 = vld [vmem:[#allocation6 + $0xe] sm:$0x3]
    %v4267 = vpack.c.bf16 %v4259, %v4259
    %v4268 = vpack.c.bf16 %v4260, %v4260
    %v4269 = vpack.c.bf16 %v4261, %v4261
    %v4270 = vpack.c.bf16 %v4262, %v4262
    %v4271 = vpack.c.bf16 %v4263, %v4263
    %v4272 = vpack.c.bf16 %v4264, %v4264
    %v4273 = vpack.c.bf16 %v4265, %v4265
    %v4274 = vpack.c.bf16 %v4266, %v4266
    %4275 = vst [vmem:[#allocation19] sm:$0x1] %v4267
    %4276 = vst [vmem:[#allocation19 + $0x1] sm:$0x1] %v4268
    %4277 = vst [vmem:[#allocation19 + $0x2] sm:$0x1] %v4269
    %4278 = vst [vmem:[#allocation19 + $0x3] sm:$0x1] %v4270
    %4279 = vst [vmem:[#allocation19 + $0x4] sm:$0x1] %v4271
    %4280 = vst [vmem:[#allocation19 + $0x5] sm:$0x1] %v4272
    %4281 = vst [vmem:[#allocation19 + $0x6] sm:$0x1] %v4273
    %4282 = vst [vmem:[#allocation19 + $0x7] sm:$0x1] %v4274
    %v4283 = vld [vmem:[#allocation7] sm:$0x3]
    %v4284 = vld [vmem:[#allocation7 + $0x2] sm:$0x3]
    %v4285 = vld [vmem:[#allocation7 + $0x4] sm:$0x3]
    %v4286 = vld [vmem:[#allocation7 + $0x6] sm:$0x3]
    %v4287 = vld [vmem:[#allocation7 + $0x8] sm:$0x3]
    %v4288 = vld [vmem:[#allocation7 + $0xa] sm:$0x3]
    %v4289 = vld [vmem:[#allocation7 + $0xc] sm:$0x3]
    %v4290 = vld [vmem:[#allocation7 + $0xe] sm:$0x3]
    %v4291 = vpack.c.bf16 %v4283, %v4283
    %v4292 = vpack.c.bf16 %v4284, %v4284
    %v4293 = vpack.c.bf16 %v4285, %v4285
    %v4294 = vpack.c.bf16 %v4286, %v4286
    %v4295 = vpack.c.bf16 %v4287, %v4287
    %v4296 = vpack.c.bf16 %v4288, %v4288
    %v4297 = vpack.c.bf16 %v4289, %v4289
    %v4298 = vpack.c.bf16 %v4290, %v4290
    %4299 = vst [vmem:[#allocation20] sm:$0x1] %v4291
    %4300 = vst [vmem:[#allocation20 + $0x1] sm:$0x1] %v4292
    %4301 = vst [vmem:[#allocation20 + $0x2] sm:$0x1] %v4293
    %4302 = vst [vmem:[#allocation20 + $0x3] sm:$0x1] %v4294
    %4303 = vst [vmem:[#allocation20 + $0x4] sm:$0x1] %v4295
    %4304 = vst [vmem:[#allocation20 + $0x5] sm:$0x1] %v4296
    %4305 = vst [vmem:[#allocation20 + $0x6] sm:$0x1] %v4297
    %4306 = vst [vmem:[#allocation20 + $0x7] sm:$0x1] %v4298
    // Predicated region
    $region54: #{lstm_module_forward.4} parent=1 // pred_check
      %p4307 = pneg %p121
    $region55: #{lstm_module_forward.4} parent=1 // pred_check_branch
      %4309 = sbr.rel (%p4307) target = $region57
    $region56: #{lstm_module_forward.4} parent=1 // pred_region
      %v4310 = vld [vmem:[#allocation2] sm:$0x3]
      %4311 = vst [vmem:[#allocation22] sm:$0x3] %v4310
      %v4312 = vld [vmem:[#allocation3] sm:$0x3]
      %4313 = vst [vmem:[#allocation23] sm:$0x3] %v4312
      %v4314 = vld [vmem:[#allocation4] sm:$0x3]
      %s4315 = scalar_lea.vmem [#allocation22], 2
      %4316 = vst [vmem:[%s4315] sm:$0x3] %v4314
      %v4317 = vld [vmem:[#allocation5] sm:$0x3]
      %s4318 = scalar_lea.vmem [#allocation23], 2
      %4319 = vst [vmem:[%s4318] sm:$0x3] %v4317
    $region57: #{lstm_module_forward.4} parent=1 // pred_fallthru
      _
    // Predicated region
    $region58: #{lstm_module_forward.4} parent=1 // pred_check
      _
    $region59: #{lstm_module_forward.4} parent=1 // pred_check_branch
      %4321 = sbr.rel (0) target = $region61
    $region60: #{lstm_module_forward.4} parent=1 // pred_region
      %s4323 = ssub.s32 128, 128
      %4324 = vsyncadd [#allocation10], %s4323
      %s4325 = sshll.u32 [#allocation19], 4
      %s4326 = int_to_ptr.vmem [resolvable:$true] %s4325
      %4331 = dma.vmem_to_hbm [thread:$0]  %s4326, 128, %s6, [#allocation10], 16, 16, 1
    $region61: #{lstm_module_forward.4} parent=1 // pred_fallthru
      _
    // Predicated region
    $region62: #{lstm_module_forward.4} parent=1 // pred_check
      _
    $region63: #{lstm_module_forward.4} parent=1 // pred_check_branch
      %4333 = sbr.rel (0) target = $region65
    $region64: #{lstm_module_forward.4} parent=1 // pred_region
      %s4334 = ssub.s32 0, 0
      %s4335 = smul.u32 8, %s4334
      %s4337 = ssub.s32 128, 128
      %4338 = vsyncadd [#allocation21], %s4337
      %s4339 = smul.addr %s4335, 16
      %s4340 = scalar_lea.hbm %s7, %s4339
      %s4341 = sshll.u32 [#allocation20], 4
      %s4342 = int_to_ptr.vmem [resolvable:$true] %s4341
      %4347 = dma.vmem_to_hbm [thread:$0]  %s4342, 128, %s4340, [#allocation21], 16, 16, 1
    $region65: #{lstm_module_forward.4} parent=1 // pred_fallthru
      _
    // Predicated region
    $region66: #{lstm_module_forward.4} parent=1 // pred_check
      _
    $region67: #{lstm_module_forward.4} parent=1 // pred_check_branch
      %4349 = sbr.rel (0) target = $region69
    $region68: #{lstm_module_forward.4} parent=1 // pred_region
      %s4351 = ssub.s32 64, 64
      %4352 = vsyncadd [#allocation21], %s4351
      %s4353 = sshll.u32 [#allocation22], 4
      %s4354 = int_to_ptr.vmem [resolvable:$true] %s4353
      %4359 = dma.vmem_to_hbm [thread:$0]  %s4354, 64, %s8, [#allocation21], 32, 32, 2
    $region69: #{lstm_module_forward.4} parent=1 // pred_fallthru
      _
    // Predicated region
    $region70: #{lstm_module_forward.4} parent=1 // pred_check
      _
    $region71: #{lstm_module_forward.4} parent=1 // pred_check_branch
      %4361 = sbr.rel (0) target = $region73
    $region72: #{lstm_module_forward.4} parent=1 // pred_region
      %s4363 = ssub.s32 64, 64
      %4364 = vsyncadd [#allocation24], %s4363
      %s4365 = sshll.u32 [#allocation23], 4
      %s4366 = int_to_ptr.vmem [resolvable:$true] %s4365
      %4371 = dma.vmem_to_hbm [thread:$0]  %s4366, 64, %s9, [#allocation24], 32, 32, 2
    $region73: #{lstm_module_forward.4} parent=1 // pred_fallthru
      _
    // Predicated region
    $region74: #{lstm_module_forward.4} parent=1 // pred_check
      _
    $region75: #{lstm_module_forward.4} parent=1 // pred_check_branch
      %4373 = sbr.rel (0) target = $region77
    $region76: #{lstm_module_forward.4} parent=1 // pred_region
      %4374 = dma.done [#allocation10], 128
    $region77: #{lstm_module_forward.4} parent=1 // pred_fallthru
      _
    // Predicated region
    $region78: #{lstm_module_forward.4} parent=1 // pred_check
      _
    $region79: #{lstm_module_forward.4} parent=1 // pred_check_branch
      %4376 = sbr.rel (0) target = $region81
    $region80: #{lstm_module_forward.4} parent=1 // pred_region
      %4377 = dma.done [#allocation21], 128
    $region81: #{lstm_module_forward.4} parent=1 // pred_fallthru
      _
    // Predicated region
    $region82: #{lstm_module_forward.4} parent=1 // pred_check
      _
    $region83: #{lstm_module_forward.4} parent=1 // pred_check_branch
      %4379 = sbr.rel (0) target = $region85
    $region84: #{lstm_module_forward.4} parent=1 // pred_region
      %4380 = dma.done [#allocation21], 64
    $region85: #{lstm_module_forward.4} parent=1 // pred_fallthru
      _
    // Predicated region
    $region86: #{lstm_module_forward.4} parent=1 // pred_check
      _
    $region87: #{lstm_module_forward.4} parent=1 // pred_check_branch
      %4382 = sbr.rel (0) target = $region89
    $region88: #{lstm_module_forward.4} parent=1 // pred_region
      %4383 = dma.done [#allocation24], 64
    $region89: #{lstm_module_forward.4} parent=1 // pred_fallthru
      _
    %4384 = vsyncpa [#allocation9], 1
    %4385 = vsyncpa [#allocation12], 1
    %4386 = vsyncpa [#allocation15], 1
    %4387 = vsyncpa [#allocation18], 1
    %4388 = vsyncpa [#allocation10], 1
    %4389 = vsyncpa [#allocation21], 1
    %4390 = vsyncpa [#allocation24], 1

</llo_original>
